<compile_context>
chip_gen: v7x
topology: tpu7x:2x2x1
jax: 0.10.0
libtpu: 0.0.40
codegen_flags: <defaults>
</compile_context>

<pallas_src>
import functools

import jax
import jax.numpy as jnp
from jax.experimental import pallas as pl
from jax.experimental.pallas import tpu as pltpu


# ----------------------------- Pallas kernel ------------------------------------------

def _conv_block_kernel(p_ref, w_ref, scale_ref, shift_ref, o_ref, *, slope):
    """One Conv(+bias / folded BN)+LeakyReLU block as a single fused MXU matmul.

    p_ref     : (mt, Kd) bf16  lane-dense packed im2col patches (batch folded into M)
    w_ref     : (Kd, Nd) bf16  block-diagonal (kron) packed conv weights, grid-resident
    scale_ref : (1,  Nd) f32   per-channel scale (eval-mode BN folded), tiled over packing
    shift_ref : (1,  Nd) f32   per-channel shift (conv bias / BN folded)
    o_ref     : (mt, Nd) bf16 (intermediate layers) or f32 (final conv)
    """
    y = jnp.dot(p_ref[...], w_ref[...], preferred_element_type=jnp.float32)
    y = y * scale_ref[...] + shift_ref[...]
    if slope != 1.0:                      # static: activation dropped for the final conv
        y = jnp.where(y >= 0.0, y, slope * y)
    o_ref[...] = y.astype(o_ref.dtype)


# ----------------------------- helpers -------------------------------------------------

def _default_lane_target():
    # 256-wide MXU on v6e/v7x; 128 on v5e.  Safe default (256) if the query fails
    # (e.g. interpret mode on CPU) -- 256 is still correct everywhere.
    try:
        kind = jax.devices()[0].device_kind.lower()
    except Exception:
        return 256
    if "v5 lite" in kind or "v5lite" in kind or "v5e" in kind:
        return 128
    return 256


def _choose_m_tile(md):
    """Rows per grid step for the packed (Md, Kd) matmul.

    Single full block when small / ragged; otherwise a multiple of 16 (bf16 sublane
    packing) that divides Md evenly, targeting >=2 grid steps (v7x dual TensorCore) and
    <=512 rows per step (bounds VMEM and keeps pipelining at large resolutions).
    """
    mult = 16
    if md % mult != 0 or md <= mult:
        return md
    upper = min(max(md // 2, mult), 512)
    for t in range(upper - upper % mult, mult - 1, -mult):
        if md % t == 0:
            return t
    return md


def _se_scale(x_nhwc, w1, w2):
    # Squeeze-excite (reduction=1, bias-free FCs) in plain JAX: <100 FLOPs; the resulting
    # per-(batch, channel) scale is multiplied into the conv input, where XLA fuses it
    # into the first im2col gather (no extra HBM pass, no 3/128-lane kernel).
    y = jnp.mean(x_nhwc, axis=(1, 2))                     # (N, C) global average pool
    h = jnp.maximum(y @ w1, 0.0)
    return jax.nn.sigmoid(h @ w2)                         # (N, C) channel scales


def _im2col(x_nhwc, kh, kw, stride, pad):
    # XLA-side im2col; bf16 cast, zero-pad and window gather fuse into the single write
    # of the patches array.  stride / pad are static Python ints (from the plan closure).
    N, H, W, C = x_nhwc.shape
    xq = x_nhwc.astype(jnp.bfloat16)
    xp = jnp.pad(xq, ((0, 0), (pad, pad), (pad, pad), (0, 0)))
    Ho = (H + 2 * pad - kh) // stride + 1
    Wo = (W + 2 * pad - kw) // stride + 1
    cols = []
    for i in range(kh):
        for j in range(kw):
            cols.append(xp[:, i:i + stride * Ho:stride, j:j + stride * Wo:stride, :])
    patches = jnp.concatenate(cols, axis=-1)              # (N, Ho, Wo, kh*kw*C) bf16
    return patches.reshape(N * Ho * Wo, kh * kw * C)      # batch folded into M


def _conv_layer(x_nhwc, arrs, lp):
    """Apply one fused conv block. `lp` is static plan data, `arrs` precomputed arrays."""
    N = x_nhwc.shape[0]
    patches = _im2col(x_nhwc, 4, 4, lp["stride"], 1)      # (M, K) bf16
    M = patches.shape[0]
    g, Md, Kd, Nd = lp["g"], lp["Md"], lp["Kd"], lp["Nd"]
    Mpad = Md * g
    if Mpad != M:                                         # pad to a multiple of g so the
        patches = jnp.pad(patches, ((0, Mpad - M), (0, 0)))   # lane-dense packing applies
    patches = patches.reshape(Md, Kd)                     # free row-major grouping

    mt = lp["m_tile"]
    out = pl.pallas_call(
        functools.partial(_conv_block_kernel, slope=lp["slope"]),
        out_shape=jax.ShapeDtypeStruct((Md, Nd), lp["out_dtype"]),
        grid=(Md // mt,),
        in_specs=[
            pl.BlockSpec((mt, Kd), lambda i: (i, 0)),     # M-tiled patches
            pl.BlockSpec((Kd, Nd), lambda i: (0, 0)),     # weights resident across grid
            pl.BlockSpec((1, Nd), lambda i: (0, 0)),
            pl.BlockSpec((1, Nd), lambda i: (0, 0)),
        ],
        out_specs=pl.BlockSpec((mt, Nd), lambda i: (i, 0)),
        compiler_params=pltpu.CompilerParams(dimension_semantics=("parallel",)),
    )(patches, arrs["w"], arrs["scale"], arrs["shift"])

    out = out.reshape(Mpad, lp["cout"])[:M]               # free unpack + drop pad rows
    return out.reshape(N, lp["Ho"], lp["Wo"], lp["cout"])


# ----------------------------- config / params -----------------------------------------

def make_conv_cfgs(input_nc=3, ndf=8, n_layers=3):
    cfgs = [dict(cin=input_nc, cout=ndf, stride=2, bn=False, slope=0.2)]
    nf_mult = 1
    for n in range(1, n_layers):
        nf_prev, nf_mult = nf_mult, min(2 ** n, 8)
        cfgs.append(dict(cin=ndf * nf_prev, cout=ndf * nf_mult, stride=2, bn=True, slope=0.2))
    nf_prev, nf_mult = nf_mult, min(2 ** n_layers, 8)
    cfgs.append(dict(cin=ndf * nf_prev, cout=ndf * nf_mult, stride=1, bn=True, slope=0.2))
    cfgs.append(dict(cin=ndf * nf_mult, cout=1, stride=1, bn=False, slope=1.0))  # no act
    return cfgs


def init_params(key, cfgs, input_nc=3, eps=1e-5):
    keys = iter(jax.random.split(key, 4 * len(cfgs) + 8))
    params = {
        "se_w1": jax.random.normal(next(keys), (input_nc, input_nc), jnp.float32) * 0.5,
        "se_w2": jax.random.normal(next(keys), (input_nc, input_nc), jnp.float32) * 0.5,
    }
    layers = []
    for c in cfgs:
        fan_in = 4 * 4 * c["cin"]
        w = jax.random.normal(next(keys), (c["cout"], c["cin"], 4, 4),
                              jnp.float32) * (1.0 / fan_in ** 0.5)
        if c["bn"]:   # use_bias=False; eval-mode BatchNorm folded into scale/shift
            gamma = jax.random.uniform(next(keys), (c["cout"],), jnp.float32, 0.5, 1.5)
            beta = jax.random.normal(next(keys), (c["cout"],), jnp.float32) * 0.1
            rmean = jax.random.normal(next(keys), (c["cout"],), jnp.float32) * 0.1
            rvar = jax.random.uniform(next(keys), (c["cout"],), jnp.float32, 0.5, 1.5)
            scale = gamma / jnp.sqrt(rvar + eps)
            shift = beta - rmean * scale
        else:         # plain conv bias
            bias = jax.random.normal(next(keys), (c["cout"],), jnp.float32) * 0.1
            scale = jnp.ones((c["cout"],), jnp.float32)
            shift = bias
        layers.append(dict(w=w, scale=scale, shift=shift))
    params["convs"] = layers
    return params


def prepare_model(params, cfgs, x_shape, lane_target=None):
    """Build (static plan, packed arrays).  Runs ONCE, eagerly, outside jit.

    Lane-dense packing: group g output pixels so the stored tile's last dim is
    g*cout == lane_target (unmasked vector stores, full MXU N dim).  Mathematically
    O_dense = P.reshape(Mpad//g, g*K) @ kron(I_g, W): the activation reshape is a free
    row-major view and the kernel stays a plain 2-D matmul.
    """
    if lane_target is None:
        lane_target = _default_lane_target()
    N, _, H, W = x_shape
    plan_layers, packed = [], []
    h, w = H, W
    for li, (cfg, lay) in enumerate(zip(cfgs, params["convs"])):
        s, cout = cfg["stride"], cfg["cout"]
        Ho = (h + 2 - 4) // s + 1
        Wo = (w + 2 - 4) // s + 1
        M = N * Ho * Wo
        K = 16 * cfg["cin"]
        g = lane_target // cout if lane_target % cout == 0 else 1
        g = max(1, min(g, M))
        Md = -(-M // g)                                   # ceil: M zero-padded to Md*g
        Kd, Nd = g * K, g * cout
        is_last = li == len(cfgs) - 1
        plan_layers.append(dict(
            stride=s, slope=cfg["slope"], Ho=Ho, Wo=Wo, cout=cout,
            g=g, Md=Md, Kd=Kd, Nd=Nd, m_tile=_choose_m_tile(Md),
            out_dtype=jnp.float32 if is_last else jnp.bfloat16))
        # (O,I,kh,kw) -> (kh,kw,I,O) -> (K, cout), then block-diagonal kron packing.
        wmat = jnp.transpose(lay["w"], (2, 3, 1, 0)).reshape(K, cout)
        if g > 1:
            wmat = jnp.kron(jnp.eye(g, dtype=wmat.dtype), wmat)
        packed.append(dict(
            w=wmat.astype(jnp.bfloat16),
            scale=jnp.tile(lay["scale"].reshape(1, cout), (1, g)).astype(jnp.float32),
            shift=jnp.tile(lay["shift"].reshape(1, cout), (1, g)).astype(jnp.float32)))
        h, w = Ho, Wo
    plan = dict(input_shape=tuple(x_shape), layers=tuple(plan_layers))
    arrays = dict(se_w1=params["se_w1"], se_w2=params["se_w2"], layers=packed)
    return plan, arrays


# ----------------------------- forward --------------------------------------------------

def nlayer_attention_forward(plan, arrays, x_nchw):
    assert tuple(x_nchw.shape) == plan["input_shape"], (x_nchw.shape, plan["input_shape"])
    x = jnp.transpose(x_nchw, (0, 2, 3, 1))               # NCHW -> NHWC
    s = _se_scale(x, arrays["se_w1"], arrays["se_w2"])    # SE attention in plain JAX
    x = x * s[:, None, None, :]                           # fused into first im2col by XLA
    for lp, arrs in zip(plan["layers"], arrays["layers"]):
        x = _conv_layer(x, arrs, lp)
    return jnp.transpose(x, (0, 3, 1, 2))                 # NHWC -> NCHW


# ----------------------------- reference (pure JAX, matched precision) ------------------

def _reference(cfgs, params, x_nchw):
    # Same math, same bf16 quantization of conv operands and intermediate activations,
    # so the only difference vs. the Pallas path is f32 accumulation order.
    x = jnp.transpose(x_nchw, (0, 2, 3, 1))
    s = _se_scale(x, params["se_w1"], params["se_w2"])
    x = x * s[:, None, None, :]
    for cfg, lay in zip(cfgs, params["convs"]):
        xq = x.astype(jnp.bfloat16).astype(jnp.float32)
        wq = lay["w"].astype(jnp.bfloat16).astype(jnp.float32)
        w_hwio = jnp.transpose(wq, (2, 3, 1, 0))          # OIHW -> HWIO
        out = jax.lax.conv_general_dilated(
            xq, w_hwio, window_strides=(cfg["stride"],) * 2,
            padding=((1, 1), (1, 1)),
            dimension_numbers=("NHWC", "HWIO", "NHWC"),
            precision=jax.lax.Precision.HIGHEST)
        out = out * lay["scale"] + lay["shift"]
        if cfg["slope"] != 1.0:
            out = jnp.where(out >= 0.0, out, cfg["slope"] * out)
        x = out
    return jnp.transpose(x, (0, 3, 1, 2))


if __name__ == "__main__":
    key = jax.random.PRNGKey(0)
    kp, kx = jax.random.split(key)
    input_nc, ndf, n_layers = 3, 8, 3
    cfgs = make_conv_cfgs(input_nc=input_nc, ndf=ndf, n_layers=n_layers)
    params = init_params(kp, cfgs, input_nc=input_nc)
    x = jax.random.normal(kx, (2, input_nc, 32, 32), jnp.float32)

    # Static plan + packed weights built once, outside jit (hoisted kron / transpose / tile).
    plan, arrays = prepare_model(params, cfgs, x.shape)
    fwd = jax.jit(functools.partial(nlayer_attention_forward, plan))
    out = jax.block_until_ready(fwd(arrays, x))

    ref = jax.block_until_ready(jax.jit(functools.partial(_reference, cfgs))(params, x))
    assert out.shape == ref.shape == (2, 1, 2, 2), (out.shape, ref.shape)
    max_err = float(jnp.max(jnp.abs(out - ref)))
    assert jnp.allclose(out, ref, atol=5e-3, rtol=5e-3), max_err
    print("KERNEL_OK")
</pallas_src>

<mosaic_0001>
module attributes {stable_mosaic.version = 11 : i64} {
  func.func @_conv_block_kernel(%arg0: i32, %arg1: memref<16x1536xbf16, #tpu.memory_space<vmem>>, %arg2: memref<1536x256xbf16, #tpu.memory_space<vmem>>, %arg3: memref<1x256xf32, #tpu.memory_space<vmem>>, %arg4: memref<1x256xf32, #tpu.memory_space<vmem>>, %arg5: memref<16x256xbf16, #tpu.memory_space<vmem>>) attributes {dimension_semantics = [#tpu.dimension_semantics<parallel>], iteration_bounds = array<i64: 1>, scalar_prefetch = 0 : i64, scratch_operands = 0 : i64, tpu.core_type = #tpu.core_type<tc>, window_params = [{transform_indices = @transform_0, window_bounds = array<i64: 16, 1536>}, {pipeline_mode = #tpu.pipeline_mode<synchronous>, transform_indices = @transform_1, window_bounds = array<i64: 1536, 256>}, {pipeline_mode = #tpu.pipeline_mode<synchronous>, transform_indices = @transform_2, window_bounds = array<i64: 1, 256>}, {pipeline_mode = #tpu.pipeline_mode<synchronous>, transform_indices = @transform_3, window_bounds = array<i64: 1, 256>}, {transform_indices = @transform_4, window_bounds = array<i64: 16, 256>}]} {
    %c0 = arith.constant 0 : index
    %c0_0 = arith.constant 0 : index
    %0 = vector.load %arg1[%c0, %c0_0] : memref<16x1536xbf16, #tpu.memory_space<vmem>>, vector<16x1536xbf16>
    %c0_1 = arith.constant 0 : index
    %c0_2 = arith.constant 0 : index
    %1 = vector.load %arg2[%c0_1, %c0_2] : memref<1536x256xbf16, #tpu.memory_space<vmem>>, vector<1536x256xbf16>
    %cst = arith.constant dense<0.000000e+00> : vector<16x256xf32>
    %2 = tpu.matmul %0, %1, %cst {dimension_numbers = #tpu.dot_dimension_numbers<[1], [0], [0], [1], [0, 0, 1, 1], [], []>} : vector<16x1536xbf16>, vector<1536x256xbf16>, vector<16x256xf32> -> vector<16x256xf32>
    %c0_3 = arith.constant 0 : index
    %c0_4 = arith.constant 0 : index
    %3 = vector.load %arg3[%c0_3, %c0_4] : memref<1x256xf32, #tpu.memory_space<vmem>>, vector<1x256xf32>
    %4 = vector.broadcast %3 : vector<1x256xf32> to vector<16x256xf32>
    %5 = arith.mulf %2, %4 : vector<16x256xf32>
    %c0_5 = arith.constant 0 : index
    %c0_6 = arith.constant 0 : index
    %6 = vector.load %arg4[%c0_5, %c0_6] : memref<1x256xf32, #tpu.memory_space<vmem>>, vector<1x256xf32>
    %7 = vector.broadcast %6 : vector<1x256xf32> to vector<16x256xf32>
    %8 = arith.addf %5, %7 : vector<16x256xf32>
    %cst_7 = arith.constant 0.000000e+00 : f32
    %9 = vector.broadcast %cst_7 : f32 to vector<16x256xf32>
    %10 = arith.cmpf oge, %8, %9 : vector<16x256xf32>
    %cst_8 = arith.constant 2.000000e-01 : f32
    %11 = vector.broadcast %cst_8 : f32 to vector<16x256xf32>
    %12 = arith.mulf %11, %8 : vector<16x256xf32>
    %13 = arith.select %10, %8, %12 : vector<16x256xi1>, vector<16x256xf32>
    %14 = arith.truncf %13 : vector<16x256xf32> to vector<16x256xbf16>
    %c0_9 = arith.constant 0 : index
    %c0_10 = arith.constant 0 : index
    %15 = vector.load %arg5[%c0_9, %c0_10] : memref<16x256xbf16, #tpu.memory_space<vmem>>, vector<16x256xbf16>
    tpu.vector_store %arg5[%c0_9, %c0_10], %14 {strides = array<i32>} : memref<16x256xbf16, #tpu.memory_space<vmem>>, vector<16x256xbf16>,
    return
  }
  func.func @transform_0(%arg0: i32) -> (i32, i32) {
    %c0_i32 = arith.constant 0 : i32
    %c0_i32_0 = arith.constant 0 : i32
    return %arg0, %c0_i32 : i32, i32
  }
  func.func @transform_1(%arg0: i32) -> (i32, i32) {
    %c0_i32 = arith.constant 0 : i32
    %c0_i32_0 = arith.constant 0 : i32
    %c0_i32_1 = arith.constant 0 : i32
    return %c0_i32, %c0_i32_0 : i32, i32
  }
  func.func @transform_2(%arg0: i32) -> (i32, i32) {
    %c0_i32 = arith.constant 0 : i32
    %c0_i32_0 = arith.constant 0 : i32
    %c0_i32_1 = arith.constant 0 : i32
    return %c0_i32, %c0_i32_0 : i32, i32
  }
  func.func @transform_3(%arg0: i32) -> (i32, i32) {
    %c0_i32 = arith.constant 0 : i32
    %c0_i32_0 = arith.constant 0 : i32
    %c0_i32_1 = arith.constant 0 : i32
    return %c0_i32, %c0_i32_0 : i32, i32
  }
  func.func @transform_4(%arg0: i32) -> (i32, i32) {
    %c0_i32 = arith.constant 0 : i32
    %c0_i32_0 = arith.constant 0 : i32
    return %arg0, %c0_i32 : i32, i32
  }
}

module attributes {stable_mosaic.version = 11 : i64} {
  func.func @_conv_block_kernel(%arg0: i32, %arg1: memref<8x2048xbf16, #tpu.memory_space<vmem>>, %arg2: memref<2048x256xbf16, #tpu.memory_space<vmem>>, %arg3: memref<1x256xf32, #tpu.memory_space<vmem>>, %arg4: memref<1x256xf32, #tpu.memory_space<vmem>>, %arg5: memref<8x256xbf16, #tpu.memory_space<vmem>>) attributes {dimension_semantics = [#tpu.dimension_semantics<parallel>], iteration_bounds = array<i64: 1>, scalar_prefetch = 0 : i64, scratch_operands = 0 : i64, tpu.core_type = #tpu.core_type<tc>, window_params = [{transform_indices = @transform_0, window_bounds = array<i64: 8, 2048>}, {pipeline_mode = #tpu.pipeline_mode<synchronous>, transform_indices = @transform_1, window_bounds = array<i64: 2048, 256>}, {pipeline_mode = #tpu.pipeline_mode<synchronous>, transform_indices = @transform_2, window_bounds = array<i64: 1, 256>}, {pipeline_mode = #tpu.pipeline_mode<synchronous>, transform_indices = @transform_3, window_bounds = array<i64: 1, 256>}, {transform_indices = @transform_4, window_bounds = array<i64: 8, 256>}]} {
    %c0 = arith.constant 0 : index
    %c0_0 = arith.constant 0 : index
    %0 = vector.load %arg1[%c0, %c0_0] : memref<8x2048xbf16, #tpu.memory_space<vmem>>, vector<8x2048xbf16>
    %c0_1 = arith.constant 0 : index
    %c0_2 = arith.constant 0 : index
    %1 = vector.load %arg2[%c0_1, %c0_2] : memref<2048x256xbf16, #tpu.memory_space<vmem>>, vector<2048x256xbf16>
    %cst = arith.constant dense<0.000000e+00> : vector<8x256xf32>
    %2 = tpu.matmul %0, %1, %cst {dimension_numbers = #tpu.dot_dimension_numbers<[1], [0], [0], [1], [0, 0, 1, 1], [], []>} : vector<8x2048xbf16>, vector<2048x256xbf16>, vector<8x256xf32> -> vector<8x256xf32>
    %c0_3 = arith.constant 0 : index
    %c0_4 = arith.constant 0 : index
    %3 = vector.load %arg3[%c0_3, %c0_4] : memref<1x256xf32, #tpu.memory_space<vmem>>, vector<1x256xf32>
    %4 = vector.broadcast %3 : vector<1x256xf32> to vector<8x256xf32>
    %5 = arith.mulf %2, %4 : vector<8x256xf32>
    %c0_5 = arith.constant 0 : index
    %c0_6 = arith.constant 0 : index
    %6 = vector.load %arg4[%c0_5, %c0_6] : memref<1x256xf32, #tpu.memory_space<vmem>>, vector<1x256xf32>
    %7 = vector.broadcast %6 : vector<1x256xf32> to vector<8x256xf32>
    %8 = arith.addf %5, %7 : vector<8x256xf32>
    %cst_7 = arith.constant 0.000000e+00 : f32
    %9 = vector.broadcast %cst_7 : f32 to vector<8x256xf32>
    %10 = arith.cmpf oge, %8, %9 : vector<8x256xf32>
    %cst_8 = arith.constant 2.000000e-01 : f32
    %11 = vector.broadcast %cst_8 : f32 to vector<8x256xf32>
    %12 = arith.mulf %11, %8 : vector<8x256xf32>
    %13 = arith.select %10, %8, %12 : vector<8x256xi1>, vector<8x256xf32>
    %14 = arith.truncf %13 : vector<8x256xf32> to vector<8x256xbf16>
    %c0_9 = arith.constant 0 : index
    %c0_10 = arith.constant 0 : index
    %15 = vector.load %arg5[%c0_9, %c0_10] : memref<8x256xbf16, #tpu.memory_space<vmem>>, vector<8x256xbf16>
    tpu.vector_store %arg5[%c0_9, %c0_10], %14 {strides = array<i32>} : memref<8x256xbf16, #tpu.memory_space<vmem>>, vector<8x256xbf16>,
    return
  }
  func.func @transform_0(%arg0: i32) -> (i32, i32) {
    %c0_i32 = arith.constant 0 : i32
    %c0_i32_0 = arith.constant 0 : i32
    return %arg0, %c0_i32 : i32, i32
  }
  func.func @transform_1(%arg0: i32) -> (i32, i32) {
    %c0_i32 = arith.constant 0 : i32
    %c0_i32_0 = arith.constant 0 : i32
    %c0_i32_1 = arith.constant 0 : i32
    return %c0_i32, %c0_i32_0 : i32, i32
  }
  func.func @transform_2(%arg0: i32) -> (i32, i32) {
    %c0_i32 = arith.constant 0 : i32
    %c0_i32_0 = arith.constant 0 : i32
    %c0_i32_1 = arith.constant 0 : i32
    return %c0_i32, %c0_i32_0 : i32, i32
  }
  func.func @transform_3(%arg0: i32) -> (i32, i32) {
    %c0_i32 = arith.constant 0 : i32
    %c0_i32_0 = arith.constant 0 : i32
    %c0_i32_1 = arith.constant 0 : i32
    return %c0_i32, %c0_i32_0 : i32, i32
  }
  func.func @transform_4(%arg0: i32) -> (i32, i32) {
    %c0_i32 = arith.constant 0 : i32
    %c0_i32_0 = arith.constant 0 : i32
    return %arg0, %c0_i32 : i32, i32
  }
}

module attributes {stable_mosaic.version = 11 : i64} {
  func.func @_conv_block_kernel(%arg0: i32, %arg1: memref<4x2048xbf16, #tpu.memory_space<vmem>>, %arg2: memref<2048x256xbf16, #tpu.memory_space<vmem>>, %arg3: memref<1x256xf32, #tpu.memory_space<vmem>>, %arg4: memref<1x256xf32, #tpu.memory_space<vmem>>, %arg5: memref<4x256xbf16, #tpu.memory_space<vmem>>) attributes {dimension_semantics = [#tpu.dimension_semantics<parallel>], iteration_bounds = array<i64: 1>, scalar_prefetch = 0 : i64, scratch_operands = 0 : i64, tpu.core_type = #tpu.core_type<tc>, window_params = [{transform_indices = @transform_0, window_bounds = array<i64: 4, 2048>}, {pipeline_mode = #tpu.pipeline_mode<synchronous>, transform_indices = @transform_1, window_bounds = array<i64: 2048, 256>}, {pipeline_mode = #tpu.pipeline_mode<synchronous>, transform_indices = @transform_2, window_bounds = array<i64: 1, 256>}, {pipeline_mode = #tpu.pipeline_mode<synchronous>, transform_indices = @transform_3, window_bounds = array<i64: 1, 256>}, {transform_indices = @transform_4, window_bounds = array<i64: 4, 256>}]} {
    %c0 = arith.constant 0 : index
    %c0_0 = arith.constant 0 : index
    %0 = vector.load %arg1[%c0, %c0_0] : memref<4x2048xbf16, #tpu.memory_space<vmem>>, vector<4x2048xbf16>
    %c0_1 = arith.constant 0 : index
    %c0_2 = arith.constant 0 : index
    %1 = vector.load %arg2[%c0_1, %c0_2] : memref<2048x256xbf16, #tpu.memory_space<vmem>>, vector<2048x256xbf16>
    %cst = arith.constant dense<0.000000e+00> : vector<4x256xf32>
    %2 = tpu.matmul %0, %1, %cst {dimension_numbers = #tpu.dot_dimension_numbers<[1], [0], [0], [1], [0, 0, 1, 1], [], []>} : vector<4x2048xbf16>, vector<2048x256xbf16>, vector<4x256xf32> -> vector<4x256xf32>
    %c0_3 = arith.constant 0 : index
    %c0_4 = arith.constant 0 : index
    %3 = vector.load %arg3[%c0_3, %c0_4] : memref<1x256xf32, #tpu.memory_space<vmem>>, vector<1x256xf32>
    %4 = vector.broadcast %3 : vector<1x256xf32> to vector<4x256xf32>
    %5 = arith.mulf %2, %4 : vector<4x256xf32>
    %c0_5 = arith.constant 0 : index
    %c0_6 = arith.constant 0 : index
    %6 = vector.load %arg4[%c0_5, %c0_6] : memref<1x256xf32, #tpu.memory_space<vmem>>, vector<1x256xf32>
    %7 = vector.broadcast %6 : vector<1x256xf32> to vector<4x256xf32>
    %8 = arith.addf %5, %7 : vector<4x256xf32>
    %cst_7 = arith.constant 0.000000e+00 : f32
    %9 = vector.broadcast %cst_7 : f32 to vector<4x256xf32>
    %10 = arith.cmpf oge, %8, %9 : vector<4x256xf32>
    %cst_8 = arith.constant 2.000000e-01 : f32
    %11 = vector.broadcast %cst_8 : f32 to vector<4x256xf32>
    %12 = arith.mulf %11, %8 : vector<4x256xf32>
    %13 = arith.select %10, %8, %12 : vector<4x256xi1>, vector<4x256xf32>
    %14 = arith.truncf %13 : vector<4x256xf32> to vector<4x256xbf16>
    %c0_9 = arith.constant 0 : index
    %c0_10 = arith.constant 0 : index
    %15 = vector.load %arg5[%c0_9, %c0_10] : memref<4x256xbf16, #tpu.memory_space<vmem>>, vector<4x256xbf16>
    tpu.vector_store %arg5[%c0_9, %c0_10], %14 {strides = array<i32>} : memref<4x256xbf16, #tpu.memory_space<vmem>>, vector<4x256xbf16>,
    return
  }
  func.func @transform_0(%arg0: i32) -> (i32, i32) {
    %c0_i32 = arith.constant 0 : i32
    %c0_i32_0 = arith.constant 0 : i32
    return %arg0, %c0_i32 : i32, i32
  }
  func.func @transform_1(%arg0: i32) -> (i32, i32) {
    %c0_i32 = arith.constant 0 : i32
    %c0_i32_0 = arith.constant 0 : i32
    %c0_i32_1 = arith.constant 0 : i32
    return %c0_i32, %c0_i32_0 : i32, i32
  }
  func.func @transform_2(%arg0: i32) -> (i32, i32) {
    %c0_i32 = arith.constant 0 : i32
    %c0_i32_0 = arith.constant 0 : i32
    %c0_i32_1 = arith.constant 0 : i32
    return %c0_i32, %c0_i32_0 : i32, i32
  }
  func.func @transform_3(%arg0: i32) -> (i32, i32) {
    %c0_i32 = arith.constant 0 : i32
    %c0_i32_0 = arith.constant 0 : i32
    %c0_i32_1 = arith.constant 0 : i32
    return %c0_i32, %c0_i32_0 : i32, i32
  }
  func.func @transform_4(%arg0: i32) -> (i32, i32) {
    %c0_i32 = arith.constant 0 : i32
    %c0_i32_0 = arith.constant 0 : i32
    return %arg0, %c0_i32 : i32, i32
  }
}

module attributes {stable_mosaic.version = 11 : i64} {
  func.func @_conv_block_kernel(%arg0: i32, %arg1: memref<5x2048xbf16, #tpu.memory_space<vmem>>, %arg2: memref<2048x256xbf16, #tpu.memory_space<vmem>>, %arg3: memref<1x256xf32, #tpu.memory_space<vmem>>, %arg4: memref<1x256xf32, #tpu.memory_space<vmem>>, %arg5: memref<5x256xbf16, #tpu.memory_space<vmem>>) attributes {dimension_semantics = [#tpu.dimension_semantics<parallel>], iteration_bounds = array<i64: 1>, scalar_prefetch = 0 : i64, scratch_operands = 0 : i64, tpu.core_type = #tpu.core_type<tc>, window_params = [{transform_indices = @transform_0, window_bounds = array<i64: 5, 2048>}, {pipeline_mode = #tpu.pipeline_mode<synchronous>, transform_indices = @transform_1, window_bounds = array<i64: 2048, 256>}, {pipeline_mode = #tpu.pipeline_mode<synchronous>, transform_indices = @transform_2, window_bounds = array<i64: 1, 256>}, {pipeline_mode = #tpu.pipeline_mode<synchronous>, transform_indices = @transform_3, window_bounds = array<i64: 1, 256>}, {transform_indices = @transform_4, window_bounds = array<i64: 5, 256>}]} {
    %c0 = arith.constant 0 : index
    %c0_0 = arith.constant 0 : index
    %0 = vector.load %arg1[%c0, %c0_0] : memref<5x2048xbf16, #tpu.memory_space<vmem>>, vector<5x2048xbf16>
    %c0_1 = arith.constant 0 : index
    %c0_2 = arith.constant 0 : index
    %1 = vector.load %arg2[%c0_1, %c0_2] : memref<2048x256xbf16, #tpu.memory_space<vmem>>, vector<2048x256xbf16>
    %cst = arith.constant dense<0.000000e+00> : vector<5x256xf32>
    %2 = tpu.matmul %0, %1, %cst {dimension_numbers = #tpu.dot_dimension_numbers<[1], [0], [0], [1], [0, 0, 1, 1], [], []>} : vector<5x2048xbf16>, vector<2048x256xbf16>, vector<5x256xf32> -> vector<5x256xf32>
    %c0_3 = arith.constant 0 : index
    %c0_4 = arith.constant 0 : index
    %3 = vector.load %arg3[%c0_3, %c0_4] : memref<1x256xf32, #tpu.memory_space<vmem>>, vector<1x256xf32>
    %4 = vector.broadcast %3 : vector<1x256xf32> to vector<5x256xf32>
    %5 = arith.mulf %2, %4 : vector<5x256xf32>
    %c0_5 = arith.constant 0 : index
    %c0_6 = arith.constant 0 : index
    %6 = vector.load %arg4[%c0_5, %c0_6] : memref<1x256xf32, #tpu.memory_space<vmem>>, vector<1x256xf32>
    %7 = vector.broadcast %6 : vector<1x256xf32> to vector<5x256xf32>
    %8 = arith.addf %5, %7 : vector<5x256xf32>
    %cst_7 = arith.constant 0.000000e+00 : f32
    %9 = vector.broadcast %cst_7 : f32 to vector<5x256xf32>
    %10 = arith.cmpf oge, %8, %9 : vector<5x256xf32>
    %cst_8 = arith.constant 2.000000e-01 : f32
    %11 = vector.broadcast %cst_8 : f32 to vector<5x256xf32>
    %12 = arith.mulf %11, %8 : vector<5x256xf32>
    %13 = arith.select %10, %8, %12 : vector<5x256xi1>, vector<5x256xf32>
    %14 = arith.truncf %13 : vector<5x256xf32> to vector<5x256xbf16>
    %c0_9 = arith.constant 0 : index
    %c0_10 = arith.constant 0 : index
    %15 = vector.load %arg5[%c0_9, %c0_10] : memref<5x256xbf16, #tpu.memory_space<vmem>>, vector<5x256xbf16>
    tpu.vector_store %arg5[%c0_9, %c0_10], %14 {strides = array<i32>} : memref<5x256xbf16, #tpu.memory_space<vmem>>, vector<5x256xbf16>,
    return
  }
  func.func @transform_0(%arg0: i32) -> (i32, i32) {
    %c0_i32 = arith.constant 0 : i32
    %c0_i32_0 = arith.constant 0 : i32
    return %arg0, %c0_i32 : i32, i32
  }
  func.func @transform_1(%arg0: i32) -> (i32, i32) {
    %c0_i32 = arith.constant 0 : i32
    %c0_i32_0 = arith.constant 0 : i32
    %c0_i32_1 = arith.constant 0 : i32
    return %c0_i32, %c0_i32_0 : i32, i32
  }
  func.func @transform_2(%arg0: i32) -> (i32, i32) {
    %c0_i32 = arith.constant 0 : i32
    %c0_i32_0 = arith.constant 0 : i32
    %c0_i32_1 = arith.constant 0 : i32
    return %c0_i32, %c0_i32_0 : i32, i32
  }
  func.func @transform_3(%arg0: i32) -> (i32, i32) {
    %c0_i32 = arith.constant 0 : i32
    %c0_i32_0 = arith.constant 0 : i32
    %c0_i32_1 = arith.constant 0 : i32
    return %c0_i32, %c0_i32_0 : i32, i32
  }
  func.func @transform_4(%arg0: i32) -> (i32, i32) {
    %c0_i32 = arith.constant 0 : i32
    %c0_i32_0 = arith.constant 0 : i32
    return %arg0, %c0_i32 : i32, i32
  }
}

module attributes {stable_mosaic.version = 11 : i64} {
  func.func @_conv_block_kernel(%arg0: i32, %arg1: memref<1x8192xbf16, #tpu.memory_space<vmem>>, %arg2: memref<8192x8xbf16, #tpu.memory_space<vmem>>, %arg3: memref<1x8xf32, #tpu.memory_space<vmem>>, %arg4: memref<1x8xf32, #tpu.memory_space<vmem>>, %arg5: memref<1x8xf32, #tpu.memory_space<vmem>>) attributes {dimension_semantics = [#tpu.dimension_semantics<parallel>], iteration_bounds = array<i64: 1>, scalar_prefetch = 0 : i64, scratch_operands = 0 : i64, tpu.core_type = #tpu.core_type<tc>, window_params = [{transform_indices = @transform_0, window_bounds = array<i64: 1, 8192>}, {pipeline_mode = #tpu.pipeline_mode<synchronous>, transform_indices = @transform_1, window_bounds = array<i64: 8192, 8>}, {pipeline_mode = #tpu.pipeline_mode<synchronous>, transform_indices = @transform_2, window_bounds = array<i64: 1, 8>}, {pipeline_mode = #tpu.pipeline_mode<synchronous>, transform_indices = @transform_3, window_bounds = array<i64: 1, 8>}, {transform_indices = @transform_4, window_bounds = array<i64: 1, 8>}]} {
    %c0 = arith.constant 0 : index
    %c0_0 = arith.constant 0 : index
    %0 = vector.load %arg1[%c0, %c0_0] : memref<1x8192xbf16, #tpu.memory_space<vmem>>, vector<1x8192xbf16>
    %c0_1 = arith.constant 0 : index
    %c0_2 = arith.constant 0 : index
    %1 = vector.load %arg2[%c0_1, %c0_2] : memref<8192x8xbf16, #tpu.memory_space<vmem>>, vector<8192x8xbf16>
    %cst = arith.constant dense<0.000000e+00> : vector<1x8xf32>
    %2 = tpu.matmul %0, %1, %cst {dimension_numbers = #tpu.dot_dimension_numbers<[1], [0], [0], [1], [0, 0, 1, 1], [], []>} : vector<1x8192xbf16>, vector<8192x8xbf16>, vector<1x8xf32> -> vector<1x8xf32>
    %c0_3 = arith.constant 0 : index
    %c0_4 = arith.constant 0 : index
    %3 = vector.load %arg3[%c0_3, %c0_4] : memref<1x8xf32, #tpu.memory_space<vmem>>, vector<1x8xf32>
    %4 = arith.mulf %2, %3 : vector<1x8xf32>
    %c0_5 = arith.constant 0 : index
    %c0_6 = arith.constant 0 : index
    %5 = vector.load %arg4[%c0_5, %c0_6] : memref<1x8xf32, #tpu.memory_space<vmem>>, vector<1x8xf32>
    %6 = arith.addf %4, %5 : vector<1x8xf32>
    %c0_7 = arith.constant 0 : index
    %c0_8 = arith.constant 0 : index
    %7 = vector.load %arg5[%c0_7, %c0_8] : memref<1x8xf32, #tpu.memory_space<vmem>>, vector<1x8xf32>
    tpu.vector_store %arg5[%c0_7, %c0_8], %6 {strides = array<i32>} : memref<1x8xf32, #tpu.memory_space<vmem>>, vector<1x8xf32>,
    return
  }
  func.func @transform_0(%arg0: i32) -> (i32, i32) {
    %c0_i32 = arith.constant 0 : i32
    %c0_i32_0 = arith.constant 0 : i32
    return %arg0, %c0_i32 : i32, i32
  }
  func.func @transform_1(%arg0: i32) -> (i32, i32) {
    %c0_i32 = arith.constant 0 : i32
    %c0_i32_0 = arith.constant 0 : i32
    %c0_i32_1 = arith.constant 0 : i32
    return %c0_i32, %c0_i32_0 : i32, i32
  }
  func.func @transform_2(%arg0: i32) -> (i32, i32) {
    %c0_i32 = arith.constant 0 : i32
    %c0_i32_0 = arith.constant 0 : i32
    %c0_i32_1 = arith.constant 0 : i32
    return %c0_i32, %c0_i32_0 : i32, i32
  }
  func.func @transform_3(%arg0: i32) -> (i32, i32) {
    %c0_i32 = arith.constant 0 : i32
    %c0_i32_0 = arith.constant 0 : i32
    %c0_i32_1 = arith.constant 0 : i32
    return %c0_i32, %c0_i32_0 : i32, i32
  }
  func.func @transform_4(%arg0: i32) -> (i32, i32) {
    %c0_i32 = arith.constant 0 : i32
    %c0_i32_0 = arith.constant 0 : i32
    return %arg0, %c0_i32 : i32, i32
  }
}

</mosaic_0001>

<llo_original>
// kernel: nlayer_attention_forward.5
$region0: #{nlayer_attention_forward.5}
  #allocation0 [shape = 'u32[]', space=smem, size = 0x4, offset = 0x4, fixed_abs, tag = 'smem constant byte address 0x4 - core index']
  #allocation1 [shape = 'u32[144,128]{1,0:T(1,128)}', space=vmem, size = 0x12000, scoped, tag = 'internal scratch']
  %s0 = inlined_call_operand.vmem [shape: bf16[16,1536], index: 0, kind: input, shape index: {}]
  %s1 = inlined_call_operand.vmem [shape: bf16[1536,256], index: 1, kind: input, shape index: {}]
  %s2 = inlined_call_operand.vmem [shape: f32[1,256], index: 2, kind: input, shape index: {}]
  %s3 = inlined_call_operand.vmem [shape: f32[1,256], index: 3, kind: input, shape index: {}]
  %s4 = inlined_call_operand.vmem [shape: bf16[16,256], index: 4, kind: output, shape index: {}]
  %s5 = sld [smem:[#allocation0]]
  $region26: #{nlayer_attention_forward.5} parent=0
    _
  %s7 = ssub.s32 1, %s5
  %s8 = scalar_select 0, %s7, %s5
  // Predicated region
  $region2: #{nlayer_attention_forward.5} parent=0 // pred_check
    _
  $region3: #{nlayer_attention_forward.5} parent=0 // pred_check_branch
    %10 = sbr.rel (0) target = $region5
  $region4: #{nlayer_attention_forward.5} parent=0 // pred_region
    _
  $region5: #{nlayer_attention_forward.5} parent=0 // pred_fallthru
    _
  // Predicated region
  $region6: #{nlayer_attention_forward.5} parent=0 // pred_check
    _
  $region7: #{nlayer_attention_forward.5} parent=0 // pred_check_branch
    %12 = sbr.rel (0) target = $region9
  $region8: #{nlayer_attention_forward.5} parent=0 // pred_region
    _
  $region9: #{nlayer_attention_forward.5} parent=0 // pred_fallthru
    _
  // Predicated region
  $region10: #{nlayer_attention_forward.5} parent=0 // pred_check
    _
  $region11: #{nlayer_attention_forward.5} parent=0 // pred_check_branch
    %14 = sbr.rel (0) target = $region13
  $region12: #{nlayer_attention_forward.5} parent=0 // pred_region
    _
  $region13: #{nlayer_attention_forward.5} parent=0 // pred_fallthru
    _
  // Predicated region
  $region14: #{nlayer_attention_forward.5} parent=0 // pred_check
    _
  $region15: #{nlayer_attention_forward.5} parent=0 // pred_check_branch
    %16 = sbr.rel (0) target = $region17
  $region16: #{nlayer_attention_forward.5} parent=0 // pred_region
    _
  $region17: #{nlayer_attention_forward.5} parent=0 // pred_fallthru
    _
  %v17 = vld [vmem:[%s0] sm:$0xff]
  %v18 = vld [vmem:[%s0 + $0x8] sm:$0xff]
  %v19 = vld [vmem:[%s0 + $0x10] sm:$0xff]
  %v20 = vld [vmem:[%s0 + $0x18] sm:$0xff]
  %v21 = vld [vmem:[%s0 + $0x20] sm:$0xff]
  %v22 = vld [vmem:[%s0 + $0x28] sm:$0xff]
  %v23 = vld [vmem:[%s0 + $0x30] sm:$0xff]
  %v24 = vld [vmem:[%s0 + $0x38] sm:$0xff]
  %v25 = vld [vmem:[%s0 + $0x40] sm:$0xff]
  %v26 = vld [vmem:[%s0 + $0x48] sm:$0xff]
  %v27 = vld [vmem:[%s0 + $0x50] sm:$0xff]
  %v28 = vld [vmem:[%s0 + $0x58] sm:$0xff]
  %v29 = vld [vmem:[%s1] sm:$0xff]
  %v30 = vld [vmem:[%s1 + $0x8] sm:$0xff]
  %v31 = vld [vmem:[%s1 + $0x10] sm:$0xff]
  %v32 = vld [vmem:[%s1 + $0x18] sm:$0xff]
  %v33 = vld [vmem:[%s1 + $0x20] sm:$0xff]
  %v34 = vld [vmem:[%s1 + $0x28] sm:$0xff]
  %v35 = vld [vmem:[%s1 + $0x30] sm:$0xff]
  %v36 = vld [vmem:[%s1 + $0x38] sm:$0xff]
  %v37 = vld [vmem:[%s1 + $0x40] sm:$0xff]
  %v38 = vld [vmem:[%s1 + $0x48] sm:$0xff]
  %v39 = vld [vmem:[%s1 + $0x50] sm:$0xff]
  %v40 = vld [vmem:[%s1 + $0x58] sm:$0xff]
  %v41 = vld [vmem:[%s1 + $0x60] sm:$0xff]
  %v42 = vld [vmem:[%s1 + $0x68] sm:$0xff]
  %v43 = vld [vmem:[%s1 + $0x70] sm:$0xff]
  %v44 = vld [vmem:[%s1 + $0x78] sm:$0xff]
  %v45 = vld [vmem:[%s1 + $0x80] sm:$0xff]
  %v46 = vld [vmem:[%s1 + $0x88] sm:$0xff]
  %v47 = vld [vmem:[%s1 + $0x90] sm:$0xff]
  %v48 = vld [vmem:[%s1 + $0x98] sm:$0xff]
  %v49 = vld [vmem:[%s1 + $0xa0] sm:$0xff]
  %v50 = vld [vmem:[%s1 + $0xa8] sm:$0xff]
  %v51 = vld [vmem:[%s1 + $0xb0] sm:$0xff]
  %v52 = vld [vmem:[%s1 + $0xb8] sm:$0xff]
  %v53 = vld [vmem:[%s1 + $0xc0] sm:$0xff]
  %v54 = vld [vmem:[%s1 + $0xc8] sm:$0xff]
  %v55 = vld [vmem:[%s1 + $0xd0] sm:$0xff]
  %v56 = vld [vmem:[%s1 + $0xd8] sm:$0xff]
  %v57 = vld [vmem:[%s1 + $0xe0] sm:$0xff]
  %v58 = vld [vmem:[%s1 + $0xe8] sm:$0xff]
  %v59 = vld [vmem:[%s1 + $0xf0] sm:$0xff]
  %v60 = vld [vmem:[%s1 + $0xf8] sm:$0xff]
  %v61 = vld [vmem:[%s1 + $0x100] sm:$0xff]
  %v62 = vld [vmem:[%s1 + $0x108] sm:$0xff]
  %v63 = vld [vmem:[%s1 + $0x110] sm:$0xff]
  %v64 = vld [vmem:[%s1 + $0x118] sm:$0xff]
  %v65 = vld [vmem:[%s1 + $0x120] sm:$0xff]
  %v66 = vld [vmem:[%s1 + $0x128] sm:$0xff]
  %v67 = vld [vmem:[%s1 + $0x130] sm:$0xff]
  %v68 = vld [vmem:[%s1 + $0x138] sm:$0xff]
  %v69 = vld [vmem:[%s1 + $0x140] sm:$0xff]
  %v70 = vld [vmem:[%s1 + $0x148] sm:$0xff]
  %v71 = vld [vmem:[%s1 + $0x150] sm:$0xff]
  %v72 = vld [vmem:[%s1 + $0x158] sm:$0xff]
  %v73 = vld [vmem:[%s1 + $0x160] sm:$0xff]
  %v74 = vld [vmem:[%s1 + $0x168] sm:$0xff]
  %v75 = vld [vmem:[%s1 + $0x170] sm:$0xff]
  %v76 = vld [vmem:[%s1 + $0x178] sm:$0xff]
  %v77 = vld [vmem:[%s1 + $0x180] sm:$0xff]
  %v78 = vld [vmem:[%s1 + $0x188] sm:$0xff]
  %v79 = vld [vmem:[%s1 + $0x190] sm:$0xff]
  %v80 = vld [vmem:[%s1 + $0x198] sm:$0xff]
  %v81 = vld [vmem:[%s1 + $0x1a0] sm:$0xff]
  %v82 = vld [vmem:[%s1 + $0x1a8] sm:$0xff]
  %v83 = vld [vmem:[%s1 + $0x1b0] sm:$0xff]
  %v84 = vld [vmem:[%s1 + $0x1b8] sm:$0xff]
  %v85 = vld [vmem:[%s1 + $0x1c0] sm:$0xff]
  %v86 = vld [vmem:[%s1 + $0x1c8] sm:$0xff]
  %v87 = vld [vmem:[%s1 + $0x1d0] sm:$0xff]
  %v88 = vld [vmem:[%s1 + $0x1d8] sm:$0xff]
  %v89 = vld [vmem:[%s1 + $0x1e0] sm:$0xff]
  %v90 = vld [vmem:[%s1 + $0x1e8] sm:$0xff]
  %v91 = vld [vmem:[%s1 + $0x1f0] sm:$0xff]
  %v92 = vld [vmem:[%s1 + $0x1f8] sm:$0xff]
  %v93 = vld [vmem:[%s1 + $0x200] sm:$0xff]
  %v94 = vld [vmem:[%s1 + $0x208] sm:$0xff]
  %v95 = vld [vmem:[%s1 + $0x210] sm:$0xff]
  %v96 = vld [vmem:[%s1 + $0x218] sm:$0xff]
  %v97 = vld [vmem:[%s1 + $0x220] sm:$0xff]
  %v98 = vld [vmem:[%s1 + $0x228] sm:$0xff]
  %v99 = vld [vmem:[%s1 + $0x230] sm:$0xff]
  %v100 = vld [vmem:[%s1 + $0x238] sm:$0xff]
  %v101 = vld [vmem:[%s1 + $0x240] sm:$0xff]
  %v102 = vld [vmem:[%s1 + $0x248] sm:$0xff]
  %v103 = vld [vmem:[%s1 + $0x250] sm:$0xff]
  %v104 = vld [vmem:[%s1 + $0x258] sm:$0xff]
  %v105 = vld [vmem:[%s1 + $0x260] sm:$0xff]
  %v106 = vld [vmem:[%s1 + $0x268] sm:$0xff]
  %v107 = vld [vmem:[%s1 + $0x270] sm:$0xff]
  %v108 = vld [vmem:[%s1 + $0x278] sm:$0xff]
  %v109 = vld [vmem:[%s1 + $0x280] sm:$0xff]
  %v110 = vld [vmem:[%s1 + $0x288] sm:$0xff]
  %v111 = vld [vmem:[%s1 + $0x290] sm:$0xff]
  %v112 = vld [vmem:[%s1 + $0x298] sm:$0xff]
  %v113 = vld [vmem:[%s1 + $0x2a0] sm:$0xff]
  %v114 = vld [vmem:[%s1 + $0x2a8] sm:$0xff]
  %v115 = vld [vmem:[%s1 + $0x2b0] sm:$0xff]
  %v116 = vld [vmem:[%s1 + $0x2b8] sm:$0xff]
  %v117 = vld [vmem:[%s1 + $0x2c0] sm:$0xff]
  %v118 = vld [vmem:[%s1 + $0x2c8] sm:$0xff]
  %v119 = vld [vmem:[%s1 + $0x2d0] sm:$0xff]
  %v120 = vld [vmem:[%s1 + $0x2d8] sm:$0xff]
  %v121 = vld [vmem:[%s1 + $0x2e0] sm:$0xff]
  %v122 = vld [vmem:[%s1 + $0x2e8] sm:$0xff]
  %v123 = vld [vmem:[%s1 + $0x2f0] sm:$0xff]
  %v124 = vld [vmem:[%s1 + $0x2f8] sm:$0xff]
  %v125 = vld [vmem:[%s1 + $0x300] sm:$0xff]
  %v126 = vld [vmem:[%s1 + $0x308] sm:$0xff]
  %v127 = vld [vmem:[%s1 + $0x310] sm:$0xff]
  %v128 = vld [vmem:[%s1 + $0x318] sm:$0xff]
  %v129 = vld [vmem:[%s1 + $0x320] sm:$0xff]
  %v130 = vld [vmem:[%s1 + $0x328] sm:$0xff]
  %v131 = vld [vmem:[%s1 + $0x330] sm:$0xff]
  %v132 = vld [vmem:[%s1 + $0x338] sm:$0xff]
  %v133 = vld [vmem:[%s1 + $0x340] sm:$0xff]
  %v134 = vld [vmem:[%s1 + $0x348] sm:$0xff]
  %v135 = vld [vmem:[%s1 + $0x350] sm:$0xff]
  %v136 = vld [vmem:[%s1 + $0x358] sm:$0xff]
  %v137 = vld [vmem:[%s1 + $0x360] sm:$0xff]
  %v138 = vld [vmem:[%s1 + $0x368] sm:$0xff]
  %v139 = vld [vmem:[%s1 + $0x370] sm:$0xff]
  %v140 = vld [vmem:[%s1 + $0x378] sm:$0xff]
  %v141 = vld [vmem:[%s1 + $0x380] sm:$0xff]
  %v142 = vld [vmem:[%s1 + $0x388] sm:$0xff]
  %v143 = vld [vmem:[%s1 + $0x390] sm:$0xff]
  %v144 = vld [vmem:[%s1 + $0x398] sm:$0xff]
  %v145 = vld [vmem:[%s1 + $0x3a0] sm:$0xff]
  %v146 = vld [vmem:[%s1 + $0x3a8] sm:$0xff]
  %v147 = vld [vmem:[%s1 + $0x3b0] sm:$0xff]
  %v148 = vld [vmem:[%s1 + $0x3b8] sm:$0xff]
  %v149 = vld [vmem:[%s1 + $0x3c0] sm:$0xff]
  %v150 = vld [vmem:[%s1 + $0x3c8] sm:$0xff]
  %v151 = vld [vmem:[%s1 + $0x3d0] sm:$0xff]
  %v152 = vld [vmem:[%s1 + $0x3d8] sm:$0xff]
  %v153 = vld [vmem:[%s1 + $0x3e0] sm:$0xff]
  %v154 = vld [vmem:[%s1 + $0x3e8] sm:$0xff]
  %v155 = vld [vmem:[%s1 + $0x3f0] sm:$0xff]
  %v156 = vld [vmem:[%s1 + $0x3f8] sm:$0xff]
  %v157 = vld [vmem:[%s1 + $0x400] sm:$0xff]
  %v158 = vld [vmem:[%s1 + $0x408] sm:$0xff]
  %v159 = vld [vmem:[%s1 + $0x410] sm:$0xff]
  %v160 = vld [vmem:[%s1 + $0x418] sm:$0xff]
  %v161 = vld [vmem:[%s1 + $0x420] sm:$0xff]
  %v162 = vld [vmem:[%s1 + $0x428] sm:$0xff]
  %v163 = vld [vmem:[%s1 + $0x430] sm:$0xff]
  %v164 = vld [vmem:[%s1 + $0x438] sm:$0xff]
  %v165 = vld [vmem:[%s1 + $0x440] sm:$0xff]
  %v166 = vld [vmem:[%s1 + $0x448] sm:$0xff]
  %v167 = vld [vmem:[%s1 + $0x450] sm:$0xff]
  %v168 = vld [vmem:[%s1 + $0x458] sm:$0xff]
  %v169 = vld [vmem:[%s1 + $0x460] sm:$0xff]
  %v170 = vld [vmem:[%s1 + $0x468] sm:$0xff]
  %v171 = vld [vmem:[%s1 + $0x470] sm:$0xff]
  %v172 = vld [vmem:[%s1 + $0x478] sm:$0xff]
  %v173 = vld [vmem:[%s1 + $0x480] sm:$0xff]
  %v174 = vld [vmem:[%s1 + $0x488] sm:$0xff]
  %v175 = vld [vmem:[%s1 + $0x490] sm:$0xff]
  %v176 = vld [vmem:[%s1 + $0x498] sm:$0xff]
  %v177 = vld [vmem:[%s1 + $0x4a0] sm:$0xff]
  %v178 = vld [vmem:[%s1 + $0x4a8] sm:$0xff]
  %v179 = vld [vmem:[%s1 + $0x4b0] sm:$0xff]
  %v180 = vld [vmem:[%s1 + $0x4b8] sm:$0xff]
  %v181 = vld [vmem:[%s1 + $0x4c0] sm:$0xff]
  %v182 = vld [vmem:[%s1 + $0x4c8] sm:$0xff]
  %v183 = vld [vmem:[%s1 + $0x4d0] sm:$0xff]
  %v184 = vld [vmem:[%s1 + $0x4d8] sm:$0xff]
  %v185 = vld [vmem:[%s1 + $0x4e0] sm:$0xff]
  %v186 = vld [vmem:[%s1 + $0x4e8] sm:$0xff]
  %v187 = vld [vmem:[%s1 + $0x4f0] sm:$0xff]
  %v188 = vld [vmem:[%s1 + $0x4f8] sm:$0xff]
  %v189 = vld [vmem:[%s1 + $0x500] sm:$0xff]
  %v190 = vld [vmem:[%s1 + $0x508] sm:$0xff]
  %v191 = vld [vmem:[%s1 + $0x510] sm:$0xff]
  %v192 = vld [vmem:[%s1 + $0x518] sm:$0xff]
  %v193 = vld [vmem:[%s1 + $0x520] sm:$0xff]
  %v194 = vld [vmem:[%s1 + $0x528] sm:$0xff]
  %v195 = vld [vmem:[%s1 + $0x530] sm:$0xff]
  %v196 = vld [vmem:[%s1 + $0x538] sm:$0xff]
  %v197 = vld [vmem:[%s1 + $0x540] sm:$0xff]
  %v198 = vld [vmem:[%s1 + $0x548] sm:$0xff]
  %v199 = vld [vmem:[%s1 + $0x550] sm:$0xff]
  %v200 = vld [vmem:[%s1 + $0x558] sm:$0xff]
  %v201 = vld [vmem:[%s1 + $0x560] sm:$0xff]
  %v202 = vld [vmem:[%s1 + $0x568] sm:$0xff]
  %v203 = vld [vmem:[%s1 + $0x570] sm:$0xff]
  %v204 = vld [vmem:[%s1 + $0x578] sm:$0xff]
  %v205 = vld [vmem:[%s1 + $0x580] sm:$0xff]
  %v206 = vld [vmem:[%s1 + $0x588] sm:$0xff]
  %v207 = vld [vmem:[%s1 + $0x590] sm:$0xff]
  %v208 = vld [vmem:[%s1 + $0x598] sm:$0xff]
  %v209 = vld [vmem:[%s1 + $0x5a0] sm:$0xff]
  %v210 = vld [vmem:[%s1 + $0x5a8] sm:$0xff]
  %v211 = vld [vmem:[%s1 + $0x5b0] sm:$0xff]
  %v212 = vld [vmem:[%s1 + $0x5b8] sm:$0xff]
  %v213 = vld [vmem:[%s1 + $0x5c0] sm:$0xff]
  %v214 = vld [vmem:[%s1 + $0x5c8] sm:$0xff]
  %v215 = vld [vmem:[%s1 + $0x5d0] sm:$0xff]
  %v216 = vld [vmem:[%s1 + $0x5d8] sm:$0xff]
  %v217 = vld [vmem:[%s1 + $0x5e0] sm:$0xff]
  %v218 = vld [vmem:[%s1 + $0x5e8] sm:$0xff]
  %v219 = vld [vmem:[%s1 + $0x5f0] sm:$0xff]
  %v220 = vld [vmem:[%s1 + $0x5f8] sm:$0xff]
  %v233 = vunpack.c.l.b16 %v17
  %v234 = vunpack.c.h.b16 %v17
  %v235 = vunpack.c.l.b16 %v18
  %v236 = vunpack.c.h.b16 %v18
  %v237 = vunpack.c.l.b16 %v19
  %v238 = vunpack.c.h.b16 %v19
  %v239 = vunpack.c.l.b16 %v20
  %v240 = vunpack.c.h.b16 %v20
  %v241 = vunpack.c.l.b16 %v21
  %v242 = vunpack.c.h.b16 %v21
  %v243 = vunpack.c.l.b16 %v22
  %v244 = vunpack.c.h.b16 %v22
  %v245 = vunpack.c.l.b16 %v23
  %v246 = vunpack.c.h.b16 %v23
  %v247 = vunpack.c.l.b16 %v24
  %v248 = vunpack.c.h.b16 %v24
  %v249 = vunpack.c.l.b16 %v25
  %v250 = vunpack.c.h.b16 %v25
  %v251 = vunpack.c.l.b16 %v26
  %v252 = vunpack.c.h.b16 %v26
  %v253 = vunpack.c.l.b16 %v27
  %v254 = vunpack.c.h.b16 %v27
  %v255 = vunpack.c.l.b16 %v28
  %v256 = vunpack.c.h.b16 %v28
  %v257 = vpack.c.b16 %v245, %v233
  %v258 = vpack.c.b16 %v246, %v234
  %v259 = vpack.c.b16 %v247, %v235
  %v260 = vpack.c.b16 %v248, %v236
  %v261 = vpack.c.b16 %v249, %v237
  %v262 = vpack.c.b16 %v250, %v238
  %v263 = vpack.c.b16 %v251, %v239
  %v264 = vpack.c.b16 %v252, %v240
  %v265 = vpack.c.b16 %v253, %v241
  %v266 = vpack.c.b16 %v254, %v242
  %v267 = vpack.c.b16 %v255, %v243
  %v268 = vpack.c.b16 %v256, %v244
  %v473 = vunpack.c.l.b16 %v29
  %v474 = vunpack.c.h.b16 %v29
  %v475 = vunpack.c.l.b16 %v30
  %v476 = vunpack.c.h.b16 %v30
  %v477 = vunpack.c.l.b16 %v31
  %v478 = vunpack.c.h.b16 %v31
  %v479 = vunpack.c.l.b16 %v32
  %v480 = vunpack.c.h.b16 %v32
  %v481 = vunpack.c.l.b16 %v33
  %v482 = vunpack.c.h.b16 %v33
  %v483 = vunpack.c.l.b16 %v34
  %v484 = vunpack.c.h.b16 %v34
  %v485 = vunpack.c.l.b16 %v35
  %v486 = vunpack.c.h.b16 %v35
  %v487 = vunpack.c.l.b16 %v36
  %v488 = vunpack.c.h.b16 %v36
  %v489 = vunpack.c.l.b16 %v37
  %v490 = vunpack.c.h.b16 %v37
  %v491 = vunpack.c.l.b16 %v38
  %v492 = vunpack.c.h.b16 %v38
  %v493 = vunpack.c.l.b16 %v39
  %v494 = vunpack.c.h.b16 %v39
  %v495 = vunpack.c.l.b16 %v40
  %v496 = vunpack.c.h.b16 %v40
  %v497 = vunpack.c.l.b16 %v41
  %v498 = vunpack.c.h.b16 %v41
  %v499 = vunpack.c.l.b16 %v42
  %v500 = vunpack.c.h.b16 %v42
  %v501 = vunpack.c.l.b16 %v43
  %v502 = vunpack.c.h.b16 %v43
  %v503 = vunpack.c.l.b16 %v44
  %v504 = vunpack.c.h.b16 %v44
  %v505 = vunpack.c.l.b16 %v45
  %v506 = vunpack.c.h.b16 %v45
  %v507 = vunpack.c.l.b16 %v46
  %v508 = vunpack.c.h.b16 %v46
  %v509 = vunpack.c.l.b16 %v47
  %v510 = vunpack.c.h.b16 %v47
  %v511 = vunpack.c.l.b16 %v48
  %v512 = vunpack.c.h.b16 %v48
  %v513 = vunpack.c.l.b16 %v49
  %v514 = vunpack.c.h.b16 %v49
  %v515 = vunpack.c.l.b16 %v50
  %v516 = vunpack.c.h.b16 %v50
  %v517 = vunpack.c.l.b16 %v51
  %v518 = vunpack.c.h.b16 %v51
  %v519 = vunpack.c.l.b16 %v52
  %v520 = vunpack.c.h.b16 %v52
  %v521 = vunpack.c.l.b16 %v53
  %v522 = vunpack.c.h.b16 %v53
  %v523 = vunpack.c.l.b16 %v54
  %v524 = vunpack.c.h.b16 %v54
  %v525 = vunpack.c.l.b16 %v55
  %v526 = vunpack.c.h.b16 %v55
  %v527 = vunpack.c.l.b16 %v56
  %v528 = vunpack.c.h.b16 %v56
  %v529 = vunpack.c.l.b16 %v57
  %v530 = vunpack.c.h.b16 %v57
  %v531 = vunpack.c.l.b16 %v58
  %v532 = vunpack.c.h.b16 %v58
  %v533 = vunpack.c.l.b16 %v59
  %v534 = vunpack.c.h.b16 %v59
  %v535 = vunpack.c.l.b16 %v60
  %v536 = vunpack.c.h.b16 %v60
  %v537 = vunpack.c.l.b16 %v61
  %v538 = vunpack.c.h.b16 %v61
  %v539 = vunpack.c.l.b16 %v62
  %v540 = vunpack.c.h.b16 %v62
  %v541 = vunpack.c.l.b16 %v63
  %v542 = vunpack.c.h.b16 %v63
  %v543 = vunpack.c.l.b16 %v64
  %v544 = vunpack.c.h.b16 %v64
  %v545 = vunpack.c.l.b16 %v65
  %v546 = vunpack.c.h.b16 %v65
  %v547 = vunpack.c.l.b16 %v66
  %v548 = vunpack.c.h.b16 %v66
  %v549 = vunpack.c.l.b16 %v67
  %v550 = vunpack.c.h.b16 %v67
  %v551 = vunpack.c.l.b16 %v68
  %v552 = vunpack.c.h.b16 %v68
  %v553 = vunpack.c.l.b16 %v69
  %v554 = vunpack.c.h.b16 %v69
  %v555 = vunpack.c.l.b16 %v70
  %v556 = vunpack.c.h.b16 %v70
  %v557 = vunpack.c.l.b16 %v71
  %v558 = vunpack.c.h.b16 %v71
  %v559 = vunpack.c.l.b16 %v72
  %v560 = vunpack.c.h.b16 %v72
  %v561 = vunpack.c.l.b16 %v73
  %v562 = vunpack.c.h.b16 %v73
  %v563 = vunpack.c.l.b16 %v74
  %v564 = vunpack.c.h.b16 %v74
  %v565 = vunpack.c.l.b16 %v75
  %v566 = vunpack.c.h.b16 %v75
  %v567 = vunpack.c.l.b16 %v76
  %v568 = vunpack.c.h.b16 %v76
  %v569 = vunpack.c.l.b16 %v77
  %v570 = vunpack.c.h.b16 %v77
  %v571 = vunpack.c.l.b16 %v78
  %v572 = vunpack.c.h.b16 %v78
  %v573 = vunpack.c.l.b16 %v79
  %v574 = vunpack.c.h.b16 %v79
  %v575 = vunpack.c.l.b16 %v80
  %v576 = vunpack.c.h.b16 %v80
  %v577 = vunpack.c.l.b16 %v81
  %v578 = vunpack.c.h.b16 %v81
  %v579 = vunpack.c.l.b16 %v82
  %v580 = vunpack.c.h.b16 %v82
  %v581 = vunpack.c.l.b16 %v83
  %v582 = vunpack.c.h.b16 %v83
  %v583 = vunpack.c.l.b16 %v84
  %v584 = vunpack.c.h.b16 %v84
  %v585 = vunpack.c.l.b16 %v85
  %v586 = vunpack.c.h.b16 %v85
  %v587 = vunpack.c.l.b16 %v86
  %v588 = vunpack.c.h.b16 %v86
  %v589 = vunpack.c.l.b16 %v87
  %v590 = vunpack.c.h.b16 %v87
  %v591 = vunpack.c.l.b16 %v88
  %v592 = vunpack.c.h.b16 %v88
  %v593 = vunpack.c.l.b16 %v89
  %v594 = vunpack.c.h.b16 %v89
  %v595 = vunpack.c.l.b16 %v90
  %v596 = vunpack.c.h.b16 %v90
  %v597 = vunpack.c.l.b16 %v91
  %v598 = vunpack.c.h.b16 %v91
  %v599 = vunpack.c.l.b16 %v92
  %v600 = vunpack.c.h.b16 %v92
  %v601 = vunpack.c.l.b16 %v93
  %v602 = vunpack.c.h.b16 %v93
  %v603 = vunpack.c.l.b16 %v94
  %v604 = vunpack.c.h.b16 %v94
  %v605 = vunpack.c.l.b16 %v95
  %v606 = vunpack.c.h.b16 %v95
  %v607 = vunpack.c.l.b16 %v96
  %v608 = vunpack.c.h.b16 %v96
  %v609 = vunpack.c.l.b16 %v97
  %v610 = vunpack.c.h.b16 %v97
  %v611 = vunpack.c.l.b16 %v98
  %v612 = vunpack.c.h.b16 %v98
  %v613 = vunpack.c.l.b16 %v99
  %v614 = vunpack.c.h.b16 %v99
  %v615 = vunpack.c.l.b16 %v100
  %v616 = vunpack.c.h.b16 %v100
  %v617 = vunpack.c.l.b16 %v101
  %v618 = vunpack.c.h.b16 %v101
  %v619 = vunpack.c.l.b16 %v102
  %v620 = vunpack.c.h.b16 %v102
  %v621 = vunpack.c.l.b16 %v103
  %v622 = vunpack.c.h.b16 %v103
  %v623 = vunpack.c.l.b16 %v104
  %v624 = vunpack.c.h.b16 %v104
  %v625 = vunpack.c.l.b16 %v105
  %v626 = vunpack.c.h.b16 %v105
  %v627 = vunpack.c.l.b16 %v106
  %v628 = vunpack.c.h.b16 %v106
  %v629 = vunpack.c.l.b16 %v107
  %v630 = vunpack.c.h.b16 %v107
  %v631 = vunpack.c.l.b16 %v108
  %v632 = vunpack.c.h.b16 %v108
  %v633 = vunpack.c.l.b16 %v109
  %v634 = vunpack.c.h.b16 %v109
  %v635 = vunpack.c.l.b16 %v110
  %v636 = vunpack.c.h.b16 %v110
  %v637 = vunpack.c.l.b16 %v111
  %v638 = vunpack.c.h.b16 %v111
  %v639 = vunpack.c.l.b16 %v112
  %v640 = vunpack.c.h.b16 %v112
  %v641 = vunpack.c.l.b16 %v113
  %v642 = vunpack.c.h.b16 %v113
  %v643 = vunpack.c.l.b16 %v114
  %v644 = vunpack.c.h.b16 %v114
  %v645 = vunpack.c.l.b16 %v115
  %v646 = vunpack.c.h.b16 %v115
  %v647 = vunpack.c.l.b16 %v116
  %v648 = vunpack.c.h.b16 %v116
  %v649 = vunpack.c.l.b16 %v117
  %v650 = vunpack.c.h.b16 %v117
  %v651 = vunpack.c.l.b16 %v118
  %v652 = vunpack.c.h.b16 %v118
  %v653 = vunpack.c.l.b16 %v119
  %v654 = vunpack.c.h.b16 %v119
  %v655 = vunpack.c.l.b16 %v120
  %v656 = vunpack.c.h.b16 %v120
  %v657 = vunpack.c.l.b16 %v121
  %v658 = vunpack.c.h.b16 %v121
  %v659 = vunpack.c.l.b16 %v122
  %v660 = vunpack.c.h.b16 %v122
  %v661 = vunpack.c.l.b16 %v123
  %v662 = vunpack.c.h.b16 %v123
  %v663 = vunpack.c.l.b16 %v124
  %v664 = vunpack.c.h.b16 %v124
  %v665 = vunpack.c.l.b16 %v125
  %v666 = vunpack.c.h.b16 %v125
  %v667 = vunpack.c.l.b16 %v126
  %v668 = vunpack.c.h.b16 %v126
  %v669 = vunpack.c.l.b16 %v127
  %v670 = vunpack.c.h.b16 %v127
  %v671 = vunpack.c.l.b16 %v128
  %v672 = vunpack.c.h.b16 %v128
  %v673 = vunpack.c.l.b16 %v129
  %v674 = vunpack.c.h.b16 %v129
  %v675 = vunpack.c.l.b16 %v130
  %v676 = vunpack.c.h.b16 %v130
  %v677 = vunpack.c.l.b16 %v131
  %v678 = vunpack.c.h.b16 %v131
  %v679 = vunpack.c.l.b16 %v132
  %v680 = vunpack.c.h.b16 %v132
  %v681 = vunpack.c.l.b16 %v133
  %v682 = vunpack.c.h.b16 %v133
  %v683 = vunpack.c.l.b16 %v134
  %v684 = vunpack.c.h.b16 %v134
  %v685 = vunpack.c.l.b16 %v135
  %v686 = vunpack.c.h.b16 %v135
  %v687 = vunpack.c.l.b16 %v136
  %v688 = vunpack.c.h.b16 %v136
  %v689 = vunpack.c.l.b16 %v137
  %v690 = vunpack.c.h.b16 %v137
  %v691 = vunpack.c.l.b16 %v138
  %v692 = vunpack.c.h.b16 %v138
  %v693 = vunpack.c.l.b16 %v139
  %v694 = vunpack.c.h.b16 %v139
  %v695 = vunpack.c.l.b16 %v140
  %v696 = vunpack.c.h.b16 %v140
  %v697 = vunpack.c.l.b16 %v141
  %v698 = vunpack.c.h.b16 %v141
  %v699 = vunpack.c.l.b16 %v142
  %v700 = vunpack.c.h.b16 %v142
  %v701 = vunpack.c.l.b16 %v143
  %v702 = vunpack.c.h.b16 %v143
  %v703 = vunpack.c.l.b16 %v144
  %v704 = vunpack.c.h.b16 %v144
  %v705 = vunpack.c.l.b16 %v145
  %v706 = vunpack.c.h.b16 %v145
  %v707 = vunpack.c.l.b16 %v146
  %v708 = vunpack.c.h.b16 %v146
  %v709 = vunpack.c.l.b16 %v147
  %v710 = vunpack.c.h.b16 %v147
  %v711 = vunpack.c.l.b16 %v148
  %v712 = vunpack.c.h.b16 %v148
  %v713 = vunpack.c.l.b16 %v149
  %v714 = vunpack.c.h.b16 %v149
  %v715 = vunpack.c.l.b16 %v150
  %v716 = vunpack.c.h.b16 %v150
  %v717 = vunpack.c.l.b16 %v151
  %v718 = vunpack.c.h.b16 %v151
  %v719 = vunpack.c.l.b16 %v152
  %v720 = vunpack.c.h.b16 %v152
  %v721 = vunpack.c.l.b16 %v153
  %v722 = vunpack.c.h.b16 %v153
  %v723 = vunpack.c.l.b16 %v154
  %v724 = vunpack.c.h.b16 %v154
  %v725 = vunpack.c.l.b16 %v155
  %v726 = vunpack.c.h.b16 %v155
  %v727 = vunpack.c.l.b16 %v156
  %v728 = vunpack.c.h.b16 %v156
  %v729 = vunpack.c.l.b16 %v157
  %v730 = vunpack.c.h.b16 %v157
  %v731 = vunpack.c.l.b16 %v158
  %v732 = vunpack.c.h.b16 %v158
  %v733 = vunpack.c.l.b16 %v159
  %v734 = vunpack.c.h.b16 %v159
  %v735 = vunpack.c.l.b16 %v160
  %v736 = vunpack.c.h.b16 %v160
  %v737 = vunpack.c.l.b16 %v161
  %v738 = vunpack.c.h.b16 %v161
  %v739 = vunpack.c.l.b16 %v162
  %v740 = vunpack.c.h.b16 %v162
  %v741 = vunpack.c.l.b16 %v163
  %v742 = vunpack.c.h.b16 %v163
  %v743 = vunpack.c.l.b16 %v164
  %v744 = vunpack.c.h.b16 %v164
  %v745 = vunpack.c.l.b16 %v165
  %v746 = vunpack.c.h.b16 %v165
  %v747 = vunpack.c.l.b16 %v166
  %v748 = vunpack.c.h.b16 %v166
  %v749 = vunpack.c.l.b16 %v167
  %v750 = vunpack.c.h.b16 %v167
  %v751 = vunpack.c.l.b16 %v168
  %v752 = vunpack.c.h.b16 %v168
  %v753 = vunpack.c.l.b16 %v169
  %v754 = vunpack.c.h.b16 %v169
  %v755 = vunpack.c.l.b16 %v170
  %v756 = vunpack.c.h.b16 %v170
  %v757 = vunpack.c.l.b16 %v171
  %v758 = vunpack.c.h.b16 %v171
  %v759 = vunpack.c.l.b16 %v172
  %v760 = vunpack.c.h.b16 %v172
  %v761 = vunpack.c.l.b16 %v173
  %v762 = vunpack.c.h.b16 %v173
  %v763 = vunpack.c.l.b16 %v174
  %v764 = vunpack.c.h.b16 %v174
  %v765 = vunpack.c.l.b16 %v175
  %v766 = vunpack.c.h.b16 %v175
  %v767 = vunpack.c.l.b16 %v176
  %v768 = vunpack.c.h.b16 %v176
  %v769 = vunpack.c.l.b16 %v177
  %v770 = vunpack.c.h.b16 %v177
  %v771 = vunpack.c.l.b16 %v178
  %v772 = vunpack.c.h.b16 %v178
  %v773 = vunpack.c.l.b16 %v179
  %v774 = vunpack.c.h.b16 %v179
  %v775 = vunpack.c.l.b16 %v180
  %v776 = vunpack.c.h.b16 %v180
  %v777 = vunpack.c.l.b16 %v181
  %v778 = vunpack.c.h.b16 %v181
  %v779 = vunpack.c.l.b16 %v182
  %v780 = vunpack.c.h.b16 %v182
  %v781 = vunpack.c.l.b16 %v183
  %v782 = vunpack.c.h.b16 %v183
  %v783 = vunpack.c.l.b16 %v184
  %v784 = vunpack.c.h.b16 %v184
  %v785 = vunpack.c.l.b16 %v185
  %v786 = vunpack.c.h.b16 %v185
  %v787 = vunpack.c.l.b16 %v186
  %v788 = vunpack.c.h.b16 %v186
  %v789 = vunpack.c.l.b16 %v187
  %v790 = vunpack.c.h.b16 %v187
  %v791 = vunpack.c.l.b16 %v188
  %v792 = vunpack.c.h.b16 %v188
  %v793 = vunpack.c.l.b16 %v189
  %v794 = vunpack.c.h.b16 %v189
  %v795 = vunpack.c.l.b16 %v190
  %v796 = vunpack.c.h.b16 %v190
  %v797 = vunpack.c.l.b16 %v191
  %v798 = vunpack.c.h.b16 %v191
  %v799 = vunpack.c.l.b16 %v192
  %v800 = vunpack.c.h.b16 %v192
  %v801 = vunpack.c.l.b16 %v193
  %v802 = vunpack.c.h.b16 %v193
  %v803 = vunpack.c.l.b16 %v194
  %v804 = vunpack.c.h.b16 %v194
  %v805 = vunpack.c.l.b16 %v195
  %v806 = vunpack.c.h.b16 %v195
  %v807 = vunpack.c.l.b16 %v196
  %v808 = vunpack.c.h.b16 %v196
  %v809 = vunpack.c.l.b16 %v197
  %v810 = vunpack.c.h.b16 %v197
  %v811 = vunpack.c.l.b16 %v198
  %v812 = vunpack.c.h.b16 %v198
  %v813 = vunpack.c.l.b16 %v199
  %v814 = vunpack.c.h.b16 %v199
  %v815 = vunpack.c.l.b16 %v200
  %v816 = vunpack.c.h.b16 %v200
  %v817 = vunpack.c.l.b16 %v201
  %v818 = vunpack.c.h.b16 %v201
  %v819 = vunpack.c.l.b16 %v202
  %v820 = vunpack.c.h.b16 %v202
  %v821 = vunpack.c.l.b16 %v203
  %v822 = vunpack.c.h.b16 %v203
  %v823 = vunpack.c.l.b16 %v204
  %v824 = vunpack.c.h.b16 %v204
  %v825 = vunpack.c.l.b16 %v205
  %v826 = vunpack.c.h.b16 %v205
  %v827 = vunpack.c.l.b16 %v206
  %v828 = vunpack.c.h.b16 %v206
  %v829 = vunpack.c.l.b16 %v207
  %v830 = vunpack.c.h.b16 %v207
  %v831 = vunpack.c.l.b16 %v208
  %v832 = vunpack.c.h.b16 %v208
  %v833 = vunpack.c.l.b16 %v209
  %v834 = vunpack.c.h.b16 %v209
  %v835 = vunpack.c.l.b16 %v210
  %v836 = vunpack.c.h.b16 %v210
  %v837 = vunpack.c.l.b16 %v211
  %v838 = vunpack.c.h.b16 %v211
  %v839 = vunpack.c.l.b16 %v212
  %v840 = vunpack.c.h.b16 %v212
  %v841 = vunpack.c.l.b16 %v213
  %v842 = vunpack.c.h.b16 %v213
  %v843 = vunpack.c.l.b16 %v214
  %v844 = vunpack.c.h.b16 %v214
  %v845 = vunpack.c.l.b16 %v215
  %v846 = vunpack.c.h.b16 %v215
  %v847 = vunpack.c.l.b16 %v216
  %v848 = vunpack.c.h.b16 %v216
  %v849 = vunpack.c.l.b16 %v217
  %v850 = vunpack.c.h.b16 %v217
  %v851 = vunpack.c.l.b16 %v218
  %v852 = vunpack.c.h.b16 %v218
  %v853 = vunpack.c.l.b16 %v219
  %v854 = vunpack.c.h.b16 %v219
  %v855 = vunpack.c.l.b16 %v220
  %v856 = vunpack.c.h.b16 %v220
  %v857 = vpack.c.b16 %v475, %v473
  %v858 = vpack.c.b16 %v476, %v474
  %v859 = vpack.c.b16 %v479, %v477
  %v860 = vpack.c.b16 %v480, %v478
  %v861 = vpack.c.b16 %v483, %v481
  %v862 = vpack.c.b16 %v484, %v482
  %v863 = vpack.c.b16 %v487, %v485
  %v864 = vpack.c.b16 %v488, %v486
  %v865 = vpack.c.b16 %v491, %v489
  %v866 = vpack.c.b16 %v492, %v490
  %v867 = vpack.c.b16 %v495, %v493
  %v868 = vpack.c.b16 %v496, %v494
  %v869 = vpack.c.b16 %v499, %v497
  %v870 = vpack.c.b16 %v500, %v498
  %v871 = vpack.c.b16 %v503, %v501
  %v872 = vpack.c.b16 %v504, %v502
  %v873 = vpack.c.b16 %v507, %v505
  %v874 = vpack.c.b16 %v508, %v506
  %v875 = vpack.c.b16 %v511, %v509
  %v876 = vpack.c.b16 %v512, %v510
  %v877 = vpack.c.b16 %v515, %v513
  %v878 = vpack.c.b16 %v516, %v514
  %v879 = vpack.c.b16 %v519, %v517
  %v880 = vpack.c.b16 %v520, %v518
  %v881 = vpack.c.b16 %v523, %v521
  %v882 = vpack.c.b16 %v524, %v522
  %v883 = vpack.c.b16 %v527, %v525
  %v884 = vpack.c.b16 %v528, %v526
  %v885 = vpack.c.b16 %v531, %v529
  %v886 = vpack.c.b16 %v532, %v530
  %v887 = vpack.c.b16 %v535, %v533
  %v888 = vpack.c.b16 %v536, %v534
  %v889 = vpack.c.b16 %v539, %v537
  %v890 = vpack.c.b16 %v540, %v538
  %v891 = vpack.c.b16 %v543, %v541
  %v892 = vpack.c.b16 %v544, %v542
  %v893 = vpack.c.b16 %v547, %v545
  %v894 = vpack.c.b16 %v548, %v546
  %v895 = vpack.c.b16 %v551, %v549
  %v896 = vpack.c.b16 %v552, %v550
  %v897 = vpack.c.b16 %v555, %v553
  %v898 = vpack.c.b16 %v556, %v554
  %v899 = vpack.c.b16 %v559, %v557
  %v900 = vpack.c.b16 %v560, %v558
  %v901 = vpack.c.b16 %v563, %v561
  %v902 = vpack.c.b16 %v564, %v562
  %v903 = vpack.c.b16 %v567, %v565
  %v904 = vpack.c.b16 %v568, %v566
  %v905 = vpack.c.b16 %v571, %v569
  %v906 = vpack.c.b16 %v572, %v570
  %v907 = vpack.c.b16 %v575, %v573
  %v908 = vpack.c.b16 %v576, %v574
  %v909 = vpack.c.b16 %v579, %v577
  %v910 = vpack.c.b16 %v580, %v578
  %v911 = vpack.c.b16 %v583, %v581
  %v912 = vpack.c.b16 %v584, %v582
  %v913 = vpack.c.b16 %v587, %v585
  %v914 = vpack.c.b16 %v588, %v586
  %v915 = vpack.c.b16 %v591, %v589
  %v916 = vpack.c.b16 %v592, %v590
  %v917 = vpack.c.b16 %v595, %v593
  %v918 = vpack.c.b16 %v596, %v594
  %v919 = vpack.c.b16 %v599, %v597
  %v920 = vpack.c.b16 %v600, %v598
  %v921 = vpack.c.b16 %v603, %v601
  %v922 = vpack.c.b16 %v604, %v602
  %v923 = vpack.c.b16 %v607, %v605
  %v924 = vpack.c.b16 %v608, %v606
  %v925 = vpack.c.b16 %v611, %v609
  %v926 = vpack.c.b16 %v612, %v610
  %v927 = vpack.c.b16 %v615, %v613
  %v928 = vpack.c.b16 %v616, %v614
  %v929 = vpack.c.b16 %v619, %v617
  %v930 = vpack.c.b16 %v620, %v618
  %v931 = vpack.c.b16 %v623, %v621
  %v932 = vpack.c.b16 %v624, %v622
  %v933 = vpack.c.b16 %v627, %v625
  %v934 = vpack.c.b16 %v628, %v626
  %v935 = vpack.c.b16 %v631, %v629
  %v936 = vpack.c.b16 %v632, %v630
  %v937 = vpack.c.b16 %v635, %v633
  %v938 = vpack.c.b16 %v636, %v634
  %v939 = vpack.c.b16 %v639, %v637
  %v940 = vpack.c.b16 %v640, %v638
  %v941 = vpack.c.b16 %v643, %v641
  %v942 = vpack.c.b16 %v644, %v642
  %v943 = vpack.c.b16 %v647, %v645
  %v944 = vpack.c.b16 %v648, %v646
  %v945 = vpack.c.b16 %v651, %v649
  %v946 = vpack.c.b16 %v652, %v650
  %v947 = vpack.c.b16 %v655, %v653
  %v948 = vpack.c.b16 %v656, %v654
  %v949 = vpack.c.b16 %v659, %v657
  %v950 = vpack.c.b16 %v660, %v658
  %v951 = vpack.c.b16 %v663, %v661
  %v952 = vpack.c.b16 %v664, %v662
  %v953 = vpack.c.b16 %v667, %v665
  %v954 = vpack.c.b16 %v668, %v666
  %v955 = vpack.c.b16 %v671, %v669
  %v956 = vpack.c.b16 %v672, %v670
  %v957 = vpack.c.b16 %v675, %v673
  %v958 = vpack.c.b16 %v676, %v674
  %v959 = vpack.c.b16 %v679, %v677
  %v960 = vpack.c.b16 %v680, %v678
  %v961 = vpack.c.b16 %v683, %v681
  %v962 = vpack.c.b16 %v684, %v682
  %v963 = vpack.c.b16 %v687, %v685
  %v964 = vpack.c.b16 %v688, %v686
  %v965 = vpack.c.b16 %v691, %v689
  %v966 = vpack.c.b16 %v692, %v690
  %v967 = vpack.c.b16 %v695, %v693
  %v968 = vpack.c.b16 %v696, %v694
  %v969 = vpack.c.b16 %v699, %v697
  %v970 = vpack.c.b16 %v700, %v698
  %v971 = vpack.c.b16 %v703, %v701
  %v972 = vpack.c.b16 %v704, %v702
  %v973 = vpack.c.b16 %v707, %v705
  %v974 = vpack.c.b16 %v708, %v706
  %v975 = vpack.c.b16 %v711, %v709
  %v976 = vpack.c.b16 %v712, %v710
  %v977 = vpack.c.b16 %v715, %v713
  %v978 = vpack.c.b16 %v716, %v714
  %v979 = vpack.c.b16 %v719, %v717
  %v980 = vpack.c.b16 %v720, %v718
  %v981 = vpack.c.b16 %v723, %v721
  %v982 = vpack.c.b16 %v724, %v722
  %v983 = vpack.c.b16 %v727, %v725
  %v984 = vpack.c.b16 %v728, %v726
  %v985 = vpack.c.b16 %v731, %v729
  %v986 = vpack.c.b16 %v732, %v730
  %v987 = vpack.c.b16 %v735, %v733
  %v988 = vpack.c.b16 %v736, %v734
  %v989 = vpack.c.b16 %v739, %v737
  %v990 = vpack.c.b16 %v740, %v738
  %v991 = vpack.c.b16 %v743, %v741
  %v992 = vpack.c.b16 %v744, %v742
  %v993 = vpack.c.b16 %v747, %v745
  %v994 = vpack.c.b16 %v748, %v746
  %v995 = vpack.c.b16 %v751, %v749
  %v996 = vpack.c.b16 %v752, %v750
  %v997 = vpack.c.b16 %v755, %v753
  %v998 = vpack.c.b16 %v756, %v754
  %v999 = vpack.c.b16 %v759, %v757
  %v1000 = vpack.c.b16 %v760, %v758
  %v1001 = vpack.c.b16 %v763, %v761
  %v1002 = vpack.c.b16 %v764, %v762
  %v1003 = vpack.c.b16 %v767, %v765
  %v1004 = vpack.c.b16 %v768, %v766
  %v1005 = vpack.c.b16 %v771, %v769
  %v1006 = vpack.c.b16 %v772, %v770
  %v1007 = vpack.c.b16 %v775, %v773
  %v1008 = vpack.c.b16 %v776, %v774
  %v1009 = vpack.c.b16 %v779, %v777
  %v1010 = vpack.c.b16 %v780, %v778
  %v1011 = vpack.c.b16 %v783, %v781
  %v1012 = vpack.c.b16 %v784, %v782
  %v1013 = vpack.c.b16 %v787, %v785
  %v1014 = vpack.c.b16 %v788, %v786
  %v1015 = vpack.c.b16 %v791, %v789
  %v1016 = vpack.c.b16 %v792, %v790
  %v1017 = vpack.c.b16 %v795, %v793
  %v1018 = vpack.c.b16 %v796, %v794
  %v1019 = vpack.c.b16 %v799, %v797
  %v1020 = vpack.c.b16 %v800, %v798
  %v1021 = vpack.c.b16 %v803, %v801
  %v1022 = vpack.c.b16 %v804, %v802
  %v1023 = vpack.c.b16 %v807, %v805
  %v1024 = vpack.c.b16 %v808, %v806
  %v1025 = vpack.c.b16 %v811, %v809
  %v1026 = vpack.c.b16 %v812, %v810
  %v1027 = vpack.c.b16 %v815, %v813
  %v1028 = vpack.c.b16 %v816, %v814
  %v1029 = vpack.c.b16 %v819, %v817
  %v1030 = vpack.c.b16 %v820, %v818
  %v1031 = vpack.c.b16 %v823, %v821
  %v1032 = vpack.c.b16 %v824, %v822
  %v1033 = vpack.c.b16 %v827, %v825
  %v1034 = vpack.c.b16 %v828, %v826
  %v1035 = vpack.c.b16 %v831, %v829
  %v1036 = vpack.c.b16 %v832, %v830
  %v1037 = vpack.c.b16 %v835, %v833
  %v1038 = vpack.c.b16 %v836, %v834
  %v1039 = vpack.c.b16 %v839, %v837
  %v1040 = vpack.c.b16 %v840, %v838
  %v1041 = vpack.c.b16 %v843, %v841
  %v1042 = vpack.c.b16 %v844, %v842
  %v1043 = vpack.c.b16 %v847, %v845
  %v1044 = vpack.c.b16 %v848, %v846
  %v1045 = vpack.c.b16 %v851, %v849
  %v1046 = vpack.c.b16 %v852, %v850
  %v1047 = vpack.c.b16 %v855, %v853
  %v1048 = vpack.c.b16 %v856, %v854
  %1241 = vmatprep.subr.bf16.mxu0 %v858
  %1242 = vmatpush1.bf16.msra.mxu0 %v857
  %1243 = vmatprep.subr.bf16.mxu0 %v860
  %1244 = vmatpush1.bf16.msra.mxu0 %v859
  %1245 = vmatprep.subr.bf16.mxu0 %v862
  %1246 = vmatpush1.bf16.msra.mxu0 %v861
  %1247 = vmatprep.subr.bf16.mxu0 %v864
  %1248 = vmatpush1.bf16.msra.mxu0 %v863
  %1249 = vmatprep.subr.bf16.mxu0 %v866
  %1250 = vmatpush1.bf16.msra.mxu0 %v865
  %1251 = vmatprep.subr.bf16.mxu0 %v868
  %1252 = vmatpush1.bf16.msra.mxu0 %v867
  %1253 = vmatprep.subr.bf16.mxu0 %v870
  %1254 = vmatpush1.bf16.msra.mxu0 %v869
  %1255 = vmatprep.subr.bf16.mxu0 %v872
  %1256 = vmatpush1.bf16.msra.mxu0 %v871
  %1257 = vmatprep.subr.bf16.mxu0 %v874
  %1258 = vmatpush1.bf16.msra.mxu0 %v873
  %1259 = vmatprep.subr.bf16.mxu0 %v876
  %1260 = vmatpush1.bf16.msra.mxu0 %v875
  %1261 = vmatprep.subr.bf16.mxu0 %v878
  %1262 = vmatpush1.bf16.msra.mxu0 %v877
  %1263 = vmatprep.subr.bf16.mxu0 %v880
  %1264 = vmatpush1.bf16.msra.mxu0 %v879
  %1265 = vmatprep.subr.bf16.mxu0 %v882
  %1266 = vmatpush1.bf16.msra.mxu0 %v881
  %1267 = vmatprep.subr.bf16.mxu0 %v884
  %1268 = vmatpush1.bf16.msra.mxu0 %v883
  %1269 = vmatprep.subr.bf16.mxu0 %v886
  %1270 = vmatpush1.bf16.msra.mxu0 %v885
  %1271 = vmatprep.subr.bf16.mxu0 %v888
  %1272 = vmatpush1.bf16.msra.mxu0 %v887
  %1273 = vmatprep.mubr.bf16.mxu0 %v258
  %1274 = vmatmul.mubr.bf16.gmra.mrb[0].mxu0 %v257
  %v1275 = vpop.f32.mrb[0].mxu0
  %v1276 = vadd.f32 0.0, %v1275
  %v1277 = vpop.f32.mrb[0].mxu0
  %v1278 = vadd.f32 0.0, %v1277
  %v1279 = vpop.f32.mrb[0].mxu0
  %v1280 = vadd.f32 0.0, %v1279
  %v1281 = vpop.f32.mrb[0].mxu0
  %v1282 = vadd.f32 0.0, %v1281
  %1283 = vdwg.mxu0
  %1284 = vmatprep.subr.bf16.mxu0 %v890
  %1285 = vmatpush1.bf16.msra.mxu0 %v889
  %1286 = vmatprep.subr.bf16.mxu0 %v892
  %1287 = vmatpush1.bf16.msra.mxu0 %v891
  %1288 = vmatprep.subr.bf16.mxu0 %v894
  %1289 = vmatpush1.bf16.msra.mxu0 %v893
  %1290 = vmatprep.subr.bf16.mxu0 %v896
  %1291 = vmatpush1.bf16.msra.mxu0 %v895
  %1292 = vmatprep.subr.bf16.mxu0 %v898
  %1293 = vmatpush1.bf16.msra.mxu0 %v897
  %1294 = vmatprep.subr.bf16.mxu0 %v900
  %1295 = vmatpush1.bf16.msra.mxu0 %v899
  %1296 = vmatprep.subr.bf16.mxu0 %v902
  %1297 = vmatpush1.bf16.msra.mxu0 %v901
  %1298 = vmatprep.subr.bf16.mxu0 %v904
  %1299 = vmatpush1.bf16.msra.mxu0 %v903
  %1300 = vmatprep.subr.bf16.mxu0 %v906
  %1301 = vmatpush1.bf16.msra.mxu0 %v905
  %1302 = vmatprep.subr.bf16.mxu0 %v908
  %1303 = vmatpush1.bf16.msra.mxu0 %v907
  %1304 = vmatprep.subr.bf16.mxu0 %v910
  %1305 = vmatpush1.bf16.msra.mxu0 %v909
  %1306 = vmatprep.subr.bf16.mxu0 %v912
  %1307 = vmatpush1.bf16.msra.mxu0 %v911
  %1308 = vmatprep.subr.bf16.mxu0 %v914
  %1309 = vmatpush1.bf16.msra.mxu0 %v913
  %1310 = vmatprep.subr.bf16.mxu0 %v916
  %1311 = vmatpush1.bf16.msra.mxu0 %v915
  %1312 = vmatprep.subr.bf16.mxu0 %v918
  %1313 = vmatpush1.bf16.msra.mxu0 %v917
  %1314 = vmatprep.subr.bf16.mxu0 %v920
  %1315 = vmatpush1.bf16.msra.mxu0 %v919
  %1316 = vmatprep.mubr.bf16.mxu0 %v260
  %1317 = vmatmul.mubr.bf16.gmra.mrb[0].mxu0 %v259
  %v1318 = vpop.f32.mrb[0].mxu0
  %v1319 = vadd.f32 %v1276, %v1318
  %v1320 = vpop.f32.mrb[0].mxu0
  %v1321 = vadd.f32 %v1278, %v1320
  %v1322 = vpop.f32.mrb[0].mxu0
  %v1323 = vadd.f32 %v1280, %v1322
  %v1324 = vpop.f32.mrb[0].mxu0
  %v1325 = vadd.f32 %v1282, %v1324
  %1326 = vdwg.mxu0
  %1327 = vmatprep.subr.bf16.mxu0 %v922
  %1328 = vmatpush1.bf16.msra.mxu0 %v921
  %1329 = vmatprep.subr.bf16.mxu0 %v924
  %1330 = vmatpush1.bf16.msra.mxu0 %v923
  %1331 = vmatprep.subr.bf16.mxu0 %v926
  %1332 = vmatpush1.bf16.msra.mxu0 %v925
  %1333 = vmatprep.subr.bf16.mxu0 %v928
  %1334 = vmatpush1.bf16.msra.mxu0 %v927
  %1335 = vmatprep.subr.bf16.mxu0 %v930
  %1336 = vmatpush1.bf16.msra.mxu0 %v929
  %1337 = vmatprep.subr.bf16.mxu0 %v932
  %1338 = vmatpush1.bf16.msra.mxu0 %v931
  %1339 = vmatprep.subr.bf16.mxu0 %v934
  %1340 = vmatpush1.bf16.msra.mxu0 %v933
  %1341 = vmatprep.subr.bf16.mxu0 %v936
  %1342 = vmatpush1.bf16.msra.mxu0 %v935
  %1343 = vmatprep.subr.bf16.mxu0 %v938
  %1344 = vmatpush1.bf16.msra.mxu0 %v937
  %1345 = vmatprep.subr.bf16.mxu0 %v940
  %1346 = vmatpush1.bf16.msra.mxu0 %v939
  %1347 = vmatprep.subr.bf16.mxu0 %v942
  %1348 = vmatpush1.bf16.msra.mxu0 %v941
  %1349 = vmatprep.subr.bf16.mxu0 %v944
  %1350 = vmatpush1.bf16.msra.mxu0 %v943
  %1351 = vmatprep.subr.bf16.mxu0 %v946
  %1352 = vmatpush1.bf16.msra.mxu0 %v945
  %1353 = vmatprep.subr.bf16.mxu0 %v948
  %1354 = vmatpush1.bf16.msra.mxu0 %v947
  %1355 = vmatprep.subr.bf16.mxu0 %v950
  %1356 = vmatpush1.bf16.msra.mxu0 %v949
  %1357 = vmatprep.subr.bf16.mxu0 %v952
  %1358 = vmatpush1.bf16.msra.mxu0 %v951
  %1359 = vmatprep.mubr.bf16.mxu0 %v262
  %1360 = vmatmul.mubr.bf16.gmra.mrb[0].mxu0 %v261
  %v1361 = vpop.f32.mrb[0].mxu0
  %v1362 = vadd.f32 %v1319, %v1361
  %v1363 = vpop.f32.mrb[0].mxu0
  %v1364 = vadd.f32 %v1321, %v1363
  %v1365 = vpop.f32.mrb[0].mxu0
  %v1366 = vadd.f32 %v1323, %v1365
  %v1367 = vpop.f32.mrb[0].mxu0
  %v1368 = vadd.f32 %v1325, %v1367
  %1369 = vdwg.mxu0
  %1370 = vmatprep.subr.bf16.mxu0 %v954
  %1371 = vmatpush1.bf16.msra.mxu0 %v953
  %1372 = vmatprep.subr.bf16.mxu0 %v956
  %1373 = vmatpush1.bf16.msra.mxu0 %v955
  %1374 = vmatprep.subr.bf16.mxu0 %v958
  %1375 = vmatpush1.bf16.msra.mxu0 %v957
  %1376 = vmatprep.subr.bf16.mxu0 %v960
  %1377 = vmatpush1.bf16.msra.mxu0 %v959
  %1378 = vmatprep.subr.bf16.mxu0 %v962
  %1379 = vmatpush1.bf16.msra.mxu0 %v961
  %1380 = vmatprep.subr.bf16.mxu0 %v964
  %1381 = vmatpush1.bf16.msra.mxu0 %v963
  %1382 = vmatprep.subr.bf16.mxu0 %v966
  %1383 = vmatpush1.bf16.msra.mxu0 %v965
  %1384 = vmatprep.subr.bf16.mxu0 %v968
  %1385 = vmatpush1.bf16.msra.mxu0 %v967
  %1386 = vmatprep.subr.bf16.mxu0 %v970
  %1387 = vmatpush1.bf16.msra.mxu0 %v969
  %1388 = vmatprep.subr.bf16.mxu0 %v972
  %1389 = vmatpush1.bf16.msra.mxu0 %v971
  %1390 = vmatprep.subr.bf16.mxu0 %v974
  %1391 = vmatpush1.bf16.msra.mxu0 %v973
  %1392 = vmatprep.subr.bf16.mxu0 %v976
  %1393 = vmatpush1.bf16.msra.mxu0 %v975
  %1394 = vmatprep.subr.bf16.mxu0 %v978
  %1395 = vmatpush1.bf16.msra.mxu0 %v977
  %1396 = vmatprep.subr.bf16.mxu0 %v980
  %1397 = vmatpush1.bf16.msra.mxu0 %v979
  %1398 = vmatprep.subr.bf16.mxu0 %v982
  %1399 = vmatpush1.bf16.msra.mxu0 %v981
  %1400 = vmatprep.subr.bf16.mxu0 %v984
  %1401 = vmatpush1.bf16.msra.mxu0 %v983
  %1402 = vmatprep.mubr.bf16.mxu0 %v264
  %1403 = vmatmul.mubr.bf16.gmra.mrb[0].mxu0 %v263
  %v1404 = vpop.f32.mrb[0].mxu0
  %v1405 = vadd.f32 %v1362, %v1404
  %v1406 = vpop.f32.mrb[0].mxu0
  %v1407 = vadd.f32 %v1364, %v1406
  %v1408 = vpop.f32.mrb[0].mxu0
  %v1409 = vadd.f32 %v1366, %v1408
  %v1410 = vpop.f32.mrb[0].mxu0
  %v1411 = vadd.f32 %v1368, %v1410
  %1412 = vdwg.mxu0
  %1413 = vmatprep.subr.bf16.mxu0 %v986
  %1414 = vmatpush1.bf16.msra.mxu0 %v985
  %1415 = vmatprep.subr.bf16.mxu0 %v988
  %1416 = vmatpush1.bf16.msra.mxu0 %v987
  %1417 = vmatprep.subr.bf16.mxu0 %v990
  %1418 = vmatpush1.bf16.msra.mxu0 %v989
  %1419 = vmatprep.subr.bf16.mxu0 %v992
  %1420 = vmatpush1.bf16.msra.mxu0 %v991
  %1421 = vmatprep.subr.bf16.mxu0 %v994
  %1422 = vmatpush1.bf16.msra.mxu0 %v993
  %1423 = vmatprep.subr.bf16.mxu0 %v996
  %1424 = vmatpush1.bf16.msra.mxu0 %v995
  %1425 = vmatprep.subr.bf16.mxu0 %v998
  %1426 = vmatpush1.bf16.msra.mxu0 %v997
  %1427 = vmatprep.subr.bf16.mxu0 %v1000
  %1428 = vmatpush1.bf16.msra.mxu0 %v999
  %1429 = vmatprep.subr.bf16.mxu0 %v1002
  %1430 = vmatpush1.bf16.msra.mxu0 %v1001
  %1431 = vmatprep.subr.bf16.mxu0 %v1004
  %1432 = vmatpush1.bf16.msra.mxu0 %v1003
  %1433 = vmatprep.subr.bf16.mxu0 %v1006
  %1434 = vmatpush1.bf16.msra.mxu0 %v1005
  %1435 = vmatprep.subr.bf16.mxu0 %v1008
  %1436 = vmatpush1.bf16.msra.mxu0 %v1007
  %1437 = vmatprep.subr.bf16.mxu0 %v1010
  %1438 = vmatpush1.bf16.msra.mxu0 %v1009
  %1439 = vmatprep.subr.bf16.mxu0 %v1012
  %1440 = vmatpush1.bf16.msra.mxu0 %v1011
  %1441 = vmatprep.subr.bf16.mxu0 %v1014
  %1442 = vmatpush1.bf16.msra.mxu0 %v1013
  %1443 = vmatprep.subr.bf16.mxu0 %v1016
  %1444 = vmatpush1.bf16.msra.mxu0 %v1015
  %1445 = vmatprep.mubr.bf16.mxu0 %v266
  %1446 = vmatmul.mubr.bf16.gmra.mrb[0].mxu0 %v265
  %v1447 = vpop.f32.mrb[0].mxu0
  %v1448 = vadd.f32 %v1405, %v1447
  %v1449 = vpop.f32.mrb[0].mxu0
  %v1450 = vadd.f32 %v1407, %v1449
  %v1451 = vpop.f32.mrb[0].mxu0
  %v1452 = vadd.f32 %v1409, %v1451
  %v1453 = vpop.f32.mrb[0].mxu0
  %v1454 = vadd.f32 %v1411, %v1453
  %1455 = vdwg.mxu0
  %1456 = vmatprep.subr.bf16.mxu0 %v1018
  %1457 = vmatpush1.bf16.msra.mxu0 %v1017
  %1458 = vmatprep.subr.bf16.mxu0 %v1020
  %1459 = vmatpush1.bf16.msra.mxu0 %v1019
  %1460 = vmatprep.subr.bf16.mxu0 %v1022
  %1461 = vmatpush1.bf16.msra.mxu0 %v1021
  %1462 = vmatprep.subr.bf16.mxu0 %v1024
  %1463 = vmatpush1.bf16.msra.mxu0 %v1023
  %1464 = vmatprep.subr.bf16.mxu0 %v1026
  %1465 = vmatpush1.bf16.msra.mxu0 %v1025
  %1466 = vmatprep.subr.bf16.mxu0 %v1028
  %1467 = vmatpush1.bf16.msra.mxu0 %v1027
  %1468 = vmatprep.subr.bf16.mxu0 %v1030
  %1469 = vmatpush1.bf16.msra.mxu0 %v1029
  %1470 = vmatprep.subr.bf16.mxu0 %v1032
  %1471 = vmatpush1.bf16.msra.mxu0 %v1031
  %1472 = vmatprep.subr.bf16.mxu0 %v1034
  %1473 = vmatpush1.bf16.msra.mxu0 %v1033
  %1474 = vmatprep.subr.bf16.mxu0 %v1036
  %1475 = vmatpush1.bf16.msra.mxu0 %v1035
  %1476 = vmatprep.subr.bf16.mxu0 %v1038
  %1477 = vmatpush1.bf16.msra.mxu0 %v1037
  %1478 = vmatprep.subr.bf16.mxu0 %v1040
  %1479 = vmatpush1.bf16.msra.mxu0 %v1039
  %1480 = vmatprep.subr.bf16.mxu0 %v1042
  %1481 = vmatpush1.bf16.msra.mxu0 %v1041
  %1482 = vmatprep.subr.bf16.mxu0 %v1044
  %1483 = vmatpush1.bf16.msra.mxu0 %v1043
  %1484 = vmatprep.subr.bf16.mxu0 %v1046
  %1485 = vmatpush1.bf16.msra.mxu0 %v1045
  %1486 = vmatprep.subr.bf16.mxu0 %v1048
  %1487 = vmatpush1.bf16.msra.mxu0 %v1047
  %1488 = vmatprep.mubr.bf16.mxu0 %v268
  %1489 = vmatmul.mubr.bf16.gmra.mrb[0].mxu0 %v267
  %v1490 = vpop.f32.mrb[0].mxu0
  %v1491 = vadd.f32 %v1448, %v1490
  %v1492 = vpop.f32.mrb[0].mxu0
  %v1493 = vadd.f32 %v1450, %v1492
  %v1494 = vpop.f32.mrb[0].mxu0
  %v1495 = vadd.f32 %v1452, %v1494
  %v1496 = vpop.f32.mrb[0].mxu0
  %v1497 = vadd.f32 %v1454, %v1496
  %1498 = vdwg.mxu0
  %v1499 = vld [vmem:[%s2] sm:$0x3]
  %v1501 = vlaneseq
  %v1502 = vshrl.u32 %v1501, 7
  %v1503 = vsub.s32 0, %v1502
  %v1504 = vrot.slane %v1499, %v1503
  %v1505 = vlaneseq
  %v1506 = vshrl.u32 %v1505, 7
  %v1507 = vsub.s32 1, %v1506
  %v1508 = vrot.slane %v1499, %v1507
  %v1511 = vmul.f32 %v1491, %v1504
  %v1512 = vmul.f32 %v1493, %v1508
  %v1513 = vmul.f32 %v1495, %v1504
  %v1514 = vmul.f32 %v1497, %v1508
  %v1515 = vld [vmem:[%s3] sm:$0x3]
  %v1517 = vlaneseq
  %v1518 = vshrl.u32 %v1517, 7
  %v1519 = vsub.s32 0, %v1518
  %v1520 = vrot.slane %v1515, %v1519
  %v1521 = vlaneseq
  %v1522 = vshrl.u32 %v1521, 7
  %v1523 = vsub.s32 1, %v1522
  %v1524 = vrot.slane %v1515, %v1523
  %v1527 = vadd.f32 %v1511, %v1520
  %v1528 = vadd.f32 %v1512, %v1524
  %v1529 = vadd.f32 %v1513, %v1520
  %v1530 = vadd.f32 %v1514, %v1524
  %vm1531 = vcmp.ge.f32.partialorder %v1527, 0.0
  %vm1532 = vcmp.ge.f32.partialorder %v1528, 0.0
  %vm1533 = vcmp.ge.f32.partialorder %v1529, 0.0
  %vm1534 = vcmp.ge.f32.partialorder %v1530, 0.0
  %v1535 = vmul.f32 %v1527, 0.2
  %v1536 = vmul.f32 %v1528, 0.2
  %v1537 = vmul.f32 %v1529, 0.2
  %v1538 = vmul.f32 %v1530, 0.2
  %v1539 = vsel %vm1531, %v1527, %v1535
  %v1540 = vsel %vm1532, %v1528, %v1536
  %v1541 = vsel %vm1533, %v1529, %v1537
  %v1542 = vsel %vm1534, %v1530, %v1538
  %v1543 = vpack.c.bf16 %v1541, %v1539
  %v1544 = vpack.c.bf16 %v1542, %v1540
  %v1547 = vunpack.c.l.b16 %v1543
  %v1548 = vunpack.c.l.b16 %v1544
  %v1549 = vunpack.c.h.b16 %v1543
  %v1550 = vunpack.c.h.b16 %v1544
  %v1551 = vpack.c.b16 %v1548, %v1547
  %v1552 = vpack.c.b16 %v1550, %v1549
  %1555 = vst [vmem:[%s4] sm:$0xff] %v1551
  %1556 = vst [vmem:[%s4 + $0x8] sm:$0xff] %v1552
  // Predicated region
  $region18: #{nlayer_attention_forward.5} parent=0 // pred_check
    _
  $region19: #{nlayer_attention_forward.5} parent=0 // pred_check_branch
    %1558 = sbr.rel (0) target = $region21
  $region20: #{nlayer_attention_forward.5} parent=0 // pred_region
    _
  $region21: #{nlayer_attention_forward.5} parent=0 // pred_fallthru
    _
  // Predicated region
  $region22: #{nlayer_attention_forward.5} parent=0 // pred_check
    _
  $region23: #{nlayer_attention_forward.5} parent=0 // pred_check_branch
    %1560 = sbr.rel (0) target = $region25
  $region24: #{nlayer_attention_forward.5} parent=0 // pred_region
    _
  $region25: #{nlayer_attention_forward.5} parent=0 // pred_fallthru
    _

// kernel: nlayer_attention_forward.6
$region0: #{nlayer_attention_forward.6}
  #allocation0 [shape = 'u32[]', space=smem, size = 0x4, offset = 0x4, fixed_abs, tag = 'smem constant byte address 0x4 - core index']
  #allocation1 [shape = 'u32[144,128]{1,0:T(1,128)}', space=vmem, size = 0x12000, scoped, tag = 'internal scratch']
  %s0 = inlined_call_operand.vmem [shape: bf16[8,2048], index: 0, kind: input, shape index: {}]
  %s1 = inlined_call_operand.vmem [shape: bf16[2048,256], index: 1, kind: input, shape index: {}]
  %s2 = inlined_call_operand.vmem [shape: f32[1,256], index: 2, kind: input, shape index: {}]
  %s3 = inlined_call_operand.vmem [shape: f32[1,256], index: 3, kind: input, shape index: {}]
  %s4 = inlined_call_operand.vmem [shape: bf16[8,256], index: 4, kind: output, shape index: {}]
  %s5 = sld [smem:[#allocation0]]
  $region26: #{nlayer_attention_forward.6} parent=0
    _
  %s7 = ssub.s32 1, %s5
  %s8 = scalar_select 0, %s7, %s5
  // Predicated region
  $region2: #{nlayer_attention_forward.6} parent=0 // pred_check
    _
  $region3: #{nlayer_attention_forward.6} parent=0 // pred_check_branch
    %10 = sbr.rel (0) target = $region5
  $region4: #{nlayer_attention_forward.6} parent=0 // pred_region
    _
  $region5: #{nlayer_attention_forward.6} parent=0 // pred_fallthru
    _
  // Predicated region
  $region6: #{nlayer_attention_forward.6} parent=0 // pred_check
    _
  $region7: #{nlayer_attention_forward.6} parent=0 // pred_check_branch
    %12 = sbr.rel (0) target = $region9
  $region8: #{nlayer_attention_forward.6} parent=0 // pred_region
    _
  $region9: #{nlayer_attention_forward.6} parent=0 // pred_fallthru
    _
  // Predicated region
  $region10: #{nlayer_attention_forward.6} parent=0 // pred_check
    _
  $region11: #{nlayer_attention_forward.6} parent=0 // pred_check_branch
    %14 = sbr.rel (0) target = $region13
  $region12: #{nlayer_attention_forward.6} parent=0 // pred_region
    _
  $region13: #{nlayer_attention_forward.6} parent=0 // pred_fallthru
    _
  // Predicated region
  $region14: #{nlayer_attention_forward.6} parent=0 // pred_check
    _
  $region15: #{nlayer_attention_forward.6} parent=0 // pred_check_branch
    %16 = sbr.rel (0) target = $region17
  $region16: #{nlayer_attention_forward.6} parent=0 // pred_region
    _
  $region17: #{nlayer_attention_forward.6} parent=0 // pred_fallthru
    _
  %v17 = vld [vmem:[%s0] sm:$0xff]
  %v18 = vld [vmem:[%s0 + $0x8] sm:$0xff]
  %v19 = vld [vmem:[%s0 + $0x10] sm:$0xff]
  %v20 = vld [vmem:[%s0 + $0x18] sm:$0xff]
  %v21 = vld [vmem:[%s0 + $0x20] sm:$0xff]
  %v22 = vld [vmem:[%s0 + $0x28] sm:$0xff]
  %v23 = vld [vmem:[%s0 + $0x30] sm:$0xff]
  %v24 = vld [vmem:[%s0 + $0x38] sm:$0xff]
  %v25 = vld [vmem:[%s1] sm:$0xff]
  %v26 = vld [vmem:[%s1 + $0x8] sm:$0xff]
  %v27 = vld [vmem:[%s1 + $0x10] sm:$0xff]
  %v28 = vld [vmem:[%s1 + $0x18] sm:$0xff]
  %v29 = vld [vmem:[%s1 + $0x20] sm:$0xff]
  %v30 = vld [vmem:[%s1 + $0x28] sm:$0xff]
  %v31 = vld [vmem:[%s1 + $0x30] sm:$0xff]
  %v32 = vld [vmem:[%s1 + $0x38] sm:$0xff]
  %v33 = vld [vmem:[%s1 + $0x40] sm:$0xff]
  %v34 = vld [vmem:[%s1 + $0x48] sm:$0xff]
  %v35 = vld [vmem:[%s1 + $0x50] sm:$0xff]
  %v36 = vld [vmem:[%s1 + $0x58] sm:$0xff]
  %v37 = vld [vmem:[%s1 + $0x60] sm:$0xff]
  %v38 = vld [vmem:[%s1 + $0x68] sm:$0xff]
  %v39 = vld [vmem:[%s1 + $0x70] sm:$0xff]
  %v40 = vld [vmem:[%s1 + $0x78] sm:$0xff]
  %v41 = vld [vmem:[%s1 + $0x80] sm:$0xff]
  %v42 = vld [vmem:[%s1 + $0x88] sm:$0xff]
  %v43 = vld [vmem:[%s1 + $0x90] sm:$0xff]
  %v44 = vld [vmem:[%s1 + $0x98] sm:$0xff]
  %v45 = vld [vmem:[%s1 + $0xa0] sm:$0xff]
  %v46 = vld [vmem:[%s1 + $0xa8] sm:$0xff]
  %v47 = vld [vmem:[%s1 + $0xb0] sm:$0xff]
  %v48 = vld [vmem:[%s1 + $0xb8] sm:$0xff]
  %v49 = vld [vmem:[%s1 + $0xc0] sm:$0xff]
  %v50 = vld [vmem:[%s1 + $0xc8] sm:$0xff]
  %v51 = vld [vmem:[%s1 + $0xd0] sm:$0xff]
  %v52 = vld [vmem:[%s1 + $0xd8] sm:$0xff]
  %v53 = vld [vmem:[%s1 + $0xe0] sm:$0xff]
  %v54 = vld [vmem:[%s1 + $0xe8] sm:$0xff]
  %v55 = vld [vmem:[%s1 + $0xf0] sm:$0xff]
  %v56 = vld [vmem:[%s1 + $0xf8] sm:$0xff]
  %v57 = vld [vmem:[%s1 + $0x100] sm:$0xff]
  %v58 = vld [vmem:[%s1 + $0x108] sm:$0xff]
  %v59 = vld [vmem:[%s1 + $0x110] sm:$0xff]
  %v60 = vld [vmem:[%s1 + $0x118] sm:$0xff]
  %v61 = vld [vmem:[%s1 + $0x120] sm:$0xff]
  %v62 = vld [vmem:[%s1 + $0x128] sm:$0xff]
  %v63 = vld [vmem:[%s1 + $0x130] sm:$0xff]
  %v64 = vld [vmem:[%s1 + $0x138] sm:$0xff]
  %v65 = vld [vmem:[%s1 + $0x140] sm:$0xff]
  %v66 = vld [vmem:[%s1 + $0x148] sm:$0xff]
  %v67 = vld [vmem:[%s1 + $0x150] sm:$0xff]
  %v68 = vld [vmem:[%s1 + $0x158] sm:$0xff]
  %v69 = vld [vmem:[%s1 + $0x160] sm:$0xff]
  %v70 = vld [vmem:[%s1 + $0x168] sm:$0xff]
  %v71 = vld [vmem:[%s1 + $0x170] sm:$0xff]
  %v72 = vld [vmem:[%s1 + $0x178] sm:$0xff]
  %v73 = vld [vmem:[%s1 + $0x180] sm:$0xff]
  %v74 = vld [vmem:[%s1 + $0x188] sm:$0xff]
  %v75 = vld [vmem:[%s1 + $0x190] sm:$0xff]
  %v76 = vld [vmem:[%s1 + $0x198] sm:$0xff]
  %v77 = vld [vmem:[%s1 + $0x1a0] sm:$0xff]
  %v78 = vld [vmem:[%s1 + $0x1a8] sm:$0xff]
  %v79 = vld [vmem:[%s1 + $0x1b0] sm:$0xff]
  %v80 = vld [vmem:[%s1 + $0x1b8] sm:$0xff]
  %v81 = vld [vmem:[%s1 + $0x1c0] sm:$0xff]
  %v82 = vld [vmem:[%s1 + $0x1c8] sm:$0xff]
  %v83 = vld [vmem:[%s1 + $0x1d0] sm:$0xff]
  %v84 = vld [vmem:[%s1 + $0x1d8] sm:$0xff]
  %v85 = vld [vmem:[%s1 + $0x1e0] sm:$0xff]
  %v86 = vld [vmem:[%s1 + $0x1e8] sm:$0xff]
  %v87 = vld [vmem:[%s1 + $0x1f0] sm:$0xff]
  %v88 = vld [vmem:[%s1 + $0x1f8] sm:$0xff]
  %v89 = vld [vmem:[%s1 + $0x200] sm:$0xff]
  %v90 = vld [vmem:[%s1 + $0x208] sm:$0xff]
  %v91 = vld [vmem:[%s1 + $0x210] sm:$0xff]
  %v92 = vld [vmem:[%s1 + $0x218] sm:$0xff]
  %v93 = vld [vmem:[%s1 + $0x220] sm:$0xff]
  %v94 = vld [vmem:[%s1 + $0x228] sm:$0xff]
  %v95 = vld [vmem:[%s1 + $0x230] sm:$0xff]
  %v96 = vld [vmem:[%s1 + $0x238] sm:$0xff]
  %v97 = vld [vmem:[%s1 + $0x240] sm:$0xff]
  %v98 = vld [vmem:[%s1 + $0x248] sm:$0xff]
  %v99 = vld [vmem:[%s1 + $0x250] sm:$0xff]
  %v100 = vld [vmem:[%s1 + $0x258] sm:$0xff]
  %v101 = vld [vmem:[%s1 + $0x260] sm:$0xff]
  %v102 = vld [vmem:[%s1 + $0x268] sm:$0xff]
  %v103 = vld [vmem:[%s1 + $0x270] sm:$0xff]
  %v104 = vld [vmem:[%s1 + $0x278] sm:$0xff]
  %v105 = vld [vmem:[%s1 + $0x280] sm:$0xff]
  %v106 = vld [vmem:[%s1 + $0x288] sm:$0xff]
  %v107 = vld [vmem:[%s1 + $0x290] sm:$0xff]
  %v108 = vld [vmem:[%s1 + $0x298] sm:$0xff]
  %v109 = vld [vmem:[%s1 + $0x2a0] sm:$0xff]
  %v110 = vld [vmem:[%s1 + $0x2a8] sm:$0xff]
  %v111 = vld [vmem:[%s1 + $0x2b0] sm:$0xff]
  %v112 = vld [vmem:[%s1 + $0x2b8] sm:$0xff]
  %v113 = vld [vmem:[%s1 + $0x2c0] sm:$0xff]
  %v114 = vld [vmem:[%s1 + $0x2c8] sm:$0xff]
  %v115 = vld [vmem:[%s1 + $0x2d0] sm:$0xff]
  %v116 = vld [vmem:[%s1 + $0x2d8] sm:$0xff]
  %v117 = vld [vmem:[%s1 + $0x2e0] sm:$0xff]
  %v118 = vld [vmem:[%s1 + $0x2e8] sm:$0xff]
  %v119 = vld [vmem:[%s1 + $0x2f0] sm:$0xff]
  %v120 = vld [vmem:[%s1 + $0x2f8] sm:$0xff]
  %v121 = vld [vmem:[%s1 + $0x300] sm:$0xff]
  %v122 = vld [vmem:[%s1 + $0x308] sm:$0xff]
  %v123 = vld [vmem:[%s1 + $0x310] sm:$0xff]
  %v124 = vld [vmem:[%s1 + $0x318] sm:$0xff]
  %v125 = vld [vmem:[%s1 + $0x320] sm:$0xff]
  %v126 = vld [vmem:[%s1 + $0x328] sm:$0xff]
  %v127 = vld [vmem:[%s1 + $0x330] sm:$0xff]
  %v128 = vld [vmem:[%s1 + $0x338] sm:$0xff]
  %v129 = vld [vmem:[%s1 + $0x340] sm:$0xff]
  %v130 = vld [vmem:[%s1 + $0x348] sm:$0xff]
  %v131 = vld [vmem:[%s1 + $0x350] sm:$0xff]
  %v132 = vld [vmem:[%s1 + $0x358] sm:$0xff]
  %v133 = vld [vmem:[%s1 + $0x360] sm:$0xff]
  %v134 = vld [vmem:[%s1 + $0x368] sm:$0xff]
  %v135 = vld [vmem:[%s1 + $0x370] sm:$0xff]
  %v136 = vld [vmem:[%s1 + $0x378] sm:$0xff]
  %v137 = vld [vmem:[%s1 + $0x380] sm:$0xff]
  %v138 = vld [vmem:[%s1 + $0x388] sm:$0xff]
  %v139 = vld [vmem:[%s1 + $0x390] sm:$0xff]
  %v140 = vld [vmem:[%s1 + $0x398] sm:$0xff]
  %v141 = vld [vmem:[%s1 + $0x3a0] sm:$0xff]
  %v142 = vld [vmem:[%s1 + $0x3a8] sm:$0xff]
  %v143 = vld [vmem:[%s1 + $0x3b0] sm:$0xff]
  %v144 = vld [vmem:[%s1 + $0x3b8] sm:$0xff]
  %v145 = vld [vmem:[%s1 + $0x3c0] sm:$0xff]
  %v146 = vld [vmem:[%s1 + $0x3c8] sm:$0xff]
  %v147 = vld [vmem:[%s1 + $0x3d0] sm:$0xff]
  %v148 = vld [vmem:[%s1 + $0x3d8] sm:$0xff]
  %v149 = vld [vmem:[%s1 + $0x3e0] sm:$0xff]
  %v150 = vld [vmem:[%s1 + $0x3e8] sm:$0xff]
  %v151 = vld [vmem:[%s1 + $0x3f0] sm:$0xff]
  %v152 = vld [vmem:[%s1 + $0x3f8] sm:$0xff]
  %v153 = vld [vmem:[%s1 + $0x400] sm:$0xff]
  %v154 = vld [vmem:[%s1 + $0x408] sm:$0xff]
  %v155 = vld [vmem:[%s1 + $0x410] sm:$0xff]
  %v156 = vld [vmem:[%s1 + $0x418] sm:$0xff]
  %v157 = vld [vmem:[%s1 + $0x420] sm:$0xff]
  %v158 = vld [vmem:[%s1 + $0x428] sm:$0xff]
  %v159 = vld [vmem:[%s1 + $0x430] sm:$0xff]
  %v160 = vld [vmem:[%s1 + $0x438] sm:$0xff]
  %v161 = vld [vmem:[%s1 + $0x440] sm:$0xff]
  %v162 = vld [vmem:[%s1 + $0x448] sm:$0xff]
  %v163 = vld [vmem:[%s1 + $0x450] sm:$0xff]
  %v164 = vld [vmem:[%s1 + $0x458] sm:$0xff]
  %v165 = vld [vmem:[%s1 + $0x460] sm:$0xff]
  %v166 = vld [vmem:[%s1 + $0x468] sm:$0xff]
  %v167 = vld [vmem:[%s1 + $0x470] sm:$0xff]
  %v168 = vld [vmem:[%s1 + $0x478] sm:$0xff]
  %v169 = vld [vmem:[%s1 + $0x480] sm:$0xff]
  %v170 = vld [vmem:[%s1 + $0x488] sm:$0xff]
  %v171 = vld [vmem:[%s1 + $0x490] sm:$0xff]
  %v172 = vld [vmem:[%s1 + $0x498] sm:$0xff]
  %v173 = vld [vmem:[%s1 + $0x4a0] sm:$0xff]
  %v174 = vld [vmem:[%s1 + $0x4a8] sm:$0xff]
  %v175 = vld [vmem:[%s1 + $0x4b0] sm:$0xff]
  %v176 = vld [vmem:[%s1 + $0x4b8] sm:$0xff]
  %v177 = vld [vmem:[%s1 + $0x4c0] sm:$0xff]
  %v178 = vld [vmem:[%s1 + $0x4c8] sm:$0xff]
  %v179 = vld [vmem:[%s1 + $0x4d0] sm:$0xff]
  %v180 = vld [vmem:[%s1 + $0x4d8] sm:$0xff]
  %v181 = vld [vmem:[%s1 + $0x4e0] sm:$0xff]
  %v182 = vld [vmem:[%s1 + $0x4e8] sm:$0xff]
  %v183 = vld [vmem:[%s1 + $0x4f0] sm:$0xff]
  %v184 = vld [vmem:[%s1 + $0x4f8] sm:$0xff]
  %v185 = vld [vmem:[%s1 + $0x500] sm:$0xff]
  %v186 = vld [vmem:[%s1 + $0x508] sm:$0xff]
  %v187 = vld [vmem:[%s1 + $0x510] sm:$0xff]
  %v188 = vld [vmem:[%s1 + $0x518] sm:$0xff]
  %v189 = vld [vmem:[%s1 + $0x520] sm:$0xff]
  %v190 = vld [vmem:[%s1 + $0x528] sm:$0xff]
  %v191 = vld [vmem:[%s1 + $0x530] sm:$0xff]
  %v192 = vld [vmem:[%s1 + $0x538] sm:$0xff]
  %v193 = vld [vmem:[%s1 + $0x540] sm:$0xff]
  %v194 = vld [vmem:[%s1 + $0x548] sm:$0xff]
  %v195 = vld [vmem:[%s1 + $0x550] sm:$0xff]
  %v196 = vld [vmem:[%s1 + $0x558] sm:$0xff]
  %v197 = vld [vmem:[%s1 + $0x560] sm:$0xff]
  %v198 = vld [vmem:[%s1 + $0x568] sm:$0xff]
  %v199 = vld [vmem:[%s1 + $0x570] sm:$0xff]
  %v200 = vld [vmem:[%s1 + $0x578] sm:$0xff]
  %v201 = vld [vmem:[%s1 + $0x580] sm:$0xff]
  %v202 = vld [vmem:[%s1 + $0x588] sm:$0xff]
  %v203 = vld [vmem:[%s1 + $0x590] sm:$0xff]
  %v204 = vld [vmem:[%s1 + $0x598] sm:$0xff]
  %v205 = vld [vmem:[%s1 + $0x5a0] sm:$0xff]
  %v206 = vld [vmem:[%s1 + $0x5a8] sm:$0xff]
  %v207 = vld [vmem:[%s1 + $0x5b0] sm:$0xff]
  %v208 = vld [vmem:[%s1 + $0x5b8] sm:$0xff]
  %v209 = vld [vmem:[%s1 + $0x5c0] sm:$0xff]
  %v210 = vld [vmem:[%s1 + $0x5c8] sm:$0xff]
  %v211 = vld [vmem:[%s1 + $0x5d0] sm:$0xff]
  %v212 = vld [vmem:[%s1 + $0x5d8] sm:$0xff]
  %v213 = vld [vmem:[%s1 + $0x5e0] sm:$0xff]
  %v214 = vld [vmem:[%s1 + $0x5e8] sm:$0xff]
  %v215 = vld [vmem:[%s1 + $0x5f0] sm:$0xff]
  %v216 = vld [vmem:[%s1 + $0x5f8] sm:$0xff]
  %v217 = vld [vmem:[%s1 + $0x600] sm:$0xff]
  %v218 = vld [vmem:[%s1 + $0x608] sm:$0xff]
  %v219 = vld [vmem:[%s1 + $0x610] sm:$0xff]
  %v220 = vld [vmem:[%s1 + $0x618] sm:$0xff]
  %v221 = vld [vmem:[%s1 + $0x620] sm:$0xff]
  %v222 = vld [vmem:[%s1 + $0x628] sm:$0xff]
  %v223 = vld [vmem:[%s1 + $0x630] sm:$0xff]
  %v224 = vld [vmem:[%s1 + $0x638] sm:$0xff]
  %v225 = vld [vmem:[%s1 + $0x640] sm:$0xff]
  %v226 = vld [vmem:[%s1 + $0x648] sm:$0xff]
  %v227 = vld [vmem:[%s1 + $0x650] sm:$0xff]
  %v228 = vld [vmem:[%s1 + $0x658] sm:$0xff]
  %v229 = vld [vmem:[%s1 + $0x660] sm:$0xff]
  %v230 = vld [vmem:[%s1 + $0x668] sm:$0xff]
  %v231 = vld [vmem:[%s1 + $0x670] sm:$0xff]
  %v232 = vld [vmem:[%s1 + $0x678] sm:$0xff]
  %v233 = vld [vmem:[%s1 + $0x680] sm:$0xff]
  %v234 = vld [vmem:[%s1 + $0x688] sm:$0xff]
  %v235 = vld [vmem:[%s1 + $0x690] sm:$0xff]
  %v236 = vld [vmem:[%s1 + $0x698] sm:$0xff]
  %v237 = vld [vmem:[%s1 + $0x6a0] sm:$0xff]
  %v238 = vld [vmem:[%s1 + $0x6a8] sm:$0xff]
  %v239 = vld [vmem:[%s1 + $0x6b0] sm:$0xff]
  %v240 = vld [vmem:[%s1 + $0x6b8] sm:$0xff]
  %v241 = vld [vmem:[%s1 + $0x6c0] sm:$0xff]
  %v242 = vld [vmem:[%s1 + $0x6c8] sm:$0xff]
  %v243 = vld [vmem:[%s1 + $0x6d0] sm:$0xff]
  %v244 = vld [vmem:[%s1 + $0x6d8] sm:$0xff]
  %v245 = vld [vmem:[%s1 + $0x6e0] sm:$0xff]
  %v246 = vld [vmem:[%s1 + $0x6e8] sm:$0xff]
  %v247 = vld [vmem:[%s1 + $0x6f0] sm:$0xff]
  %v248 = vld [vmem:[%s1 + $0x6f8] sm:$0xff]
  %v249 = vld [vmem:[%s1 + $0x700] sm:$0xff]
  %v250 = vld [vmem:[%s1 + $0x708] sm:$0xff]
  %v251 = vld [vmem:[%s1 + $0x710] sm:$0xff]
  %v252 = vld [vmem:[%s1 + $0x718] sm:$0xff]
  %v253 = vld [vmem:[%s1 + $0x720] sm:$0xff]
  %v254 = vld [vmem:[%s1 + $0x728] sm:$0xff]
  %v255 = vld [vmem:[%s1 + $0x730] sm:$0xff]
  %v256 = vld [vmem:[%s1 + $0x738] sm:$0xff]
  %v257 = vld [vmem:[%s1 + $0x740] sm:$0xff]
  %v258 = vld [vmem:[%s1 + $0x748] sm:$0xff]
  %v259 = vld [vmem:[%s1 + $0x750] sm:$0xff]
  %v260 = vld [vmem:[%s1 + $0x758] sm:$0xff]
  %v261 = vld [vmem:[%s1 + $0x760] sm:$0xff]
  %v262 = vld [vmem:[%s1 + $0x768] sm:$0xff]
  %v263 = vld [vmem:[%s1 + $0x770] sm:$0xff]
  %v264 = vld [vmem:[%s1 + $0x778] sm:$0xff]
  %v265 = vld [vmem:[%s1 + $0x780] sm:$0xff]
  %v266 = vld [vmem:[%s1 + $0x788] sm:$0xff]
  %v267 = vld [vmem:[%s1 + $0x790] sm:$0xff]
  %v268 = vld [vmem:[%s1 + $0x798] sm:$0xff]
  %v269 = vld [vmem:[%s1 + $0x7a0] sm:$0xff]
  %v270 = vld [vmem:[%s1 + $0x7a8] sm:$0xff]
  %v271 = vld [vmem:[%s1 + $0x7b0] sm:$0xff]
  %v272 = vld [vmem:[%s1 + $0x7b8] sm:$0xff]
  %v273 = vld [vmem:[%s1 + $0x7c0] sm:$0xff]
  %v274 = vld [vmem:[%s1 + $0x7c8] sm:$0xff]
  %v275 = vld [vmem:[%s1 + $0x7d0] sm:$0xff]
  %v276 = vld [vmem:[%s1 + $0x7d8] sm:$0xff]
  %v277 = vld [vmem:[%s1 + $0x7e0] sm:$0xff]
  %v278 = vld [vmem:[%s1 + $0x7e8] sm:$0xff]
  %v279 = vld [vmem:[%s1 + $0x7f0] sm:$0xff]
  %v280 = vld [vmem:[%s1 + $0x7f8] sm:$0xff]
  %v289 = vunpack.c.l.b16 %v17
  %v290 = vunpack.c.h.b16 %v17
  %v291 = vunpack.c.l.b16 %v18
  %v292 = vunpack.c.h.b16 %v18
  %v293 = vunpack.c.l.b16 %v19
  %v294 = vunpack.c.h.b16 %v19
  %v295 = vunpack.c.l.b16 %v20
  %v296 = vunpack.c.h.b16 %v20
  %v297 = vunpack.c.l.b16 %v21
  %v298 = vunpack.c.h.b16 %v21
  %v299 = vunpack.c.l.b16 %v22
  %v300 = vunpack.c.h.b16 %v22
  %v301 = vunpack.c.l.b16 %v23
  %v302 = vunpack.c.h.b16 %v23
  %v303 = vunpack.c.l.b16 %v24
  %v304 = vunpack.c.h.b16 %v24
  %v305 = vpack.c.b16 %v289, %v289
  %v306 = vpack.c.b16 %v290, %v290
  %v307 = vpack.c.b16 %v291, %v291
  %v308 = vpack.c.b16 %v292, %v292
  %v309 = vpack.c.b16 %v293, %v293
  %v310 = vpack.c.b16 %v294, %v294
  %v311 = vpack.c.b16 %v295, %v295
  %v312 = vpack.c.b16 %v296, %v296
  %v313 = vpack.c.b16 %v297, %v297
  %v314 = vpack.c.b16 %v298, %v298
  %v315 = vpack.c.b16 %v299, %v299
  %v316 = vpack.c.b16 %v300, %v300
  %v317 = vpack.c.b16 %v301, %v301
  %v318 = vpack.c.b16 %v302, %v302
  %v319 = vpack.c.b16 %v303, %v303
  %v320 = vpack.c.b16 %v304, %v304
  %v593 = vunpack.c.l.b16 %v25
  %v594 = vunpack.c.h.b16 %v25
  %v595 = vunpack.c.l.b16 %v26
  %v596 = vunpack.c.h.b16 %v26
  %v597 = vunpack.c.l.b16 %v27
  %v598 = vunpack.c.h.b16 %v27
  %v599 = vunpack.c.l.b16 %v28
  %v600 = vunpack.c.h.b16 %v28
  %v601 = vunpack.c.l.b16 %v29
  %v602 = vunpack.c.h.b16 %v29
  %v603 = vunpack.c.l.b16 %v30
  %v604 = vunpack.c.h.b16 %v30
  %v605 = vunpack.c.l.b16 %v31
  %v606 = vunpack.c.h.b16 %v31
  %v607 = vunpack.c.l.b16 %v32
  %v608 = vunpack.c.h.b16 %v32
  %v609 = vunpack.c.l.b16 %v33
  %v610 = vunpack.c.h.b16 %v33
  %v611 = vunpack.c.l.b16 %v34
  %v612 = vunpack.c.h.b16 %v34
  %v613 = vunpack.c.l.b16 %v35
  %v614 = vunpack.c.h.b16 %v35
  %v615 = vunpack.c.l.b16 %v36
  %v616 = vunpack.c.h.b16 %v36
  %v617 = vunpack.c.l.b16 %v37
  %v618 = vunpack.c.h.b16 %v37
  %v619 = vunpack.c.l.b16 %v38
  %v620 = vunpack.c.h.b16 %v38
  %v621 = vunpack.c.l.b16 %v39
  %v622 = vunpack.c.h.b16 %v39
  %v623 = vunpack.c.l.b16 %v40
  %v624 = vunpack.c.h.b16 %v40
  %v625 = vunpack.c.l.b16 %v41
  %v626 = vunpack.c.h.b16 %v41
  %v627 = vunpack.c.l.b16 %v42
  %v628 = vunpack.c.h.b16 %v42
  %v629 = vunpack.c.l.b16 %v43
  %v630 = vunpack.c.h.b16 %v43
  %v631 = vunpack.c.l.b16 %v44
  %v632 = vunpack.c.h.b16 %v44
  %v633 = vunpack.c.l.b16 %v45
  %v634 = vunpack.c.h.b16 %v45
  %v635 = vunpack.c.l.b16 %v46
  %v636 = vunpack.c.h.b16 %v46
  %v637 = vunpack.c.l.b16 %v47
  %v638 = vunpack.c.h.b16 %v47
  %v639 = vunpack.c.l.b16 %v48
  %v640 = vunpack.c.h.b16 %v48
  %v641 = vunpack.c.l.b16 %v49
  %v642 = vunpack.c.h.b16 %v49
  %v643 = vunpack.c.l.b16 %v50
  %v644 = vunpack.c.h.b16 %v50
  %v645 = vunpack.c.l.b16 %v51
  %v646 = vunpack.c.h.b16 %v51
  %v647 = vunpack.c.l.b16 %v52
  %v648 = vunpack.c.h.b16 %v52
  %v649 = vunpack.c.l.b16 %v53
  %v650 = vunpack.c.h.b16 %v53
  %v651 = vunpack.c.l.b16 %v54
  %v652 = vunpack.c.h.b16 %v54
  %v653 = vunpack.c.l.b16 %v55
  %v654 = vunpack.c.h.b16 %v55
  %v655 = vunpack.c.l.b16 %v56
  %v656 = vunpack.c.h.b16 %v56
  %v657 = vunpack.c.l.b16 %v57
  %v658 = vunpack.c.h.b16 %v57
  %v659 = vunpack.c.l.b16 %v58
  %v660 = vunpack.c.h.b16 %v58
  %v661 = vunpack.c.l.b16 %v59
  %v662 = vunpack.c.h.b16 %v59
  %v663 = vunpack.c.l.b16 %v60
  %v664 = vunpack.c.h.b16 %v60
  %v665 = vunpack.c.l.b16 %v61
  %v666 = vunpack.c.h.b16 %v61
  %v667 = vunpack.c.l.b16 %v62
  %v668 = vunpack.c.h.b16 %v62
  %v669 = vunpack.c.l.b16 %v63
  %v670 = vunpack.c.h.b16 %v63
  %v671 = vunpack.c.l.b16 %v64
  %v672 = vunpack.c.h.b16 %v64
  %v673 = vunpack.c.l.b16 %v65
  %v674 = vunpack.c.h.b16 %v65
  %v675 = vunpack.c.l.b16 %v66
  %v676 = vunpack.c.h.b16 %v66
  %v677 = vunpack.c.l.b16 %v67
  %v678 = vunpack.c.h.b16 %v67
  %v679 = vunpack.c.l.b16 %v68
  %v680 = vunpack.c.h.b16 %v68
  %v681 = vunpack.c.l.b16 %v69
  %v682 = vunpack.c.h.b16 %v69
  %v683 = vunpack.c.l.b16 %v70
  %v684 = vunpack.c.h.b16 %v70
  %v685 = vunpack.c.l.b16 %v71
  %v686 = vunpack.c.h.b16 %v71
  %v687 = vunpack.c.l.b16 %v72
  %v688 = vunpack.c.h.b16 %v72
  %v689 = vunpack.c.l.b16 %v73
  %v690 = vunpack.c.h.b16 %v73
  %v691 = vunpack.c.l.b16 %v74
  %v692 = vunpack.c.h.b16 %v74
  %v693 = vunpack.c.l.b16 %v75
  %v694 = vunpack.c.h.b16 %v75
  %v695 = vunpack.c.l.b16 %v76
  %v696 = vunpack.c.h.b16 %v76
  %v697 = vunpack.c.l.b16 %v77
  %v698 = vunpack.c.h.b16 %v77
  %v699 = vunpack.c.l.b16 %v78
  %v700 = vunpack.c.h.b16 %v78
  %v701 = vunpack.c.l.b16 %v79
  %v702 = vunpack.c.h.b16 %v79
  %v703 = vunpack.c.l.b16 %v80
  %v704 = vunpack.c.h.b16 %v80
  %v705 = vunpack.c.l.b16 %v81
  %v706 = vunpack.c.h.b16 %v81
  %v707 = vunpack.c.l.b16 %v82
  %v708 = vunpack.c.h.b16 %v82
  %v709 = vunpack.c.l.b16 %v83
  %v710 = vunpack.c.h.b16 %v83
  %v711 = vunpack.c.l.b16 %v84
  %v712 = vunpack.c.h.b16 %v84
  %v713 = vunpack.c.l.b16 %v85
  %v714 = vunpack.c.h.b16 %v85
  %v715 = vunpack.c.l.b16 %v86
  %v716 = vunpack.c.h.b16 %v86
  %v717 = vunpack.c.l.b16 %v87
  %v718 = vunpack.c.h.b16 %v87
  %v719 = vunpack.c.l.b16 %v88
  %v720 = vunpack.c.h.b16 %v88
  %v721 = vunpack.c.l.b16 %v89
  %v722 = vunpack.c.h.b16 %v89
  %v723 = vunpack.c.l.b16 %v90
  %v724 = vunpack.c.h.b16 %v90
  %v725 = vunpack.c.l.b16 %v91
  %v726 = vunpack.c.h.b16 %v91
  %v727 = vunpack.c.l.b16 %v92
  %v728 = vunpack.c.h.b16 %v92
  %v729 = vunpack.c.l.b16 %v93
  %v730 = vunpack.c.h.b16 %v93
  %v731 = vunpack.c.l.b16 %v94
  %v732 = vunpack.c.h.b16 %v94
  %v733 = vunpack.c.l.b16 %v95
  %v734 = vunpack.c.h.b16 %v95
  %v735 = vunpack.c.l.b16 %v96
  %v736 = vunpack.c.h.b16 %v96
  %v737 = vunpack.c.l.b16 %v97
  %v738 = vunpack.c.h.b16 %v97
  %v739 = vunpack.c.l.b16 %v98
  %v740 = vunpack.c.h.b16 %v98
  %v741 = vunpack.c.l.b16 %v99
  %v742 = vunpack.c.h.b16 %v99
  %v743 = vunpack.c.l.b16 %v100
  %v744 = vunpack.c.h.b16 %v100
  %v745 = vunpack.c.l.b16 %v101
  %v746 = vunpack.c.h.b16 %v101
  %v747 = vunpack.c.l.b16 %v102
  %v748 = vunpack.c.h.b16 %v102
  %v749 = vunpack.c.l.b16 %v103
  %v750 = vunpack.c.h.b16 %v103
  %v751 = vunpack.c.l.b16 %v104
  %v752 = vunpack.c.h.b16 %v104
  %v753 = vunpack.c.l.b16 %v105
  %v754 = vunpack.c.h.b16 %v105
  %v755 = vunpack.c.l.b16 %v106
  %v756 = vunpack.c.h.b16 %v106
  %v757 = vunpack.c.l.b16 %v107
  %v758 = vunpack.c.h.b16 %v107
  %v759 = vunpack.c.l.b16 %v108
  %v760 = vunpack.c.h.b16 %v108
  %v761 = vunpack.c.l.b16 %v109
  %v762 = vunpack.c.h.b16 %v109
  %v763 = vunpack.c.l.b16 %v110
  %v764 = vunpack.c.h.b16 %v110
  %v765 = vunpack.c.l.b16 %v111
  %v766 = vunpack.c.h.b16 %v111
  %v767 = vunpack.c.l.b16 %v112
  %v768 = vunpack.c.h.b16 %v112
  %v769 = vunpack.c.l.b16 %v113
  %v770 = vunpack.c.h.b16 %v113
  %v771 = vunpack.c.l.b16 %v114
  %v772 = vunpack.c.h.b16 %v114
  %v773 = vunpack.c.l.b16 %v115
  %v774 = vunpack.c.h.b16 %v115
  %v775 = vunpack.c.l.b16 %v116
  %v776 = vunpack.c.h.b16 %v116
  %v777 = vunpack.c.l.b16 %v117
  %v778 = vunpack.c.h.b16 %v117
  %v779 = vunpack.c.l.b16 %v118
  %v780 = vunpack.c.h.b16 %v118
  %v781 = vunpack.c.l.b16 %v119
  %v782 = vunpack.c.h.b16 %v119
  %v783 = vunpack.c.l.b16 %v120
  %v784 = vunpack.c.h.b16 %v120
  %v785 = vunpack.c.l.b16 %v121
  %v786 = vunpack.c.h.b16 %v121
  %v787 = vunpack.c.l.b16 %v122
  %v788 = vunpack.c.h.b16 %v122
  %v789 = vunpack.c.l.b16 %v123
  %v790 = vunpack.c.h.b16 %v123
  %v791 = vunpack.c.l.b16 %v124
  %v792 = vunpack.c.h.b16 %v124
  %v793 = vunpack.c.l.b16 %v125
  %v794 = vunpack.c.h.b16 %v125
  %v795 = vunpack.c.l.b16 %v126
  %v796 = vunpack.c.h.b16 %v126
  %v797 = vunpack.c.l.b16 %v127
  %v798 = vunpack.c.h.b16 %v127
  %v799 = vunpack.c.l.b16 %v128
  %v800 = vunpack.c.h.b16 %v128
  %v801 = vunpack.c.l.b16 %v129
  %v802 = vunpack.c.h.b16 %v129
  %v803 = vunpack.c.l.b16 %v130
  %v804 = vunpack.c.h.b16 %v130
  %v805 = vunpack.c.l.b16 %v131
  %v806 = vunpack.c.h.b16 %v131
  %v807 = vunpack.c.l.b16 %v132
  %v808 = vunpack.c.h.b16 %v132
  %v809 = vunpack.c.l.b16 %v133
  %v810 = vunpack.c.h.b16 %v133
  %v811 = vunpack.c.l.b16 %v134
  %v812 = vunpack.c.h.b16 %v134
  %v813 = vunpack.c.l.b16 %v135
  %v814 = vunpack.c.h.b16 %v135
  %v815 = vunpack.c.l.b16 %v136
  %v816 = vunpack.c.h.b16 %v136
  %v817 = vunpack.c.l.b16 %v137
  %v818 = vunpack.c.h.b16 %v137
  %v819 = vunpack.c.l.b16 %v138
  %v820 = vunpack.c.h.b16 %v138
  %v821 = vunpack.c.l.b16 %v139
  %v822 = vunpack.c.h.b16 %v139
  %v823 = vunpack.c.l.b16 %v140
  %v824 = vunpack.c.h.b16 %v140
  %v825 = vunpack.c.l.b16 %v141
  %v826 = vunpack.c.h.b16 %v141
  %v827 = vunpack.c.l.b16 %v142
  %v828 = vunpack.c.h.b16 %v142
  %v829 = vunpack.c.l.b16 %v143
  %v830 = vunpack.c.h.b16 %v143
  %v831 = vunpack.c.l.b16 %v144
  %v832 = vunpack.c.h.b16 %v144
  %v833 = vunpack.c.l.b16 %v145
  %v834 = vunpack.c.h.b16 %v145
  %v835 = vunpack.c.l.b16 %v146
  %v836 = vunpack.c.h.b16 %v146
  %v837 = vunpack.c.l.b16 %v147
  %v838 = vunpack.c.h.b16 %v147
  %v839 = vunpack.c.l.b16 %v148
  %v840 = vunpack.c.h.b16 %v148
  %v841 = vunpack.c.l.b16 %v149
  %v842 = vunpack.c.h.b16 %v149
  %v843 = vunpack.c.l.b16 %v150
  %v844 = vunpack.c.h.b16 %v150
  %v845 = vunpack.c.l.b16 %v151
  %v846 = vunpack.c.h.b16 %v151
  %v847 = vunpack.c.l.b16 %v152
  %v848 = vunpack.c.h.b16 %v152
  %v849 = vunpack.c.l.b16 %v153
  %v850 = vunpack.c.h.b16 %v153
  %v851 = vunpack.c.l.b16 %v154
  %v852 = vunpack.c.h.b16 %v154
  %v853 = vunpack.c.l.b16 %v155
  %v854 = vunpack.c.h.b16 %v155
  %v855 = vunpack.c.l.b16 %v156
  %v856 = vunpack.c.h.b16 %v156
  %v857 = vunpack.c.l.b16 %v157
  %v858 = vunpack.c.h.b16 %v157
  %v859 = vunpack.c.l.b16 %v158
  %v860 = vunpack.c.h.b16 %v158
  %v861 = vunpack.c.l.b16 %v159
  %v862 = vunpack.c.h.b16 %v159
  %v863 = vunpack.c.l.b16 %v160
  %v864 = vunpack.c.h.b16 %v160
  %v865 = vunpack.c.l.b16 %v161
  %v866 = vunpack.c.h.b16 %v161
  %v867 = vunpack.c.l.b16 %v162
  %v868 = vunpack.c.h.b16 %v162
  %v869 = vunpack.c.l.b16 %v163
  %v870 = vunpack.c.h.b16 %v163
  %v871 = vunpack.c.l.b16 %v164
  %v872 = vunpack.c.h.b16 %v164
  %v873 = vunpack.c.l.b16 %v165
  %v874 = vunpack.c.h.b16 %v165
  %v875 = vunpack.c.l.b16 %v166
  %v876 = vunpack.c.h.b16 %v166
  %v877 = vunpack.c.l.b16 %v167
  %v878 = vunpack.c.h.b16 %v167
  %v879 = vunpack.c.l.b16 %v168
  %v880 = vunpack.c.h.b16 %v168
  %v881 = vunpack.c.l.b16 %v169
  %v882 = vunpack.c.h.b16 %v169
  %v883 = vunpack.c.l.b16 %v170
  %v884 = vunpack.c.h.b16 %v170
  %v885 = vunpack.c.l.b16 %v171
  %v886 = vunpack.c.h.b16 %v171
  %v887 = vunpack.c.l.b16 %v172
  %v888 = vunpack.c.h.b16 %v172
  %v889 = vunpack.c.l.b16 %v173
  %v890 = vunpack.c.h.b16 %v173
  %v891 = vunpack.c.l.b16 %v174
  %v892 = vunpack.c.h.b16 %v174
  %v893 = vunpack.c.l.b16 %v175
  %v894 = vunpack.c.h.b16 %v175
  %v895 = vunpack.c.l.b16 %v176
  %v896 = vunpack.c.h.b16 %v176
  %v897 = vunpack.c.l.b16 %v177
  %v898 = vunpack.c.h.b16 %v177
  %v899 = vunpack.c.l.b16 %v178
  %v900 = vunpack.c.h.b16 %v178
  %v901 = vunpack.c.l.b16 %v179
  %v902 = vunpack.c.h.b16 %v179
  %v903 = vunpack.c.l.b16 %v180
  %v904 = vunpack.c.h.b16 %v180
  %v905 = vunpack.c.l.b16 %v181
  %v906 = vunpack.c.h.b16 %v181
  %v907 = vunpack.c.l.b16 %v182
  %v908 = vunpack.c.h.b16 %v182
  %v909 = vunpack.c.l.b16 %v183
  %v910 = vunpack.c.h.b16 %v183
  %v911 = vunpack.c.l.b16 %v184
  %v912 = vunpack.c.h.b16 %v184
  %v913 = vunpack.c.l.b16 %v185
  %v914 = vunpack.c.h.b16 %v185
  %v915 = vunpack.c.l.b16 %v186
  %v916 = vunpack.c.h.b16 %v186
  %v917 = vunpack.c.l.b16 %v187
  %v918 = vunpack.c.h.b16 %v187
  %v919 = vunpack.c.l.b16 %v188
  %v920 = vunpack.c.h.b16 %v188
  %v921 = vunpack.c.l.b16 %v189
  %v922 = vunpack.c.h.b16 %v189
  %v923 = vunpack.c.l.b16 %v190
  %v924 = vunpack.c.h.b16 %v190
  %v925 = vunpack.c.l.b16 %v191
  %v926 = vunpack.c.h.b16 %v191
  %v927 = vunpack.c.l.b16 %v192
  %v928 = vunpack.c.h.b16 %v192
  %v929 = vunpack.c.l.b16 %v193
  %v930 = vunpack.c.h.b16 %v193
  %v931 = vunpack.c.l.b16 %v194
  %v932 = vunpack.c.h.b16 %v194
  %v933 = vunpack.c.l.b16 %v195
  %v934 = vunpack.c.h.b16 %v195
  %v935 = vunpack.c.l.b16 %v196
  %v936 = vunpack.c.h.b16 %v196
  %v937 = vunpack.c.l.b16 %v197
  %v938 = vunpack.c.h.b16 %v197
  %v939 = vunpack.c.l.b16 %v198
  %v940 = vunpack.c.h.b16 %v198
  %v941 = vunpack.c.l.b16 %v199
  %v942 = vunpack.c.h.b16 %v199
  %v943 = vunpack.c.l.b16 %v200
  %v944 = vunpack.c.h.b16 %v200
  %v945 = vunpack.c.l.b16 %v201
  %v946 = vunpack.c.h.b16 %v201
  %v947 = vunpack.c.l.b16 %v202
  %v948 = vunpack.c.h.b16 %v202
  %v949 = vunpack.c.l.b16 %v203
  %v950 = vunpack.c.h.b16 %v203
  %v951 = vunpack.c.l.b16 %v204
  %v952 = vunpack.c.h.b16 %v204
  %v953 = vunpack.c.l.b16 %v205
  %v954 = vunpack.c.h.b16 %v205
  %v955 = vunpack.c.l.b16 %v206
  %v956 = vunpack.c.h.b16 %v206
  %v957 = vunpack.c.l.b16 %v207
  %v958 = vunpack.c.h.b16 %v207
  %v959 = vunpack.c.l.b16 %v208
  %v960 = vunpack.c.h.b16 %v208
  %v961 = vunpack.c.l.b16 %v209
  %v962 = vunpack.c.h.b16 %v209
  %v963 = vunpack.c.l.b16 %v210
  %v964 = vunpack.c.h.b16 %v210
  %v965 = vunpack.c.l.b16 %v211
  %v966 = vunpack.c.h.b16 %v211
  %v967 = vunpack.c.l.b16 %v212
  %v968 = vunpack.c.h.b16 %v212
  %v969 = vunpack.c.l.b16 %v213
  %v970 = vunpack.c.h.b16 %v213
  %v971 = vunpack.c.l.b16 %v214
  %v972 = vunpack.c.h.b16 %v214
  %v973 = vunpack.c.l.b16 %v215
  %v974 = vunpack.c.h.b16 %v215
  %v975 = vunpack.c.l.b16 %v216
  %v976 = vunpack.c.h.b16 %v216
  %v977 = vunpack.c.l.b16 %v217
  %v978 = vunpack.c.h.b16 %v217
  %v979 = vunpack.c.l.b16 %v218
  %v980 = vunpack.c.h.b16 %v218
  %v981 = vunpack.c.l.b16 %v219
  %v982 = vunpack.c.h.b16 %v219
  %v983 = vunpack.c.l.b16 %v220
  %v984 = vunpack.c.h.b16 %v220
  %v985 = vunpack.c.l.b16 %v221
  %v986 = vunpack.c.h.b16 %v221
  %v987 = vunpack.c.l.b16 %v222
  %v988 = vunpack.c.h.b16 %v222
  %v989 = vunpack.c.l.b16 %v223
  %v990 = vunpack.c.h.b16 %v223
  %v991 = vunpack.c.l.b16 %v224
  %v992 = vunpack.c.h.b16 %v224
  %v993 = vunpack.c.l.b16 %v225
  %v994 = vunpack.c.h.b16 %v225
  %v995 = vunpack.c.l.b16 %v226
  %v996 = vunpack.c.h.b16 %v226
  %v997 = vunpack.c.l.b16 %v227
  %v998 = vunpack.c.h.b16 %v227
  %v999 = vunpack.c.l.b16 %v228
  %v1000 = vunpack.c.h.b16 %v228
  %v1001 = vunpack.c.l.b16 %v229
  %v1002 = vunpack.c.h.b16 %v229
  %v1003 = vunpack.c.l.b16 %v230
  %v1004 = vunpack.c.h.b16 %v230
  %v1005 = vunpack.c.l.b16 %v231
  %v1006 = vunpack.c.h.b16 %v231
  %v1007 = vunpack.c.l.b16 %v232
  %v1008 = vunpack.c.h.b16 %v232
  %v1009 = vunpack.c.l.b16 %v233
  %v1010 = vunpack.c.h.b16 %v233
  %v1011 = vunpack.c.l.b16 %v234
  %v1012 = vunpack.c.h.b16 %v234
  %v1013 = vunpack.c.l.b16 %v235
  %v1014 = vunpack.c.h.b16 %v235
  %v1015 = vunpack.c.l.b16 %v236
  %v1016 = vunpack.c.h.b16 %v236
  %v1017 = vunpack.c.l.b16 %v237
  %v1018 = vunpack.c.h.b16 %v237
  %v1019 = vunpack.c.l.b16 %v238
  %v1020 = vunpack.c.h.b16 %v238
  %v1021 = vunpack.c.l.b16 %v239
  %v1022 = vunpack.c.h.b16 %v239
  %v1023 = vunpack.c.l.b16 %v240
  %v1024 = vunpack.c.h.b16 %v240
  %v1025 = vunpack.c.l.b16 %v241
  %v1026 = vunpack.c.h.b16 %v241
  %v1027 = vunpack.c.l.b16 %v242
  %v1028 = vunpack.c.h.b16 %v242
  %v1029 = vunpack.c.l.b16 %v243
  %v1030 = vunpack.c.h.b16 %v243
  %v1031 = vunpack.c.l.b16 %v244
  %v1032 = vunpack.c.h.b16 %v244
  %v1033 = vunpack.c.l.b16 %v245
  %v1034 = vunpack.c.h.b16 %v245
  %v1035 = vunpack.c.l.b16 %v246
  %v1036 = vunpack.c.h.b16 %v246
  %v1037 = vunpack.c.l.b16 %v247
  %v1038 = vunpack.c.h.b16 %v247
  %v1039 = vunpack.c.l.b16 %v248
  %v1040 = vunpack.c.h.b16 %v248
  %v1041 = vunpack.c.l.b16 %v249
  %v1042 = vunpack.c.h.b16 %v249
  %v1043 = vunpack.c.l.b16 %v250
  %v1044 = vunpack.c.h.b16 %v250
  %v1045 = vunpack.c.l.b16 %v251
  %v1046 = vunpack.c.h.b16 %v251
  %v1047 = vunpack.c.l.b16 %v252
  %v1048 = vunpack.c.h.b16 %v252
  %v1049 = vunpack.c.l.b16 %v253
  %v1050 = vunpack.c.h.b16 %v253
  %v1051 = vunpack.c.l.b16 %v254
  %v1052 = vunpack.c.h.b16 %v254
  %v1053 = vunpack.c.l.b16 %v255
  %v1054 = vunpack.c.h.b16 %v255
  %v1055 = vunpack.c.l.b16 %v256
  %v1056 = vunpack.c.h.b16 %v256
  %v1057 = vunpack.c.l.b16 %v257
  %v1058 = vunpack.c.h.b16 %v257
  %v1059 = vunpack.c.l.b16 %v258
  %v1060 = vunpack.c.h.b16 %v258
  %v1061 = vunpack.c.l.b16 %v259
  %v1062 = vunpack.c.h.b16 %v259
  %v1063 = vunpack.c.l.b16 %v260
  %v1064 = vunpack.c.h.b16 %v260
  %v1065 = vunpack.c.l.b16 %v261
  %v1066 = vunpack.c.h.b16 %v261
  %v1067 = vunpack.c.l.b16 %v262
  %v1068 = vunpack.c.h.b16 %v262
  %v1069 = vunpack.c.l.b16 %v263
  %v1070 = vunpack.c.h.b16 %v263
  %v1071 = vunpack.c.l.b16 %v264
  %v1072 = vunpack.c.h.b16 %v264
  %v1073 = vunpack.c.l.b16 %v265
  %v1074 = vunpack.c.h.b16 %v265
  %v1075 = vunpack.c.l.b16 %v266
  %v1076 = vunpack.c.h.b16 %v266
  %v1077 = vunpack.c.l.b16 %v267
  %v1078 = vunpack.c.h.b16 %v267
  %v1079 = vunpack.c.l.b16 %v268
  %v1080 = vunpack.c.h.b16 %v268
  %v1081 = vunpack.c.l.b16 %v269
  %v1082 = vunpack.c.h.b16 %v269
  %v1083 = vunpack.c.l.b16 %v270
  %v1084 = vunpack.c.h.b16 %v270
  %v1085 = vunpack.c.l.b16 %v271
  %v1086 = vunpack.c.h.b16 %v271
  %v1087 = vunpack.c.l.b16 %v272
  %v1088 = vunpack.c.h.b16 %v272
  %v1089 = vunpack.c.l.b16 %v273
  %v1090 = vunpack.c.h.b16 %v273
  %v1091 = vunpack.c.l.b16 %v274
  %v1092 = vunpack.c.h.b16 %v274
  %v1093 = vunpack.c.l.b16 %v275
  %v1094 = vunpack.c.h.b16 %v275
  %v1095 = vunpack.c.l.b16 %v276
  %v1096 = vunpack.c.h.b16 %v276
  %v1097 = vunpack.c.l.b16 %v277
  %v1098 = vunpack.c.h.b16 %v277
  %v1099 = vunpack.c.l.b16 %v278
  %v1100 = vunpack.c.h.b16 %v278
  %v1101 = vunpack.c.l.b16 %v279
  %v1102 = vunpack.c.h.b16 %v279
  %v1103 = vunpack.c.l.b16 %v280
  %v1104 = vunpack.c.h.b16 %v280
  %v1105 = vpack.c.b16 %v595, %v593
  %v1106 = vpack.c.b16 %v596, %v594
  %v1107 = vpack.c.b16 %v599, %v597
  %v1108 = vpack.c.b16 %v600, %v598
  %v1109 = vpack.c.b16 %v603, %v601
  %v1110 = vpack.c.b16 %v604, %v602
  %v1111 = vpack.c.b16 %v607, %v605
  %v1112 = vpack.c.b16 %v608, %v606
  %v1113 = vpack.c.b16 %v611, %v609
  %v1114 = vpack.c.b16 %v612, %v610
  %v1115 = vpack.c.b16 %v615, %v613
  %v1116 = vpack.c.b16 %v616, %v614
  %v1117 = vpack.c.b16 %v619, %v617
  %v1118 = vpack.c.b16 %v620, %v618
  %v1119 = vpack.c.b16 %v623, %v621
  %v1120 = vpack.c.b16 %v624, %v622
  %v1121 = vpack.c.b16 %v627, %v625
  %v1122 = vpack.c.b16 %v628, %v626
  %v1123 = vpack.c.b16 %v631, %v629
  %v1124 = vpack.c.b16 %v632, %v630
  %v1125 = vpack.c.b16 %v635, %v633
  %v1126 = vpack.c.b16 %v636, %v634
  %v1127 = vpack.c.b16 %v639, %v637
  %v1128 = vpack.c.b16 %v640, %v638
  %v1129 = vpack.c.b16 %v643, %v641
  %v1130 = vpack.c.b16 %v644, %v642
  %v1131 = vpack.c.b16 %v647, %v645
  %v1132 = vpack.c.b16 %v648, %v646
  %v1133 = vpack.c.b16 %v651, %v649
  %v1134 = vpack.c.b16 %v652, %v650
  %v1135 = vpack.c.b16 %v655, %v653
  %v1136 = vpack.c.b16 %v656, %v654
  %v1137 = vpack.c.b16 %v659, %v657
  %v1138 = vpack.c.b16 %v660, %v658
  %v1139 = vpack.c.b16 %v663, %v661
  %v1140 = vpack.c.b16 %v664, %v662
  %v1141 = vpack.c.b16 %v667, %v665
  %v1142 = vpack.c.b16 %v668, %v666
  %v1143 = vpack.c.b16 %v671, %v669
  %v1144 = vpack.c.b16 %v672, %v670
  %v1145 = vpack.c.b16 %v675, %v673
  %v1146 = vpack.c.b16 %v676, %v674
  %v1147 = vpack.c.b16 %v679, %v677
  %v1148 = vpack.c.b16 %v680, %v678
  %v1149 = vpack.c.b16 %v683, %v681
  %v1150 = vpack.c.b16 %v684, %v682
  %v1151 = vpack.c.b16 %v687, %v685
  %v1152 = vpack.c.b16 %v688, %v686
  %v1153 = vpack.c.b16 %v691, %v689
  %v1154 = vpack.c.b16 %v692, %v690
  %v1155 = vpack.c.b16 %v695, %v693
  %v1156 = vpack.c.b16 %v696, %v694
  %v1157 = vpack.c.b16 %v699, %v697
  %v1158 = vpack.c.b16 %v700, %v698
  %v1159 = vpack.c.b16 %v703, %v701
  %v1160 = vpack.c.b16 %v704, %v702
  %v1161 = vpack.c.b16 %v707, %v705
  %v1162 = vpack.c.b16 %v708, %v706
  %v1163 = vpack.c.b16 %v711, %v709
  %v1164 = vpack.c.b16 %v712, %v710
  %v1165 = vpack.c.b16 %v715, %v713
  %v1166 = vpack.c.b16 %v716, %v714
  %v1167 = vpack.c.b16 %v719, %v717
  %v1168 = vpack.c.b16 %v720, %v718
  %v1169 = vpack.c.b16 %v723, %v721
  %v1170 = vpack.c.b16 %v724, %v722
  %v1171 = vpack.c.b16 %v727, %v725
  %v1172 = vpack.c.b16 %v728, %v726
  %v1173 = vpack.c.b16 %v731, %v729
  %v1174 = vpack.c.b16 %v732, %v730
  %v1175 = vpack.c.b16 %v735, %v733
  %v1176 = vpack.c.b16 %v736, %v734
  %v1177 = vpack.c.b16 %v739, %v737
  %v1178 = vpack.c.b16 %v740, %v738
  %v1179 = vpack.c.b16 %v743, %v741
  %v1180 = vpack.c.b16 %v744, %v742
  %v1181 = vpack.c.b16 %v747, %v745
  %v1182 = vpack.c.b16 %v748, %v746
  %v1183 = vpack.c.b16 %v751, %v749
  %v1184 = vpack.c.b16 %v752, %v750
  %v1185 = vpack.c.b16 %v755, %v753
  %v1186 = vpack.c.b16 %v756, %v754
  %v1187 = vpack.c.b16 %v759, %v757
  %v1188 = vpack.c.b16 %v760, %v758
  %v1189 = vpack.c.b16 %v763, %v761
  %v1190 = vpack.c.b16 %v764, %v762
  %v1191 = vpack.c.b16 %v767, %v765
  %v1192 = vpack.c.b16 %v768, %v766
  %v1193 = vpack.c.b16 %v771, %v769
  %v1194 = vpack.c.b16 %v772, %v770
  %v1195 = vpack.c.b16 %v775, %v773
  %v1196 = vpack.c.b16 %v776, %v774
  %v1197 = vpack.c.b16 %v779, %v777
  %v1198 = vpack.c.b16 %v780, %v778
  %v1199 = vpack.c.b16 %v783, %v781
  %v1200 = vpack.c.b16 %v784, %v782
  %v1201 = vpack.c.b16 %v787, %v785
  %v1202 = vpack.c.b16 %v788, %v786
  %v1203 = vpack.c.b16 %v791, %v789
  %v1204 = vpack.c.b16 %v792, %v790
  %v1205 = vpack.c.b16 %v795, %v793
  %v1206 = vpack.c.b16 %v796, %v794
  %v1207 = vpack.c.b16 %v799, %v797
  %v1208 = vpack.c.b16 %v800, %v798
  %v1209 = vpack.c.b16 %v803, %v801
  %v1210 = vpack.c.b16 %v804, %v802
  %v1211 = vpack.c.b16 %v807, %v805
  %v1212 = vpack.c.b16 %v808, %v806
  %v1213 = vpack.c.b16 %v811, %v809
  %v1214 = vpack.c.b16 %v812, %v810
  %v1215 = vpack.c.b16 %v815, %v813
  %v1216 = vpack.c.b16 %v816, %v814
  %v1217 = vpack.c.b16 %v819, %v817
  %v1218 = vpack.c.b16 %v820, %v818
  %v1219 = vpack.c.b16 %v823, %v821
  %v1220 = vpack.c.b16 %v824, %v822
  %v1221 = vpack.c.b16 %v827, %v825
  %v1222 = vpack.c.b16 %v828, %v826
  %v1223 = vpack.c.b16 %v831, %v829
  %v1224 = vpack.c.b16 %v832, %v830
  %v1225 = vpack.c.b16 %v835, %v833
  %v1226 = vpack.c.b16 %v836, %v834
  %v1227 = vpack.c.b16 %v839, %v837
  %v1228 = vpack.c.b16 %v840, %v838
  %v1229 = vpack.c.b16 %v843, %v841
  %v1230 = vpack.c.b16 %v844, %v842
  %v1231 = vpack.c.b16 %v847, %v845
  %v1232 = vpack.c.b16 %v848, %v846
  %v1233 = vpack.c.b16 %v851, %v849
  %v1234 = vpack.c.b16 %v852, %v850
  %v1235 = vpack.c.b16 %v855, %v853
  %v1236 = vpack.c.b16 %v856, %v854
  %v1237 = vpack.c.b16 %v859, %v857
  %v1238 = vpack.c.b16 %v860, %v858
  %v1239 = vpack.c.b16 %v863, %v861
  %v1240 = vpack.c.b16 %v864, %v862
  %v1241 = vpack.c.b16 %v867, %v865
  %v1242 = vpack.c.b16 %v868, %v866
  %v1243 = vpack.c.b16 %v871, %v869
  %v1244 = vpack.c.b16 %v872, %v870
  %v1245 = vpack.c.b16 %v875, %v873
  %v1246 = vpack.c.b16 %v876, %v874
  %v1247 = vpack.c.b16 %v879, %v877
  %v1248 = vpack.c.b16 %v880, %v878
  %v1249 = vpack.c.b16 %v883, %v881
  %v1250 = vpack.c.b16 %v884, %v882
  %v1251 = vpack.c.b16 %v887, %v885
  %v1252 = vpack.c.b16 %v888, %v886
  %v1253 = vpack.c.b16 %v891, %v889
  %v1254 = vpack.c.b16 %v892, %v890
  %v1255 = vpack.c.b16 %v895, %v893
  %v1256 = vpack.c.b16 %v896, %v894
  %v1257 = vpack.c.b16 %v899, %v897
  %v1258 = vpack.c.b16 %v900, %v898
  %v1259 = vpack.c.b16 %v903, %v901
  %v1260 = vpack.c.b16 %v904, %v902
  %v1261 = vpack.c.b16 %v907, %v905
  %v1262 = vpack.c.b16 %v908, %v906
  %v1263 = vpack.c.b16 %v911, %v909
  %v1264 = vpack.c.b16 %v912, %v910
  %v1265 = vpack.c.b16 %v915, %v913
  %v1266 = vpack.c.b16 %v916, %v914
  %v1267 = vpack.c.b16 %v919, %v917
  %v1268 = vpack.c.b16 %v920, %v918
  %v1269 = vpack.c.b16 %v923, %v921
  %v1270 = vpack.c.b16 %v924, %v922
  %v1271 = vpack.c.b16 %v927, %v925
  %v1272 = vpack.c.b16 %v928, %v926
  %v1273 = vpack.c.b16 %v931, %v929
  %v1274 = vpack.c.b16 %v932, %v930
  %v1275 = vpack.c.b16 %v935, %v933
  %v1276 = vpack.c.b16 %v936, %v934
  %v1277 = vpack.c.b16 %v939, %v937
  %v1278 = vpack.c.b16 %v940, %v938
  %v1279 = vpack.c.b16 %v943, %v941
  %v1280 = vpack.c.b16 %v944, %v942
  %v1281 = vpack.c.b16 %v947, %v945
  %v1282 = vpack.c.b16 %v948, %v946
  %v1283 = vpack.c.b16 %v951, %v949
  %v1284 = vpack.c.b16 %v952, %v950
  %v1285 = vpack.c.b16 %v955, %v953
  %v1286 = vpack.c.b16 %v956, %v954
  %v1287 = vpack.c.b16 %v959, %v957
  %v1288 = vpack.c.b16 %v960, %v958
  %v1289 = vpack.c.b16 %v963, %v961
  %v1290 = vpack.c.b16 %v964, %v962
  %v1291 = vpack.c.b16 %v967, %v965
  %v1292 = vpack.c.b16 %v968, %v966
  %v1293 = vpack.c.b16 %v971, %v969
  %v1294 = vpack.c.b16 %v972, %v970
  %v1295 = vpack.c.b16 %v975, %v973
  %v1296 = vpack.c.b16 %v976, %v974
  %v1297 = vpack.c.b16 %v979, %v977
  %v1298 = vpack.c.b16 %v980, %v978
  %v1299 = vpack.c.b16 %v983, %v981
  %v1300 = vpack.c.b16 %v984, %v982
  %v1301 = vpack.c.b16 %v987, %v985
  %v1302 = vpack.c.b16 %v988, %v986
  %v1303 = vpack.c.b16 %v991, %v989
  %v1304 = vpack.c.b16 %v992, %v990
  %v1305 = vpack.c.b16 %v995, %v993
  %v1306 = vpack.c.b16 %v996, %v994
  %v1307 = vpack.c.b16 %v999, %v997
  %v1308 = vpack.c.b16 %v1000, %v998
  %v1309 = vpack.c.b16 %v1003, %v1001
  %v1310 = vpack.c.b16 %v1004, %v1002
  %v1311 = vpack.c.b16 %v1007, %v1005
  %v1312 = vpack.c.b16 %v1008, %v1006
  %v1313 = vpack.c.b16 %v1011, %v1009
  %v1314 = vpack.c.b16 %v1012, %v1010
  %v1315 = vpack.c.b16 %v1015, %v1013
  %v1316 = vpack.c.b16 %v1016, %v1014
  %v1317 = vpack.c.b16 %v1019, %v1017
  %v1318 = vpack.c.b16 %v1020, %v1018
  %v1319 = vpack.c.b16 %v1023, %v1021
  %v1320 = vpack.c.b16 %v1024, %v1022
  %v1321 = vpack.c.b16 %v1027, %v1025
  %v1322 = vpack.c.b16 %v1028, %v1026
  %v1323 = vpack.c.b16 %v1031, %v1029
  %v1324 = vpack.c.b16 %v1032, %v1030
  %v1325 = vpack.c.b16 %v1035, %v1033
  %v1326 = vpack.c.b16 %v1036, %v1034
  %v1327 = vpack.c.b16 %v1039, %v1037
  %v1328 = vpack.c.b16 %v1040, %v1038
  %v1329 = vpack.c.b16 %v1043, %v1041
  %v1330 = vpack.c.b16 %v1044, %v1042
  %v1331 = vpack.c.b16 %v1047, %v1045
  %v1332 = vpack.c.b16 %v1048, %v1046
  %v1333 = vpack.c.b16 %v1051, %v1049
  %v1334 = vpack.c.b16 %v1052, %v1050
  %v1335 = vpack.c.b16 %v1055, %v1053
  %v1336 = vpack.c.b16 %v1056, %v1054
  %v1337 = vpack.c.b16 %v1059, %v1057
  %v1338 = vpack.c.b16 %v1060, %v1058
  %v1339 = vpack.c.b16 %v1063, %v1061
  %v1340 = vpack.c.b16 %v1064, %v1062
  %v1341 = vpack.c.b16 %v1067, %v1065
  %v1342 = vpack.c.b16 %v1068, %v1066
  %v1343 = vpack.c.b16 %v1071, %v1069
  %v1344 = vpack.c.b16 %v1072, %v1070
  %v1345 = vpack.c.b16 %v1075, %v1073
  %v1346 = vpack.c.b16 %v1076, %v1074
  %v1347 = vpack.c.b16 %v1079, %v1077
  %v1348 = vpack.c.b16 %v1080, %v1078
  %v1349 = vpack.c.b16 %v1083, %v1081
  %v1350 = vpack.c.b16 %v1084, %v1082
  %v1351 = vpack.c.b16 %v1087, %v1085
  %v1352 = vpack.c.b16 %v1088, %v1086
  %v1353 = vpack.c.b16 %v1091, %v1089
  %v1354 = vpack.c.b16 %v1092, %v1090
  %v1355 = vpack.c.b16 %v1095, %v1093
  %v1356 = vpack.c.b16 %v1096, %v1094
  %v1357 = vpack.c.b16 %v1099, %v1097
  %v1358 = vpack.c.b16 %v1100, %v1098
  %v1359 = vpack.c.b16 %v1103, %v1101
  %v1360 = vpack.c.b16 %v1104, %v1102
  %1617 = vmatprep.subr.bf16.mxu0 %v1106
  %1618 = vmatpush1.bf16.msra.mxu0 %v1105
  %1619 = vmatprep.subr.bf16.mxu0 %v1108
  %1620 = vmatpush1.bf16.msra.mxu0 %v1107
  %1621 = vmatprep.subr.bf16.mxu0 %v1110
  %1622 = vmatpush1.bf16.msra.mxu0 %v1109
  %1623 = vmatprep.subr.bf16.mxu0 %v1112
  %1624 = vmatpush1.bf16.msra.mxu0 %v1111
  %1625 = vmatprep.subr.bf16.mxu0 %v1114
  %1626 = vmatpush1.bf16.msra.mxu0 %v1113
  %1627 = vmatprep.subr.bf16.mxu0 %v1116
  %1628 = vmatpush1.bf16.msra.mxu0 %v1115
  %1629 = vmatprep.subr.bf16.mxu0 %v1118
  %1630 = vmatpush1.bf16.msra.mxu0 %v1117
  %1631 = vmatprep.subr.bf16.mxu0 %v1120
  %1632 = vmatpush1.bf16.msra.mxu0 %v1119
  %1633 = vmatprep.subr.bf16.mxu0 %v1122
  %1634 = vmatpush1.bf16.msra.mxu0 %v1121
  %1635 = vmatprep.subr.bf16.mxu0 %v1124
  %1636 = vmatpush1.bf16.msra.mxu0 %v1123
  %1637 = vmatprep.subr.bf16.mxu0 %v1126
  %1638 = vmatpush1.bf16.msra.mxu0 %v1125
  %1639 = vmatprep.subr.bf16.mxu0 %v1128
  %1640 = vmatpush1.bf16.msra.mxu0 %v1127
  %1641 = vmatprep.subr.bf16.mxu0 %v1130
  %1642 = vmatpush1.bf16.msra.mxu0 %v1129
  %1643 = vmatprep.subr.bf16.mxu0 %v1132
  %1644 = vmatpush1.bf16.msra.mxu0 %v1131
  %1645 = vmatprep.subr.bf16.mxu0 %v1134
  %1646 = vmatpush1.bf16.msra.mxu0 %v1133
  %1647 = vmatprep.subr.bf16.mxu0 %v1136
  %1648 = vmatpush1.bf16.msra.mxu0 %v1135
  %1649 = vmatprep.mubr.bf16.mxu0 %v306
  %1650 = vmatmul.mubr.bf16.gmra.mrb[0].mxu0 %v305
  %v1651 = vpop.f32.mrb[0].mxu0
  %v1652 = vadd.f32 0.0, %v1651
  %v1653 = vpop.f32.mrb[0].mxu0
  %v1654 = vadd.f32 0.0, %v1653
  %v1655 = vpop.f32.mrb[0].mxu0
  %v1656 = vpop.f32.mrb[0].mxu0
  %1657 = vdwg.mxu0
  %1658 = vmatprep.subr.bf16.mxu0 %v1138
  %1659 = vmatpush1.bf16.msra.mxu0 %v1137
  %1660 = vmatprep.subr.bf16.mxu0 %v1140
  %1661 = vmatpush1.bf16.msra.mxu0 %v1139
  %1662 = vmatprep.subr.bf16.mxu0 %v1142
  %1663 = vmatpush1.bf16.msra.mxu0 %v1141
  %1664 = vmatprep.subr.bf16.mxu0 %v1144
  %1665 = vmatpush1.bf16.msra.mxu0 %v1143
  %1666 = vmatprep.subr.bf16.mxu0 %v1146
  %1667 = vmatpush1.bf16.msra.mxu0 %v1145
  %1668 = vmatprep.subr.bf16.mxu0 %v1148
  %1669 = vmatpush1.bf16.msra.mxu0 %v1147
  %1670 = vmatprep.subr.bf16.mxu0 %v1150
  %1671 = vmatpush1.bf16.msra.mxu0 %v1149
  %1672 = vmatprep.subr.bf16.mxu0 %v1152
  %1673 = vmatpush1.bf16.msra.mxu0 %v1151
  %1674 = vmatprep.subr.bf16.mxu0 %v1154
  %1675 = vmatpush1.bf16.msra.mxu0 %v1153
  %1676 = vmatprep.subr.bf16.mxu0 %v1156
  %1677 = vmatpush1.bf16.msra.mxu0 %v1155
  %1678 = vmatprep.subr.bf16.mxu0 %v1158
  %1679 = vmatpush1.bf16.msra.mxu0 %v1157
  %1680 = vmatprep.subr.bf16.mxu0 %v1160
  %1681 = vmatpush1.bf16.msra.mxu0 %v1159
  %1682 = vmatprep.subr.bf16.mxu0 %v1162
  %1683 = vmatpush1.bf16.msra.mxu0 %v1161
  %1684 = vmatprep.subr.bf16.mxu0 %v1164
  %1685 = vmatpush1.bf16.msra.mxu0 %v1163
  %1686 = vmatprep.subr.bf16.mxu0 %v1166
  %1687 = vmatpush1.bf16.msra.mxu0 %v1165
  %1688 = vmatprep.subr.bf16.mxu0 %v1168
  %1689 = vmatpush1.bf16.msra.mxu0 %v1167
  %1690 = vmatprep.mubr.bf16.mxu0 %v308
  %1691 = vmatmul.mubr.bf16.gmra.mrb[0].mxu0 %v307
  %v1692 = vpop.f32.mrb[0].mxu0
  %v1693 = vadd.f32 %v1652, %v1692
  %v1694 = vpop.f32.mrb[0].mxu0
  %v1695 = vadd.f32 %v1654, %v1694
  %v1696 = vpop.f32.mrb[0].mxu0
  %v1697 = vpop.f32.mrb[0].mxu0
  %1698 = vdwg.mxu0
  %1699 = vmatprep.subr.bf16.mxu0 %v1170
  %1700 = vmatpush1.bf16.msra.mxu0 %v1169
  %1701 = vmatprep.subr.bf16.mxu0 %v1172
  %1702 = vmatpush1.bf16.msra.mxu0 %v1171
  %1703 = vmatprep.subr.bf16.mxu0 %v1174
  %1704 = vmatpush1.bf16.msra.mxu0 %v1173
  %1705 = vmatprep.subr.bf16.mxu0 %v1176
  %1706 = vmatpush1.bf16.msra.mxu0 %v1175
  %1707 = vmatprep.subr.bf16.mxu0 %v1178
  %1708 = vmatpush1.bf16.msra.mxu0 %v1177
  %1709 = vmatprep.subr.bf16.mxu0 %v1180
  %1710 = vmatpush1.bf16.msra.mxu0 %v1179
  %1711 = vmatprep.subr.bf16.mxu0 %v1182
  %1712 = vmatpush1.bf16.msra.mxu0 %v1181
  %1713 = vmatprep.subr.bf16.mxu0 %v1184
  %1714 = vmatpush1.bf16.msra.mxu0 %v1183
  %1715 = vmatprep.subr.bf16.mxu0 %v1186
  %1716 = vmatpush1.bf16.msra.mxu0 %v1185
  %1717 = vmatprep.subr.bf16.mxu0 %v1188
  %1718 = vmatpush1.bf16.msra.mxu0 %v1187
  %1719 = vmatprep.subr.bf16.mxu0 %v1190
  %1720 = vmatpush1.bf16.msra.mxu0 %v1189
  %1721 = vmatprep.subr.bf16.mxu0 %v1192
  %1722 = vmatpush1.bf16.msra.mxu0 %v1191
  %1723 = vmatprep.subr.bf16.mxu0 %v1194
  %1724 = vmatpush1.bf16.msra.mxu0 %v1193
  %1725 = vmatprep.subr.bf16.mxu0 %v1196
  %1726 = vmatpush1.bf16.msra.mxu0 %v1195
  %1727 = vmatprep.subr.bf16.mxu0 %v1198
  %1728 = vmatpush1.bf16.msra.mxu0 %v1197
  %1729 = vmatprep.subr.bf16.mxu0 %v1200
  %1730 = vmatpush1.bf16.msra.mxu0 %v1199
  %1731 = vmatprep.mubr.bf16.mxu0 %v310
  %1732 = vmatmul.mubr.bf16.gmra.mrb[0].mxu0 %v309
  %v1733 = vpop.f32.mrb[0].mxu0
  %v1734 = vadd.f32 %v1693, %v1733
  %v1735 = vpop.f32.mrb[0].mxu0
  %v1736 = vadd.f32 %v1695, %v1735
  %v1737 = vpop.f32.mrb[0].mxu0
  %v1738 = vpop.f32.mrb[0].mxu0
  %1739 = vdwg.mxu0
  %1740 = vmatprep.subr.bf16.mxu0 %v1202
  %1741 = vmatpush1.bf16.msra.mxu0 %v1201
  %1742 = vmatprep.subr.bf16.mxu0 %v1204
  %1743 = vmatpush1.bf16.msra.mxu0 %v1203
  %1744 = vmatprep.subr.bf16.mxu0 %v1206
  %1745 = vmatpush1.bf16.msra.mxu0 %v1205
  %1746 = vmatprep.subr.bf16.mxu0 %v1208
  %1747 = vmatpush1.bf16.msra.mxu0 %v1207
  %1748 = vmatprep.subr.bf16.mxu0 %v1210
  %1749 = vmatpush1.bf16.msra.mxu0 %v1209
  %1750 = vmatprep.subr.bf16.mxu0 %v1212
  %1751 = vmatpush1.bf16.msra.mxu0 %v1211
  %1752 = vmatprep.subr.bf16.mxu0 %v1214
  %1753 = vmatpush1.bf16.msra.mxu0 %v1213
  %1754 = vmatprep.subr.bf16.mxu0 %v1216
  %1755 = vmatpush1.bf16.msra.mxu0 %v1215
  %1756 = vmatprep.subr.bf16.mxu0 %v1218
  %1757 = vmatpush1.bf16.msra.mxu0 %v1217
  %1758 = vmatprep.subr.bf16.mxu0 %v1220
  %1759 = vmatpush1.bf16.msra.mxu0 %v1219
  %1760 = vmatprep.subr.bf16.mxu0 %v1222
  %1761 = vmatpush1.bf16.msra.mxu0 %v1221
  %1762 = vmatprep.subr.bf16.mxu0 %v1224
  %1763 = vmatpush1.bf16.msra.mxu0 %v1223
  %1764 = vmatprep.subr.bf16.mxu0 %v1226
  %1765 = vmatpush1.bf16.msra.mxu0 %v1225
  %1766 = vmatprep.subr.bf16.mxu0 %v1228
  %1767 = vmatpush1.bf16.msra.mxu0 %v1227
  %1768 = vmatprep.subr.bf16.mxu0 %v1230
  %1769 = vmatpush1.bf16.msra.mxu0 %v1229
  %1770 = vmatprep.subr.bf16.mxu0 %v1232
  %1771 = vmatpush1.bf16.msra.mxu0 %v1231
  %1772 = vmatprep.mubr.bf16.mxu0 %v312
  %1773 = vmatmul.mubr.bf16.gmra.mrb[0].mxu0 %v311
  %v1774 = vpop.f32.mrb[0].mxu0
  %v1775 = vadd.f32 %v1734, %v1774
  %v1776 = vpop.f32.mrb[0].mxu0
  %v1777 = vadd.f32 %v1736, %v1776
  %v1778 = vpop.f32.mrb[0].mxu0
  %v1779 = vpop.f32.mrb[0].mxu0
  %1780 = vdwg.mxu0
  %1781 = vmatprep.subr.bf16.mxu0 %v1234
  %1782 = vmatpush1.bf16.msra.mxu0 %v1233
  %1783 = vmatprep.subr.bf16.mxu0 %v1236
  %1784 = vmatpush1.bf16.msra.mxu0 %v1235
  %1785 = vmatprep.subr.bf16.mxu0 %v1238
  %1786 = vmatpush1.bf16.msra.mxu0 %v1237
  %1787 = vmatprep.subr.bf16.mxu0 %v1240
  %1788 = vmatpush1.bf16.msra.mxu0 %v1239
  %1789 = vmatprep.subr.bf16.mxu0 %v1242
  %1790 = vmatpush1.bf16.msra.mxu0 %v1241
  %1791 = vmatprep.subr.bf16.mxu0 %v1244
  %1792 = vmatpush1.bf16.msra.mxu0 %v1243
  %1793 = vmatprep.subr.bf16.mxu0 %v1246
  %1794 = vmatpush1.bf16.msra.mxu0 %v1245
  %1795 = vmatprep.subr.bf16.mxu0 %v1248
  %1796 = vmatpush1.bf16.msra.mxu0 %v1247
  %1797 = vmatprep.subr.bf16.mxu0 %v1250
  %1798 = vmatpush1.bf16.msra.mxu0 %v1249
  %1799 = vmatprep.subr.bf16.mxu0 %v1252
  %1800 = vmatpush1.bf16.msra.mxu0 %v1251
  %1801 = vmatprep.subr.bf16.mxu0 %v1254
  %1802 = vmatpush1.bf16.msra.mxu0 %v1253
  %1803 = vmatprep.subr.bf16.mxu0 %v1256
  %1804 = vmatpush1.bf16.msra.mxu0 %v1255
  %1805 = vmatprep.subr.bf16.mxu0 %v1258
  %1806 = vmatpush1.bf16.msra.mxu0 %v1257
  %1807 = vmatprep.subr.bf16.mxu0 %v1260
  %1808 = vmatpush1.bf16.msra.mxu0 %v1259
  %1809 = vmatprep.subr.bf16.mxu0 %v1262
  %1810 = vmatpush1.bf16.msra.mxu0 %v1261
  %1811 = vmatprep.subr.bf16.mxu0 %v1264
  %1812 = vmatpush1.bf16.msra.mxu0 %v1263
  %1813 = vmatprep.mubr.bf16.mxu0 %v314
  %1814 = vmatmul.mubr.bf16.gmra.mrb[0].mxu0 %v313
  %v1815 = vpop.f32.mrb[0].mxu0
  %v1816 = vadd.f32 %v1775, %v1815
  %v1817 = vpop.f32.mrb[0].mxu0
  %v1818 = vadd.f32 %v1777, %v1817
  %v1819 = vpop.f32.mrb[0].mxu0
  %v1820 = vpop.f32.mrb[0].mxu0
  %1821 = vdwg.mxu0
  %1822 = vmatprep.subr.bf16.mxu0 %v1266
  %1823 = vmatpush1.bf16.msra.mxu0 %v1265
  %1824 = vmatprep.subr.bf16.mxu0 %v1268
  %1825 = vmatpush1.bf16.msra.mxu0 %v1267
  %1826 = vmatprep.subr.bf16.mxu0 %v1270
  %1827 = vmatpush1.bf16.msra.mxu0 %v1269
  %1828 = vmatprep.subr.bf16.mxu0 %v1272
  %1829 = vmatpush1.bf16.msra.mxu0 %v1271
  %1830 = vmatprep.subr.bf16.mxu0 %v1274
  %1831 = vmatpush1.bf16.msra.mxu0 %v1273
  %1832 = vmatprep.subr.bf16.mxu0 %v1276
  %1833 = vmatpush1.bf16.msra.mxu0 %v1275
  %1834 = vmatprep.subr.bf16.mxu0 %v1278
  %1835 = vmatpush1.bf16.msra.mxu0 %v1277
  %1836 = vmatprep.subr.bf16.mxu0 %v1280
  %1837 = vmatpush1.bf16.msra.mxu0 %v1279
  %1838 = vmatprep.subr.bf16.mxu0 %v1282
  %1839 = vmatpush1.bf16.msra.mxu0 %v1281
  %1840 = vmatprep.subr.bf16.mxu0 %v1284
  %1841 = vmatpush1.bf16.msra.mxu0 %v1283
  %1842 = vmatprep.subr.bf16.mxu0 %v1286
  %1843 = vmatpush1.bf16.msra.mxu0 %v1285
  %1844 = vmatprep.subr.bf16.mxu0 %v1288
  %1845 = vmatpush1.bf16.msra.mxu0 %v1287
  %1846 = vmatprep.subr.bf16.mxu0 %v1290
  %1847 = vmatpush1.bf16.msra.mxu0 %v1289
  %1848 = vmatprep.subr.bf16.mxu0 %v1292
  %1849 = vmatpush1.bf16.msra.mxu0 %v1291
  %1850 = vmatprep.subr.bf16.mxu0 %v1294
  %1851 = vmatpush1.bf16.msra.mxu0 %v1293
  %1852 = vmatprep.subr.bf16.mxu0 %v1296
  %1853 = vmatpush1.bf16.msra.mxu0 %v1295
  %1854 = vmatprep.mubr.bf16.mxu0 %v316
  %1855 = vmatmul.mubr.bf16.gmra.mrb[0].mxu0 %v315
  %v1856 = vpop.f32.mrb[0].mxu0
  %v1857 = vadd.f32 %v1816, %v1856
  %v1858 = vpop.f32.mrb[0].mxu0
  %v1859 = vadd.f32 %v1818, %v1858
  %v1860 = vpop.f32.mrb[0].mxu0
  %v1861 = vpop.f32.mrb[0].mxu0
  %1862 = vdwg.mxu0
  %1863 = vmatprep.subr.bf16.mxu0 %v1298
  %1864 = vmatpush1.bf16.msra.mxu0 %v1297
  %1865 = vmatprep.subr.bf16.mxu0 %v1300
  %1866 = vmatpush1.bf16.msra.mxu0 %v1299
  %1867 = vmatprep.subr.bf16.mxu0 %v1302
  %1868 = vmatpush1.bf16.msra.mxu0 %v1301
  %1869 = vmatprep.subr.bf16.mxu0 %v1304
  %1870 = vmatpush1.bf16.msra.mxu0 %v1303
  %1871 = vmatprep.subr.bf16.mxu0 %v1306
  %1872 = vmatpush1.bf16.msra.mxu0 %v1305
  %1873 = vmatprep.subr.bf16.mxu0 %v1308
  %1874 = vmatpush1.bf16.msra.mxu0 %v1307
  %1875 = vmatprep.subr.bf16.mxu0 %v1310
  %1876 = vmatpush1.bf16.msra.mxu0 %v1309
  %1877 = vmatprep.subr.bf16.mxu0 %v1312
  %1878 = vmatpush1.bf16.msra.mxu0 %v1311
  %1879 = vmatprep.subr.bf16.mxu0 %v1314
  %1880 = vmatpush1.bf16.msra.mxu0 %v1313
  %1881 = vmatprep.subr.bf16.mxu0 %v1316
  %1882 = vmatpush1.bf16.msra.mxu0 %v1315
  %1883 = vmatprep.subr.bf16.mxu0 %v1318
  %1884 = vmatpush1.bf16.msra.mxu0 %v1317
  %1885 = vmatprep.subr.bf16.mxu0 %v1320
  %1886 = vmatpush1.bf16.msra.mxu0 %v1319
  %1887 = vmatprep.subr.bf16.mxu0 %v1322
  %1888 = vmatpush1.bf16.msra.mxu0 %v1321
  %1889 = vmatprep.subr.bf16.mxu0 %v1324
  %1890 = vmatpush1.bf16.msra.mxu0 %v1323
  %1891 = vmatprep.subr.bf16.mxu0 %v1326
  %1892 = vmatpush1.bf16.msra.mxu0 %v1325
  %1893 = vmatprep.subr.bf16.mxu0 %v1328
  %1894 = vmatpush1.bf16.msra.mxu0 %v1327
  %1895 = vmatprep.mubr.bf16.mxu0 %v318
  %1896 = vmatmul.mubr.bf16.gmra.mrb[0].mxu0 %v317
  %v1897 = vpop.f32.mrb[0].mxu0
  %v1898 = vadd.f32 %v1857, %v1897
  %v1899 = vpop.f32.mrb[0].mxu0
  %v1900 = vadd.f32 %v1859, %v1899
  %v1901 = vpop.f32.mrb[0].mxu0
  %v1902 = vpop.f32.mrb[0].mxu0
  %1903 = vdwg.mxu0
  %1904 = vmatprep.subr.bf16.mxu0 %v1330
  %1905 = vmatpush1.bf16.msra.mxu0 %v1329
  %1906 = vmatprep.subr.bf16.mxu0 %v1332
  %1907 = vmatpush1.bf16.msra.mxu0 %v1331
  %1908 = vmatprep.subr.bf16.mxu0 %v1334
  %1909 = vmatpush1.bf16.msra.mxu0 %v1333
  %1910 = vmatprep.subr.bf16.mxu0 %v1336
  %1911 = vmatpush1.bf16.msra.mxu0 %v1335
  %1912 = vmatprep.subr.bf16.mxu0 %v1338
  %1913 = vmatpush1.bf16.msra.mxu0 %v1337
  %1914 = vmatprep.subr.bf16.mxu0 %v1340
  %1915 = vmatpush1.bf16.msra.mxu0 %v1339
  %1916 = vmatprep.subr.bf16.mxu0 %v1342
  %1917 = vmatpush1.bf16.msra.mxu0 %v1341
  %1918 = vmatprep.subr.bf16.mxu0 %v1344
  %1919 = vmatpush1.bf16.msra.mxu0 %v1343
  %1920 = vmatprep.subr.bf16.mxu0 %v1346
  %1921 = vmatpush1.bf16.msra.mxu0 %v1345
  %1922 = vmatprep.subr.bf16.mxu0 %v1348
  %1923 = vmatpush1.bf16.msra.mxu0 %v1347
  %1924 = vmatprep.subr.bf16.mxu0 %v1350
  %1925 = vmatpush1.bf16.msra.mxu0 %v1349
  %1926 = vmatprep.subr.bf16.mxu0 %v1352
  %1927 = vmatpush1.bf16.msra.mxu0 %v1351
  %1928 = vmatprep.subr.bf16.mxu0 %v1354
  %1929 = vmatpush1.bf16.msra.mxu0 %v1353
  %1930 = vmatprep.subr.bf16.mxu0 %v1356
  %1931 = vmatpush1.bf16.msra.mxu0 %v1355
  %1932 = vmatprep.subr.bf16.mxu0 %v1358
  %1933 = vmatpush1.bf16.msra.mxu0 %v1357
  %1934 = vmatprep.subr.bf16.mxu0 %v1360
  %1935 = vmatpush1.bf16.msra.mxu0 %v1359
  %1936 = vmatprep.mubr.bf16.mxu0 %v320
  %1937 = vmatmul.mubr.bf16.gmra.mrb[0].mxu0 %v319
  %v1938 = vpop.f32.mrb[0].mxu0
  %v1939 = vadd.f32 %v1898, %v1938
  %v1940 = vpop.f32.mrb[0].mxu0
  %v1941 = vadd.f32 %v1900, %v1940
  %v1942 = vpop.f32.mrb[0].mxu0
  %v1943 = vpop.f32.mrb[0].mxu0
  %1944 = vdwg.mxu0
  %v1945 = vld [vmem:[%s2] sm:$0x3]
  %v1947 = vlaneseq
  %v1948 = vshrl.u32 %v1947, 7
  %v1949 = vsub.s32 0, %v1948
  %v1950 = vrot.slane %v1945, %v1949
  %v1951 = vlaneseq
  %v1952 = vshrl.u32 %v1951, 7
  %v1953 = vsub.s32 1, %v1952
  %v1954 = vrot.slane %v1945, %v1953
  %v1957 = vmul.f32 %v1939, %v1950
  %v1958 = vmul.f32 %v1941, %v1954
  %v1959 = vld [vmem:[%s3] sm:$0x3]
  %v1961 = vlaneseq
  %v1962 = vshrl.u32 %v1961, 7
  %v1963 = vsub.s32 0, %v1962
  %v1964 = vrot.slane %v1959, %v1963
  %v1965 = vlaneseq
  %v1966 = vshrl.u32 %v1965, 7
  %v1967 = vsub.s32 1, %v1966
  %v1968 = vrot.slane %v1959, %v1967
  %v1971 = vadd.f32 %v1957, %v1964
  %v1972 = vadd.f32 %v1958, %v1968
  %vm1973 = vcmp.ge.f32.partialorder %v1971, 0.0
  %vm1974 = vcmp.ge.f32.partialorder %v1972, 0.0
  %v1975 = vmul.f32 %v1971, 0.2
  %v1976 = vmul.f32 %v1972, 0.2
  %v1977 = vsel %vm1973, %v1971, %v1975
  %v1978 = vsel %vm1974, %v1972, %v1976
  %v1979 = vpack.c.bf16 %v1977, %v1977
  %v1980 = vpack.c.bf16 %v1978, %v1978
  %v1983 = vunpack.c.l.b16 %v1979
  %v1984 = vunpack.c.l.b16 %v1980
  %v1985 = vpack.c.b16 %v1984, %v1983
  %1987 = vst [vmem:[%s4] sm:$0xff] %v1985
  // Predicated region
  $region18: #{nlayer_attention_forward.6} parent=0 // pred_check
    _
  $region19: #{nlayer_attention_forward.6} parent=0 // pred_check_branch
    %1989 = sbr.rel (0) target = $region21
  $region20: #{nlayer_attention_forward.6} parent=0 // pred_region
    _
  $region21: #{nlayer_attention_forward.6} parent=0 // pred_fallthru
    _
  // Predicated region
  $region22: #{nlayer_attention_forward.6} parent=0 // pred_check
    _
  $region23: #{nlayer_attention_forward.6} parent=0 // pred_check_branch
    %1991 = sbr.rel (0) target = $region25
  $region24: #{nlayer_attention_forward.6} parent=0 // pred_region
    _
  $region25: #{nlayer_attention_forward.6} parent=0 // pred_fallthru
    _

// kernel: nlayer_attention_forward.7
$region0: #{nlayer_attention_forward.7}
  #allocation0 [shape = 'u32[]', space=smem, size = 0x4, offset = 0x4, fixed_abs, tag = 'smem constant byte address 0x4 - core index']
  #allocation1 [shape = 'u32[144,128]{1,0:T(1,128)}', space=vmem, size = 0x12000, scoped, tag = 'internal scratch']
  %s0 = inlined_call_operand.vmem [shape: bf16[4,2048], index: 0, kind: input, shape index: {}]
  %s1 = inlined_call_operand.vmem [shape: bf16[2048,256], index: 1, kind: input, shape index: {}]
  %s2 = inlined_call_operand.vmem [shape: f32[1,256], index: 2, kind: input, shape index: {}]
  %s3 = inlined_call_operand.vmem [shape: f32[1,256], index: 3, kind: input, shape index: {}]
  %s4 = inlined_call_operand.vmem [shape: bf16[4,256], index: 4, kind: output, shape index: {}]
  %s5 = sld [smem:[#allocation0]]
  $region26: #{nlayer_attention_forward.7} parent=0
    _
  %s7 = ssub.s32 1, %s5
  %s8 = scalar_select 0, %s7, %s5
  // Predicated region
  $region2: #{nlayer_attention_forward.7} parent=0 // pred_check
    _
  $region3: #{nlayer_attention_forward.7} parent=0 // pred_check_branch
    %10 = sbr.rel (0) target = $region5
  $region4: #{nlayer_attention_forward.7} parent=0 // pred_region
    _
  $region5: #{nlayer_attention_forward.7} parent=0 // pred_fallthru
    _
  // Predicated region
  $region6: #{nlayer_attention_forward.7} parent=0 // pred_check
    _
  $region7: #{nlayer_attention_forward.7} parent=0 // pred_check_branch
    %12 = sbr.rel (0) target = $region9
  $region8: #{nlayer_attention_forward.7} parent=0 // pred_region
    _
  $region9: #{nlayer_attention_forward.7} parent=0 // pred_fallthru
    _
  // Predicated region
  $region10: #{nlayer_attention_forward.7} parent=0 // pred_check
    _
  $region11: #{nlayer_attention_forward.7} parent=0 // pred_check_branch
    %14 = sbr.rel (0) target = $region13
  $region12: #{nlayer_attention_forward.7} parent=0 // pred_region
    _
  $region13: #{nlayer_attention_forward.7} parent=0 // pred_fallthru
    _
  // Predicated region
  $region14: #{nlayer_attention_forward.7} parent=0 // pred_check
    _
  $region15: #{nlayer_attention_forward.7} parent=0 // pred_check_branch
    %16 = sbr.rel (0) target = $region17
  $region16: #{nlayer_attention_forward.7} parent=0 // pred_region
    _
  $region17: #{nlayer_attention_forward.7} parent=0 // pred_fallthru
    _
  %v17 = vld [vmem:[%s0] sm:$0xff]
  %v18 = vld [vmem:[%s0 + $0x8] sm:$0xff]
  %v19 = vld [vmem:[%s0 + $0x10] sm:$0xff]
  %v20 = vld [vmem:[%s0 + $0x18] sm:$0xff]
  %v21 = vld [vmem:[%s1] sm:$0xff]
  %v22 = vld [vmem:[%s1 + $0x8] sm:$0xff]
  %v23 = vld [vmem:[%s1 + $0x10] sm:$0xff]
  %v24 = vld [vmem:[%s1 + $0x18] sm:$0xff]
  %v25 = vld [vmem:[%s1 + $0x20] sm:$0xff]
  %v26 = vld [vmem:[%s1 + $0x28] sm:$0xff]
  %v27 = vld [vmem:[%s1 + $0x30] sm:$0xff]
  %v28 = vld [vmem:[%s1 + $0x38] sm:$0xff]
  %v29 = vld [vmem:[%s1 + $0x40] sm:$0xff]
  %v30 = vld [vmem:[%s1 + $0x48] sm:$0xff]
  %v31 = vld [vmem:[%s1 + $0x50] sm:$0xff]
  %v32 = vld [vmem:[%s1 + $0x58] sm:$0xff]
  %v33 = vld [vmem:[%s1 + $0x60] sm:$0xff]
  %v34 = vld [vmem:[%s1 + $0x68] sm:$0xff]
  %v35 = vld [vmem:[%s1 + $0x70] sm:$0xff]
  %v36 = vld [vmem:[%s1 + $0x78] sm:$0xff]
  %v37 = vld [vmem:[%s1 + $0x80] sm:$0xff]
  %v38 = vld [vmem:[%s1 + $0x88] sm:$0xff]
  %v39 = vld [vmem:[%s1 + $0x90] sm:$0xff]
  %v40 = vld [vmem:[%s1 + $0x98] sm:$0xff]
  %v41 = vld [vmem:[%s1 + $0xa0] sm:$0xff]
  %v42 = vld [vmem:[%s1 + $0xa8] sm:$0xff]
  %v43 = vld [vmem:[%s1 + $0xb0] sm:$0xff]
  %v44 = vld [vmem:[%s1 + $0xb8] sm:$0xff]
  %v45 = vld [vmem:[%s1 + $0xc0] sm:$0xff]
  %v46 = vld [vmem:[%s1 + $0xc8] sm:$0xff]
  %v47 = vld [vmem:[%s1 + $0xd0] sm:$0xff]
  %v48 = vld [vmem:[%s1 + $0xd8] sm:$0xff]
  %v49 = vld [vmem:[%s1 + $0xe0] sm:$0xff]
  %v50 = vld [vmem:[%s1 + $0xe8] sm:$0xff]
  %v51 = vld [vmem:[%s1 + $0xf0] sm:$0xff]
  %v52 = vld [vmem:[%s1 + $0xf8] sm:$0xff]
  %v53 = vld [vmem:[%s1 + $0x100] sm:$0xff]
  %v54 = vld [vmem:[%s1 + $0x108] sm:$0xff]
  %v55 = vld [vmem:[%s1 + $0x110] sm:$0xff]
  %v56 = vld [vmem:[%s1 + $0x118] sm:$0xff]
  %v57 = vld [vmem:[%s1 + $0x120] sm:$0xff]
  %v58 = vld [vmem:[%s1 + $0x128] sm:$0xff]
  %v59 = vld [vmem:[%s1 + $0x130] sm:$0xff]
  %v60 = vld [vmem:[%s1 + $0x138] sm:$0xff]
  %v61 = vld [vmem:[%s1 + $0x140] sm:$0xff]
  %v62 = vld [vmem:[%s1 + $0x148] sm:$0xff]
  %v63 = vld [vmem:[%s1 + $0x150] sm:$0xff]
  %v64 = vld [vmem:[%s1 + $0x158] sm:$0xff]
  %v65 = vld [vmem:[%s1 + $0x160] sm:$0xff]
  %v66 = vld [vmem:[%s1 + $0x168] sm:$0xff]
  %v67 = vld [vmem:[%s1 + $0x170] sm:$0xff]
  %v68 = vld [vmem:[%s1 + $0x178] sm:$0xff]
  %v69 = vld [vmem:[%s1 + $0x180] sm:$0xff]
  %v70 = vld [vmem:[%s1 + $0x188] sm:$0xff]
  %v71 = vld [vmem:[%s1 + $0x190] sm:$0xff]
  %v72 = vld [vmem:[%s1 + $0x198] sm:$0xff]
  %v73 = vld [vmem:[%s1 + $0x1a0] sm:$0xff]
  %v74 = vld [vmem:[%s1 + $0x1a8] sm:$0xff]
  %v75 = vld [vmem:[%s1 + $0x1b0] sm:$0xff]
  %v76 = vld [vmem:[%s1 + $0x1b8] sm:$0xff]
  %v77 = vld [vmem:[%s1 + $0x1c0] sm:$0xff]
  %v78 = vld [vmem:[%s1 + $0x1c8] sm:$0xff]
  %v79 = vld [vmem:[%s1 + $0x1d0] sm:$0xff]
  %v80 = vld [vmem:[%s1 + $0x1d8] sm:$0xff]
  %v81 = vld [vmem:[%s1 + $0x1e0] sm:$0xff]
  %v82 = vld [vmem:[%s1 + $0x1e8] sm:$0xff]
  %v83 = vld [vmem:[%s1 + $0x1f0] sm:$0xff]
  %v84 = vld [vmem:[%s1 + $0x1f8] sm:$0xff]
  %v85 = vld [vmem:[%s1 + $0x200] sm:$0xff]
  %v86 = vld [vmem:[%s1 + $0x208] sm:$0xff]
  %v87 = vld [vmem:[%s1 + $0x210] sm:$0xff]
  %v88 = vld [vmem:[%s1 + $0x218] sm:$0xff]
  %v89 = vld [vmem:[%s1 + $0x220] sm:$0xff]
  %v90 = vld [vmem:[%s1 + $0x228] sm:$0xff]
  %v91 = vld [vmem:[%s1 + $0x230] sm:$0xff]
  %v92 = vld [vmem:[%s1 + $0x238] sm:$0xff]
  %v93 = vld [vmem:[%s1 + $0x240] sm:$0xff]
  %v94 = vld [vmem:[%s1 + $0x248] sm:$0xff]
  %v95 = vld [vmem:[%s1 + $0x250] sm:$0xff]
  %v96 = vld [vmem:[%s1 + $0x258] sm:$0xff]
  %v97 = vld [vmem:[%s1 + $0x260] sm:$0xff]
  %v98 = vld [vmem:[%s1 + $0x268] sm:$0xff]
  %v99 = vld [vmem:[%s1 + $0x270] sm:$0xff]
  %v100 = vld [vmem:[%s1 + $0x278] sm:$0xff]
  %v101 = vld [vmem:[%s1 + $0x280] sm:$0xff]
  %v102 = vld [vmem:[%s1 + $0x288] sm:$0xff]
  %v103 = vld [vmem:[%s1 + $0x290] sm:$0xff]
  %v104 = vld [vmem:[%s1 + $0x298] sm:$0xff]
  %v105 = vld [vmem:[%s1 + $0x2a0] sm:$0xff]
  %v106 = vld [vmem:[%s1 + $0x2a8] sm:$0xff]
  %v107 = vld [vmem:[%s1 + $0x2b0] sm:$0xff]
  %v108 = vld [vmem:[%s1 + $0x2b8] sm:$0xff]
  %v109 = vld [vmem:[%s1 + $0x2c0] sm:$0xff]
  %v110 = vld [vmem:[%s1 + $0x2c8] sm:$0xff]
  %v111 = vld [vmem:[%s1 + $0x2d0] sm:$0xff]
  %v112 = vld [vmem:[%s1 + $0x2d8] sm:$0xff]
  %v113 = vld [vmem:[%s1 + $0x2e0] sm:$0xff]
  %v114 = vld [vmem:[%s1 + $0x2e8] sm:$0xff]
  %v115 = vld [vmem:[%s1 + $0x2f0] sm:$0xff]
  %v116 = vld [vmem:[%s1 + $0x2f8] sm:$0xff]
  %v117 = vld [vmem:[%s1 + $0x300] sm:$0xff]
  %v118 = vld [vmem:[%s1 + $0x308] sm:$0xff]
  %v119 = vld [vmem:[%s1 + $0x310] sm:$0xff]
  %v120 = vld [vmem:[%s1 + $0x318] sm:$0xff]
  %v121 = vld [vmem:[%s1 + $0x320] sm:$0xff]
  %v122 = vld [vmem:[%s1 + $0x328] sm:$0xff]
  %v123 = vld [vmem:[%s1 + $0x330] sm:$0xff]
  %v124 = vld [vmem:[%s1 + $0x338] sm:$0xff]
  %v125 = vld [vmem:[%s1 + $0x340] sm:$0xff]
  %v126 = vld [vmem:[%s1 + $0x348] sm:$0xff]
  %v127 = vld [vmem:[%s1 + $0x350] sm:$0xff]
  %v128 = vld [vmem:[%s1 + $0x358] sm:$0xff]
  %v129 = vld [vmem:[%s1 + $0x360] sm:$0xff]
  %v130 = vld [vmem:[%s1 + $0x368] sm:$0xff]
  %v131 = vld [vmem:[%s1 + $0x370] sm:$0xff]
  %v132 = vld [vmem:[%s1 + $0x378] sm:$0xff]
  %v133 = vld [vmem:[%s1 + $0x380] sm:$0xff]
  %v134 = vld [vmem:[%s1 + $0x388] sm:$0xff]
  %v135 = vld [vmem:[%s1 + $0x390] sm:$0xff]
  %v136 = vld [vmem:[%s1 + $0x398] sm:$0xff]
  %v137 = vld [vmem:[%s1 + $0x3a0] sm:$0xff]
  %v138 = vld [vmem:[%s1 + $0x3a8] sm:$0xff]
  %v139 = vld [vmem:[%s1 + $0x3b0] sm:$0xff]
  %v140 = vld [vmem:[%s1 + $0x3b8] sm:$0xff]
  %v141 = vld [vmem:[%s1 + $0x3c0] sm:$0xff]
  %v142 = vld [vmem:[%s1 + $0x3c8] sm:$0xff]
  %v143 = vld [vmem:[%s1 + $0x3d0] sm:$0xff]
  %v144 = vld [vmem:[%s1 + $0x3d8] sm:$0xff]
  %v145 = vld [vmem:[%s1 + $0x3e0] sm:$0xff]
  %v146 = vld [vmem:[%s1 + $0x3e8] sm:$0xff]
  %v147 = vld [vmem:[%s1 + $0x3f0] sm:$0xff]
  %v148 = vld [vmem:[%s1 + $0x3f8] sm:$0xff]
  %v149 = vld [vmem:[%s1 + $0x400] sm:$0xff]
  %v150 = vld [vmem:[%s1 + $0x408] sm:$0xff]
  %v151 = vld [vmem:[%s1 + $0x410] sm:$0xff]
  %v152 = vld [vmem:[%s1 + $0x418] sm:$0xff]
  %v153 = vld [vmem:[%s1 + $0x420] sm:$0xff]
  %v154 = vld [vmem:[%s1 + $0x428] sm:$0xff]
  %v155 = vld [vmem:[%s1 + $0x430] sm:$0xff]
  %v156 = vld [vmem:[%s1 + $0x438] sm:$0xff]
  %v157 = vld [vmem:[%s1 + $0x440] sm:$0xff]
  %v158 = vld [vmem:[%s1 + $0x448] sm:$0xff]
  %v159 = vld [vmem:[%s1 + $0x450] sm:$0xff]
  %v160 = vld [vmem:[%s1 + $0x458] sm:$0xff]
  %v161 = vld [vmem:[%s1 + $0x460] sm:$0xff]
  %v162 = vld [vmem:[%s1 + $0x468] sm:$0xff]
  %v163 = vld [vmem:[%s1 + $0x470] sm:$0xff]
  %v164 = vld [vmem:[%s1 + $0x478] sm:$0xff]
  %v165 = vld [vmem:[%s1 + $0x480] sm:$0xff]
  %v166 = vld [vmem:[%s1 + $0x488] sm:$0xff]
  %v167 = vld [vmem:[%s1 + $0x490] sm:$0xff]
  %v168 = vld [vmem:[%s1 + $0x498] sm:$0xff]
  %v169 = vld [vmem:[%s1 + $0x4a0] sm:$0xff]
  %v170 = vld [vmem:[%s1 + $0x4a8] sm:$0xff]
  %v171 = vld [vmem:[%s1 + $0x4b0] sm:$0xff]
  %v172 = vld [vmem:[%s1 + $0x4b8] sm:$0xff]
  %v173 = vld [vmem:[%s1 + $0x4c0] sm:$0xff]
  %v174 = vld [vmem:[%s1 + $0x4c8] sm:$0xff]
  %v175 = vld [vmem:[%s1 + $0x4d0] sm:$0xff]
  %v176 = vld [vmem:[%s1 + $0x4d8] sm:$0xff]
  %v177 = vld [vmem:[%s1 + $0x4e0] sm:$0xff]
  %v178 = vld [vmem:[%s1 + $0x4e8] sm:$0xff]
  %v179 = vld [vmem:[%s1 + $0x4f0] sm:$0xff]
  %v180 = vld [vmem:[%s1 + $0x4f8] sm:$0xff]
  %v181 = vld [vmem:[%s1 + $0x500] sm:$0xff]
  %v182 = vld [vmem:[%s1 + $0x508] sm:$0xff]
  %v183 = vld [vmem:[%s1 + $0x510] sm:$0xff]
  %v184 = vld [vmem:[%s1 + $0x518] sm:$0xff]
  %v185 = vld [vmem:[%s1 + $0x520] sm:$0xff]
  %v186 = vld [vmem:[%s1 + $0x528] sm:$0xff]
  %v187 = vld [vmem:[%s1 + $0x530] sm:$0xff]
  %v188 = vld [vmem:[%s1 + $0x538] sm:$0xff]
  %v189 = vld [vmem:[%s1 + $0x540] sm:$0xff]
  %v190 = vld [vmem:[%s1 + $0x548] sm:$0xff]
  %v191 = vld [vmem:[%s1 + $0x550] sm:$0xff]
  %v192 = vld [vmem:[%s1 + $0x558] sm:$0xff]
  %v193 = vld [vmem:[%s1 + $0x560] sm:$0xff]
  %v194 = vld [vmem:[%s1 + $0x568] sm:$0xff]
  %v195 = vld [vmem:[%s1 + $0x570] sm:$0xff]
  %v196 = vld [vmem:[%s1 + $0x578] sm:$0xff]
  %v197 = vld [vmem:[%s1 + $0x580] sm:$0xff]
  %v198 = vld [vmem:[%s1 + $0x588] sm:$0xff]
  %v199 = vld [vmem:[%s1 + $0x590] sm:$0xff]
  %v200 = vld [vmem:[%s1 + $0x598] sm:$0xff]
  %v201 = vld [vmem:[%s1 + $0x5a0] sm:$0xff]
  %v202 = vld [vmem:[%s1 + $0x5a8] sm:$0xff]
  %v203 = vld [vmem:[%s1 + $0x5b0] sm:$0xff]
  %v204 = vld [vmem:[%s1 + $0x5b8] sm:$0xff]
  %v205 = vld [vmem:[%s1 + $0x5c0] sm:$0xff]
  %v206 = vld [vmem:[%s1 + $0x5c8] sm:$0xff]
  %v207 = vld [vmem:[%s1 + $0x5d0] sm:$0xff]
  %v208 = vld [vmem:[%s1 + $0x5d8] sm:$0xff]
  %v209 = vld [vmem:[%s1 + $0x5e0] sm:$0xff]
  %v210 = vld [vmem:[%s1 + $0x5e8] sm:$0xff]
  %v211 = vld [vmem:[%s1 + $0x5f0] sm:$0xff]
  %v212 = vld [vmem:[%s1 + $0x5f8] sm:$0xff]
  %v213 = vld [vmem:[%s1 + $0x600] sm:$0xff]
  %v214 = vld [vmem:[%s1 + $0x608] sm:$0xff]
  %v215 = vld [vmem:[%s1 + $0x610] sm:$0xff]
  %v216 = vld [vmem:[%s1 + $0x618] sm:$0xff]
  %v217 = vld [vmem:[%s1 + $0x620] sm:$0xff]
  %v218 = vld [vmem:[%s1 + $0x628] sm:$0xff]
  %v219 = vld [vmem:[%s1 + $0x630] sm:$0xff]
  %v220 = vld [vmem:[%s1 + $0x638] sm:$0xff]
  %v221 = vld [vmem:[%s1 + $0x640] sm:$0xff]
  %v222 = vld [vmem:[%s1 + $0x648] sm:$0xff]
  %v223 = vld [vmem:[%s1 + $0x650] sm:$0xff]
  %v224 = vld [vmem:[%s1 + $0x658] sm:$0xff]
  %v225 = vld [vmem:[%s1 + $0x660] sm:$0xff]
  %v226 = vld [vmem:[%s1 + $0x668] sm:$0xff]
  %v227 = vld [vmem:[%s1 + $0x670] sm:$0xff]
  %v228 = vld [vmem:[%s1 + $0x678] sm:$0xff]
  %v229 = vld [vmem:[%s1 + $0x680] sm:$0xff]
  %v230 = vld [vmem:[%s1 + $0x688] sm:$0xff]
  %v231 = vld [vmem:[%s1 + $0x690] sm:$0xff]
  %v232 = vld [vmem:[%s1 + $0x698] sm:$0xff]
  %v233 = vld [vmem:[%s1 + $0x6a0] sm:$0xff]
  %v234 = vld [vmem:[%s1 + $0x6a8] sm:$0xff]
  %v235 = vld [vmem:[%s1 + $0x6b0] sm:$0xff]
  %v236 = vld [vmem:[%s1 + $0x6b8] sm:$0xff]
  %v237 = vld [vmem:[%s1 + $0x6c0] sm:$0xff]
  %v238 = vld [vmem:[%s1 + $0x6c8] sm:$0xff]
  %v239 = vld [vmem:[%s1 + $0x6d0] sm:$0xff]
  %v240 = vld [vmem:[%s1 + $0x6d8] sm:$0xff]
  %v241 = vld [vmem:[%s1 + $0x6e0] sm:$0xff]
  %v242 = vld [vmem:[%s1 + $0x6e8] sm:$0xff]
  %v243 = vld [vmem:[%s1 + $0x6f0] sm:$0xff]
  %v244 = vld [vmem:[%s1 + $0x6f8] sm:$0xff]
  %v245 = vld [vmem:[%s1 + $0x700] sm:$0xff]
  %v246 = vld [vmem:[%s1 + $0x708] sm:$0xff]
  %v247 = vld [vmem:[%s1 + $0x710] sm:$0xff]
  %v248 = vld [vmem:[%s1 + $0x718] sm:$0xff]
  %v249 = vld [vmem:[%s1 + $0x720] sm:$0xff]
  %v250 = vld [vmem:[%s1 + $0x728] sm:$0xff]
  %v251 = vld [vmem:[%s1 + $0x730] sm:$0xff]
  %v252 = vld [vmem:[%s1 + $0x738] sm:$0xff]
  %v253 = vld [vmem:[%s1 + $0x740] sm:$0xff]
  %v254 = vld [vmem:[%s1 + $0x748] sm:$0xff]
  %v255 = vld [vmem:[%s1 + $0x750] sm:$0xff]
  %v256 = vld [vmem:[%s1 + $0x758] sm:$0xff]
  %v257 = vld [vmem:[%s1 + $0x760] sm:$0xff]
  %v258 = vld [vmem:[%s1 + $0x768] sm:$0xff]
  %v259 = vld [vmem:[%s1 + $0x770] sm:$0xff]
  %v260 = vld [vmem:[%s1 + $0x778] sm:$0xff]
  %v261 = vld [vmem:[%s1 + $0x780] sm:$0xff]
  %v262 = vld [vmem:[%s1 + $0x788] sm:$0xff]
  %v263 = vld [vmem:[%s1 + $0x790] sm:$0xff]
  %v264 = vld [vmem:[%s1 + $0x798] sm:$0xff]
  %v265 = vld [vmem:[%s1 + $0x7a0] sm:$0xff]
  %v266 = vld [vmem:[%s1 + $0x7a8] sm:$0xff]
  %v267 = vld [vmem:[%s1 + $0x7b0] sm:$0xff]
  %v268 = vld [vmem:[%s1 + $0x7b8] sm:$0xff]
  %v269 = vld [vmem:[%s1 + $0x7c0] sm:$0xff]
  %v270 = vld [vmem:[%s1 + $0x7c8] sm:$0xff]
  %v271 = vld [vmem:[%s1 + $0x7d0] sm:$0xff]
  %v272 = vld [vmem:[%s1 + $0x7d8] sm:$0xff]
  %v273 = vld [vmem:[%s1 + $0x7e0] sm:$0xff]
  %v274 = vld [vmem:[%s1 + $0x7e8] sm:$0xff]
  %v275 = vld [vmem:[%s1 + $0x7f0] sm:$0xff]
  %v276 = vld [vmem:[%s1 + $0x7f8] sm:$0xff]
  %v281 = vcombine.high %v17, %v17
  %v283 = vunpack.c.l.s4 1983009808
  %v284 = vunpack.c.0.s8 %v283
  %v285 = vlaneseq
  %v286 = vshrl.u32 %v285, 7
  %v287 = vsub.s32 %v284, %v286
  %v288 = vrot.slane %v17, %v287
  %v290 = vunpack.c.l.s4 1983009808
  %v291 = vunpack.c.0.s8 %v290
  %v292 = vlaneseq
  %v293 = vshrl.u32 %v292, 7
  %v294 = vsub.s32 %v291, %v293
  %v295 = vrot.slane %v281, %v294
  %v296 = vcombine.high %v288, %v288
  %v297 = vcombine.high %v295, %v295
  %v298 = vcombine.high %v18, %v18
  %v300 = vunpack.c.l.s4 1983009808
  %v301 = vunpack.c.0.s8 %v300
  %v302 = vlaneseq
  %v303 = vshrl.u32 %v302, 7
  %v304 = vsub.s32 %v301, %v303
  %v305 = vrot.slane %v18, %v304
  %v307 = vunpack.c.l.s4 1983009808
  %v308 = vunpack.c.0.s8 %v307
  %v309 = vlaneseq
  %v310 = vshrl.u32 %v309, 7
  %v311 = vsub.s32 %v308, %v310
  %v312 = vrot.slane %v298, %v311
  %v313 = vcombine.high %v305, %v305
  %v314 = vcombine.high %v312, %v312
  %v315 = vcombine.high %v19, %v19
  %v317 = vunpack.c.l.s4 1983009808
  %v318 = vunpack.c.0.s8 %v317
  %v319 = vlaneseq
  %v320 = vshrl.u32 %v319, 7
  %v321 = vsub.s32 %v318, %v320
  %v322 = vrot.slane %v19, %v321
  %v324 = vunpack.c.l.s4 1983009808
  %v325 = vunpack.c.0.s8 %v324
  %v326 = vlaneseq
  %v327 = vshrl.u32 %v326, 7
  %v328 = vsub.s32 %v325, %v327
  %v329 = vrot.slane %v315, %v328
  %v330 = vcombine.high %v322, %v322
  %v331 = vcombine.high %v329, %v329
  %v332 = vcombine.high %v20, %v20
  %v334 = vunpack.c.l.s4 1983009808
  %v335 = vunpack.c.0.s8 %v334
  %v336 = vlaneseq
  %v337 = vshrl.u32 %v336, 7
  %v338 = vsub.s32 %v335, %v337
  %v339 = vrot.slane %v20, %v338
  %v341 = vunpack.c.l.s4 1983009808
  %v342 = vunpack.c.0.s8 %v341
  %v343 = vlaneseq
  %v344 = vshrl.u32 %v343, 7
  %v345 = vsub.s32 %v342, %v344
  %v346 = vrot.slane %v332, %v345
  %v347 = vcombine.high %v339, %v339
  %v348 = vcombine.high %v346, %v346
  %v621 = vunpack.c.l.b16 %v21
  %v622 = vunpack.c.h.b16 %v21
  %v623 = vunpack.c.l.b16 %v22
  %v624 = vunpack.c.h.b16 %v22
  %v625 = vunpack.c.l.b16 %v23
  %v626 = vunpack.c.h.b16 %v23
  %v627 = vunpack.c.l.b16 %v24
  %v628 = vunpack.c.h.b16 %v24
  %v629 = vunpack.c.l.b16 %v25
  %v630 = vunpack.c.h.b16 %v25
  %v631 = vunpack.c.l.b16 %v26
  %v632 = vunpack.c.h.b16 %v26
  %v633 = vunpack.c.l.b16 %v27
  %v634 = vunpack.c.h.b16 %v27
  %v635 = vunpack.c.l.b16 %v28
  %v636 = vunpack.c.h.b16 %v28
  %v637 = vunpack.c.l.b16 %v29
  %v638 = vunpack.c.h.b16 %v29
  %v639 = vunpack.c.l.b16 %v30
  %v640 = vunpack.c.h.b16 %v30
  %v641 = vunpack.c.l.b16 %v31
  %v642 = vunpack.c.h.b16 %v31
  %v643 = vunpack.c.l.b16 %v32
  %v644 = vunpack.c.h.b16 %v32
  %v645 = vunpack.c.l.b16 %v33
  %v646 = vunpack.c.h.b16 %v33
  %v647 = vunpack.c.l.b16 %v34
  %v648 = vunpack.c.h.b16 %v34
  %v649 = vunpack.c.l.b16 %v35
  %v650 = vunpack.c.h.b16 %v35
  %v651 = vunpack.c.l.b16 %v36
  %v652 = vunpack.c.h.b16 %v36
  %v653 = vunpack.c.l.b16 %v37
  %v654 = vunpack.c.h.b16 %v37
  %v655 = vunpack.c.l.b16 %v38
  %v656 = vunpack.c.h.b16 %v38
  %v657 = vunpack.c.l.b16 %v39
  %v658 = vunpack.c.h.b16 %v39
  %v659 = vunpack.c.l.b16 %v40
  %v660 = vunpack.c.h.b16 %v40
  %v661 = vunpack.c.l.b16 %v41
  %v662 = vunpack.c.h.b16 %v41
  %v663 = vunpack.c.l.b16 %v42
  %v664 = vunpack.c.h.b16 %v42
  %v665 = vunpack.c.l.b16 %v43
  %v666 = vunpack.c.h.b16 %v43
  %v667 = vunpack.c.l.b16 %v44
  %v668 = vunpack.c.h.b16 %v44
  %v669 = vunpack.c.l.b16 %v45
  %v670 = vunpack.c.h.b16 %v45
  %v671 = vunpack.c.l.b16 %v46
  %v672 = vunpack.c.h.b16 %v46
  %v673 = vunpack.c.l.b16 %v47
  %v674 = vunpack.c.h.b16 %v47
  %v675 = vunpack.c.l.b16 %v48
  %v676 = vunpack.c.h.b16 %v48
  %v677 = vunpack.c.l.b16 %v49
  %v678 = vunpack.c.h.b16 %v49
  %v679 = vunpack.c.l.b16 %v50
  %v680 = vunpack.c.h.b16 %v50
  %v681 = vunpack.c.l.b16 %v51
  %v682 = vunpack.c.h.b16 %v51
  %v683 = vunpack.c.l.b16 %v52
  %v684 = vunpack.c.h.b16 %v52
  %v685 = vunpack.c.l.b16 %v53
  %v686 = vunpack.c.h.b16 %v53
  %v687 = vunpack.c.l.b16 %v54
  %v688 = vunpack.c.h.b16 %v54
  %v689 = vunpack.c.l.b16 %v55
  %v690 = vunpack.c.h.b16 %v55
  %v691 = vunpack.c.l.b16 %v56
  %v692 = vunpack.c.h.b16 %v56
  %v693 = vunpack.c.l.b16 %v57
  %v694 = vunpack.c.h.b16 %v57
  %v695 = vunpack.c.l.b16 %v58
  %v696 = vunpack.c.h.b16 %v58
  %v697 = vunpack.c.l.b16 %v59
  %v698 = vunpack.c.h.b16 %v59
  %v699 = vunpack.c.l.b16 %v60
  %v700 = vunpack.c.h.b16 %v60
  %v701 = vunpack.c.l.b16 %v61
  %v702 = vunpack.c.h.b16 %v61
  %v703 = vunpack.c.l.b16 %v62
  %v704 = vunpack.c.h.b16 %v62
  %v705 = vunpack.c.l.b16 %v63
  %v706 = vunpack.c.h.b16 %v63
  %v707 = vunpack.c.l.b16 %v64
  %v708 = vunpack.c.h.b16 %v64
  %v709 = vunpack.c.l.b16 %v65
  %v710 = vunpack.c.h.b16 %v65
  %v711 = vunpack.c.l.b16 %v66
  %v712 = vunpack.c.h.b16 %v66
  %v713 = vunpack.c.l.b16 %v67
  %v714 = vunpack.c.h.b16 %v67
  %v715 = vunpack.c.l.b16 %v68
  %v716 = vunpack.c.h.b16 %v68
  %v717 = vunpack.c.l.b16 %v69
  %v718 = vunpack.c.h.b16 %v69
  %v719 = vunpack.c.l.b16 %v70
  %v720 = vunpack.c.h.b16 %v70
  %v721 = vunpack.c.l.b16 %v71
  %v722 = vunpack.c.h.b16 %v71
  %v723 = vunpack.c.l.b16 %v72
  %v724 = vunpack.c.h.b16 %v72
  %v725 = vunpack.c.l.b16 %v73
  %v726 = vunpack.c.h.b16 %v73
  %v727 = vunpack.c.l.b16 %v74
  %v728 = vunpack.c.h.b16 %v74
  %v729 = vunpack.c.l.b16 %v75
  %v730 = vunpack.c.h.b16 %v75
  %v731 = vunpack.c.l.b16 %v76
  %v732 = vunpack.c.h.b16 %v76
  %v733 = vunpack.c.l.b16 %v77
  %v734 = vunpack.c.h.b16 %v77
  %v735 = vunpack.c.l.b16 %v78
  %v736 = vunpack.c.h.b16 %v78
  %v737 = vunpack.c.l.b16 %v79
  %v738 = vunpack.c.h.b16 %v79
  %v739 = vunpack.c.l.b16 %v80
  %v740 = vunpack.c.h.b16 %v80
  %v741 = vunpack.c.l.b16 %v81
  %v742 = vunpack.c.h.b16 %v81
  %v743 = vunpack.c.l.b16 %v82
  %v744 = vunpack.c.h.b16 %v82
  %v745 = vunpack.c.l.b16 %v83
  %v746 = vunpack.c.h.b16 %v83
  %v747 = vunpack.c.l.b16 %v84
  %v748 = vunpack.c.h.b16 %v84
  %v749 = vunpack.c.l.b16 %v85
  %v750 = vunpack.c.h.b16 %v85
  %v751 = vunpack.c.l.b16 %v86
  %v752 = vunpack.c.h.b16 %v86
  %v753 = vunpack.c.l.b16 %v87
  %v754 = vunpack.c.h.b16 %v87
  %v755 = vunpack.c.l.b16 %v88
  %v756 = vunpack.c.h.b16 %v88
  %v757 = vunpack.c.l.b16 %v89
  %v758 = vunpack.c.h.b16 %v89
  %v759 = vunpack.c.l.b16 %v90
  %v760 = vunpack.c.h.b16 %v90
  %v761 = vunpack.c.l.b16 %v91
  %v762 = vunpack.c.h.b16 %v91
  %v763 = vunpack.c.l.b16 %v92
  %v764 = vunpack.c.h.b16 %v92
  %v765 = vunpack.c.l.b16 %v93
  %v766 = vunpack.c.h.b16 %v93
  %v767 = vunpack.c.l.b16 %v94
  %v768 = vunpack.c.h.b16 %v94
  %v769 = vunpack.c.l.b16 %v95
  %v770 = vunpack.c.h.b16 %v95
  %v771 = vunpack.c.l.b16 %v96
  %v772 = vunpack.c.h.b16 %v96
  %v773 = vunpack.c.l.b16 %v97
  %v774 = vunpack.c.h.b16 %v97
  %v775 = vunpack.c.l.b16 %v98
  %v776 = vunpack.c.h.b16 %v98
  %v777 = vunpack.c.l.b16 %v99
  %v778 = vunpack.c.h.b16 %v99
  %v779 = vunpack.c.l.b16 %v100
  %v780 = vunpack.c.h.b16 %v100
  %v781 = vunpack.c.l.b16 %v101
  %v782 = vunpack.c.h.b16 %v101
  %v783 = vunpack.c.l.b16 %v102
  %v784 = vunpack.c.h.b16 %v102
  %v785 = vunpack.c.l.b16 %v103
  %v786 = vunpack.c.h.b16 %v103
  %v787 = vunpack.c.l.b16 %v104
  %v788 = vunpack.c.h.b16 %v104
  %v789 = vunpack.c.l.b16 %v105
  %v790 = vunpack.c.h.b16 %v105
  %v791 = vunpack.c.l.b16 %v106
  %v792 = vunpack.c.h.b16 %v106
  %v793 = vunpack.c.l.b16 %v107
  %v794 = vunpack.c.h.b16 %v107
  %v795 = vunpack.c.l.b16 %v108
  %v796 = vunpack.c.h.b16 %v108
  %v797 = vunpack.c.l.b16 %v109
  %v798 = vunpack.c.h.b16 %v109
  %v799 = vunpack.c.l.b16 %v110
  %v800 = vunpack.c.h.b16 %v110
  %v801 = vunpack.c.l.b16 %v111
  %v802 = vunpack.c.h.b16 %v111
  %v803 = vunpack.c.l.b16 %v112
  %v804 = vunpack.c.h.b16 %v112
  %v805 = vunpack.c.l.b16 %v113
  %v806 = vunpack.c.h.b16 %v113
  %v807 = vunpack.c.l.b16 %v114
  %v808 = vunpack.c.h.b16 %v114
  %v809 = vunpack.c.l.b16 %v115
  %v810 = vunpack.c.h.b16 %v115
  %v811 = vunpack.c.l.b16 %v116
  %v812 = vunpack.c.h.b16 %v116
  %v813 = vunpack.c.l.b16 %v117
  %v814 = vunpack.c.h.b16 %v117
  %v815 = vunpack.c.l.b16 %v118
  %v816 = vunpack.c.h.b16 %v118
  %v817 = vunpack.c.l.b16 %v119
  %v818 = vunpack.c.h.b16 %v119
  %v819 = vunpack.c.l.b16 %v120
  %v820 = vunpack.c.h.b16 %v120
  %v821 = vunpack.c.l.b16 %v121
  %v822 = vunpack.c.h.b16 %v121
  %v823 = vunpack.c.l.b16 %v122
  %v824 = vunpack.c.h.b16 %v122
  %v825 = vunpack.c.l.b16 %v123
  %v826 = vunpack.c.h.b16 %v123
  %v827 = vunpack.c.l.b16 %v124
  %v828 = vunpack.c.h.b16 %v124
  %v829 = vunpack.c.l.b16 %v125
  %v830 = vunpack.c.h.b16 %v125
  %v831 = vunpack.c.l.b16 %v126
  %v832 = vunpack.c.h.b16 %v126
  %v833 = vunpack.c.l.b16 %v127
  %v834 = vunpack.c.h.b16 %v127
  %v835 = vunpack.c.l.b16 %v128
  %v836 = vunpack.c.h.b16 %v128
  %v837 = vunpack.c.l.b16 %v129
  %v838 = vunpack.c.h.b16 %v129
  %v839 = vunpack.c.l.b16 %v130
  %v840 = vunpack.c.h.b16 %v130
  %v841 = vunpack.c.l.b16 %v131
  %v842 = vunpack.c.h.b16 %v131
  %v843 = vunpack.c.l.b16 %v132
  %v844 = vunpack.c.h.b16 %v132
  %v845 = vunpack.c.l.b16 %v133
  %v846 = vunpack.c.h.b16 %v133
  %v847 = vunpack.c.l.b16 %v134
  %v848 = vunpack.c.h.b16 %v134
  %v849 = vunpack.c.l.b16 %v135
  %v850 = vunpack.c.h.b16 %v135
  %v851 = vunpack.c.l.b16 %v136
  %v852 = vunpack.c.h.b16 %v136
  %v853 = vunpack.c.l.b16 %v137
  %v854 = vunpack.c.h.b16 %v137
  %v855 = vunpack.c.l.b16 %v138
  %v856 = vunpack.c.h.b16 %v138
  %v857 = vunpack.c.l.b16 %v139
  %v858 = vunpack.c.h.b16 %v139
  %v859 = vunpack.c.l.b16 %v140
  %v860 = vunpack.c.h.b16 %v140
  %v861 = vunpack.c.l.b16 %v141
  %v862 = vunpack.c.h.b16 %v141
  %v863 = vunpack.c.l.b16 %v142
  %v864 = vunpack.c.h.b16 %v142
  %v865 = vunpack.c.l.b16 %v143
  %v866 = vunpack.c.h.b16 %v143
  %v867 = vunpack.c.l.b16 %v144
  %v868 = vunpack.c.h.b16 %v144
  %v869 = vunpack.c.l.b16 %v145
  %v870 = vunpack.c.h.b16 %v145
  %v871 = vunpack.c.l.b16 %v146
  %v872 = vunpack.c.h.b16 %v146
  %v873 = vunpack.c.l.b16 %v147
  %v874 = vunpack.c.h.b16 %v147
  %v875 = vunpack.c.l.b16 %v148
  %v876 = vunpack.c.h.b16 %v148
  %v877 = vunpack.c.l.b16 %v149
  %v878 = vunpack.c.h.b16 %v149
  %v879 = vunpack.c.l.b16 %v150
  %v880 = vunpack.c.h.b16 %v150
  %v881 = vunpack.c.l.b16 %v151
  %v882 = vunpack.c.h.b16 %v151
  %v883 = vunpack.c.l.b16 %v152
  %v884 = vunpack.c.h.b16 %v152
  %v885 = vunpack.c.l.b16 %v153
  %v886 = vunpack.c.h.b16 %v153
  %v887 = vunpack.c.l.b16 %v154
  %v888 = vunpack.c.h.b16 %v154
  %v889 = vunpack.c.l.b16 %v155
  %v890 = vunpack.c.h.b16 %v155
  %v891 = vunpack.c.l.b16 %v156
  %v892 = vunpack.c.h.b16 %v156
  %v893 = vunpack.c.l.b16 %v157
  %v894 = vunpack.c.h.b16 %v157
  %v895 = vunpack.c.l.b16 %v158
  %v896 = vunpack.c.h.b16 %v158
  %v897 = vunpack.c.l.b16 %v159
  %v898 = vunpack.c.h.b16 %v159
  %v899 = vunpack.c.l.b16 %v160
  %v900 = vunpack.c.h.b16 %v160
  %v901 = vunpack.c.l.b16 %v161
  %v902 = vunpack.c.h.b16 %v161
  %v903 = vunpack.c.l.b16 %v162
  %v904 = vunpack.c.h.b16 %v162
  %v905 = vunpack.c.l.b16 %v163
  %v906 = vunpack.c.h.b16 %v163
  %v907 = vunpack.c.l.b16 %v164
  %v908 = vunpack.c.h.b16 %v164
  %v909 = vunpack.c.l.b16 %v165
  %v910 = vunpack.c.h.b16 %v165
  %v911 = vunpack.c.l.b16 %v166
  %v912 = vunpack.c.h.b16 %v166
  %v913 = vunpack.c.l.b16 %v167
  %v914 = vunpack.c.h.b16 %v167
  %v915 = vunpack.c.l.b16 %v168
  %v916 = vunpack.c.h.b16 %v168
  %v917 = vunpack.c.l.b16 %v169
  %v918 = vunpack.c.h.b16 %v169
  %v919 = vunpack.c.l.b16 %v170
  %v920 = vunpack.c.h.b16 %v170
  %v921 = vunpack.c.l.b16 %v171
  %v922 = vunpack.c.h.b16 %v171
  %v923 = vunpack.c.l.b16 %v172
  %v924 = vunpack.c.h.b16 %v172
  %v925 = vunpack.c.l.b16 %v173
  %v926 = vunpack.c.h.b16 %v173
  %v927 = vunpack.c.l.b16 %v174
  %v928 = vunpack.c.h.b16 %v174
  %v929 = vunpack.c.l.b16 %v175
  %v930 = vunpack.c.h.b16 %v175
  %v931 = vunpack.c.l.b16 %v176
  %v932 = vunpack.c.h.b16 %v176
  %v933 = vunpack.c.l.b16 %v177
  %v934 = vunpack.c.h.b16 %v177
  %v935 = vunpack.c.l.b16 %v178
  %v936 = vunpack.c.h.b16 %v178
  %v937 = vunpack.c.l.b16 %v179
  %v938 = vunpack.c.h.b16 %v179
  %v939 = vunpack.c.l.b16 %v180
  %v940 = vunpack.c.h.b16 %v180
  %v941 = vunpack.c.l.b16 %v181
  %v942 = vunpack.c.h.b16 %v181
  %v943 = vunpack.c.l.b16 %v182
  %v944 = vunpack.c.h.b16 %v182
  %v945 = vunpack.c.l.b16 %v183
  %v946 = vunpack.c.h.b16 %v183
  %v947 = vunpack.c.l.b16 %v184
  %v948 = vunpack.c.h.b16 %v184
  %v949 = vunpack.c.l.b16 %v185
  %v950 = vunpack.c.h.b16 %v185
  %v951 = vunpack.c.l.b16 %v186
  %v952 = vunpack.c.h.b16 %v186
  %v953 = vunpack.c.l.b16 %v187
  %v954 = vunpack.c.h.b16 %v187
  %v955 = vunpack.c.l.b16 %v188
  %v956 = vunpack.c.h.b16 %v188
  %v957 = vunpack.c.l.b16 %v189
  %v958 = vunpack.c.h.b16 %v189
  %v959 = vunpack.c.l.b16 %v190
  %v960 = vunpack.c.h.b16 %v190
  %v961 = vunpack.c.l.b16 %v191
  %v962 = vunpack.c.h.b16 %v191
  %v963 = vunpack.c.l.b16 %v192
  %v964 = vunpack.c.h.b16 %v192
  %v965 = vunpack.c.l.b16 %v193
  %v966 = vunpack.c.h.b16 %v193
  %v967 = vunpack.c.l.b16 %v194
  %v968 = vunpack.c.h.b16 %v194
  %v969 = vunpack.c.l.b16 %v195
  %v970 = vunpack.c.h.b16 %v195
  %v971 = vunpack.c.l.b16 %v196
  %v972 = vunpack.c.h.b16 %v196
  %v973 = vunpack.c.l.b16 %v197
  %v974 = vunpack.c.h.b16 %v197
  %v975 = vunpack.c.l.b16 %v198
  %v976 = vunpack.c.h.b16 %v198
  %v977 = vunpack.c.l.b16 %v199
  %v978 = vunpack.c.h.b16 %v199
  %v979 = vunpack.c.l.b16 %v200
  %v980 = vunpack.c.h.b16 %v200
  %v981 = vunpack.c.l.b16 %v201
  %v982 = vunpack.c.h.b16 %v201
  %v983 = vunpack.c.l.b16 %v202
  %v984 = vunpack.c.h.b16 %v202
  %v985 = vunpack.c.l.b16 %v203
  %v986 = vunpack.c.h.b16 %v203
  %v987 = vunpack.c.l.b16 %v204
  %v988 = vunpack.c.h.b16 %v204
  %v989 = vunpack.c.l.b16 %v205
  %v990 = vunpack.c.h.b16 %v205
  %v991 = vunpack.c.l.b16 %v206
  %v992 = vunpack.c.h.b16 %v206
  %v993 = vunpack.c.l.b16 %v207
  %v994 = vunpack.c.h.b16 %v207
  %v995 = vunpack.c.l.b16 %v208
  %v996 = vunpack.c.h.b16 %v208
  %v997 = vunpack.c.l.b16 %v209
  %v998 = vunpack.c.h.b16 %v209
  %v999 = vunpack.c.l.b16 %v210
  %v1000 = vunpack.c.h.b16 %v210
  %v1001 = vunpack.c.l.b16 %v211
  %v1002 = vunpack.c.h.b16 %v211
  %v1003 = vunpack.c.l.b16 %v212
  %v1004 = vunpack.c.h.b16 %v212
  %v1005 = vunpack.c.l.b16 %v213
  %v1006 = vunpack.c.h.b16 %v213
  %v1007 = vunpack.c.l.b16 %v214
  %v1008 = vunpack.c.h.b16 %v214
  %v1009 = vunpack.c.l.b16 %v215
  %v1010 = vunpack.c.h.b16 %v215
  %v1011 = vunpack.c.l.b16 %v216
  %v1012 = vunpack.c.h.b16 %v216
  %v1013 = vunpack.c.l.b16 %v217
  %v1014 = vunpack.c.h.b16 %v217
  %v1015 = vunpack.c.l.b16 %v218
  %v1016 = vunpack.c.h.b16 %v218
  %v1017 = vunpack.c.l.b16 %v219
  %v1018 = vunpack.c.h.b16 %v219
  %v1019 = vunpack.c.l.b16 %v220
  %v1020 = vunpack.c.h.b16 %v220
  %v1021 = vunpack.c.l.b16 %v221
  %v1022 = vunpack.c.h.b16 %v221
  %v1023 = vunpack.c.l.b16 %v222
  %v1024 = vunpack.c.h.b16 %v222
  %v1025 = vunpack.c.l.b16 %v223
  %v1026 = vunpack.c.h.b16 %v223
  %v1027 = vunpack.c.l.b16 %v224
  %v1028 = vunpack.c.h.b16 %v224
  %v1029 = vunpack.c.l.b16 %v225
  %v1030 = vunpack.c.h.b16 %v225
  %v1031 = vunpack.c.l.b16 %v226
  %v1032 = vunpack.c.h.b16 %v226
  %v1033 = vunpack.c.l.b16 %v227
  %v1034 = vunpack.c.h.b16 %v227
  %v1035 = vunpack.c.l.b16 %v228
  %v1036 = vunpack.c.h.b16 %v228
  %v1037 = vunpack.c.l.b16 %v229
  %v1038 = vunpack.c.h.b16 %v229
  %v1039 = vunpack.c.l.b16 %v230
  %v1040 = vunpack.c.h.b16 %v230
  %v1041 = vunpack.c.l.b16 %v231
  %v1042 = vunpack.c.h.b16 %v231
  %v1043 = vunpack.c.l.b16 %v232
  %v1044 = vunpack.c.h.b16 %v232
  %v1045 = vunpack.c.l.b16 %v233
  %v1046 = vunpack.c.h.b16 %v233
  %v1047 = vunpack.c.l.b16 %v234
  %v1048 = vunpack.c.h.b16 %v234
  %v1049 = vunpack.c.l.b16 %v235
  %v1050 = vunpack.c.h.b16 %v235
  %v1051 = vunpack.c.l.b16 %v236
  %v1052 = vunpack.c.h.b16 %v236
  %v1053 = vunpack.c.l.b16 %v237
  %v1054 = vunpack.c.h.b16 %v237
  %v1055 = vunpack.c.l.b16 %v238
  %v1056 = vunpack.c.h.b16 %v238
  %v1057 = vunpack.c.l.b16 %v239
  %v1058 = vunpack.c.h.b16 %v239
  %v1059 = vunpack.c.l.b16 %v240
  %v1060 = vunpack.c.h.b16 %v240
  %v1061 = vunpack.c.l.b16 %v241
  %v1062 = vunpack.c.h.b16 %v241
  %v1063 = vunpack.c.l.b16 %v242
  %v1064 = vunpack.c.h.b16 %v242
  %v1065 = vunpack.c.l.b16 %v243
  %v1066 = vunpack.c.h.b16 %v243
  %v1067 = vunpack.c.l.b16 %v244
  %v1068 = vunpack.c.h.b16 %v244
  %v1069 = vunpack.c.l.b16 %v245
  %v1070 = vunpack.c.h.b16 %v245
  %v1071 = vunpack.c.l.b16 %v246
  %v1072 = vunpack.c.h.b16 %v246
  %v1073 = vunpack.c.l.b16 %v247
  %v1074 = vunpack.c.h.b16 %v247
  %v1075 = vunpack.c.l.b16 %v248
  %v1076 = vunpack.c.h.b16 %v248
  %v1077 = vunpack.c.l.b16 %v249
  %v1078 = vunpack.c.h.b16 %v249
  %v1079 = vunpack.c.l.b16 %v250
  %v1080 = vunpack.c.h.b16 %v250
  %v1081 = vunpack.c.l.b16 %v251
  %v1082 = vunpack.c.h.b16 %v251
  %v1083 = vunpack.c.l.b16 %v252
  %v1084 = vunpack.c.h.b16 %v252
  %v1085 = vunpack.c.l.b16 %v253
  %v1086 = vunpack.c.h.b16 %v253
  %v1087 = vunpack.c.l.b16 %v254
  %v1088 = vunpack.c.h.b16 %v254
  %v1089 = vunpack.c.l.b16 %v255
  %v1090 = vunpack.c.h.b16 %v255
  %v1091 = vunpack.c.l.b16 %v256
  %v1092 = vunpack.c.h.b16 %v256
  %v1093 = vunpack.c.l.b16 %v257
  %v1094 = vunpack.c.h.b16 %v257
  %v1095 = vunpack.c.l.b16 %v258
  %v1096 = vunpack.c.h.b16 %v258
  %v1097 = vunpack.c.l.b16 %v259
  %v1098 = vunpack.c.h.b16 %v259
  %v1099 = vunpack.c.l.b16 %v260
  %v1100 = vunpack.c.h.b16 %v260
  %v1101 = vunpack.c.l.b16 %v261
  %v1102 = vunpack.c.h.b16 %v261
  %v1103 = vunpack.c.l.b16 %v262
  %v1104 = vunpack.c.h.b16 %v262
  %v1105 = vunpack.c.l.b16 %v263
  %v1106 = vunpack.c.h.b16 %v263
  %v1107 = vunpack.c.l.b16 %v264
  %v1108 = vunpack.c.h.b16 %v264
  %v1109 = vunpack.c.l.b16 %v265
  %v1110 = vunpack.c.h.b16 %v265
  %v1111 = vunpack.c.l.b16 %v266
  %v1112 = vunpack.c.h.b16 %v266
  %v1113 = vunpack.c.l.b16 %v267
  %v1114 = vunpack.c.h.b16 %v267
  %v1115 = vunpack.c.l.b16 %v268
  %v1116 = vunpack.c.h.b16 %v268
  %v1117 = vunpack.c.l.b16 %v269
  %v1118 = vunpack.c.h.b16 %v269
  %v1119 = vunpack.c.l.b16 %v270
  %v1120 = vunpack.c.h.b16 %v270
  %v1121 = vunpack.c.l.b16 %v271
  %v1122 = vunpack.c.h.b16 %v271
  %v1123 = vunpack.c.l.b16 %v272
  %v1124 = vunpack.c.h.b16 %v272
  %v1125 = vunpack.c.l.b16 %v273
  %v1126 = vunpack.c.h.b16 %v273
  %v1127 = vunpack.c.l.b16 %v274
  %v1128 = vunpack.c.h.b16 %v274
  %v1129 = vunpack.c.l.b16 %v275
  %v1130 = vunpack.c.h.b16 %v275
  %v1131 = vunpack.c.l.b16 %v276
  %v1132 = vunpack.c.h.b16 %v276
  %v1133 = vpack.c.b16 %v623, %v621
  %v1134 = vpack.c.b16 %v624, %v622
  %v1135 = vpack.c.b16 %v627, %v625
  %v1136 = vpack.c.b16 %v628, %v626
  %v1137 = vpack.c.b16 %v631, %v629
  %v1138 = vpack.c.b16 %v632, %v630
  %v1139 = vpack.c.b16 %v635, %v633
  %v1140 = vpack.c.b16 %v636, %v634
  %v1141 = vpack.c.b16 %v639, %v637
  %v1142 = vpack.c.b16 %v640, %v638
  %v1143 = vpack.c.b16 %v643, %v641
  %v1144 = vpack.c.b16 %v644, %v642
  %v1145 = vpack.c.b16 %v647, %v645
  %v1146 = vpack.c.b16 %v648, %v646
  %v1147 = vpack.c.b16 %v651, %v649
  %v1148 = vpack.c.b16 %v652, %v650
  %v1149 = vpack.c.b16 %v655, %v653
  %v1150 = vpack.c.b16 %v656, %v654
  %v1151 = vpack.c.b16 %v659, %v657
  %v1152 = vpack.c.b16 %v660, %v658
  %v1153 = vpack.c.b16 %v663, %v661
  %v1154 = vpack.c.b16 %v664, %v662
  %v1155 = vpack.c.b16 %v667, %v665
  %v1156 = vpack.c.b16 %v668, %v666
  %v1157 = vpack.c.b16 %v671, %v669
  %v1158 = vpack.c.b16 %v672, %v670
  %v1159 = vpack.c.b16 %v675, %v673
  %v1160 = vpack.c.b16 %v676, %v674
  %v1161 = vpack.c.b16 %v679, %v677
  %v1162 = vpack.c.b16 %v680, %v678
  %v1163 = vpack.c.b16 %v683, %v681
  %v1164 = vpack.c.b16 %v684, %v682
  %v1165 = vpack.c.b16 %v687, %v685
  %v1166 = vpack.c.b16 %v688, %v686
  %v1167 = vpack.c.b16 %v691, %v689
  %v1168 = vpack.c.b16 %v692, %v690
  %v1169 = vpack.c.b16 %v695, %v693
  %v1170 = vpack.c.b16 %v696, %v694
  %v1171 = vpack.c.b16 %v699, %v697
  %v1172 = vpack.c.b16 %v700, %v698
  %v1173 = vpack.c.b16 %v703, %v701
  %v1174 = vpack.c.b16 %v704, %v702
  %v1175 = vpack.c.b16 %v707, %v705
  %v1176 = vpack.c.b16 %v708, %v706
  %v1177 = vpack.c.b16 %v711, %v709
  %v1178 = vpack.c.b16 %v712, %v710
  %v1179 = vpack.c.b16 %v715, %v713
  %v1180 = vpack.c.b16 %v716, %v714
  %v1181 = vpack.c.b16 %v719, %v717
  %v1182 = vpack.c.b16 %v720, %v718
  %v1183 = vpack.c.b16 %v723, %v721
  %v1184 = vpack.c.b16 %v724, %v722
  %v1185 = vpack.c.b16 %v727, %v725
  %v1186 = vpack.c.b16 %v728, %v726
  %v1187 = vpack.c.b16 %v731, %v729
  %v1188 = vpack.c.b16 %v732, %v730
  %v1189 = vpack.c.b16 %v735, %v733
  %v1190 = vpack.c.b16 %v736, %v734
  %v1191 = vpack.c.b16 %v739, %v737
  %v1192 = vpack.c.b16 %v740, %v738
  %v1193 = vpack.c.b16 %v743, %v741
  %v1194 = vpack.c.b16 %v744, %v742
  %v1195 = vpack.c.b16 %v747, %v745
  %v1196 = vpack.c.b16 %v748, %v746
  %v1197 = vpack.c.b16 %v751, %v749
  %v1198 = vpack.c.b16 %v752, %v750
  %v1199 = vpack.c.b16 %v755, %v753
  %v1200 = vpack.c.b16 %v756, %v754
  %v1201 = vpack.c.b16 %v759, %v757
  %v1202 = vpack.c.b16 %v760, %v758
  %v1203 = vpack.c.b16 %v763, %v761
  %v1204 = vpack.c.b16 %v764, %v762
  %v1205 = vpack.c.b16 %v767, %v765
  %v1206 = vpack.c.b16 %v768, %v766
  %v1207 = vpack.c.b16 %v771, %v769
  %v1208 = vpack.c.b16 %v772, %v770
  %v1209 = vpack.c.b16 %v775, %v773
  %v1210 = vpack.c.b16 %v776, %v774
  %v1211 = vpack.c.b16 %v779, %v777
  %v1212 = vpack.c.b16 %v780, %v778
  %v1213 = vpack.c.b16 %v783, %v781
  %v1214 = vpack.c.b16 %v784, %v782
  %v1215 = vpack.c.b16 %v787, %v785
  %v1216 = vpack.c.b16 %v788, %v786
  %v1217 = vpack.c.b16 %v791, %v789
  %v1218 = vpack.c.b16 %v792, %v790
  %v1219 = vpack.c.b16 %v795, %v793
  %v1220 = vpack.c.b16 %v796, %v794
  %v1221 = vpack.c.b16 %v799, %v797
  %v1222 = vpack.c.b16 %v800, %v798
  %v1223 = vpack.c.b16 %v803, %v801
  %v1224 = vpack.c.b16 %v804, %v802
  %v1225 = vpack.c.b16 %v807, %v805
  %v1226 = vpack.c.b16 %v808, %v806
  %v1227 = vpack.c.b16 %v811, %v809
  %v1228 = vpack.c.b16 %v812, %v810
  %v1229 = vpack.c.b16 %v815, %v813
  %v1230 = vpack.c.b16 %v816, %v814
  %v1231 = vpack.c.b16 %v819, %v817
  %v1232 = vpack.c.b16 %v820, %v818
  %v1233 = vpack.c.b16 %v823, %v821
  %v1234 = vpack.c.b16 %v824, %v822
  %v1235 = vpack.c.b16 %v827, %v825
  %v1236 = vpack.c.b16 %v828, %v826
  %v1237 = vpack.c.b16 %v831, %v829
  %v1238 = vpack.c.b16 %v832, %v830
  %v1239 = vpack.c.b16 %v835, %v833
  %v1240 = vpack.c.b16 %v836, %v834
  %v1241 = vpack.c.b16 %v839, %v837
  %v1242 = vpack.c.b16 %v840, %v838
  %v1243 = vpack.c.b16 %v843, %v841
  %v1244 = vpack.c.b16 %v844, %v842
  %v1245 = vpack.c.b16 %v847, %v845
  %v1246 = vpack.c.b16 %v848, %v846
  %v1247 = vpack.c.b16 %v851, %v849
  %v1248 = vpack.c.b16 %v852, %v850
  %v1249 = vpack.c.b16 %v855, %v853
  %v1250 = vpack.c.b16 %v856, %v854
  %v1251 = vpack.c.b16 %v859, %v857
  %v1252 = vpack.c.b16 %v860, %v858
  %v1253 = vpack.c.b16 %v863, %v861
  %v1254 = vpack.c.b16 %v864, %v862
  %v1255 = vpack.c.b16 %v867, %v865
  %v1256 = vpack.c.b16 %v868, %v866
  %v1257 = vpack.c.b16 %v871, %v869
  %v1258 = vpack.c.b16 %v872, %v870
  %v1259 = vpack.c.b16 %v875, %v873
  %v1260 = vpack.c.b16 %v876, %v874
  %v1261 = vpack.c.b16 %v879, %v877
  %v1262 = vpack.c.b16 %v880, %v878
  %v1263 = vpack.c.b16 %v883, %v881
  %v1264 = vpack.c.b16 %v884, %v882
  %v1265 = vpack.c.b16 %v887, %v885
  %v1266 = vpack.c.b16 %v888, %v886
  %v1267 = vpack.c.b16 %v891, %v889
  %v1268 = vpack.c.b16 %v892, %v890
  %v1269 = vpack.c.b16 %v895, %v893
  %v1270 = vpack.c.b16 %v896, %v894
  %v1271 = vpack.c.b16 %v899, %v897
  %v1272 = vpack.c.b16 %v900, %v898
  %v1273 = vpack.c.b16 %v903, %v901
  %v1274 = vpack.c.b16 %v904, %v902
  %v1275 = vpack.c.b16 %v907, %v905
  %v1276 = vpack.c.b16 %v908, %v906
  %v1277 = vpack.c.b16 %v911, %v909
  %v1278 = vpack.c.b16 %v912, %v910
  %v1279 = vpack.c.b16 %v915, %v913
  %v1280 = vpack.c.b16 %v916, %v914
  %v1281 = vpack.c.b16 %v919, %v917
  %v1282 = vpack.c.b16 %v920, %v918
  %v1283 = vpack.c.b16 %v923, %v921
  %v1284 = vpack.c.b16 %v924, %v922
  %v1285 = vpack.c.b16 %v927, %v925
  %v1286 = vpack.c.b16 %v928, %v926
  %v1287 = vpack.c.b16 %v931, %v929
  %v1288 = vpack.c.b16 %v932, %v930
  %v1289 = vpack.c.b16 %v935, %v933
  %v1290 = vpack.c.b16 %v936, %v934
  %v1291 = vpack.c.b16 %v939, %v937
  %v1292 = vpack.c.b16 %v940, %v938
  %v1293 = vpack.c.b16 %v943, %v941
  %v1294 = vpack.c.b16 %v944, %v942
  %v1295 = vpack.c.b16 %v947, %v945
  %v1296 = vpack.c.b16 %v948, %v946
  %v1297 = vpack.c.b16 %v951, %v949
  %v1298 = vpack.c.b16 %v952, %v950
  %v1299 = vpack.c.b16 %v955, %v953
  %v1300 = vpack.c.b16 %v956, %v954
  %v1301 = vpack.c.b16 %v959, %v957
  %v1302 = vpack.c.b16 %v960, %v958
  %v1303 = vpack.c.b16 %v963, %v961
  %v1304 = vpack.c.b16 %v964, %v962
  %v1305 = vpack.c.b16 %v967, %v965
  %v1306 = vpack.c.b16 %v968, %v966
  %v1307 = vpack.c.b16 %v971, %v969
  %v1308 = vpack.c.b16 %v972, %v970
  %v1309 = vpack.c.b16 %v975, %v973
  %v1310 = vpack.c.b16 %v976, %v974
  %v1311 = vpack.c.b16 %v979, %v977
  %v1312 = vpack.c.b16 %v980, %v978
  %v1313 = vpack.c.b16 %v983, %v981
  %v1314 = vpack.c.b16 %v984, %v982
  %v1315 = vpack.c.b16 %v987, %v985
  %v1316 = vpack.c.b16 %v988, %v986
  %v1317 = vpack.c.b16 %v991, %v989
  %v1318 = vpack.c.b16 %v992, %v990
  %v1319 = vpack.c.b16 %v995, %v993
  %v1320 = vpack.c.b16 %v996, %v994
  %v1321 = vpack.c.b16 %v999, %v997
  %v1322 = vpack.c.b16 %v1000, %v998
  %v1323 = vpack.c.b16 %v1003, %v1001
  %v1324 = vpack.c.b16 %v1004, %v1002
  %v1325 = vpack.c.b16 %v1007, %v1005
  %v1326 = vpack.c.b16 %v1008, %v1006
  %v1327 = vpack.c.b16 %v1011, %v1009
  %v1328 = vpack.c.b16 %v1012, %v1010
  %v1329 = vpack.c.b16 %v1015, %v1013
  %v1330 = vpack.c.b16 %v1016, %v1014
  %v1331 = vpack.c.b16 %v1019, %v1017
  %v1332 = vpack.c.b16 %v1020, %v1018
  %v1333 = vpack.c.b16 %v1023, %v1021
  %v1334 = vpack.c.b16 %v1024, %v1022
  %v1335 = vpack.c.b16 %v1027, %v1025
  %v1336 = vpack.c.b16 %v1028, %v1026
  %v1337 = vpack.c.b16 %v1031, %v1029
  %v1338 = vpack.c.b16 %v1032, %v1030
  %v1339 = vpack.c.b16 %v1035, %v1033
  %v1340 = vpack.c.b16 %v1036, %v1034
  %v1341 = vpack.c.b16 %v1039, %v1037
  %v1342 = vpack.c.b16 %v1040, %v1038
  %v1343 = vpack.c.b16 %v1043, %v1041
  %v1344 = vpack.c.b16 %v1044, %v1042
  %v1345 = vpack.c.b16 %v1047, %v1045
  %v1346 = vpack.c.b16 %v1048, %v1046
  %v1347 = vpack.c.b16 %v1051, %v1049
  %v1348 = vpack.c.b16 %v1052, %v1050
  %v1349 = vpack.c.b16 %v1055, %v1053
  %v1350 = vpack.c.b16 %v1056, %v1054
  %v1351 = vpack.c.b16 %v1059, %v1057
  %v1352 = vpack.c.b16 %v1060, %v1058
  %v1353 = vpack.c.b16 %v1063, %v1061
  %v1354 = vpack.c.b16 %v1064, %v1062
  %v1355 = vpack.c.b16 %v1067, %v1065
  %v1356 = vpack.c.b16 %v1068, %v1066
  %v1357 = vpack.c.b16 %v1071, %v1069
  %v1358 = vpack.c.b16 %v1072, %v1070
  %v1359 = vpack.c.b16 %v1075, %v1073
  %v1360 = vpack.c.b16 %v1076, %v1074
  %v1361 = vpack.c.b16 %v1079, %v1077
  %v1362 = vpack.c.b16 %v1080, %v1078
  %v1363 = vpack.c.b16 %v1083, %v1081
  %v1364 = vpack.c.b16 %v1084, %v1082
  %v1365 = vpack.c.b16 %v1087, %v1085
  %v1366 = vpack.c.b16 %v1088, %v1086
  %v1367 = vpack.c.b16 %v1091, %v1089
  %v1368 = vpack.c.b16 %v1092, %v1090
  %v1369 = vpack.c.b16 %v1095, %v1093
  %v1370 = vpack.c.b16 %v1096, %v1094
  %v1371 = vpack.c.b16 %v1099, %v1097
  %v1372 = vpack.c.b16 %v1100, %v1098
  %v1373 = vpack.c.b16 %v1103, %v1101
  %v1374 = vpack.c.b16 %v1104, %v1102
  %v1375 = vpack.c.b16 %v1107, %v1105
  %v1376 = vpack.c.b16 %v1108, %v1106
  %v1377 = vpack.c.b16 %v1111, %v1109
  %v1378 = vpack.c.b16 %v1112, %v1110
  %v1379 = vpack.c.b16 %v1115, %v1113
  %v1380 = vpack.c.b16 %v1116, %v1114
  %v1381 = vpack.c.b16 %v1119, %v1117
  %v1382 = vpack.c.b16 %v1120, %v1118
  %v1383 = vpack.c.b16 %v1123, %v1121
  %v1384 = vpack.c.b16 %v1124, %v1122
  %v1385 = vpack.c.b16 %v1127, %v1125
  %v1386 = vpack.c.b16 %v1128, %v1126
  %v1387 = vpack.c.b16 %v1131, %v1129
  %v1388 = vpack.c.b16 %v1132, %v1130
  %1645 = vmatprep.subr.bf16.mxu0 %v1134
  %1646 = vmatpush1.bf16.msra.mxu0 %v1133
  %1647 = vmatprep.subr.bf16.mxu0 %v1136
  %1648 = vmatpush1.bf16.msra.mxu0 %v1135
  %1649 = vmatprep.subr.bf16.mxu0 %v1138
  %1650 = vmatpush1.bf16.msra.mxu0 %v1137
  %1651 = vmatprep.subr.bf16.mxu0 %v1140
  %1652 = vmatpush1.bf16.msra.mxu0 %v1139
  %1653 = vmatprep.subr.bf16.mxu0 %v1142
  %1654 = vmatpush1.bf16.msra.mxu0 %v1141
  %1655 = vmatprep.subr.bf16.mxu0 %v1144
  %1656 = vmatpush1.bf16.msra.mxu0 %v1143
  %1657 = vmatprep.subr.bf16.mxu0 %v1146
  %1658 = vmatpush1.bf16.msra.mxu0 %v1145
  %1659 = vmatprep.subr.bf16.mxu0 %v1148
  %1660 = vmatpush1.bf16.msra.mxu0 %v1147
  %1661 = vmatprep.subr.bf16.mxu0 %v1150
  %1662 = vmatpush1.bf16.msra.mxu0 %v1149
  %1663 = vmatprep.subr.bf16.mxu0 %v1152
  %1664 = vmatpush1.bf16.msra.mxu0 %v1151
  %1665 = vmatprep.subr.bf16.mxu0 %v1154
  %1666 = vmatpush1.bf16.msra.mxu0 %v1153
  %1667 = vmatprep.subr.bf16.mxu0 %v1156
  %1668 = vmatpush1.bf16.msra.mxu0 %v1155
  %1669 = vmatprep.subr.bf16.mxu0 %v1158
  %1670 = vmatpush1.bf16.msra.mxu0 %v1157
  %1671 = vmatprep.subr.bf16.mxu0 %v1160
  %1672 = vmatpush1.bf16.msra.mxu0 %v1159
  %1673 = vmatprep.subr.bf16.mxu0 %v1162
  %1674 = vmatpush1.bf16.msra.mxu0 %v1161
  %1675 = vmatprep.subr.bf16.mxu0 %v1164
  %1676 = vmatpush1.bf16.msra.mxu0 %v1163
  %1677 = vmatprep.mubr.bf16.mxu0 %v296
  %1678 = vmatmul.mubr.bf16.gmra.mrb[0].mxu0 %v288
  %v1679 = vpop.f32.mrb[0].mxu0
  %v1680 = vadd.f32 0.0, %v1679
  %v1681 = vpop.f32.mrb[0].mxu0
  %v1682 = vadd.f32 0.0, %v1681
  %v1683 = vpop.f32.mrb[0].mxu0
  %v1684 = vpop.f32.mrb[0].mxu0
  %1685 = vdwg.mxu0
  %1686 = vmatprep.subr.bf16.mxu0 %v1166
  %1687 = vmatpush1.bf16.msra.mxu0 %v1165
  %1688 = vmatprep.subr.bf16.mxu0 %v1168
  %1689 = vmatpush1.bf16.msra.mxu0 %v1167
  %1690 = vmatprep.subr.bf16.mxu0 %v1170
  %1691 = vmatpush1.bf16.msra.mxu0 %v1169
  %1692 = vmatprep.subr.bf16.mxu0 %v1172
  %1693 = vmatpush1.bf16.msra.mxu0 %v1171
  %1694 = vmatprep.subr.bf16.mxu0 %v1174
  %1695 = vmatpush1.bf16.msra.mxu0 %v1173
  %1696 = vmatprep.subr.bf16.mxu0 %v1176
  %1697 = vmatpush1.bf16.msra.mxu0 %v1175
  %1698 = vmatprep.subr.bf16.mxu0 %v1178
  %1699 = vmatpush1.bf16.msra.mxu0 %v1177
  %1700 = vmatprep.subr.bf16.mxu0 %v1180
  %1701 = vmatpush1.bf16.msra.mxu0 %v1179
  %1702 = vmatprep.subr.bf16.mxu0 %v1182
  %1703 = vmatpush1.bf16.msra.mxu0 %v1181
  %1704 = vmatprep.subr.bf16.mxu0 %v1184
  %1705 = vmatpush1.bf16.msra.mxu0 %v1183
  %1706 = vmatprep.subr.bf16.mxu0 %v1186
  %1707 = vmatpush1.bf16.msra.mxu0 %v1185
  %1708 = vmatprep.subr.bf16.mxu0 %v1188
  %1709 = vmatpush1.bf16.msra.mxu0 %v1187
  %1710 = vmatprep.subr.bf16.mxu0 %v1190
  %1711 = vmatpush1.bf16.msra.mxu0 %v1189
  %1712 = vmatprep.subr.bf16.mxu0 %v1192
  %1713 = vmatpush1.bf16.msra.mxu0 %v1191
  %1714 = vmatprep.subr.bf16.mxu0 %v1194
  %1715 = vmatpush1.bf16.msra.mxu0 %v1193
  %1716 = vmatprep.subr.bf16.mxu0 %v1196
  %1717 = vmatpush1.bf16.msra.mxu0 %v1195
  %1718 = vmatprep.mubr.bf16.mxu0 %v297
  %1719 = vmatmul.mubr.bf16.gmra.mrb[0].mxu0 %v295
  %v1720 = vpop.f32.mrb[0].mxu0
  %v1721 = vadd.f32 %v1680, %v1720
  %v1722 = vpop.f32.mrb[0].mxu0
  %v1723 = vadd.f32 %v1682, %v1722
  %v1724 = vpop.f32.mrb[0].mxu0
  %v1725 = vpop.f32.mrb[0].mxu0
  %1726 = vdwg.mxu0
  %1727 = vmatprep.subr.bf16.mxu0 %v1198
  %1728 = vmatpush1.bf16.msra.mxu0 %v1197
  %1729 = vmatprep.subr.bf16.mxu0 %v1200
  %1730 = vmatpush1.bf16.msra.mxu0 %v1199
  %1731 = vmatprep.subr.bf16.mxu0 %v1202
  %1732 = vmatpush1.bf16.msra.mxu0 %v1201
  %1733 = vmatprep.subr.bf16.mxu0 %v1204
  %1734 = vmatpush1.bf16.msra.mxu0 %v1203
  %1735 = vmatprep.subr.bf16.mxu0 %v1206
  %1736 = vmatpush1.bf16.msra.mxu0 %v1205
  %1737 = vmatprep.subr.bf16.mxu0 %v1208
  %1738 = vmatpush1.bf16.msra.mxu0 %v1207
  %1739 = vmatprep.subr.bf16.mxu0 %v1210
  %1740 = vmatpush1.bf16.msra.mxu0 %v1209
  %1741 = vmatprep.subr.bf16.mxu0 %v1212
  %1742 = vmatpush1.bf16.msra.mxu0 %v1211
  %1743 = vmatprep.subr.bf16.mxu0 %v1214
  %1744 = vmatpush1.bf16.msra.mxu0 %v1213
  %1745 = vmatprep.subr.bf16.mxu0 %v1216
  %1746 = vmatpush1.bf16.msra.mxu0 %v1215
  %1747 = vmatprep.subr.bf16.mxu0 %v1218
  %1748 = vmatpush1.bf16.msra.mxu0 %v1217
  %1749 = vmatprep.subr.bf16.mxu0 %v1220
  %1750 = vmatpush1.bf16.msra.mxu0 %v1219
  %1751 = vmatprep.subr.bf16.mxu0 %v1222
  %1752 = vmatpush1.bf16.msra.mxu0 %v1221
  %1753 = vmatprep.subr.bf16.mxu0 %v1224
  %1754 = vmatpush1.bf16.msra.mxu0 %v1223
  %1755 = vmatprep.subr.bf16.mxu0 %v1226
  %1756 = vmatpush1.bf16.msra.mxu0 %v1225
  %1757 = vmatprep.subr.bf16.mxu0 %v1228
  %1758 = vmatpush1.bf16.msra.mxu0 %v1227
  %1759 = vmatprep.mubr.bf16.mxu0 %v313
  %1760 = vmatmul.mubr.bf16.gmra.mrb[0].mxu0 %v305
  %v1761 = vpop.f32.mrb[0].mxu0
  %v1762 = vadd.f32 %v1721, %v1761
  %v1763 = vpop.f32.mrb[0].mxu0
  %v1764 = vadd.f32 %v1723, %v1763
  %v1765 = vpop.f32.mrb[0].mxu0
  %v1766 = vpop.f32.mrb[0].mxu0
  %1767 = vdwg.mxu0
  %1768 = vmatprep.subr.bf16.mxu0 %v1230
  %1769 = vmatpush1.bf16.msra.mxu0 %v1229
  %1770 = vmatprep.subr.bf16.mxu0 %v1232
  %1771 = vmatpush1.bf16.msra.mxu0 %v1231
  %1772 = vmatprep.subr.bf16.mxu0 %v1234
  %1773 = vmatpush1.bf16.msra.mxu0 %v1233
  %1774 = vmatprep.subr.bf16.mxu0 %v1236
  %1775 = vmatpush1.bf16.msra.mxu0 %v1235
  %1776 = vmatprep.subr.bf16.mxu0 %v1238
  %1777 = vmatpush1.bf16.msra.mxu0 %v1237
  %1778 = vmatprep.subr.bf16.mxu0 %v1240
  %1779 = vmatpush1.bf16.msra.mxu0 %v1239
  %1780 = vmatprep.subr.bf16.mxu0 %v1242
  %1781 = vmatpush1.bf16.msra.mxu0 %v1241
  %1782 = vmatprep.subr.bf16.mxu0 %v1244
  %1783 = vmatpush1.bf16.msra.mxu0 %v1243
  %1784 = vmatprep.subr.bf16.mxu0 %v1246
  %1785 = vmatpush1.bf16.msra.mxu0 %v1245
  %1786 = vmatprep.subr.bf16.mxu0 %v1248
  %1787 = vmatpush1.bf16.msra.mxu0 %v1247
  %1788 = vmatprep.subr.bf16.mxu0 %v1250
  %1789 = vmatpush1.bf16.msra.mxu0 %v1249
  %1790 = vmatprep.subr.bf16.mxu0 %v1252
  %1791 = vmatpush1.bf16.msra.mxu0 %v1251
  %1792 = vmatprep.subr.bf16.mxu0 %v1254
  %1793 = vmatpush1.bf16.msra.mxu0 %v1253
  %1794 = vmatprep.subr.bf16.mxu0 %v1256
  %1795 = vmatpush1.bf16.msra.mxu0 %v1255
  %1796 = vmatprep.subr.bf16.mxu0 %v1258
  %1797 = vmatpush1.bf16.msra.mxu0 %v1257
  %1798 = vmatprep.subr.bf16.mxu0 %v1260
  %1799 = vmatpush1.bf16.msra.mxu0 %v1259
  %1800 = vmatprep.mubr.bf16.mxu0 %v314
  %1801 = vmatmul.mubr.bf16.gmra.mrb[0].mxu0 %v312
  %v1802 = vpop.f32.mrb[0].mxu0
  %v1803 = vadd.f32 %v1762, %v1802
  %v1804 = vpop.f32.mrb[0].mxu0
  %v1805 = vadd.f32 %v1764, %v1804
  %v1806 = vpop.f32.mrb[0].mxu0
  %v1807 = vpop.f32.mrb[0].mxu0
  %1808 = vdwg.mxu0
  %1809 = vmatprep.subr.bf16.mxu0 %v1262
  %1810 = vmatpush1.bf16.msra.mxu0 %v1261
  %1811 = vmatprep.subr.bf16.mxu0 %v1264
  %1812 = vmatpush1.bf16.msra.mxu0 %v1263
  %1813 = vmatprep.subr.bf16.mxu0 %v1266
  %1814 = vmatpush1.bf16.msra.mxu0 %v1265
  %1815 = vmatprep.subr.bf16.mxu0 %v1268
  %1816 = vmatpush1.bf16.msra.mxu0 %v1267
  %1817 = vmatprep.subr.bf16.mxu0 %v1270
  %1818 = vmatpush1.bf16.msra.mxu0 %v1269
  %1819 = vmatprep.subr.bf16.mxu0 %v1272
  %1820 = vmatpush1.bf16.msra.mxu0 %v1271
  %1821 = vmatprep.subr.bf16.mxu0 %v1274
  %1822 = vmatpush1.bf16.msra.mxu0 %v1273
  %1823 = vmatprep.subr.bf16.mxu0 %v1276
  %1824 = vmatpush1.bf16.msra.mxu0 %v1275
  %1825 = vmatprep.subr.bf16.mxu0 %v1278
  %1826 = vmatpush1.bf16.msra.mxu0 %v1277
  %1827 = vmatprep.subr.bf16.mxu0 %v1280
  %1828 = vmatpush1.bf16.msra.mxu0 %v1279
  %1829 = vmatprep.subr.bf16.mxu0 %v1282
  %1830 = vmatpush1.bf16.msra.mxu0 %v1281
  %1831 = vmatprep.subr.bf16.mxu0 %v1284
  %1832 = vmatpush1.bf16.msra.mxu0 %v1283
  %1833 = vmatprep.subr.bf16.mxu0 %v1286
  %1834 = vmatpush1.bf16.msra.mxu0 %v1285
  %1835 = vmatprep.subr.bf16.mxu0 %v1288
  %1836 = vmatpush1.bf16.msra.mxu0 %v1287
  %1837 = vmatprep.subr.bf16.mxu0 %v1290
  %1838 = vmatpush1.bf16.msra.mxu0 %v1289
  %1839 = vmatprep.subr.bf16.mxu0 %v1292
  %1840 = vmatpush1.bf16.msra.mxu0 %v1291
  %1841 = vmatprep.mubr.bf16.mxu0 %v330
  %1842 = vmatmul.mubr.bf16.gmra.mrb[0].mxu0 %v322
  %v1843 = vpop.f32.mrb[0].mxu0
  %v1844 = vadd.f32 %v1803, %v1843
  %v1845 = vpop.f32.mrb[0].mxu0
  %v1846 = vadd.f32 %v1805, %v1845
  %v1847 = vpop.f32.mrb[0].mxu0
  %v1848 = vpop.f32.mrb[0].mxu0
  %1849 = vdwg.mxu0
  %1850 = vmatprep.subr.bf16.mxu0 %v1294
  %1851 = vmatpush1.bf16.msra.mxu0 %v1293
  %1852 = vmatprep.subr.bf16.mxu0 %v1296
  %1853 = vmatpush1.bf16.msra.mxu0 %v1295
  %1854 = vmatprep.subr.bf16.mxu0 %v1298
  %1855 = vmatpush1.bf16.msra.mxu0 %v1297
  %1856 = vmatprep.subr.bf16.mxu0 %v1300
  %1857 = vmatpush1.bf16.msra.mxu0 %v1299
  %1858 = vmatprep.subr.bf16.mxu0 %v1302
  %1859 = vmatpush1.bf16.msra.mxu0 %v1301
  %1860 = vmatprep.subr.bf16.mxu0 %v1304
  %1861 = vmatpush1.bf16.msra.mxu0 %v1303
  %1862 = vmatprep.subr.bf16.mxu0 %v1306
  %1863 = vmatpush1.bf16.msra.mxu0 %v1305
  %1864 = vmatprep.subr.bf16.mxu0 %v1308
  %1865 = vmatpush1.bf16.msra.mxu0 %v1307
  %1866 = vmatprep.subr.bf16.mxu0 %v1310
  %1867 = vmatpush1.bf16.msra.mxu0 %v1309
  %1868 = vmatprep.subr.bf16.mxu0 %v1312
  %1869 = vmatpush1.bf16.msra.mxu0 %v1311
  %1870 = vmatprep.subr.bf16.mxu0 %v1314
  %1871 = vmatpush1.bf16.msra.mxu0 %v1313
  %1872 = vmatprep.subr.bf16.mxu0 %v1316
  %1873 = vmatpush1.bf16.msra.mxu0 %v1315
  %1874 = vmatprep.subr.bf16.mxu0 %v1318
  %1875 = vmatpush1.bf16.msra.mxu0 %v1317
  %1876 = vmatprep.subr.bf16.mxu0 %v1320
  %1877 = vmatpush1.bf16.msra.mxu0 %v1319
  %1878 = vmatprep.subr.bf16.mxu0 %v1322
  %1879 = vmatpush1.bf16.msra.mxu0 %v1321
  %1880 = vmatprep.subr.bf16.mxu0 %v1324
  %1881 = vmatpush1.bf16.msra.mxu0 %v1323
  %1882 = vmatprep.mubr.bf16.mxu0 %v331
  %1883 = vmatmul.mubr.bf16.gmra.mrb[0].mxu0 %v329
  %v1884 = vpop.f32.mrb[0].mxu0
  %v1885 = vadd.f32 %v1844, %v1884
  %v1886 = vpop.f32.mrb[0].mxu0
  %v1887 = vadd.f32 %v1846, %v1886
  %v1888 = vpop.f32.mrb[0].mxu0
  %v1889 = vpop.f32.mrb[0].mxu0
  %1890 = vdwg.mxu0
  %1891 = vmatprep.subr.bf16.mxu0 %v1326
  %1892 = vmatpush1.bf16.msra.mxu0 %v1325
  %1893 = vmatprep.subr.bf16.mxu0 %v1328
  %1894 = vmatpush1.bf16.msra.mxu0 %v1327
  %1895 = vmatprep.subr.bf16.mxu0 %v1330
  %1896 = vmatpush1.bf16.msra.mxu0 %v1329
  %1897 = vmatprep.subr.bf16.mxu0 %v1332
  %1898 = vmatpush1.bf16.msra.mxu0 %v1331
  %1899 = vmatprep.subr.bf16.mxu0 %v1334
  %1900 = vmatpush1.bf16.msra.mxu0 %v1333
  %1901 = vmatprep.subr.bf16.mxu0 %v1336
  %1902 = vmatpush1.bf16.msra.mxu0 %v1335
  %1903 = vmatprep.subr.bf16.mxu0 %v1338
  %1904 = vmatpush1.bf16.msra.mxu0 %v1337
  %1905 = vmatprep.subr.bf16.mxu0 %v1340
  %1906 = vmatpush1.bf16.msra.mxu0 %v1339
  %1907 = vmatprep.subr.bf16.mxu0 %v1342
  %1908 = vmatpush1.bf16.msra.mxu0 %v1341
  %1909 = vmatprep.subr.bf16.mxu0 %v1344
  %1910 = vmatpush1.bf16.msra.mxu0 %v1343
  %1911 = vmatprep.subr.bf16.mxu0 %v1346
  %1912 = vmatpush1.bf16.msra.mxu0 %v1345
  %1913 = vmatprep.subr.bf16.mxu0 %v1348
  %1914 = vmatpush1.bf16.msra.mxu0 %v1347
  %1915 = vmatprep.subr.bf16.mxu0 %v1350
  %1916 = vmatpush1.bf16.msra.mxu0 %v1349
  %1917 = vmatprep.subr.bf16.mxu0 %v1352
  %1918 = vmatpush1.bf16.msra.mxu0 %v1351
  %1919 = vmatprep.subr.bf16.mxu0 %v1354
  %1920 = vmatpush1.bf16.msra.mxu0 %v1353
  %1921 = vmatprep.subr.bf16.mxu0 %v1356
  %1922 = vmatpush1.bf16.msra.mxu0 %v1355
  %1923 = vmatprep.mubr.bf16.mxu0 %v347
  %1924 = vmatmul.mubr.bf16.gmra.mrb[0].mxu0 %v339
  %v1925 = vpop.f32.mrb[0].mxu0
  %v1926 = vadd.f32 %v1885, %v1925
  %v1927 = vpop.f32.mrb[0].mxu0
  %v1928 = vadd.f32 %v1887, %v1927
  %v1929 = vpop.f32.mrb[0].mxu0
  %v1930 = vpop.f32.mrb[0].mxu0
  %1931 = vdwg.mxu0
  %1932 = vmatprep.subr.bf16.mxu0 %v1358
  %1933 = vmatpush1.bf16.msra.mxu0 %v1357
  %1934 = vmatprep.subr.bf16.mxu0 %v1360
  %1935 = vmatpush1.bf16.msra.mxu0 %v1359
  %1936 = vmatprep.subr.bf16.mxu0 %v1362
  %1937 = vmatpush1.bf16.msra.mxu0 %v1361
  %1938 = vmatprep.subr.bf16.mxu0 %v1364
  %1939 = vmatpush1.bf16.msra.mxu0 %v1363
  %1940 = vmatprep.subr.bf16.mxu0 %v1366
  %1941 = vmatpush1.bf16.msra.mxu0 %v1365
  %1942 = vmatprep.subr.bf16.mxu0 %v1368
  %1943 = vmatpush1.bf16.msra.mxu0 %v1367
  %1944 = vmatprep.subr.bf16.mxu0 %v1370
  %1945 = vmatpush1.bf16.msra.mxu0 %v1369
  %1946 = vmatprep.subr.bf16.mxu0 %v1372
  %1947 = vmatpush1.bf16.msra.mxu0 %v1371
  %1948 = vmatprep.subr.bf16.mxu0 %v1374
  %1949 = vmatpush1.bf16.msra.mxu0 %v1373
  %1950 = vmatprep.subr.bf16.mxu0 %v1376
  %1951 = vmatpush1.bf16.msra.mxu0 %v1375
  %1952 = vmatprep.subr.bf16.mxu0 %v1378
  %1953 = vmatpush1.bf16.msra.mxu0 %v1377
  %1954 = vmatprep.subr.bf16.mxu0 %v1380
  %1955 = vmatpush1.bf16.msra.mxu0 %v1379
  %1956 = vmatprep.subr.bf16.mxu0 %v1382
  %1957 = vmatpush1.bf16.msra.mxu0 %v1381
  %1958 = vmatprep.subr.bf16.mxu0 %v1384
  %1959 = vmatpush1.bf16.msra.mxu0 %v1383
  %1960 = vmatprep.subr.bf16.mxu0 %v1386
  %1961 = vmatpush1.bf16.msra.mxu0 %v1385
  %1962 = vmatprep.subr.bf16.mxu0 %v1388
  %1963 = vmatpush1.bf16.msra.mxu0 %v1387
  %1964 = vmatprep.mubr.bf16.mxu0 %v348
  %1965 = vmatmul.mubr.bf16.gmra.mrb[0].mxu0 %v346
  %v1966 = vpop.f32.mrb[0].mxu0
  %v1967 = vadd.f32 %v1926, %v1966
  %v1968 = vpop.f32.mrb[0].mxu0
  %v1969 = vadd.f32 %v1928, %v1968
  %v1970 = vpop.f32.mrb[0].mxu0
  %v1971 = vpop.f32.mrb[0].mxu0
  %1972 = vdwg.mxu0
  %v1973 = vld [vmem:[%s2] sm:$0x3]
  %v1975 = vlaneseq
  %v1976 = vshrl.u32 %v1975, 7
  %v1977 = vsub.s32 0, %v1976
  %v1978 = vrot.slane %v1973, %v1977
  %v1979 = vlaneseq
  %v1980 = vshrl.u32 %v1979, 7
  %v1981 = vsub.s32 1, %v1980
  %v1982 = vrot.slane %v1973, %v1981
  %v1985 = vmul.f32 %v1967, %v1978
  %v1986 = vmul.f32 %v1969, %v1982
  %v1987 = vld [vmem:[%s3] sm:$0x3]
  %v1989 = vlaneseq
  %v1990 = vshrl.u32 %v1989, 7
  %v1991 = vsub.s32 0, %v1990
  %v1992 = vrot.slane %v1987, %v1991
  %v1993 = vlaneseq
  %v1994 = vshrl.u32 %v1993, 7
  %v1995 = vsub.s32 1, %v1994
  %v1996 = vrot.slane %v1987, %v1995
  %v1999 = vadd.f32 %v1985, %v1992
  %v2000 = vadd.f32 %v1986, %v1996
  %vm2001 = vcmp.ge.f32.partialorder %v1999, 0.0
  %vm2002 = vcmp.ge.f32.partialorder %v2000, 0.0
  %v2003 = vmul.f32 %v1999, 0.2
  %v2004 = vmul.f32 %v2000, 0.2
  %v2005 = vsel %vm2001, %v1999, %v2003
  %v2006 = vsel %vm2002, %v2000, %v2004
  %v2007 = vpack.c.bf16 %v2005, %v2005
  %v2008 = vpack.c.bf16 %v2006, %v2006
  %v2011 = vcombine.low %v2007, %v2008
  %v2013 = vunpack.c.l.s4 1983009808
  %v2014 = vunpack.c.0.s8 %v2013
  %v2015 = vlaneseq
  %v2016 = vshrl.u32 %v2015, 7
  %v2017 = vsub.s32 %v2014, %v2016
  %v2018 = vrot.slane %v2011, %v2017
  %2020 = vst [vmem:[%s4] sm:$0xf] %v2018
  // Predicated region
  $region18: #{nlayer_attention_forward.7} parent=0 // pred_check
    _
  $region19: #{nlayer_attention_forward.7} parent=0 // pred_check_branch
    %2022 = sbr.rel (0) target = $region21
  $region20: #{nlayer_attention_forward.7} parent=0 // pred_region
    _
  $region21: #{nlayer_attention_forward.7} parent=0 // pred_fallthru
    _
  // Predicated region
  $region22: #{nlayer_attention_forward.7} parent=0 // pred_check
    _
  $region23: #{nlayer_attention_forward.7} parent=0 // pred_check_branch
    %2024 = sbr.rel (0) target = $region25
  $region24: #{nlayer_attention_forward.7} parent=0 // pred_region
    _
  $region25: #{nlayer_attention_forward.7} parent=0 // pred_fallthru
    _

// kernel: nlayer_attention_forward.8
$region0: #{nlayer_attention_forward.8}
  #allocation0 [shape = 'u32[]', space=smem, size = 0x4, offset = 0x4, fixed_abs, tag = 'smem constant byte address 0x4 - core index']
  #allocation1 [shape = 'u32[144,128]{1,0:T(1,128)}', space=vmem, size = 0x12000, scoped, tag = 'internal scratch']
  %s0 = inlined_call_operand.vmem [shape: bf16[5,2048], index: 0, kind: input, shape index: {}]
  %s1 = inlined_call_operand.vmem [shape: bf16[2048,256], index: 1, kind: input, shape index: {}]
  %s2 = inlined_call_operand.vmem [shape: f32[1,256], index: 2, kind: input, shape index: {}]
  %s3 = inlined_call_operand.vmem [shape: f32[1,256], index: 3, kind: input, shape index: {}]
  %s4 = inlined_call_operand.vmem [shape: bf16[5,256], index: 4, kind: output, shape index: {}]
  %s5 = sld [smem:[#allocation0]]
  $region26: #{nlayer_attention_forward.8} parent=0
    _
  %s7 = ssub.s32 1, %s5
  %s8 = scalar_select 0, %s7, %s5
  // Predicated region
  $region2: #{nlayer_attention_forward.8} parent=0 // pred_check
    _
  $region3: #{nlayer_attention_forward.8} parent=0 // pred_check_branch
    %10 = sbr.rel (0) target = $region5
  $region4: #{nlayer_attention_forward.8} parent=0 // pred_region
    _
  $region5: #{nlayer_attention_forward.8} parent=0 // pred_fallthru
    _
  // Predicated region
  $region6: #{nlayer_attention_forward.8} parent=0 // pred_check
    _
  $region7: #{nlayer_attention_forward.8} parent=0 // pred_check_branch
    %12 = sbr.rel (0) target = $region9
  $region8: #{nlayer_attention_forward.8} parent=0 // pred_region
    _
  $region9: #{nlayer_attention_forward.8} parent=0 // pred_fallthru
    _
  // Predicated region
  $region10: #{nlayer_attention_forward.8} parent=0 // pred_check
    _
  $region11: #{nlayer_attention_forward.8} parent=0 // pred_check_branch
    %14 = sbr.rel (0) target = $region13
  $region12: #{nlayer_attention_forward.8} parent=0 // pred_region
    _
  $region13: #{nlayer_attention_forward.8} parent=0 // pred_fallthru
    _
  // Predicated region
  $region14: #{nlayer_attention_forward.8} parent=0 // pred_check
    _
  $region15: #{nlayer_attention_forward.8} parent=0 // pred_check_branch
    %16 = sbr.rel (0) target = $region17
  $region16: #{nlayer_attention_forward.8} parent=0 // pred_region
    _
  $region17: #{nlayer_attention_forward.8} parent=0 // pred_fallthru
    _
  %v17 = vld [vmem:[%s0] sm:$0x77]
  %v18 = vld [vmem:[%s0 + $0x8] sm:$0x77]
  %v19 = vld [vmem:[%s0 + $0x10] sm:$0x77]
  %v20 = vld [vmem:[%s0 + $0x18] sm:$0x77]
  %v21 = vld [vmem:[%s0 + $0x20] sm:$0x77]
  %v22 = vld [vmem:[%s0 + $0x28] sm:$0x77]
  %v23 = vld [vmem:[%s0 + $0x30] sm:$0x77]
  %v24 = vld [vmem:[%s0 + $0x38] sm:$0x77]
  %v25 = vld [vmem:[%s1] sm:$0xff]
  %v26 = vld [vmem:[%s1 + $0x8] sm:$0xff]
  %v27 = vld [vmem:[%s1 + $0x10] sm:$0xff]
  %v28 = vld [vmem:[%s1 + $0x18] sm:$0xff]
  %v29 = vld [vmem:[%s1 + $0x20] sm:$0xff]
  %v30 = vld [vmem:[%s1 + $0x28] sm:$0xff]
  %v31 = vld [vmem:[%s1 + $0x30] sm:$0xff]
  %v32 = vld [vmem:[%s1 + $0x38] sm:$0xff]
  %v33 = vld [vmem:[%s1 + $0x40] sm:$0xff]
  %v34 = vld [vmem:[%s1 + $0x48] sm:$0xff]
  %v35 = vld [vmem:[%s1 + $0x50] sm:$0xff]
  %v36 = vld [vmem:[%s1 + $0x58] sm:$0xff]
  %v37 = vld [vmem:[%s1 + $0x60] sm:$0xff]
  %v38 = vld [vmem:[%s1 + $0x68] sm:$0xff]
  %v39 = vld [vmem:[%s1 + $0x70] sm:$0xff]
  %v40 = vld [vmem:[%s1 + $0x78] sm:$0xff]
  %v41 = vld [vmem:[%s1 + $0x80] sm:$0xff]
  %v42 = vld [vmem:[%s1 + $0x88] sm:$0xff]
  %v43 = vld [vmem:[%s1 + $0x90] sm:$0xff]
  %v44 = vld [vmem:[%s1 + $0x98] sm:$0xff]
  %v45 = vld [vmem:[%s1 + $0xa0] sm:$0xff]
  %v46 = vld [vmem:[%s1 + $0xa8] sm:$0xff]
  %v47 = vld [vmem:[%s1 + $0xb0] sm:$0xff]
  %v48 = vld [vmem:[%s1 + $0xb8] sm:$0xff]
  %v49 = vld [vmem:[%s1 + $0xc0] sm:$0xff]
  %v50 = vld [vmem:[%s1 + $0xc8] sm:$0xff]
  %v51 = vld [vmem:[%s1 + $0xd0] sm:$0xff]
  %v52 = vld [vmem:[%s1 + $0xd8] sm:$0xff]
  %v53 = vld [vmem:[%s1 + $0xe0] sm:$0xff]
  %v54 = vld [vmem:[%s1 + $0xe8] sm:$0xff]
  %v55 = vld [vmem:[%s1 + $0xf0] sm:$0xff]
  %v56 = vld [vmem:[%s1 + $0xf8] sm:$0xff]
  %v57 = vld [vmem:[%s1 + $0x100] sm:$0xff]
  %v58 = vld [vmem:[%s1 + $0x108] sm:$0xff]
  %v59 = vld [vmem:[%s1 + $0x110] sm:$0xff]
  %v60 = vld [vmem:[%s1 + $0x118] sm:$0xff]
  %v61 = vld [vmem:[%s1 + $0x120] sm:$0xff]
  %v62 = vld [vmem:[%s1 + $0x128] sm:$0xff]
  %v63 = vld [vmem:[%s1 + $0x130] sm:$0xff]
  %v64 = vld [vmem:[%s1 + $0x138] sm:$0xff]
  %v65 = vld [vmem:[%s1 + $0x140] sm:$0xff]
  %v66 = vld [vmem:[%s1 + $0x148] sm:$0xff]
  %v67 = vld [vmem:[%s1 + $0x150] sm:$0xff]
  %v68 = vld [vmem:[%s1 + $0x158] sm:$0xff]
  %v69 = vld [vmem:[%s1 + $0x160] sm:$0xff]
  %v70 = vld [vmem:[%s1 + $0x168] sm:$0xff]
  %v71 = vld [vmem:[%s1 + $0x170] sm:$0xff]
  %v72 = vld [vmem:[%s1 + $0x178] sm:$0xff]
  %v73 = vld [vmem:[%s1 + $0x180] sm:$0xff]
  %v74 = vld [vmem:[%s1 + $0x188] sm:$0xff]
  %v75 = vld [vmem:[%s1 + $0x190] sm:$0xff]
  %v76 = vld [vmem:[%s1 + $0x198] sm:$0xff]
  %v77 = vld [vmem:[%s1 + $0x1a0] sm:$0xff]
  %v78 = vld [vmem:[%s1 + $0x1a8] sm:$0xff]
  %v79 = vld [vmem:[%s1 + $0x1b0] sm:$0xff]
  %v80 = vld [vmem:[%s1 + $0x1b8] sm:$0xff]
  %v81 = vld [vmem:[%s1 + $0x1c0] sm:$0xff]
  %v82 = vld [vmem:[%s1 + $0x1c8] sm:$0xff]
  %v83 = vld [vmem:[%s1 + $0x1d0] sm:$0xff]
  %v84 = vld [vmem:[%s1 + $0x1d8] sm:$0xff]
  %v85 = vld [vmem:[%s1 + $0x1e0] sm:$0xff]
  %v86 = vld [vmem:[%s1 + $0x1e8] sm:$0xff]
  %v87 = vld [vmem:[%s1 + $0x1f0] sm:$0xff]
  %v88 = vld [vmem:[%s1 + $0x1f8] sm:$0xff]
  %v89 = vld [vmem:[%s1 + $0x200] sm:$0xff]
  %v90 = vld [vmem:[%s1 + $0x208] sm:$0xff]
  %v91 = vld [vmem:[%s1 + $0x210] sm:$0xff]
  %v92 = vld [vmem:[%s1 + $0x218] sm:$0xff]
  %v93 = vld [vmem:[%s1 + $0x220] sm:$0xff]
  %v94 = vld [vmem:[%s1 + $0x228] sm:$0xff]
  %v95 = vld [vmem:[%s1 + $0x230] sm:$0xff]
  %v96 = vld [vmem:[%s1 + $0x238] sm:$0xff]
  %v97 = vld [vmem:[%s1 + $0x240] sm:$0xff]
  %v98 = vld [vmem:[%s1 + $0x248] sm:$0xff]
  %v99 = vld [vmem:[%s1 + $0x250] sm:$0xff]
  %v100 = vld [vmem:[%s1 + $0x258] sm:$0xff]
  %v101 = vld [vmem:[%s1 + $0x260] sm:$0xff]
  %v102 = vld [vmem:[%s1 + $0x268] sm:$0xff]
  %v103 = vld [vmem:[%s1 + $0x270] sm:$0xff]
  %v104 = vld [vmem:[%s1 + $0x278] sm:$0xff]
  %v105 = vld [vmem:[%s1 + $0x280] sm:$0xff]
  %v106 = vld [vmem:[%s1 + $0x288] sm:$0xff]
  %v107 = vld [vmem:[%s1 + $0x290] sm:$0xff]
  %v108 = vld [vmem:[%s1 + $0x298] sm:$0xff]
  %v109 = vld [vmem:[%s1 + $0x2a0] sm:$0xff]
  %v110 = vld [vmem:[%s1 + $0x2a8] sm:$0xff]
  %v111 = vld [vmem:[%s1 + $0x2b0] sm:$0xff]
  %v112 = vld [vmem:[%s1 + $0x2b8] sm:$0xff]
  %v113 = vld [vmem:[%s1 + $0x2c0] sm:$0xff]
  %v114 = vld [vmem:[%s1 + $0x2c8] sm:$0xff]
  %v115 = vld [vmem:[%s1 + $0x2d0] sm:$0xff]
  %v116 = vld [vmem:[%s1 + $0x2d8] sm:$0xff]
  %v117 = vld [vmem:[%s1 + $0x2e0] sm:$0xff]
  %v118 = vld [vmem:[%s1 + $0x2e8] sm:$0xff]
  %v119 = vld [vmem:[%s1 + $0x2f0] sm:$0xff]
  %v120 = vld [vmem:[%s1 + $0x2f8] sm:$0xff]
  %v121 = vld [vmem:[%s1 + $0x300] sm:$0xff]
  %v122 = vld [vmem:[%s1 + $0x308] sm:$0xff]
  %v123 = vld [vmem:[%s1 + $0x310] sm:$0xff]
  %v124 = vld [vmem:[%s1 + $0x318] sm:$0xff]
  %v125 = vld [vmem:[%s1 + $0x320] sm:$0xff]
  %v126 = vld [vmem:[%s1 + $0x328] sm:$0xff]
  %v127 = vld [vmem:[%s1 + $0x330] sm:$0xff]
  %v128 = vld [vmem:[%s1 + $0x338] sm:$0xff]
  %v129 = vld [vmem:[%s1 + $0x340] sm:$0xff]
  %v130 = vld [vmem:[%s1 + $0x348] sm:$0xff]
  %v131 = vld [vmem:[%s1 + $0x350] sm:$0xff]
  %v132 = vld [vmem:[%s1 + $0x358] sm:$0xff]
  %v133 = vld [vmem:[%s1 + $0x360] sm:$0xff]
  %v134 = vld [vmem:[%s1 + $0x368] sm:$0xff]
  %v135 = vld [vmem:[%s1 + $0x370] sm:$0xff]
  %v136 = vld [vmem:[%s1 + $0x378] sm:$0xff]
  %v137 = vld [vmem:[%s1 + $0x380] sm:$0xff]
  %v138 = vld [vmem:[%s1 + $0x388] sm:$0xff]
  %v139 = vld [vmem:[%s1 + $0x390] sm:$0xff]
  %v140 = vld [vmem:[%s1 + $0x398] sm:$0xff]
  %v141 = vld [vmem:[%s1 + $0x3a0] sm:$0xff]
  %v142 = vld [vmem:[%s1 + $0x3a8] sm:$0xff]
  %v143 = vld [vmem:[%s1 + $0x3b0] sm:$0xff]
  %v144 = vld [vmem:[%s1 + $0x3b8] sm:$0xff]
  %v145 = vld [vmem:[%s1 + $0x3c0] sm:$0xff]
  %v146 = vld [vmem:[%s1 + $0x3c8] sm:$0xff]
  %v147 = vld [vmem:[%s1 + $0x3d0] sm:$0xff]
  %v148 = vld [vmem:[%s1 + $0x3d8] sm:$0xff]
  %v149 = vld [vmem:[%s1 + $0x3e0] sm:$0xff]
  %v150 = vld [vmem:[%s1 + $0x3e8] sm:$0xff]
  %v151 = vld [vmem:[%s1 + $0x3f0] sm:$0xff]
  %v152 = vld [vmem:[%s1 + $0x3f8] sm:$0xff]
  %v153 = vld [vmem:[%s1 + $0x400] sm:$0xff]
  %v154 = vld [vmem:[%s1 + $0x408] sm:$0xff]
  %v155 = vld [vmem:[%s1 + $0x410] sm:$0xff]
  %v156 = vld [vmem:[%s1 + $0x418] sm:$0xff]
  %v157 = vld [vmem:[%s1 + $0x420] sm:$0xff]
  %v158 = vld [vmem:[%s1 + $0x428] sm:$0xff]
  %v159 = vld [vmem:[%s1 + $0x430] sm:$0xff]
  %v160 = vld [vmem:[%s1 + $0x438] sm:$0xff]
  %v161 = vld [vmem:[%s1 + $0x440] sm:$0xff]
  %v162 = vld [vmem:[%s1 + $0x448] sm:$0xff]
  %v163 = vld [vmem:[%s1 + $0x450] sm:$0xff]
  %v164 = vld [vmem:[%s1 + $0x458] sm:$0xff]
  %v165 = vld [vmem:[%s1 + $0x460] sm:$0xff]
  %v166 = vld [vmem:[%s1 + $0x468] sm:$0xff]
  %v167 = vld [vmem:[%s1 + $0x470] sm:$0xff]
  %v168 = vld [vmem:[%s1 + $0x478] sm:$0xff]
  %v169 = vld [vmem:[%s1 + $0x480] sm:$0xff]
  %v170 = vld [vmem:[%s1 + $0x488] sm:$0xff]
  %v171 = vld [vmem:[%s1 + $0x490] sm:$0xff]
  %v172 = vld [vmem:[%s1 + $0x498] sm:$0xff]
  %v173 = vld [vmem:[%s1 + $0x4a0] sm:$0xff]
  %v174 = vld [vmem:[%s1 + $0x4a8] sm:$0xff]
  %v175 = vld [vmem:[%s1 + $0x4b0] sm:$0xff]
  %v176 = vld [vmem:[%s1 + $0x4b8] sm:$0xff]
  %v177 = vld [vmem:[%s1 + $0x4c0] sm:$0xff]
  %v178 = vld [vmem:[%s1 + $0x4c8] sm:$0xff]
  %v179 = vld [vmem:[%s1 + $0x4d0] sm:$0xff]
  %v180 = vld [vmem:[%s1 + $0x4d8] sm:$0xff]
  %v181 = vld [vmem:[%s1 + $0x4e0] sm:$0xff]
  %v182 = vld [vmem:[%s1 + $0x4e8] sm:$0xff]
  %v183 = vld [vmem:[%s1 + $0x4f0] sm:$0xff]
  %v184 = vld [vmem:[%s1 + $0x4f8] sm:$0xff]
  %v185 = vld [vmem:[%s1 + $0x500] sm:$0xff]
  %v186 = vld [vmem:[%s1 + $0x508] sm:$0xff]
  %v187 = vld [vmem:[%s1 + $0x510] sm:$0xff]
  %v188 = vld [vmem:[%s1 + $0x518] sm:$0xff]
  %v189 = vld [vmem:[%s1 + $0x520] sm:$0xff]
  %v190 = vld [vmem:[%s1 + $0x528] sm:$0xff]
  %v191 = vld [vmem:[%s1 + $0x530] sm:$0xff]
  %v192 = vld [vmem:[%s1 + $0x538] sm:$0xff]
  %v193 = vld [vmem:[%s1 + $0x540] sm:$0xff]
  %v194 = vld [vmem:[%s1 + $0x548] sm:$0xff]
  %v195 = vld [vmem:[%s1 + $0x550] sm:$0xff]
  %v196 = vld [vmem:[%s1 + $0x558] sm:$0xff]
  %v197 = vld [vmem:[%s1 + $0x560] sm:$0xff]
  %v198 = vld [vmem:[%s1 + $0x568] sm:$0xff]
  %v199 = vld [vmem:[%s1 + $0x570] sm:$0xff]
  %v200 = vld [vmem:[%s1 + $0x578] sm:$0xff]
  %v201 = vld [vmem:[%s1 + $0x580] sm:$0xff]
  %v202 = vld [vmem:[%s1 + $0x588] sm:$0xff]
  %v203 = vld [vmem:[%s1 + $0x590] sm:$0xff]
  %v204 = vld [vmem:[%s1 + $0x598] sm:$0xff]
  %v205 = vld [vmem:[%s1 + $0x5a0] sm:$0xff]
  %v206 = vld [vmem:[%s1 + $0x5a8] sm:$0xff]
  %v207 = vld [vmem:[%s1 + $0x5b0] sm:$0xff]
  %v208 = vld [vmem:[%s1 + $0x5b8] sm:$0xff]
  %v209 = vld [vmem:[%s1 + $0x5c0] sm:$0xff]
  %v210 = vld [vmem:[%s1 + $0x5c8] sm:$0xff]
  %v211 = vld [vmem:[%s1 + $0x5d0] sm:$0xff]
  %v212 = vld [vmem:[%s1 + $0x5d8] sm:$0xff]
  %v213 = vld [vmem:[%s1 + $0x5e0] sm:$0xff]
  %v214 = vld [vmem:[%s1 + $0x5e8] sm:$0xff]
  %v215 = vld [vmem:[%s1 + $0x5f0] sm:$0xff]
  %v216 = vld [vmem:[%s1 + $0x5f8] sm:$0xff]
  %v217 = vld [vmem:[%s1 + $0x600] sm:$0xff]
  %v218 = vld [vmem:[%s1 + $0x608] sm:$0xff]
  %v219 = vld [vmem:[%s1 + $0x610] sm:$0xff]
  %v220 = vld [vmem:[%s1 + $0x618] sm:$0xff]
  %v221 = vld [vmem:[%s1 + $0x620] sm:$0xff]
  %v222 = vld [vmem:[%s1 + $0x628] sm:$0xff]
  %v223 = vld [vmem:[%s1 + $0x630] sm:$0xff]
  %v224 = vld [vmem:[%s1 + $0x638] sm:$0xff]
  %v225 = vld [vmem:[%s1 + $0x640] sm:$0xff]
  %v226 = vld [vmem:[%s1 + $0x648] sm:$0xff]
  %v227 = vld [vmem:[%s1 + $0x650] sm:$0xff]
  %v228 = vld [vmem:[%s1 + $0x658] sm:$0xff]
  %v229 = vld [vmem:[%s1 + $0x660] sm:$0xff]
  %v230 = vld [vmem:[%s1 + $0x668] sm:$0xff]
  %v231 = vld [vmem:[%s1 + $0x670] sm:$0xff]
  %v232 = vld [vmem:[%s1 + $0x678] sm:$0xff]
  %v233 = vld [vmem:[%s1 + $0x680] sm:$0xff]
  %v234 = vld [vmem:[%s1 + $0x688] sm:$0xff]
  %v235 = vld [vmem:[%s1 + $0x690] sm:$0xff]
  %v236 = vld [vmem:[%s1 + $0x698] sm:$0xff]
  %v237 = vld [vmem:[%s1 + $0x6a0] sm:$0xff]
  %v238 = vld [vmem:[%s1 + $0x6a8] sm:$0xff]
  %v239 = vld [vmem:[%s1 + $0x6b0] sm:$0xff]
  %v240 = vld [vmem:[%s1 + $0x6b8] sm:$0xff]
  %v241 = vld [vmem:[%s1 + $0x6c0] sm:$0xff]
  %v242 = vld [vmem:[%s1 + $0x6c8] sm:$0xff]
  %v243 = vld [vmem:[%s1 + $0x6d0] sm:$0xff]
  %v244 = vld [vmem:[%s1 + $0x6d8] sm:$0xff]
  %v245 = vld [vmem:[%s1 + $0x6e0] sm:$0xff]
  %v246 = vld [vmem:[%s1 + $0x6e8] sm:$0xff]
  %v247 = vld [vmem:[%s1 + $0x6f0] sm:$0xff]
  %v248 = vld [vmem:[%s1 + $0x6f8] sm:$0xff]
  %v249 = vld [vmem:[%s1 + $0x700] sm:$0xff]
  %v250 = vld [vmem:[%s1 + $0x708] sm:$0xff]
  %v251 = vld [vmem:[%s1 + $0x710] sm:$0xff]
  %v252 = vld [vmem:[%s1 + $0x718] sm:$0xff]
  %v253 = vld [vmem:[%s1 + $0x720] sm:$0xff]
  %v254 = vld [vmem:[%s1 + $0x728] sm:$0xff]
  %v255 = vld [vmem:[%s1 + $0x730] sm:$0xff]
  %v256 = vld [vmem:[%s1 + $0x738] sm:$0xff]
  %v257 = vld [vmem:[%s1 + $0x740] sm:$0xff]
  %v258 = vld [vmem:[%s1 + $0x748] sm:$0xff]
  %v259 = vld [vmem:[%s1 + $0x750] sm:$0xff]
  %v260 = vld [vmem:[%s1 + $0x758] sm:$0xff]
  %v261 = vld [vmem:[%s1 + $0x760] sm:$0xff]
  %v262 = vld [vmem:[%s1 + $0x768] sm:$0xff]
  %v263 = vld [vmem:[%s1 + $0x770] sm:$0xff]
  %v264 = vld [vmem:[%s1 + $0x778] sm:$0xff]
  %v265 = vld [vmem:[%s1 + $0x780] sm:$0xff]
  %v266 = vld [vmem:[%s1 + $0x788] sm:$0xff]
  %v267 = vld [vmem:[%s1 + $0x790] sm:$0xff]
  %v268 = vld [vmem:[%s1 + $0x798] sm:$0xff]
  %v269 = vld [vmem:[%s1 + $0x7a0] sm:$0xff]
  %v270 = vld [vmem:[%s1 + $0x7a8] sm:$0xff]
  %v271 = vld [vmem:[%s1 + $0x7b0] sm:$0xff]
  %v272 = vld [vmem:[%s1 + $0x7b8] sm:$0xff]
  %v273 = vld [vmem:[%s1 + $0x7c0] sm:$0xff]
  %v274 = vld [vmem:[%s1 + $0x7c8] sm:$0xff]
  %v275 = vld [vmem:[%s1 + $0x7d0] sm:$0xff]
  %v276 = vld [vmem:[%s1 + $0x7d8] sm:$0xff]
  %v277 = vld [vmem:[%s1 + $0x7e0] sm:$0xff]
  %v278 = vld [vmem:[%s1 + $0x7e8] sm:$0xff]
  %v279 = vld [vmem:[%s1 + $0x7f0] sm:$0xff]
  %v280 = vld [vmem:[%s1 + $0x7f8] sm:$0xff]
  %v289 = vunpack.c.l.b16 %v17
  %v290 = vunpack.c.h.b16 %v17
  %v291 = vunpack.c.l.b16 %v18
  %v292 = vunpack.c.h.b16 %v18
  %v293 = vunpack.c.l.b16 %v19
  %v294 = vunpack.c.h.b16 %v19
  %v295 = vunpack.c.l.b16 %v20
  %v296 = vunpack.c.h.b16 %v20
  %v297 = vunpack.c.l.b16 %v21
  %v298 = vunpack.c.h.b16 %v21
  %v299 = vunpack.c.l.b16 %v22
  %v300 = vunpack.c.h.b16 %v22
  %v301 = vunpack.c.l.b16 %v23
  %v302 = vunpack.c.h.b16 %v23
  %v303 = vunpack.c.l.b16 %v24
  %v304 = vunpack.c.h.b16 %v24
  %v305 = vpack.c.b16 %v289, %v289
  %v306 = vpack.c.b16 %v290, %v290
  %v307 = vpack.c.b16 %v291, %v291
  %v308 = vpack.c.b16 %v292, %v292
  %v309 = vpack.c.b16 %v293, %v293
  %v310 = vpack.c.b16 %v294, %v294
  %v311 = vpack.c.b16 %v295, %v295
  %v312 = vpack.c.b16 %v296, %v296
  %v313 = vpack.c.b16 %v297, %v297
  %v314 = vpack.c.b16 %v298, %v298
  %v315 = vpack.c.b16 %v299, %v299
  %v316 = vpack.c.b16 %v300, %v300
  %v317 = vpack.c.b16 %v301, %v301
  %v318 = vpack.c.b16 %v302, %v302
  %v319 = vpack.c.b16 %v303, %v303
  %v320 = vpack.c.b16 %v304, %v304
  %v593 = vunpack.c.l.b16 %v25
  %v594 = vunpack.c.h.b16 %v25
  %v595 = vunpack.c.l.b16 %v26
  %v596 = vunpack.c.h.b16 %v26
  %v597 = vunpack.c.l.b16 %v27
  %v598 = vunpack.c.h.b16 %v27
  %v599 = vunpack.c.l.b16 %v28
  %v600 = vunpack.c.h.b16 %v28
  %v601 = vunpack.c.l.b16 %v29
  %v602 = vunpack.c.h.b16 %v29
  %v603 = vunpack.c.l.b16 %v30
  %v604 = vunpack.c.h.b16 %v30
  %v605 = vunpack.c.l.b16 %v31
  %v606 = vunpack.c.h.b16 %v31
  %v607 = vunpack.c.l.b16 %v32
  %v608 = vunpack.c.h.b16 %v32
  %v609 = vunpack.c.l.b16 %v33
  %v610 = vunpack.c.h.b16 %v33
  %v611 = vunpack.c.l.b16 %v34
  %v612 = vunpack.c.h.b16 %v34
  %v613 = vunpack.c.l.b16 %v35
  %v614 = vunpack.c.h.b16 %v35
  %v615 = vunpack.c.l.b16 %v36
  %v616 = vunpack.c.h.b16 %v36
  %v617 = vunpack.c.l.b16 %v37
  %v618 = vunpack.c.h.b16 %v37
  %v619 = vunpack.c.l.b16 %v38
  %v620 = vunpack.c.h.b16 %v38
  %v621 = vunpack.c.l.b16 %v39
  %v622 = vunpack.c.h.b16 %v39
  %v623 = vunpack.c.l.b16 %v40
  %v624 = vunpack.c.h.b16 %v40
  %v625 = vunpack.c.l.b16 %v41
  %v626 = vunpack.c.h.b16 %v41
  %v627 = vunpack.c.l.b16 %v42
  %v628 = vunpack.c.h.b16 %v42
  %v629 = vunpack.c.l.b16 %v43
  %v630 = vunpack.c.h.b16 %v43
  %v631 = vunpack.c.l.b16 %v44
  %v632 = vunpack.c.h.b16 %v44
  %v633 = vunpack.c.l.b16 %v45
  %v634 = vunpack.c.h.b16 %v45
  %v635 = vunpack.c.l.b16 %v46
  %v636 = vunpack.c.h.b16 %v46
  %v637 = vunpack.c.l.b16 %v47
  %v638 = vunpack.c.h.b16 %v47
  %v639 = vunpack.c.l.b16 %v48
  %v640 = vunpack.c.h.b16 %v48
  %v641 = vunpack.c.l.b16 %v49
  %v642 = vunpack.c.h.b16 %v49
  %v643 = vunpack.c.l.b16 %v50
  %v644 = vunpack.c.h.b16 %v50
  %v645 = vunpack.c.l.b16 %v51
  %v646 = vunpack.c.h.b16 %v51
  %v647 = vunpack.c.l.b16 %v52
  %v648 = vunpack.c.h.b16 %v52
  %v649 = vunpack.c.l.b16 %v53
  %v650 = vunpack.c.h.b16 %v53
  %v651 = vunpack.c.l.b16 %v54
  %v652 = vunpack.c.h.b16 %v54
  %v653 = vunpack.c.l.b16 %v55
  %v654 = vunpack.c.h.b16 %v55
  %v655 = vunpack.c.l.b16 %v56
  %v656 = vunpack.c.h.b16 %v56
  %v657 = vunpack.c.l.b16 %v57
  %v658 = vunpack.c.h.b16 %v57
  %v659 = vunpack.c.l.b16 %v58
  %v660 = vunpack.c.h.b16 %v58
  %v661 = vunpack.c.l.b16 %v59
  %v662 = vunpack.c.h.b16 %v59
  %v663 = vunpack.c.l.b16 %v60
  %v664 = vunpack.c.h.b16 %v60
  %v665 = vunpack.c.l.b16 %v61
  %v666 = vunpack.c.h.b16 %v61
  %v667 = vunpack.c.l.b16 %v62
  %v668 = vunpack.c.h.b16 %v62
  %v669 = vunpack.c.l.b16 %v63
  %v670 = vunpack.c.h.b16 %v63
  %v671 = vunpack.c.l.b16 %v64
  %v672 = vunpack.c.h.b16 %v64
  %v673 = vunpack.c.l.b16 %v65
  %v674 = vunpack.c.h.b16 %v65
  %v675 = vunpack.c.l.b16 %v66
  %v676 = vunpack.c.h.b16 %v66
  %v677 = vunpack.c.l.b16 %v67
  %v678 = vunpack.c.h.b16 %v67
  %v679 = vunpack.c.l.b16 %v68
  %v680 = vunpack.c.h.b16 %v68
  %v681 = vunpack.c.l.b16 %v69
  %v682 = vunpack.c.h.b16 %v69
  %v683 = vunpack.c.l.b16 %v70
  %v684 = vunpack.c.h.b16 %v70
  %v685 = vunpack.c.l.b16 %v71
  %v686 = vunpack.c.h.b16 %v71
  %v687 = vunpack.c.l.b16 %v72
  %v688 = vunpack.c.h.b16 %v72
  %v689 = vunpack.c.l.b16 %v73
  %v690 = vunpack.c.h.b16 %v73
  %v691 = vunpack.c.l.b16 %v74
  %v692 = vunpack.c.h.b16 %v74
  %v693 = vunpack.c.l.b16 %v75
  %v694 = vunpack.c.h.b16 %v75
  %v695 = vunpack.c.l.b16 %v76
  %v696 = vunpack.c.h.b16 %v76
  %v697 = vunpack.c.l.b16 %v77
  %v698 = vunpack.c.h.b16 %v77
  %v699 = vunpack.c.l.b16 %v78
  %v700 = vunpack.c.h.b16 %v78
  %v701 = vunpack.c.l.b16 %v79
  %v702 = vunpack.c.h.b16 %v79
  %v703 = vunpack.c.l.b16 %v80
  %v704 = vunpack.c.h.b16 %v80
  %v705 = vunpack.c.l.b16 %v81
  %v706 = vunpack.c.h.b16 %v81
  %v707 = vunpack.c.l.b16 %v82
  %v708 = vunpack.c.h.b16 %v82
  %v709 = vunpack.c.l.b16 %v83
  %v710 = vunpack.c.h.b16 %v83
  %v711 = vunpack.c.l.b16 %v84
  %v712 = vunpack.c.h.b16 %v84
  %v713 = vunpack.c.l.b16 %v85
  %v714 = vunpack.c.h.b16 %v85
  %v715 = vunpack.c.l.b16 %v86
  %v716 = vunpack.c.h.b16 %v86
  %v717 = vunpack.c.l.b16 %v87
  %v718 = vunpack.c.h.b16 %v87
  %v719 = vunpack.c.l.b16 %v88
  %v720 = vunpack.c.h.b16 %v88
  %v721 = vunpack.c.l.b16 %v89
  %v722 = vunpack.c.h.b16 %v89
  %v723 = vunpack.c.l.b16 %v90
  %v724 = vunpack.c.h.b16 %v90
  %v725 = vunpack.c.l.b16 %v91
  %v726 = vunpack.c.h.b16 %v91
  %v727 = vunpack.c.l.b16 %v92
  %v728 = vunpack.c.h.b16 %v92
  %v729 = vunpack.c.l.b16 %v93
  %v730 = vunpack.c.h.b16 %v93
  %v731 = vunpack.c.l.b16 %v94
  %v732 = vunpack.c.h.b16 %v94
  %v733 = vunpack.c.l.b16 %v95
  %v734 = vunpack.c.h.b16 %v95
  %v735 = vunpack.c.l.b16 %v96
  %v736 = vunpack.c.h.b16 %v96
  %v737 = vunpack.c.l.b16 %v97
  %v738 = vunpack.c.h.b16 %v97
  %v739 = vunpack.c.l.b16 %v98
  %v740 = vunpack.c.h.b16 %v98
  %v741 = vunpack.c.l.b16 %v99
  %v742 = vunpack.c.h.b16 %v99
  %v743 = vunpack.c.l.b16 %v100
  %v744 = vunpack.c.h.b16 %v100
  %v745 = vunpack.c.l.b16 %v101
  %v746 = vunpack.c.h.b16 %v101
  %v747 = vunpack.c.l.b16 %v102
  %v748 = vunpack.c.h.b16 %v102
  %v749 = vunpack.c.l.b16 %v103
  %v750 = vunpack.c.h.b16 %v103
  %v751 = vunpack.c.l.b16 %v104
  %v752 = vunpack.c.h.b16 %v104
  %v753 = vunpack.c.l.b16 %v105
  %v754 = vunpack.c.h.b16 %v105
  %v755 = vunpack.c.l.b16 %v106
  %v756 = vunpack.c.h.b16 %v106
  %v757 = vunpack.c.l.b16 %v107
  %v758 = vunpack.c.h.b16 %v107
  %v759 = vunpack.c.l.b16 %v108
  %v760 = vunpack.c.h.b16 %v108
  %v761 = vunpack.c.l.b16 %v109
  %v762 = vunpack.c.h.b16 %v109
  %v763 = vunpack.c.l.b16 %v110
  %v764 = vunpack.c.h.b16 %v110
  %v765 = vunpack.c.l.b16 %v111
  %v766 = vunpack.c.h.b16 %v111
  %v767 = vunpack.c.l.b16 %v112
  %v768 = vunpack.c.h.b16 %v112
  %v769 = vunpack.c.l.b16 %v113
  %v770 = vunpack.c.h.b16 %v113
  %v771 = vunpack.c.l.b16 %v114
  %v772 = vunpack.c.h.b16 %v114
  %v773 = vunpack.c.l.b16 %v115
  %v774 = vunpack.c.h.b16 %v115
  %v775 = vunpack.c.l.b16 %v116
  %v776 = vunpack.c.h.b16 %v116
  %v777 = vunpack.c.l.b16 %v117
  %v778 = vunpack.c.h.b16 %v117
  %v779 = vunpack.c.l.b16 %v118
  %v780 = vunpack.c.h.b16 %v118
  %v781 = vunpack.c.l.b16 %v119
  %v782 = vunpack.c.h.b16 %v119
  %v783 = vunpack.c.l.b16 %v120
  %v784 = vunpack.c.h.b16 %v120
  %v785 = vunpack.c.l.b16 %v121
  %v786 = vunpack.c.h.b16 %v121
  %v787 = vunpack.c.l.b16 %v122
  %v788 = vunpack.c.h.b16 %v122
  %v789 = vunpack.c.l.b16 %v123
  %v790 = vunpack.c.h.b16 %v123
  %v791 = vunpack.c.l.b16 %v124
  %v792 = vunpack.c.h.b16 %v124
  %v793 = vunpack.c.l.b16 %v125
  %v794 = vunpack.c.h.b16 %v125
  %v795 = vunpack.c.l.b16 %v126
  %v796 = vunpack.c.h.b16 %v126
  %v797 = vunpack.c.l.b16 %v127
  %v798 = vunpack.c.h.b16 %v127
  %v799 = vunpack.c.l.b16 %v128
  %v800 = vunpack.c.h.b16 %v128
  %v801 = vunpack.c.l.b16 %v129
  %v802 = vunpack.c.h.b16 %v129
  %v803 = vunpack.c.l.b16 %v130
  %v804 = vunpack.c.h.b16 %v130
  %v805 = vunpack.c.l.b16 %v131
  %v806 = vunpack.c.h.b16 %v131
  %v807 = vunpack.c.l.b16 %v132
  %v808 = vunpack.c.h.b16 %v132
  %v809 = vunpack.c.l.b16 %v133
  %v810 = vunpack.c.h.b16 %v133
  %v811 = vunpack.c.l.b16 %v134
  %v812 = vunpack.c.h.b16 %v134
  %v813 = vunpack.c.l.b16 %v135
  %v814 = vunpack.c.h.b16 %v135
  %v815 = vunpack.c.l.b16 %v136
  %v816 = vunpack.c.h.b16 %v136
  %v817 = vunpack.c.l.b16 %v137
  %v818 = vunpack.c.h.b16 %v137
  %v819 = vunpack.c.l.b16 %v138
  %v820 = vunpack.c.h.b16 %v138
  %v821 = vunpack.c.l.b16 %v139
  %v822 = vunpack.c.h.b16 %v139
  %v823 = vunpack.c.l.b16 %v140
  %v824 = vunpack.c.h.b16 %v140
  %v825 = vunpack.c.l.b16 %v141
  %v826 = vunpack.c.h.b16 %v141
  %v827 = vunpack.c.l.b16 %v142
  %v828 = vunpack.c.h.b16 %v142
  %v829 = vunpack.c.l.b16 %v143
  %v830 = vunpack.c.h.b16 %v143
  %v831 = vunpack.c.l.b16 %v144
  %v832 = vunpack.c.h.b16 %v144
  %v833 = vunpack.c.l.b16 %v145
  %v834 = vunpack.c.h.b16 %v145
  %v835 = vunpack.c.l.b16 %v146
  %v836 = vunpack.c.h.b16 %v146
  %v837 = vunpack.c.l.b16 %v147
  %v838 = vunpack.c.h.b16 %v147
  %v839 = vunpack.c.l.b16 %v148
  %v840 = vunpack.c.h.b16 %v148
  %v841 = vunpack.c.l.b16 %v149
  %v842 = vunpack.c.h.b16 %v149
  %v843 = vunpack.c.l.b16 %v150
  %v844 = vunpack.c.h.b16 %v150
  %v845 = vunpack.c.l.b16 %v151
  %v846 = vunpack.c.h.b16 %v151
  %v847 = vunpack.c.l.b16 %v152
  %v848 = vunpack.c.h.b16 %v152
  %v849 = vunpack.c.l.b16 %v153
  %v850 = vunpack.c.h.b16 %v153
  %v851 = vunpack.c.l.b16 %v154
  %v852 = vunpack.c.h.b16 %v154
  %v853 = vunpack.c.l.b16 %v155
  %v854 = vunpack.c.h.b16 %v155
  %v855 = vunpack.c.l.b16 %v156
  %v856 = vunpack.c.h.b16 %v156
  %v857 = vunpack.c.l.b16 %v157
  %v858 = vunpack.c.h.b16 %v157
  %v859 = vunpack.c.l.b16 %v158
  %v860 = vunpack.c.h.b16 %v158
  %v861 = vunpack.c.l.b16 %v159
  %v862 = vunpack.c.h.b16 %v159
  %v863 = vunpack.c.l.b16 %v160
  %v864 = vunpack.c.h.b16 %v160
  %v865 = vunpack.c.l.b16 %v161
  %v866 = vunpack.c.h.b16 %v161
  %v867 = vunpack.c.l.b16 %v162
  %v868 = vunpack.c.h.b16 %v162
  %v869 = vunpack.c.l.b16 %v163
  %v870 = vunpack.c.h.b16 %v163
  %v871 = vunpack.c.l.b16 %v164
  %v872 = vunpack.c.h.b16 %v164
  %v873 = vunpack.c.l.b16 %v165
  %v874 = vunpack.c.h.b16 %v165
  %v875 = vunpack.c.l.b16 %v166
  %v876 = vunpack.c.h.b16 %v166
  %v877 = vunpack.c.l.b16 %v167
  %v878 = vunpack.c.h.b16 %v167
  %v879 = vunpack.c.l.b16 %v168
  %v880 = vunpack.c.h.b16 %v168
  %v881 = vunpack.c.l.b16 %v169
  %v882 = vunpack.c.h.b16 %v169
  %v883 = vunpack.c.l.b16 %v170
  %v884 = vunpack.c.h.b16 %v170
  %v885 = vunpack.c.l.b16 %v171
  %v886 = vunpack.c.h.b16 %v171
  %v887 = vunpack.c.l.b16 %v172
  %v888 = vunpack.c.h.b16 %v172
  %v889 = vunpack.c.l.b16 %v173
  %v890 = vunpack.c.h.b16 %v173
  %v891 = vunpack.c.l.b16 %v174
  %v892 = vunpack.c.h.b16 %v174
  %v893 = vunpack.c.l.b16 %v175
  %v894 = vunpack.c.h.b16 %v175
  %v895 = vunpack.c.l.b16 %v176
  %v896 = vunpack.c.h.b16 %v176
  %v897 = vunpack.c.l.b16 %v177
  %v898 = vunpack.c.h.b16 %v177
  %v899 = vunpack.c.l.b16 %v178
  %v900 = vunpack.c.h.b16 %v178
  %v901 = vunpack.c.l.b16 %v179
  %v902 = vunpack.c.h.b16 %v179
  %v903 = vunpack.c.l.b16 %v180
  %v904 = vunpack.c.h.b16 %v180
  %v905 = vunpack.c.l.b16 %v181
  %v906 = vunpack.c.h.b16 %v181
  %v907 = vunpack.c.l.b16 %v182
  %v908 = vunpack.c.h.b16 %v182
  %v909 = vunpack.c.l.b16 %v183
  %v910 = vunpack.c.h.b16 %v183
  %v911 = vunpack.c.l.b16 %v184
  %v912 = vunpack.c.h.b16 %v184
  %v913 = vunpack.c.l.b16 %v185
  %v914 = vunpack.c.h.b16 %v185
  %v915 = vunpack.c.l.b16 %v186
  %v916 = vunpack.c.h.b16 %v186
  %v917 = vunpack.c.l.b16 %v187
  %v918 = vunpack.c.h.b16 %v187
  %v919 = vunpack.c.l.b16 %v188
  %v920 = vunpack.c.h.b16 %v188
  %v921 = vunpack.c.l.b16 %v189
  %v922 = vunpack.c.h.b16 %v189
  %v923 = vunpack.c.l.b16 %v190
  %v924 = vunpack.c.h.b16 %v190
  %v925 = vunpack.c.l.b16 %v191
  %v926 = vunpack.c.h.b16 %v191
  %v927 = vunpack.c.l.b16 %v192
  %v928 = vunpack.c.h.b16 %v192
  %v929 = vunpack.c.l.b16 %v193
  %v930 = vunpack.c.h.b16 %v193
  %v931 = vunpack.c.l.b16 %v194
  %v932 = vunpack.c.h.b16 %v194
  %v933 = vunpack.c.l.b16 %v195
  %v934 = vunpack.c.h.b16 %v195
  %v935 = vunpack.c.l.b16 %v196
  %v936 = vunpack.c.h.b16 %v196
  %v937 = vunpack.c.l.b16 %v197
  %v938 = vunpack.c.h.b16 %v197
  %v939 = vunpack.c.l.b16 %v198
  %v940 = vunpack.c.h.b16 %v198
  %v941 = vunpack.c.l.b16 %v199
  %v942 = vunpack.c.h.b16 %v199
  %v943 = vunpack.c.l.b16 %v200
  %v944 = vunpack.c.h.b16 %v200
  %v945 = vunpack.c.l.b16 %v201
  %v946 = vunpack.c.h.b16 %v201
  %v947 = vunpack.c.l.b16 %v202
  %v948 = vunpack.c.h.b16 %v202
  %v949 = vunpack.c.l.b16 %v203
  %v950 = vunpack.c.h.b16 %v203
  %v951 = vunpack.c.l.b16 %v204
  %v952 = vunpack.c.h.b16 %v204
  %v953 = vunpack.c.l.b16 %v205
  %v954 = vunpack.c.h.b16 %v205
  %v955 = vunpack.c.l.b16 %v206
  %v956 = vunpack.c.h.b16 %v206
  %v957 = vunpack.c.l.b16 %v207
  %v958 = vunpack.c.h.b16 %v207
  %v959 = vunpack.c.l.b16 %v208
  %v960 = vunpack.c.h.b16 %v208
  %v961 = vunpack.c.l.b16 %v209
  %v962 = vunpack.c.h.b16 %v209
  %v963 = vunpack.c.l.b16 %v210
  %v964 = vunpack.c.h.b16 %v210
  %v965 = vunpack.c.l.b16 %v211
  %v966 = vunpack.c.h.b16 %v211
  %v967 = vunpack.c.l.b16 %v212
  %v968 = vunpack.c.h.b16 %v212
  %v969 = vunpack.c.l.b16 %v213
  %v970 = vunpack.c.h.b16 %v213
  %v971 = vunpack.c.l.b16 %v214
  %v972 = vunpack.c.h.b16 %v214
  %v973 = vunpack.c.l.b16 %v215
  %v974 = vunpack.c.h.b16 %v215
  %v975 = vunpack.c.l.b16 %v216
  %v976 = vunpack.c.h.b16 %v216
  %v977 = vunpack.c.l.b16 %v217
  %v978 = vunpack.c.h.b16 %v217
  %v979 = vunpack.c.l.b16 %v218
  %v980 = vunpack.c.h.b16 %v218
  %v981 = vunpack.c.l.b16 %v219
  %v982 = vunpack.c.h.b16 %v219
  %v983 = vunpack.c.l.b16 %v220
  %v984 = vunpack.c.h.b16 %v220
  %v985 = vunpack.c.l.b16 %v221
  %v986 = vunpack.c.h.b16 %v221
  %v987 = vunpack.c.l.b16 %v222
  %v988 = vunpack.c.h.b16 %v222
  %v989 = vunpack.c.l.b16 %v223
  %v990 = vunpack.c.h.b16 %v223
  %v991 = vunpack.c.l.b16 %v224
  %v992 = vunpack.c.h.b16 %v224
  %v993 = vunpack.c.l.b16 %v225
  %v994 = vunpack.c.h.b16 %v225
  %v995 = vunpack.c.l.b16 %v226
  %v996 = vunpack.c.h.b16 %v226
  %v997 = vunpack.c.l.b16 %v227
  %v998 = vunpack.c.h.b16 %v227
  %v999 = vunpack.c.l.b16 %v228
  %v1000 = vunpack.c.h.b16 %v228
  %v1001 = vunpack.c.l.b16 %v229
  %v1002 = vunpack.c.h.b16 %v229
  %v1003 = vunpack.c.l.b16 %v230
  %v1004 = vunpack.c.h.b16 %v230
  %v1005 = vunpack.c.l.b16 %v231
  %v1006 = vunpack.c.h.b16 %v231
  %v1007 = vunpack.c.l.b16 %v232
  %v1008 = vunpack.c.h.b16 %v232
  %v1009 = vunpack.c.l.b16 %v233
  %v1010 = vunpack.c.h.b16 %v233
  %v1011 = vunpack.c.l.b16 %v234
  %v1012 = vunpack.c.h.b16 %v234
  %v1013 = vunpack.c.l.b16 %v235
  %v1014 = vunpack.c.h.b16 %v235
  %v1015 = vunpack.c.l.b16 %v236
  %v1016 = vunpack.c.h.b16 %v236
  %v1017 = vunpack.c.l.b16 %v237
  %v1018 = vunpack.c.h.b16 %v237
  %v1019 = vunpack.c.l.b16 %v238
  %v1020 = vunpack.c.h.b16 %v238
  %v1021 = vunpack.c.l.b16 %v239
  %v1022 = vunpack.c.h.b16 %v239
  %v1023 = vunpack.c.l.b16 %v240
  %v1024 = vunpack.c.h.b16 %v240
  %v1025 = vunpack.c.l.b16 %v241
  %v1026 = vunpack.c.h.b16 %v241
  %v1027 = vunpack.c.l.b16 %v242
  %v1028 = vunpack.c.h.b16 %v242
  %v1029 = vunpack.c.l.b16 %v243
  %v1030 = vunpack.c.h.b16 %v243
  %v1031 = vunpack.c.l.b16 %v244
  %v1032 = vunpack.c.h.b16 %v244
  %v1033 = vunpack.c.l.b16 %v245
  %v1034 = vunpack.c.h.b16 %v245
  %v1035 = vunpack.c.l.b16 %v246
  %v1036 = vunpack.c.h.b16 %v246
  %v1037 = vunpack.c.l.b16 %v247
  %v1038 = vunpack.c.h.b16 %v247
  %v1039 = vunpack.c.l.b16 %v248
  %v1040 = vunpack.c.h.b16 %v248
  %v1041 = vunpack.c.l.b16 %v249
  %v1042 = vunpack.c.h.b16 %v249
  %v1043 = vunpack.c.l.b16 %v250
  %v1044 = vunpack.c.h.b16 %v250
  %v1045 = vunpack.c.l.b16 %v251
  %v1046 = vunpack.c.h.b16 %v251
  %v1047 = vunpack.c.l.b16 %v252
  %v1048 = vunpack.c.h.b16 %v252
  %v1049 = vunpack.c.l.b16 %v253
  %v1050 = vunpack.c.h.b16 %v253
  %v1051 = vunpack.c.l.b16 %v254
  %v1052 = vunpack.c.h.b16 %v254
  %v1053 = vunpack.c.l.b16 %v255
  %v1054 = vunpack.c.h.b16 %v255
  %v1055 = vunpack.c.l.b16 %v256
  %v1056 = vunpack.c.h.b16 %v256
  %v1057 = vunpack.c.l.b16 %v257
  %v1058 = vunpack.c.h.b16 %v257
  %v1059 = vunpack.c.l.b16 %v258
  %v1060 = vunpack.c.h.b16 %v258
  %v1061 = vunpack.c.l.b16 %v259
  %v1062 = vunpack.c.h.b16 %v259
  %v1063 = vunpack.c.l.b16 %v260
  %v1064 = vunpack.c.h.b16 %v260
  %v1065 = vunpack.c.l.b16 %v261
  %v1066 = vunpack.c.h.b16 %v261
  %v1067 = vunpack.c.l.b16 %v262
  %v1068 = vunpack.c.h.b16 %v262
  %v1069 = vunpack.c.l.b16 %v263
  %v1070 = vunpack.c.h.b16 %v263
  %v1071 = vunpack.c.l.b16 %v264
  %v1072 = vunpack.c.h.b16 %v264
  %v1073 = vunpack.c.l.b16 %v265
  %v1074 = vunpack.c.h.b16 %v265
  %v1075 = vunpack.c.l.b16 %v266
  %v1076 = vunpack.c.h.b16 %v266
  %v1077 = vunpack.c.l.b16 %v267
  %v1078 = vunpack.c.h.b16 %v267
  %v1079 = vunpack.c.l.b16 %v268
  %v1080 = vunpack.c.h.b16 %v268
  %v1081 = vunpack.c.l.b16 %v269
  %v1082 = vunpack.c.h.b16 %v269
  %v1083 = vunpack.c.l.b16 %v270
  %v1084 = vunpack.c.h.b16 %v270
  %v1085 = vunpack.c.l.b16 %v271
  %v1086 = vunpack.c.h.b16 %v271
  %v1087 = vunpack.c.l.b16 %v272
  %v1088 = vunpack.c.h.b16 %v272
  %v1089 = vunpack.c.l.b16 %v273
  %v1090 = vunpack.c.h.b16 %v273
  %v1091 = vunpack.c.l.b16 %v274
  %v1092 = vunpack.c.h.b16 %v274
  %v1093 = vunpack.c.l.b16 %v275
  %v1094 = vunpack.c.h.b16 %v275
  %v1095 = vunpack.c.l.b16 %v276
  %v1096 = vunpack.c.h.b16 %v276
  %v1097 = vunpack.c.l.b16 %v277
  %v1098 = vunpack.c.h.b16 %v277
  %v1099 = vunpack.c.l.b16 %v278
  %v1100 = vunpack.c.h.b16 %v278
  %v1101 = vunpack.c.l.b16 %v279
  %v1102 = vunpack.c.h.b16 %v279
  %v1103 = vunpack.c.l.b16 %v280
  %v1104 = vunpack.c.h.b16 %v280
  %v1105 = vpack.c.b16 %v595, %v593
  %v1106 = vpack.c.b16 %v596, %v594
  %v1107 = vpack.c.b16 %v599, %v597
  %v1108 = vpack.c.b16 %v600, %v598
  %v1109 = vpack.c.b16 %v603, %v601
  %v1110 = vpack.c.b16 %v604, %v602
  %v1111 = vpack.c.b16 %v607, %v605
  %v1112 = vpack.c.b16 %v608, %v606
  %v1113 = vpack.c.b16 %v611, %v609
  %v1114 = vpack.c.b16 %v612, %v610
  %v1115 = vpack.c.b16 %v615, %v613
  %v1116 = vpack.c.b16 %v616, %v614
  %v1117 = vpack.c.b16 %v619, %v617
  %v1118 = vpack.c.b16 %v620, %v618
  %v1119 = vpack.c.b16 %v623, %v621
  %v1120 = vpack.c.b16 %v624, %v622
  %v1121 = vpack.c.b16 %v627, %v625
  %v1122 = vpack.c.b16 %v628, %v626
  %v1123 = vpack.c.b16 %v631, %v629
  %v1124 = vpack.c.b16 %v632, %v630
  %v1125 = vpack.c.b16 %v635, %v633
  %v1126 = vpack.c.b16 %v636, %v634
  %v1127 = vpack.c.b16 %v639, %v637
  %v1128 = vpack.c.b16 %v640, %v638
  %v1129 = vpack.c.b16 %v643, %v641
  %v1130 = vpack.c.b16 %v644, %v642
  %v1131 = vpack.c.b16 %v647, %v645
  %v1132 = vpack.c.b16 %v648, %v646
  %v1133 = vpack.c.b16 %v651, %v649
  %v1134 = vpack.c.b16 %v652, %v650
  %v1135 = vpack.c.b16 %v655, %v653
  %v1136 = vpack.c.b16 %v656, %v654
  %v1137 = vpack.c.b16 %v659, %v657
  %v1138 = vpack.c.b16 %v660, %v658
  %v1139 = vpack.c.b16 %v663, %v661
  %v1140 = vpack.c.b16 %v664, %v662
  %v1141 = vpack.c.b16 %v667, %v665
  %v1142 = vpack.c.b16 %v668, %v666
  %v1143 = vpack.c.b16 %v671, %v669
  %v1144 = vpack.c.b16 %v672, %v670
  %v1145 = vpack.c.b16 %v675, %v673
  %v1146 = vpack.c.b16 %v676, %v674
  %v1147 = vpack.c.b16 %v679, %v677
  %v1148 = vpack.c.b16 %v680, %v678
  %v1149 = vpack.c.b16 %v683, %v681
  %v1150 = vpack.c.b16 %v684, %v682
  %v1151 = vpack.c.b16 %v687, %v685
  %v1152 = vpack.c.b16 %v688, %v686
  %v1153 = vpack.c.b16 %v691, %v689
  %v1154 = vpack.c.b16 %v692, %v690
  %v1155 = vpack.c.b16 %v695, %v693
  %v1156 = vpack.c.b16 %v696, %v694
  %v1157 = vpack.c.b16 %v699, %v697
  %v1158 = vpack.c.b16 %v700, %v698
  %v1159 = vpack.c.b16 %v703, %v701
  %v1160 = vpack.c.b16 %v704, %v702
  %v1161 = vpack.c.b16 %v707, %v705
  %v1162 = vpack.c.b16 %v708, %v706
  %v1163 = vpack.c.b16 %v711, %v709
  %v1164 = vpack.c.b16 %v712, %v710
  %v1165 = vpack.c.b16 %v715, %v713
  %v1166 = vpack.c.b16 %v716, %v714
  %v1167 = vpack.c.b16 %v719, %v717
  %v1168 = vpack.c.b16 %v720, %v718
  %v1169 = vpack.c.b16 %v723, %v721
  %v1170 = vpack.c.b16 %v724, %v722
  %v1171 = vpack.c.b16 %v727, %v725
  %v1172 = vpack.c.b16 %v728, %v726
  %v1173 = vpack.c.b16 %v731, %v729
  %v1174 = vpack.c.b16 %v732, %v730
  %v1175 = vpack.c.b16 %v735, %v733
  %v1176 = vpack.c.b16 %v736, %v734
  %v1177 = vpack.c.b16 %v739, %v737
  %v1178 = vpack.c.b16 %v740, %v738
  %v1179 = vpack.c.b16 %v743, %v741
  %v1180 = vpack.c.b16 %v744, %v742
  %v1181 = vpack.c.b16 %v747, %v745
  %v1182 = vpack.c.b16 %v748, %v746
  %v1183 = vpack.c.b16 %v751, %v749
  %v1184 = vpack.c.b16 %v752, %v750
  %v1185 = vpack.c.b16 %v755, %v753
  %v1186 = vpack.c.b16 %v756, %v754
  %v1187 = vpack.c.b16 %v759, %v757
  %v1188 = vpack.c.b16 %v760, %v758
  %v1189 = vpack.c.b16 %v763, %v761
  %v1190 = vpack.c.b16 %v764, %v762
  %v1191 = vpack.c.b16 %v767, %v765
  %v1192 = vpack.c.b16 %v768, %v766
  %v1193 = vpack.c.b16 %v771, %v769
  %v1194 = vpack.c.b16 %v772, %v770
  %v1195 = vpack.c.b16 %v775, %v773
  %v1196 = vpack.c.b16 %v776, %v774
  %v1197 = vpack.c.b16 %v779, %v777
  %v1198 = vpack.c.b16 %v780, %v778
  %v1199 = vpack.c.b16 %v783, %v781
  %v1200 = vpack.c.b16 %v784, %v782
  %v1201 = vpack.c.b16 %v787, %v785
  %v1202 = vpack.c.b16 %v788, %v786
  %v1203 = vpack.c.b16 %v791, %v789
  %v1204 = vpack.c.b16 %v792, %v790
  %v1205 = vpack.c.b16 %v795, %v793
  %v1206 = vpack.c.b16 %v796, %v794
  %v1207 = vpack.c.b16 %v799, %v797
  %v1208 = vpack.c.b16 %v800, %v798
  %v1209 = vpack.c.b16 %v803, %v801
  %v1210 = vpack.c.b16 %v804, %v802
  %v1211 = vpack.c.b16 %v807, %v805
  %v1212 = vpack.c.b16 %v808, %v806
  %v1213 = vpack.c.b16 %v811, %v809
  %v1214 = vpack.c.b16 %v812, %v810
  %v1215 = vpack.c.b16 %v815, %v813
  %v1216 = vpack.c.b16 %v816, %v814
  %v1217 = vpack.c.b16 %v819, %v817
  %v1218 = vpack.c.b16 %v820, %v818
  %v1219 = vpack.c.b16 %v823, %v821
  %v1220 = vpack.c.b16 %v824, %v822
  %v1221 = vpack.c.b16 %v827, %v825
  %v1222 = vpack.c.b16 %v828, %v826
  %v1223 = vpack.c.b16 %v831, %v829
  %v1224 = vpack.c.b16 %v832, %v830
  %v1225 = vpack.c.b16 %v835, %v833
  %v1226 = vpack.c.b16 %v836, %v834
  %v1227 = vpack.c.b16 %v839, %v837
  %v1228 = vpack.c.b16 %v840, %v838
  %v1229 = vpack.c.b16 %v843, %v841
  %v1230 = vpack.c.b16 %v844, %v842
  %v1231 = vpack.c.b16 %v847, %v845
  %v1232 = vpack.c.b16 %v848, %v846
  %v1233 = vpack.c.b16 %v851, %v849
  %v1234 = vpack.c.b16 %v852, %v850
  %v1235 = vpack.c.b16 %v855, %v853
  %v1236 = vpack.c.b16 %v856, %v854
  %v1237 = vpack.c.b16 %v859, %v857
  %v1238 = vpack.c.b16 %v860, %v858
  %v1239 = vpack.c.b16 %v863, %v861
  %v1240 = vpack.c.b16 %v864, %v862
  %v1241 = vpack.c.b16 %v867, %v865
  %v1242 = vpack.c.b16 %v868, %v866
  %v1243 = vpack.c.b16 %v871, %v869
  %v1244 = vpack.c.b16 %v872, %v870
  %v1245 = vpack.c.b16 %v875, %v873
  %v1246 = vpack.c.b16 %v876, %v874
  %v1247 = vpack.c.b16 %v879, %v877
  %v1248 = vpack.c.b16 %v880, %v878
  %v1249 = vpack.c.b16 %v883, %v881
  %v1250 = vpack.c.b16 %v884, %v882
  %v1251 = vpack.c.b16 %v887, %v885
  %v1252 = vpack.c.b16 %v888, %v886
  %v1253 = vpack.c.b16 %v891, %v889
  %v1254 = vpack.c.b16 %v892, %v890
  %v1255 = vpack.c.b16 %v895, %v893
  %v1256 = vpack.c.b16 %v896, %v894
  %v1257 = vpack.c.b16 %v899, %v897
  %v1258 = vpack.c.b16 %v900, %v898
  %v1259 = vpack.c.b16 %v903, %v901
  %v1260 = vpack.c.b16 %v904, %v902
  %v1261 = vpack.c.b16 %v907, %v905
  %v1262 = vpack.c.b16 %v908, %v906
  %v1263 = vpack.c.b16 %v911, %v909
  %v1264 = vpack.c.b16 %v912, %v910
  %v1265 = vpack.c.b16 %v915, %v913
  %v1266 = vpack.c.b16 %v916, %v914
  %v1267 = vpack.c.b16 %v919, %v917
  %v1268 = vpack.c.b16 %v920, %v918
  %v1269 = vpack.c.b16 %v923, %v921
  %v1270 = vpack.c.b16 %v924, %v922
  %v1271 = vpack.c.b16 %v927, %v925
  %v1272 = vpack.c.b16 %v928, %v926
  %v1273 = vpack.c.b16 %v931, %v929
  %v1274 = vpack.c.b16 %v932, %v930
  %v1275 = vpack.c.b16 %v935, %v933
  %v1276 = vpack.c.b16 %v936, %v934
  %v1277 = vpack.c.b16 %v939, %v937
  %v1278 = vpack.c.b16 %v940, %v938
  %v1279 = vpack.c.b16 %v943, %v941
  %v1280 = vpack.c.b16 %v944, %v942
  %v1281 = vpack.c.b16 %v947, %v945
  %v1282 = vpack.c.b16 %v948, %v946
  %v1283 = vpack.c.b16 %v951, %v949
  %v1284 = vpack.c.b16 %v952, %v950
  %v1285 = vpack.c.b16 %v955, %v953
  %v1286 = vpack.c.b16 %v956, %v954
  %v1287 = vpack.c.b16 %v959, %v957
  %v1288 = vpack.c.b16 %v960, %v958
  %v1289 = vpack.c.b16 %v963, %v961
  %v1290 = vpack.c.b16 %v964, %v962
  %v1291 = vpack.c.b16 %v967, %v965
  %v1292 = vpack.c.b16 %v968, %v966
  %v1293 = vpack.c.b16 %v971, %v969
  %v1294 = vpack.c.b16 %v972, %v970
  %v1295 = vpack.c.b16 %v975, %v973
  %v1296 = vpack.c.b16 %v976, %v974
  %v1297 = vpack.c.b16 %v979, %v977
  %v1298 = vpack.c.b16 %v980, %v978
  %v1299 = vpack.c.b16 %v983, %v981
  %v1300 = vpack.c.b16 %v984, %v982
  %v1301 = vpack.c.b16 %v987, %v985
  %v1302 = vpack.c.b16 %v988, %v986
  %v1303 = vpack.c.b16 %v991, %v989
  %v1304 = vpack.c.b16 %v992, %v990
  %v1305 = vpack.c.b16 %v995, %v993
  %v1306 = vpack.c.b16 %v996, %v994
  %v1307 = vpack.c.b16 %v999, %v997
  %v1308 = vpack.c.b16 %v1000, %v998
  %v1309 = vpack.c.b16 %v1003, %v1001
  %v1310 = vpack.c.b16 %v1004, %v1002
  %v1311 = vpack.c.b16 %v1007, %v1005
  %v1312 = vpack.c.b16 %v1008, %v1006
  %v1313 = vpack.c.b16 %v1011, %v1009
  %v1314 = vpack.c.b16 %v1012, %v1010
  %v1315 = vpack.c.b16 %v1015, %v1013
  %v1316 = vpack.c.b16 %v1016, %v1014
  %v1317 = vpack.c.b16 %v1019, %v1017
  %v1318 = vpack.c.b16 %v1020, %v1018
  %v1319 = vpack.c.b16 %v1023, %v1021
  %v1320 = vpack.c.b16 %v1024, %v1022
  %v1321 = vpack.c.b16 %v1027, %v1025
  %v1322 = vpack.c.b16 %v1028, %v1026
  %v1323 = vpack.c.b16 %v1031, %v1029
  %v1324 = vpack.c.b16 %v1032, %v1030
  %v1325 = vpack.c.b16 %v1035, %v1033
  %v1326 = vpack.c.b16 %v1036, %v1034
  %v1327 = vpack.c.b16 %v1039, %v1037
  %v1328 = vpack.c.b16 %v1040, %v1038
  %v1329 = vpack.c.b16 %v1043, %v1041
  %v1330 = vpack.c.b16 %v1044, %v1042
  %v1331 = vpack.c.b16 %v1047, %v1045
  %v1332 = vpack.c.b16 %v1048, %v1046
  %v1333 = vpack.c.b16 %v1051, %v1049
  %v1334 = vpack.c.b16 %v1052, %v1050
  %v1335 = vpack.c.b16 %v1055, %v1053
  %v1336 = vpack.c.b16 %v1056, %v1054
  %v1337 = vpack.c.b16 %v1059, %v1057
  %v1338 = vpack.c.b16 %v1060, %v1058
  %v1339 = vpack.c.b16 %v1063, %v1061
  %v1340 = vpack.c.b16 %v1064, %v1062
  %v1341 = vpack.c.b16 %v1067, %v1065
  %v1342 = vpack.c.b16 %v1068, %v1066
  %v1343 = vpack.c.b16 %v1071, %v1069
  %v1344 = vpack.c.b16 %v1072, %v1070
  %v1345 = vpack.c.b16 %v1075, %v1073
  %v1346 = vpack.c.b16 %v1076, %v1074
  %v1347 = vpack.c.b16 %v1079, %v1077
  %v1348 = vpack.c.b16 %v1080, %v1078
  %v1349 = vpack.c.b16 %v1083, %v1081
  %v1350 = vpack.c.b16 %v1084, %v1082
  %v1351 = vpack.c.b16 %v1087, %v1085
  %v1352 = vpack.c.b16 %v1088, %v1086
  %v1353 = vpack.c.b16 %v1091, %v1089
  %v1354 = vpack.c.b16 %v1092, %v1090
  %v1355 = vpack.c.b16 %v1095, %v1093
  %v1356 = vpack.c.b16 %v1096, %v1094
  %v1357 = vpack.c.b16 %v1099, %v1097
  %v1358 = vpack.c.b16 %v1100, %v1098
  %v1359 = vpack.c.b16 %v1103, %v1101
  %v1360 = vpack.c.b16 %v1104, %v1102
  %1617 = vmatprep.subr.bf16.mxu0 %v1106
  %1618 = vmatpush1.bf16.msra.mxu0 %v1105
  %1619 = vmatprep.subr.bf16.mxu0 %v1108
  %1620 = vmatpush1.bf16.msra.mxu0 %v1107
  %1621 = vmatprep.subr.bf16.mxu0 %v1110
  %1622 = vmatpush1.bf16.msra.mxu0 %v1109
  %1623 = vmatprep.subr.bf16.mxu0 %v1112
  %1624 = vmatpush1.bf16.msra.mxu0 %v1111
  %1625 = vmatprep.subr.bf16.mxu0 %v1114
  %1626 = vmatpush1.bf16.msra.mxu0 %v1113
  %1627 = vmatprep.subr.bf16.mxu0 %v1116
  %1628 = vmatpush1.bf16.msra.mxu0 %v1115
  %1629 = vmatprep.subr.bf16.mxu0 %v1118
  %1630 = vmatpush1.bf16.msra.mxu0 %v1117
  %1631 = vmatprep.subr.bf16.mxu0 %v1120
  %1632 = vmatpush1.bf16.msra.mxu0 %v1119
  %1633 = vmatprep.subr.bf16.mxu0 %v1122
  %1634 = vmatpush1.bf16.msra.mxu0 %v1121
  %1635 = vmatprep.subr.bf16.mxu0 %v1124
  %1636 = vmatpush1.bf16.msra.mxu0 %v1123
  %1637 = vmatprep.subr.bf16.mxu0 %v1126
  %1638 = vmatpush1.bf16.msra.mxu0 %v1125
  %1639 = vmatprep.subr.bf16.mxu0 %v1128
  %1640 = vmatpush1.bf16.msra.mxu0 %v1127
  %1641 = vmatprep.subr.bf16.mxu0 %v1130
  %1642 = vmatpush1.bf16.msra.mxu0 %v1129
  %1643 = vmatprep.subr.bf16.mxu0 %v1132
  %1644 = vmatpush1.bf16.msra.mxu0 %v1131
  %1645 = vmatprep.subr.bf16.mxu0 %v1134
  %1646 = vmatpush1.bf16.msra.mxu0 %v1133
  %1647 = vmatprep.subr.bf16.mxu0 %v1136
  %1648 = vmatpush1.bf16.msra.mxu0 %v1135
  %1649 = vmatprep.mubr.bf16.mxu0 %v306
  %1650 = vmatmul.mubr.bf16.gmra.mrb[0].mxu0 %v305
  %v1651 = vpop.f32.mrb[0].mxu0
  %v1652 = vadd.f32 0.0, %v1651
  %v1653 = vpop.f32.mrb[0].mxu0
  %v1654 = vadd.f32 0.0, %v1653
  %v1655 = vpop.f32.mrb[0].mxu0
  %v1656 = vpop.f32.mrb[0].mxu0
  %1657 = vdwg.mxu0
  %1658 = vmatprep.subr.bf16.mxu0 %v1138
  %1659 = vmatpush1.bf16.msra.mxu0 %v1137
  %1660 = vmatprep.subr.bf16.mxu0 %v1140
  %1661 = vmatpush1.bf16.msra.mxu0 %v1139
  %1662 = vmatprep.subr.bf16.mxu0 %v1142
  %1663 = vmatpush1.bf16.msra.mxu0 %v1141
  %1664 = vmatprep.subr.bf16.mxu0 %v1144
  %1665 = vmatpush1.bf16.msra.mxu0 %v1143
  %1666 = vmatprep.subr.bf16.mxu0 %v1146
  %1667 = vmatpush1.bf16.msra.mxu0 %v1145
  %1668 = vmatprep.subr.bf16.mxu0 %v1148
  %1669 = vmatpush1.bf16.msra.mxu0 %v1147
  %1670 = vmatprep.subr.bf16.mxu0 %v1150
  %1671 = vmatpush1.bf16.msra.mxu0 %v1149
  %1672 = vmatprep.subr.bf16.mxu0 %v1152
  %1673 = vmatpush1.bf16.msra.mxu0 %v1151
  %1674 = vmatprep.subr.bf16.mxu0 %v1154
  %1675 = vmatpush1.bf16.msra.mxu0 %v1153
  %1676 = vmatprep.subr.bf16.mxu0 %v1156
  %1677 = vmatpush1.bf16.msra.mxu0 %v1155
  %1678 = vmatprep.subr.bf16.mxu0 %v1158
  %1679 = vmatpush1.bf16.msra.mxu0 %v1157
  %1680 = vmatprep.subr.bf16.mxu0 %v1160
  %1681 = vmatpush1.bf16.msra.mxu0 %v1159
  %1682 = vmatprep.subr.bf16.mxu0 %v1162
  %1683 = vmatpush1.bf16.msra.mxu0 %v1161
  %1684 = vmatprep.subr.bf16.mxu0 %v1164
  %1685 = vmatpush1.bf16.msra.mxu0 %v1163
  %1686 = vmatprep.subr.bf16.mxu0 %v1166
  %1687 = vmatpush1.bf16.msra.mxu0 %v1165
  %1688 = vmatprep.subr.bf16.mxu0 %v1168
  %1689 = vmatpush1.bf16.msra.mxu0 %v1167
  %1690 = vmatprep.mubr.bf16.mxu0 %v308
  %1691 = vmatmul.mubr.bf16.gmra.mrb[0].mxu0 %v307
  %v1692 = vpop.f32.mrb[0].mxu0
  %v1693 = vadd.f32 %v1652, %v1692
  %v1694 = vpop.f32.mrb[0].mxu0
  %v1695 = vadd.f32 %v1654, %v1694
  %v1696 = vpop.f32.mrb[0].mxu0
  %v1697 = vpop.f32.mrb[0].mxu0
  %1698 = vdwg.mxu0
  %1699 = vmatprep.subr.bf16.mxu0 %v1170
  %1700 = vmatpush1.bf16.msra.mxu0 %v1169
  %1701 = vmatprep.subr.bf16.mxu0 %v1172
  %1702 = vmatpush1.bf16.msra.mxu0 %v1171
  %1703 = vmatprep.subr.bf16.mxu0 %v1174
  %1704 = vmatpush1.bf16.msra.mxu0 %v1173
  %1705 = vmatprep.subr.bf16.mxu0 %v1176
  %1706 = vmatpush1.bf16.msra.mxu0 %v1175
  %1707 = vmatprep.subr.bf16.mxu0 %v1178
  %1708 = vmatpush1.bf16.msra.mxu0 %v1177
  %1709 = vmatprep.subr.bf16.mxu0 %v1180
  %1710 = vmatpush1.bf16.msra.mxu0 %v1179
  %1711 = vmatprep.subr.bf16.mxu0 %v1182
  %1712 = vmatpush1.bf16.msra.mxu0 %v1181
  %1713 = vmatprep.subr.bf16.mxu0 %v1184
  %1714 = vmatpush1.bf16.msra.mxu0 %v1183
  %1715 = vmatprep.subr.bf16.mxu0 %v1186
  %1716 = vmatpush1.bf16.msra.mxu0 %v1185
  %1717 = vmatprep.subr.bf16.mxu0 %v1188
  %1718 = vmatpush1.bf16.msra.mxu0 %v1187
  %1719 = vmatprep.subr.bf16.mxu0 %v1190
  %1720 = vmatpush1.bf16.msra.mxu0 %v1189
  %1721 = vmatprep.subr.bf16.mxu0 %v1192
  %1722 = vmatpush1.bf16.msra.mxu0 %v1191
  %1723 = vmatprep.subr.bf16.mxu0 %v1194
  %1724 = vmatpush1.bf16.msra.mxu0 %v1193
  %1725 = vmatprep.subr.bf16.mxu0 %v1196
  %1726 = vmatpush1.bf16.msra.mxu0 %v1195
  %1727 = vmatprep.subr.bf16.mxu0 %v1198
  %1728 = vmatpush1.bf16.msra.mxu0 %v1197
  %1729 = vmatprep.subr.bf16.mxu0 %v1200
  %1730 = vmatpush1.bf16.msra.mxu0 %v1199
  %1731 = vmatprep.mubr.bf16.mxu0 %v310
  %1732 = vmatmul.mubr.bf16.gmra.mrb[0].mxu0 %v309
  %v1733 = vpop.f32.mrb[0].mxu0
  %v1734 = vadd.f32 %v1693, %v1733
  %v1735 = vpop.f32.mrb[0].mxu0
  %v1736 = vadd.f32 %v1695, %v1735
  %v1737 = vpop.f32.mrb[0].mxu0
  %v1738 = vpop.f32.mrb[0].mxu0
  %1739 = vdwg.mxu0
  %1740 = vmatprep.subr.bf16.mxu0 %v1202
  %1741 = vmatpush1.bf16.msra.mxu0 %v1201
  %1742 = vmatprep.subr.bf16.mxu0 %v1204
  %1743 = vmatpush1.bf16.msra.mxu0 %v1203
  %1744 = vmatprep.subr.bf16.mxu0 %v1206
  %1745 = vmatpush1.bf16.msra.mxu0 %v1205
  %1746 = vmatprep.subr.bf16.mxu0 %v1208
  %1747 = vmatpush1.bf16.msra.mxu0 %v1207
  %1748 = vmatprep.subr.bf16.mxu0 %v1210
  %1749 = vmatpush1.bf16.msra.mxu0 %v1209
  %1750 = vmatprep.subr.bf16.mxu0 %v1212
  %1751 = vmatpush1.bf16.msra.mxu0 %v1211
  %1752 = vmatprep.subr.bf16.mxu0 %v1214
  %1753 = vmatpush1.bf16.msra.mxu0 %v1213
  %1754 = vmatprep.subr.bf16.mxu0 %v1216
  %1755 = vmatpush1.bf16.msra.mxu0 %v1215
  %1756 = vmatprep.subr.bf16.mxu0 %v1218
  %1757 = vmatpush1.bf16.msra.mxu0 %v1217
  %1758 = vmatprep.subr.bf16.mxu0 %v1220
  %1759 = vmatpush1.bf16.msra.mxu0 %v1219
  %1760 = vmatprep.subr.bf16.mxu0 %v1222
  %1761 = vmatpush1.bf16.msra.mxu0 %v1221
  %1762 = vmatprep.subr.bf16.mxu0 %v1224
  %1763 = vmatpush1.bf16.msra.mxu0 %v1223
  %1764 = vmatprep.subr.bf16.mxu0 %v1226
  %1765 = vmatpush1.bf16.msra.mxu0 %v1225
  %1766 = vmatprep.subr.bf16.mxu0 %v1228
  %1767 = vmatpush1.bf16.msra.mxu0 %v1227
  %1768 = vmatprep.subr.bf16.mxu0 %v1230
  %1769 = vmatpush1.bf16.msra.mxu0 %v1229
  %1770 = vmatprep.subr.bf16.mxu0 %v1232
  %1771 = vmatpush1.bf16.msra.mxu0 %v1231
  %1772 = vmatprep.mubr.bf16.mxu0 %v312
  %1773 = vmatmul.mubr.bf16.gmra.mrb[0].mxu0 %v311
  %v1774 = vpop.f32.mrb[0].mxu0
  %v1775 = vadd.f32 %v1734, %v1774
  %v1776 = vpop.f32.mrb[0].mxu0
  %v1777 = vadd.f32 %v1736, %v1776
  %v1778 = vpop.f32.mrb[0].mxu0
  %v1779 = vpop.f32.mrb[0].mxu0
  %1780 = vdwg.mxu0
  %1781 = vmatprep.subr.bf16.mxu0 %v1234
  %1782 = vmatpush1.bf16.msra.mxu0 %v1233
  %1783 = vmatprep.subr.bf16.mxu0 %v1236
  %1784 = vmatpush1.bf16.msra.mxu0 %v1235
  %1785 = vmatprep.subr.bf16.mxu0 %v1238
  %1786 = vmatpush1.bf16.msra.mxu0 %v1237
  %1787 = vmatprep.subr.bf16.mxu0 %v1240
  %1788 = vmatpush1.bf16.msra.mxu0 %v1239
  %1789 = vmatprep.subr.bf16.mxu0 %v1242
  %1790 = vmatpush1.bf16.msra.mxu0 %v1241
  %1791 = vmatprep.subr.bf16.mxu0 %v1244
  %1792 = vmatpush1.bf16.msra.mxu0 %v1243
  %1793 = vmatprep.subr.bf16.mxu0 %v1246
  %1794 = vmatpush1.bf16.msra.mxu0 %v1245
  %1795 = vmatprep.subr.bf16.mxu0 %v1248
  %1796 = vmatpush1.bf16.msra.mxu0 %v1247
  %1797 = vmatprep.subr.bf16.mxu0 %v1250
  %1798 = vmatpush1.bf16.msra.mxu0 %v1249
  %1799 = vmatprep.subr.bf16.mxu0 %v1252
  %1800 = vmatpush1.bf16.msra.mxu0 %v1251
  %1801 = vmatprep.subr.bf16.mxu0 %v1254
  %1802 = vmatpush1.bf16.msra.mxu0 %v1253
  %1803 = vmatprep.subr.bf16.mxu0 %v1256
  %1804 = vmatpush1.bf16.msra.mxu0 %v1255
  %1805 = vmatprep.subr.bf16.mxu0 %v1258
  %1806 = vmatpush1.bf16.msra.mxu0 %v1257
  %1807 = vmatprep.subr.bf16.mxu0 %v1260
  %1808 = vmatpush1.bf16.msra.mxu0 %v1259
  %1809 = vmatprep.subr.bf16.mxu0 %v1262
  %1810 = vmatpush1.bf16.msra.mxu0 %v1261
  %1811 = vmatprep.subr.bf16.mxu0 %v1264
  %1812 = vmatpush1.bf16.msra.mxu0 %v1263
  %1813 = vmatprep.mubr.bf16.mxu0 %v314
  %1814 = vmatmul.mubr.bf16.gmra.mrb[0].mxu0 %v313
  %v1815 = vpop.f32.mrb[0].mxu0
  %v1816 = vadd.f32 %v1775, %v1815
  %v1817 = vpop.f32.mrb[0].mxu0
  %v1818 = vadd.f32 %v1777, %v1817
  %v1819 = vpop.f32.mrb[0].mxu0
  %v1820 = vpop.f32.mrb[0].mxu0
  %1821 = vdwg.mxu0
  %1822 = vmatprep.subr.bf16.mxu0 %v1266
  %1823 = vmatpush1.bf16.msra.mxu0 %v1265
  %1824 = vmatprep.subr.bf16.mxu0 %v1268
  %1825 = vmatpush1.bf16.msra.mxu0 %v1267
  %1826 = vmatprep.subr.bf16.mxu0 %v1270
  %1827 = vmatpush1.bf16.msra.mxu0 %v1269
  %1828 = vmatprep.subr.bf16.mxu0 %v1272
  %1829 = vmatpush1.bf16.msra.mxu0 %v1271
  %1830 = vmatprep.subr.bf16.mxu0 %v1274
  %1831 = vmatpush1.bf16.msra.mxu0 %v1273
  %1832 = vmatprep.subr.bf16.mxu0 %v1276
  %1833 = vmatpush1.bf16.msra.mxu0 %v1275
  %1834 = vmatprep.subr.bf16.mxu0 %v1278
  %1835 = vmatpush1.bf16.msra.mxu0 %v1277
  %1836 = vmatprep.subr.bf16.mxu0 %v1280
  %1837 = vmatpush1.bf16.msra.mxu0 %v1279
  %1838 = vmatprep.subr.bf16.mxu0 %v1282
  %1839 = vmatpush1.bf16.msra.mxu0 %v1281
  %1840 = vmatprep.subr.bf16.mxu0 %v1284
  %1841 = vmatpush1.bf16.msra.mxu0 %v1283
  %1842 = vmatprep.subr.bf16.mxu0 %v1286
  %1843 = vmatpush1.bf16.msra.mxu0 %v1285
  %1844 = vmatprep.subr.bf16.mxu0 %v1288
  %1845 = vmatpush1.bf16.msra.mxu0 %v1287
  %1846 = vmatprep.subr.bf16.mxu0 %v1290
  %1847 = vmatpush1.bf16.msra.mxu0 %v1289
  %1848 = vmatprep.subr.bf16.mxu0 %v1292
  %1849 = vmatpush1.bf16.msra.mxu0 %v1291
  %1850 = vmatprep.subr.bf16.mxu0 %v1294
  %1851 = vmatpush1.bf16.msra.mxu0 %v1293
  %1852 = vmatprep.subr.bf16.mxu0 %v1296
  %1853 = vmatpush1.bf16.msra.mxu0 %v1295
  %1854 = vmatprep.mubr.bf16.mxu0 %v316
  %1855 = vmatmul.mubr.bf16.gmra.mrb[0].mxu0 %v315
  %v1856 = vpop.f32.mrb[0].mxu0
  %v1857 = vadd.f32 %v1816, %v1856
  %v1858 = vpop.f32.mrb[0].mxu0
  %v1859 = vadd.f32 %v1818, %v1858
  %v1860 = vpop.f32.mrb[0].mxu0
  %v1861 = vpop.f32.mrb[0].mxu0
  %1862 = vdwg.mxu0
  %1863 = vmatprep.subr.bf16.mxu0 %v1298
  %1864 = vmatpush1.bf16.msra.mxu0 %v1297
  %1865 = vmatprep.subr.bf16.mxu0 %v1300
  %1866 = vmatpush1.bf16.msra.mxu0 %v1299
  %1867 = vmatprep.subr.bf16.mxu0 %v1302
  %1868 = vmatpush1.bf16.msra.mxu0 %v1301
  %1869 = vmatprep.subr.bf16.mxu0 %v1304
  %1870 = vmatpush1.bf16.msra.mxu0 %v1303
  %1871 = vmatprep.subr.bf16.mxu0 %v1306
  %1872 = vmatpush1.bf16.msra.mxu0 %v1305
  %1873 = vmatprep.subr.bf16.mxu0 %v1308
  %1874 = vmatpush1.bf16.msra.mxu0 %v1307
  %1875 = vmatprep.subr.bf16.mxu0 %v1310
  %1876 = vmatpush1.bf16.msra.mxu0 %v1309
  %1877 = vmatprep.subr.bf16.mxu0 %v1312
  %1878 = vmatpush1.bf16.msra.mxu0 %v1311
  %1879 = vmatprep.subr.bf16.mxu0 %v1314
  %1880 = vmatpush1.bf16.msra.mxu0 %v1313
  %1881 = vmatprep.subr.bf16.mxu0 %v1316
  %1882 = vmatpush1.bf16.msra.mxu0 %v1315
  %1883 = vmatprep.subr.bf16.mxu0 %v1318
  %1884 = vmatpush1.bf16.msra.mxu0 %v1317
  %1885 = vmatprep.subr.bf16.mxu0 %v1320
  %1886 = vmatpush1.bf16.msra.mxu0 %v1319
  %1887 = vmatprep.subr.bf16.mxu0 %v1322
  %1888 = vmatpush1.bf16.msra.mxu0 %v1321
  %1889 = vmatprep.subr.bf16.mxu0 %v1324
  %1890 = vmatpush1.bf16.msra.mxu0 %v1323
  %1891 = vmatprep.subr.bf16.mxu0 %v1326
  %1892 = vmatpush1.bf16.msra.mxu0 %v1325
  %1893 = vmatprep.subr.bf16.mxu0 %v1328
  %1894 = vmatpush1.bf16.msra.mxu0 %v1327
  %1895 = vmatprep.mubr.bf16.mxu0 %v318
  %1896 = vmatmul.mubr.bf16.gmra.mrb[0].mxu0 %v317
  %v1897 = vpop.f32.mrb[0].mxu0
  %v1898 = vadd.f32 %v1857, %v1897
  %v1899 = vpop.f32.mrb[0].mxu0
  %v1900 = vadd.f32 %v1859, %v1899
  %v1901 = vpop.f32.mrb[0].mxu0
  %v1902 = vpop.f32.mrb[0].mxu0
  %1903 = vdwg.mxu0
  %1904 = vmatprep.subr.bf16.mxu0 %v1330
  %1905 = vmatpush1.bf16.msra.mxu0 %v1329
  %1906 = vmatprep.subr.bf16.mxu0 %v1332
  %1907 = vmatpush1.bf16.msra.mxu0 %v1331
  %1908 = vmatprep.subr.bf16.mxu0 %v1334
  %1909 = vmatpush1.bf16.msra.mxu0 %v1333
  %1910 = vmatprep.subr.bf16.mxu0 %v1336
  %1911 = vmatpush1.bf16.msra.mxu0 %v1335
  %1912 = vmatprep.subr.bf16.mxu0 %v1338
  %1913 = vmatpush1.bf16.msra.mxu0 %v1337
  %1914 = vmatprep.subr.bf16.mxu0 %v1340
  %1915 = vmatpush1.bf16.msra.mxu0 %v1339
  %1916 = vmatprep.subr.bf16.mxu0 %v1342
  %1917 = vmatpush1.bf16.msra.mxu0 %v1341
  %1918 = vmatprep.subr.bf16.mxu0 %v1344
  %1919 = vmatpush1.bf16.msra.mxu0 %v1343
  %1920 = vmatprep.subr.bf16.mxu0 %v1346
  %1921 = vmatpush1.bf16.msra.mxu0 %v1345
  %1922 = vmatprep.subr.bf16.mxu0 %v1348
  %1923 = vmatpush1.bf16.msra.mxu0 %v1347
  %1924 = vmatprep.subr.bf16.mxu0 %v1350
  %1925 = vmatpush1.bf16.msra.mxu0 %v1349
  %1926 = vmatprep.subr.bf16.mxu0 %v1352
  %1927 = vmatpush1.bf16.msra.mxu0 %v1351
  %1928 = vmatprep.subr.bf16.mxu0 %v1354
  %1929 = vmatpush1.bf16.msra.mxu0 %v1353
  %1930 = vmatprep.subr.bf16.mxu0 %v1356
  %1931 = vmatpush1.bf16.msra.mxu0 %v1355
  %1932 = vmatprep.subr.bf16.mxu0 %v1358
  %1933 = vmatpush1.bf16.msra.mxu0 %v1357
  %1934 = vmatprep.subr.bf16.mxu0 %v1360
  %1935 = vmatpush1.bf16.msra.mxu0 %v1359
  %1936 = vmatprep.mubr.bf16.mxu0 %v320
  %1937 = vmatmul.mubr.bf16.gmra.mrb[0].mxu0 %v319
  %v1938 = vpop.f32.mrb[0].mxu0
  %v1939 = vadd.f32 %v1898, %v1938
  %v1940 = vpop.f32.mrb[0].mxu0
  %v1941 = vadd.f32 %v1900, %v1940
  %v1942 = vpop.f32.mrb[0].mxu0
  %v1943 = vpop.f32.mrb[0].mxu0
  %1944 = vdwg.mxu0
  %v1945 = vld [vmem:[%s2] sm:$0x3]
  %v1947 = vlaneseq
  %v1948 = vshrl.u32 %v1947, 7
  %v1949 = vsub.s32 0, %v1948
  %v1950 = vrot.slane %v1945, %v1949
  %v1951 = vlaneseq
  %v1952 = vshrl.u32 %v1951, 7
  %v1953 = vsub.s32 1, %v1952
  %v1954 = vrot.slane %v1945, %v1953
  %v1957 = vmul.f32 %v1939, %v1950
  %v1958 = vmul.f32 %v1941, %v1954
  %v1959 = vld [vmem:[%s3] sm:$0x3]
  %v1961 = vlaneseq
  %v1962 = vshrl.u32 %v1961, 7
  %v1963 = vsub.s32 0, %v1962
  %v1964 = vrot.slane %v1959, %v1963
  %v1965 = vlaneseq
  %v1966 = vshrl.u32 %v1965, 7
  %v1967 = vsub.s32 1, %v1966
  %v1968 = vrot.slane %v1959, %v1967
  %v1971 = vadd.f32 %v1957, %v1964
  %v1972 = vadd.f32 %v1958, %v1968
  %vm1973 = vcmp.ge.f32.partialorder %v1971, 0.0
  %vm1974 = vcmp.ge.f32.partialorder %v1972, 0.0
  %v1975 = vmul.f32 %v1971, 0.2
  %v1976 = vmul.f32 %v1972, 0.2
  %v1977 = vsel %vm1973, %v1971, %v1975
  %v1978 = vsel %vm1974, %v1972, %v1976
  %v1979 = vpack.c.bf16 %v1977, %v1977
  %v1980 = vpack.c.bf16 %v1978, %v1978
  %v1983 = vunpack.c.l.b16 %v1979
  %v1984 = vunpack.c.l.b16 %v1980
  %v1985 = vpack.c.b16 %v1984, %v1983
  %vm1987 = vcmask 1042432
  %vm1988 = vsmask.f32 2304
  %vm1989 = vmand %vm1987, %vm1988
  %vm1990 = vcmask 1046532
  %vm1991 = vsmask.f32 6400
  %vm1992 = vmand %vm1990, %vm1991
  %vm1993 = vmor %vm1992, %vm1989
  %v1994 = vld [vmem:[%s4] sm:$0x77]
  %v1995 = vsel %vm1993, %v1985, %v1994
  %1996 = vst [vmem:[%s4] sm:$0x77] %v1995
  // Predicated region
  $region18: #{nlayer_attention_forward.8} parent=0 // pred_check
    _
  $region19: #{nlayer_attention_forward.8} parent=0 // pred_check_branch
    %1998 = sbr.rel (0) target = $region21
  $region20: #{nlayer_attention_forward.8} parent=0 // pred_region
    _
  $region21: #{nlayer_attention_forward.8} parent=0 // pred_fallthru
    _
  // Predicated region
  $region22: #{nlayer_attention_forward.8} parent=0 // pred_check
    _
  $region23: #{nlayer_attention_forward.8} parent=0 // pred_check_branch
    %2000 = sbr.rel (0) target = $region25
  $region24: #{nlayer_attention_forward.8} parent=0 // pred_region
    _
  $region25: #{nlayer_attention_forward.8} parent=0 // pred_fallthru
    _

// kernel: nlayer_attention_forward.9
$region0: #{nlayer_attention_forward.9}
  #allocation0 [shape = 'u32[]', space=smem, size = 0x4, offset = 0x4, fixed_abs, tag = 'smem constant byte address 0x4 - core index']
  #allocation1 [shape = 'u32[144,128]{1,0:T(1,128)}', space=vmem, size = 0x12000, scoped, tag = 'internal scratch']
  %s0 = inlined_call_operand.vmem [shape: bf16[1,8192], index: 0, kind: input, shape index: {}]
  %s1 = inlined_call_operand.vmem [shape: bf16[8192,8], index: 1, kind: input, shape index: {}]
  %s2 = inlined_call_operand.vmem [shape: f32[1,8], index: 2, kind: input, shape index: {}]
  %s3 = inlined_call_operand.vmem [shape: f32[1,8], index: 3, kind: input, shape index: {}]
  %s4 = inlined_call_operand.vmem [shape: f32[1,8], index: 4, kind: output, shape index: {}]
  %s5 = sld [smem:[#allocation0]]
  $region26: #{nlayer_attention_forward.9} parent=0
    _
  %s7 = ssub.s32 1, %s5
  %s8 = scalar_select 0, %s7, %s5
  // Predicated region
  $region2: #{nlayer_attention_forward.9} parent=0 // pred_check
    _
  $region3: #{nlayer_attention_forward.9} parent=0 // pred_check_branch
    %10 = sbr.rel (0) target = $region5
  $region4: #{nlayer_attention_forward.9} parent=0 // pred_region
    _
  $region5: #{nlayer_attention_forward.9} parent=0 // pred_fallthru
    _
  // Predicated region
  $region6: #{nlayer_attention_forward.9} parent=0 // pred_check
    _
  $region7: #{nlayer_attention_forward.9} parent=0 // pred_check_branch
    %12 = sbr.rel (0) target = $region9
  $region8: #{nlayer_attention_forward.9} parent=0 // pred_region
    _
  $region9: #{nlayer_attention_forward.9} parent=0 // pred_fallthru
    _
  // Predicated region
  $region10: #{nlayer_attention_forward.9} parent=0 // pred_check
    _
  $region11: #{nlayer_attention_forward.9} parent=0 // pred_check_branch
    %14 = sbr.rel (0) target = $region13
  $region12: #{nlayer_attention_forward.9} parent=0 // pred_region
    _
  $region13: #{nlayer_attention_forward.9} parent=0 // pred_fallthru
    _
  // Predicated region
  $region14: #{nlayer_attention_forward.9} parent=0 // pred_check
    _
  $region15: #{nlayer_attention_forward.9} parent=0 // pred_check_branch
    %16 = sbr.rel (0) target = $region17
  $region16: #{nlayer_attention_forward.9} parent=0 // pred_region
    _
  $region17: #{nlayer_attention_forward.9} parent=0 // pred_fallthru
    _
  %v18 = vld [vmem:[%s0] sm:$0xff]
  %v19 = vld [vmem:[%s0 + $0x8] sm:$0xff]
  %v20 = vld [vmem:[%s0 + $0x10] sm:$0xff]
  %v21 = vld [vmem:[%s0 + $0x18] sm:$0xff]
  %v22 = vld [vmem:[%s0 + $0x20] sm:$0xff]
  %v23 = vld [vmem:[%s0 + $0x28] sm:$0xff]
  %v24 = vld [vmem:[%s0 + $0x30] sm:$0xff]
  %v25 = vld [vmem:[%s0 + $0x38] sm:$0xff]
  %v26 = vld [vmem:[%s1] sm:$0xf]
  %v27 = vld [vmem:[%s1 + $0x4] sm:$0xf]
  %v28 = vld [vmem:[%s1 + $0x8] sm:$0xf]
  %v29 = vld [vmem:[%s1 + $0xc] sm:$0xf]
  %v30 = vld [vmem:[%s1 + $0x10] sm:$0xf]
  %v31 = vld [vmem:[%s1 + $0x14] sm:$0xf]
  %v32 = vld [vmem:[%s1 + $0x18] sm:$0xf]
  %v33 = vld [vmem:[%s1 + $0x1c] sm:$0xf]
  %v34 = vld [vmem:[%s1 + $0x20] sm:$0xf]
  %v35 = vld [vmem:[%s1 + $0x24] sm:$0xf]
  %v36 = vld [vmem:[%s1 + $0x28] sm:$0xf]
  %v37 = vld [vmem:[%s1 + $0x2c] sm:$0xf]
  %v38 = vld [vmem:[%s1 + $0x30] sm:$0xf]
  %v39 = vld [vmem:[%s1 + $0x34] sm:$0xf]
  %v40 = vld [vmem:[%s1 + $0x38] sm:$0xf]
  %v41 = vld [vmem:[%s1 + $0x3c] sm:$0xf]
  %v42 = vld [vmem:[%s1 + $0x40] sm:$0xf]
  %v43 = vld [vmem:[%s1 + $0x44] sm:$0xf]
  %v44 = vld [vmem:[%s1 + $0x48] sm:$0xf]
  %v45 = vld [vmem:[%s1 + $0x4c] sm:$0xf]
  %v46 = vld [vmem:[%s1 + $0x50] sm:$0xf]
  %v47 = vld [vmem:[%s1 + $0x54] sm:$0xf]
  %v48 = vld [vmem:[%s1 + $0x58] sm:$0xf]
  %v49 = vld [vmem:[%s1 + $0x5c] sm:$0xf]
  %v50 = vld [vmem:[%s1 + $0x60] sm:$0xf]
  %v51 = vld [vmem:[%s1 + $0x64] sm:$0xf]
  %v52 = vld [vmem:[%s1 + $0x68] sm:$0xf]
  %v53 = vld [vmem:[%s1 + $0x6c] sm:$0xf]
  %v54 = vld [vmem:[%s1 + $0x70] sm:$0xf]
  %v55 = vld [vmem:[%s1 + $0x74] sm:$0xf]
  %v56 = vld [vmem:[%s1 + $0x78] sm:$0xf]
  %v57 = vld [vmem:[%s1 + $0x7c] sm:$0xf]
  %v58 = vld [vmem:[%s1 + $0x80] sm:$0xf]
  %v59 = vld [vmem:[%s1 + $0x84] sm:$0xf]
  %v60 = vld [vmem:[%s1 + $0x88] sm:$0xf]
  %v61 = vld [vmem:[%s1 + $0x8c] sm:$0xf]
  %v62 = vld [vmem:[%s1 + $0x90] sm:$0xf]
  %v63 = vld [vmem:[%s1 + $0x94] sm:$0xf]
  %v64 = vld [vmem:[%s1 + $0x98] sm:$0xf]
  %v65 = vld [vmem:[%s1 + $0x9c] sm:$0xf]
  %v66 = vld [vmem:[%s1 + $0xa0] sm:$0xf]
  %v67 = vld [vmem:[%s1 + $0xa4] sm:$0xf]
  %v68 = vld [vmem:[%s1 + $0xa8] sm:$0xf]
  %v69 = vld [vmem:[%s1 + $0xac] sm:$0xf]
  %v70 = vld [vmem:[%s1 + $0xb0] sm:$0xf]
  %v71 = vld [vmem:[%s1 + $0xb4] sm:$0xf]
  %v72 = vld [vmem:[%s1 + $0xb8] sm:$0xf]
  %v73 = vld [vmem:[%s1 + $0xbc] sm:$0xf]
  %v74 = vld [vmem:[%s1 + $0xc0] sm:$0xf]
  %v75 = vld [vmem:[%s1 + $0xc4] sm:$0xf]
  %v76 = vld [vmem:[%s1 + $0xc8] sm:$0xf]
  %v77 = vld [vmem:[%s1 + $0xcc] sm:$0xf]
  %v78 = vld [vmem:[%s1 + $0xd0] sm:$0xf]
  %v79 = vld [vmem:[%s1 + $0xd4] sm:$0xf]
  %v80 = vld [vmem:[%s1 + $0xd8] sm:$0xf]
  %v81 = vld [vmem:[%s1 + $0xdc] sm:$0xf]
  %v82 = vld [vmem:[%s1 + $0xe0] sm:$0xf]
  %v83 = vld [vmem:[%s1 + $0xe4] sm:$0xf]
  %v84 = vld [vmem:[%s1 + $0xe8] sm:$0xf]
  %v85 = vld [vmem:[%s1 + $0xec] sm:$0xf]
  %v86 = vld [vmem:[%s1 + $0xf0] sm:$0xf]
  %v87 = vld [vmem:[%s1 + $0xf4] sm:$0xf]
  %v88 = vld [vmem:[%s1 + $0xf8] sm:$0xf]
  %v89 = vld [vmem:[%s1 + $0xfc] sm:$0xf]
  %v90 = vld [vmem:[%s1 + $0x100] sm:$0xf]
  %v91 = vld [vmem:[%s1 + $0x104] sm:$0xf]
  %v92 = vld [vmem:[%s1 + $0x108] sm:$0xf]
  %v93 = vld [vmem:[%s1 + $0x10c] sm:$0xf]
  %v94 = vld [vmem:[%s1 + $0x110] sm:$0xf]
  %v95 = vld [vmem:[%s1 + $0x114] sm:$0xf]
  %v96 = vld [vmem:[%s1 + $0x118] sm:$0xf]
  %v97 = vld [vmem:[%s1 + $0x11c] sm:$0xf]
  %v98 = vld [vmem:[%s1 + $0x120] sm:$0xf]
  %v99 = vld [vmem:[%s1 + $0x124] sm:$0xf]
  %v100 = vld [vmem:[%s1 + $0x128] sm:$0xf]
  %v101 = vld [vmem:[%s1 + $0x12c] sm:$0xf]
  %v102 = vld [vmem:[%s1 + $0x130] sm:$0xf]
  %v103 = vld [vmem:[%s1 + $0x134] sm:$0xf]
  %v104 = vld [vmem:[%s1 + $0x138] sm:$0xf]
  %v105 = vld [vmem:[%s1 + $0x13c] sm:$0xf]
  %v106 = vld [vmem:[%s1 + $0x140] sm:$0xf]
  %v107 = vld [vmem:[%s1 + $0x144] sm:$0xf]
  %v108 = vld [vmem:[%s1 + $0x148] sm:$0xf]
  %v109 = vld [vmem:[%s1 + $0x14c] sm:$0xf]
  %v110 = vld [vmem:[%s1 + $0x150] sm:$0xf]
  %v111 = vld [vmem:[%s1 + $0x154] sm:$0xf]
  %v112 = vld [vmem:[%s1 + $0x158] sm:$0xf]
  %v113 = vld [vmem:[%s1 + $0x15c] sm:$0xf]
  %v114 = vld [vmem:[%s1 + $0x160] sm:$0xf]
  %v115 = vld [vmem:[%s1 + $0x164] sm:$0xf]
  %v116 = vld [vmem:[%s1 + $0x168] sm:$0xf]
  %v117 = vld [vmem:[%s1 + $0x16c] sm:$0xf]
  %v118 = vld [vmem:[%s1 + $0x170] sm:$0xf]
  %v119 = vld [vmem:[%s1 + $0x174] sm:$0xf]
  %v120 = vld [vmem:[%s1 + $0x178] sm:$0xf]
  %v121 = vld [vmem:[%s1 + $0x17c] sm:$0xf]
  %v122 = vld [vmem:[%s1 + $0x180] sm:$0xf]
  %v123 = vld [vmem:[%s1 + $0x184] sm:$0xf]
  %v124 = vld [vmem:[%s1 + $0x188] sm:$0xf]
  %v125 = vld [vmem:[%s1 + $0x18c] sm:$0xf]
  %v126 = vld [vmem:[%s1 + $0x190] sm:$0xf]
  %v127 = vld [vmem:[%s1 + $0x194] sm:$0xf]
  %v128 = vld [vmem:[%s1 + $0x198] sm:$0xf]
  %v129 = vld [vmem:[%s1 + $0x19c] sm:$0xf]
  %v130 = vld [vmem:[%s1 + $0x1a0] sm:$0xf]
  %v131 = vld [vmem:[%s1 + $0x1a4] sm:$0xf]
  %v132 = vld [vmem:[%s1 + $0x1a8] sm:$0xf]
  %v133 = vld [vmem:[%s1 + $0x1ac] sm:$0xf]
  %v134 = vld [vmem:[%s1 + $0x1b0] sm:$0xf]
  %v135 = vld [vmem:[%s1 + $0x1b4] sm:$0xf]
  %v136 = vld [vmem:[%s1 + $0x1b8] sm:$0xf]
  %v137 = vld [vmem:[%s1 + $0x1bc] sm:$0xf]
  %v138 = vld [vmem:[%s1 + $0x1c0] sm:$0xf]
  %v139 = vld [vmem:[%s1 + $0x1c4] sm:$0xf]
  %v140 = vld [vmem:[%s1 + $0x1c8] sm:$0xf]
  %v141 = vld [vmem:[%s1 + $0x1cc] sm:$0xf]
  %v142 = vld [vmem:[%s1 + $0x1d0] sm:$0xf]
  %v143 = vld [vmem:[%s1 + $0x1d4] sm:$0xf]
  %v144 = vld [vmem:[%s1 + $0x1d8] sm:$0xf]
  %v145 = vld [vmem:[%s1 + $0x1dc] sm:$0xf]
  %v146 = vld [vmem:[%s1 + $0x1e0] sm:$0xf]
  %v147 = vld [vmem:[%s1 + $0x1e4] sm:$0xf]
  %v148 = vld [vmem:[%s1 + $0x1e8] sm:$0xf]
  %v149 = vld [vmem:[%s1 + $0x1ec] sm:$0xf]
  %v150 = vld [vmem:[%s1 + $0x1f0] sm:$0xf]
  %v151 = vld [vmem:[%s1 + $0x1f4] sm:$0xf]
  %v152 = vld [vmem:[%s1 + $0x1f8] sm:$0xf]
  %v153 = vld [vmem:[%s1 + $0x1fc] sm:$0xf]
  %v154 = vld [vmem:[%s1 + $0x200] sm:$0xf]
  %v155 = vld [vmem:[%s1 + $0x204] sm:$0xf]
  %v156 = vld [vmem:[%s1 + $0x208] sm:$0xf]
  %v157 = vld [vmem:[%s1 + $0x20c] sm:$0xf]
  %v158 = vld [vmem:[%s1 + $0x210] sm:$0xf]
  %v159 = vld [vmem:[%s1 + $0x214] sm:$0xf]
  %v160 = vld [vmem:[%s1 + $0x218] sm:$0xf]
  %v161 = vld [vmem:[%s1 + $0x21c] sm:$0xf]
  %v162 = vld [vmem:[%s1 + $0x220] sm:$0xf]
  %v163 = vld [vmem:[%s1 + $0x224] sm:$0xf]
  %v164 = vld [vmem:[%s1 + $0x228] sm:$0xf]
  %v165 = vld [vmem:[%s1 + $0x22c] sm:$0xf]
  %v166 = vld [vmem:[%s1 + $0x230] sm:$0xf]
  %v167 = vld [vmem:[%s1 + $0x234] sm:$0xf]
  %v168 = vld [vmem:[%s1 + $0x238] sm:$0xf]
  %v169 = vld [vmem:[%s1 + $0x23c] sm:$0xf]
  %v170 = vld [vmem:[%s1 + $0x240] sm:$0xf]
  %v171 = vld [vmem:[%s1 + $0x244] sm:$0xf]
  %v172 = vld [vmem:[%s1 + $0x248] sm:$0xf]
  %v173 = vld [vmem:[%s1 + $0x24c] sm:$0xf]
  %v174 = vld [vmem:[%s1 + $0x250] sm:$0xf]
  %v175 = vld [vmem:[%s1 + $0x254] sm:$0xf]
  %v176 = vld [vmem:[%s1 + $0x258] sm:$0xf]
  %v177 = vld [vmem:[%s1 + $0x25c] sm:$0xf]
  %v178 = vld [vmem:[%s1 + $0x260] sm:$0xf]
  %v179 = vld [vmem:[%s1 + $0x264] sm:$0xf]
  %v180 = vld [vmem:[%s1 + $0x268] sm:$0xf]
  %v181 = vld [vmem:[%s1 + $0x26c] sm:$0xf]
  %v182 = vld [vmem:[%s1 + $0x270] sm:$0xf]
  %v183 = vld [vmem:[%s1 + $0x274] sm:$0xf]
  %v184 = vld [vmem:[%s1 + $0x278] sm:$0xf]
  %v185 = vld [vmem:[%s1 + $0x27c] sm:$0xf]
  %v186 = vld [vmem:[%s1 + $0x280] sm:$0xf]
  %v187 = vld [vmem:[%s1 + $0x284] sm:$0xf]
  %v188 = vld [vmem:[%s1 + $0x288] sm:$0xf]
  %v189 = vld [vmem:[%s1 + $0x28c] sm:$0xf]
  %v190 = vld [vmem:[%s1 + $0x290] sm:$0xf]
  %v191 = vld [vmem:[%s1 + $0x294] sm:$0xf]
  %v192 = vld [vmem:[%s1 + $0x298] sm:$0xf]
  %v193 = vld [vmem:[%s1 + $0x29c] sm:$0xf]
  %v194 = vld [vmem:[%s1 + $0x2a0] sm:$0xf]
  %v195 = vld [vmem:[%s1 + $0x2a4] sm:$0xf]
  %v196 = vld [vmem:[%s1 + $0x2a8] sm:$0xf]
  %v197 = vld [vmem:[%s1 + $0x2ac] sm:$0xf]
  %v198 = vld [vmem:[%s1 + $0x2b0] sm:$0xf]
  %v199 = vld [vmem:[%s1 + $0x2b4] sm:$0xf]
  %v200 = vld [vmem:[%s1 + $0x2b8] sm:$0xf]
  %v201 = vld [vmem:[%s1 + $0x2bc] sm:$0xf]
  %v202 = vld [vmem:[%s1 + $0x2c0] sm:$0xf]
  %v203 = vld [vmem:[%s1 + $0x2c4] sm:$0xf]
  %v204 = vld [vmem:[%s1 + $0x2c8] sm:$0xf]
  %v205 = vld [vmem:[%s1 + $0x2cc] sm:$0xf]
  %v206 = vld [vmem:[%s1 + $0x2d0] sm:$0xf]
  %v207 = vld [vmem:[%s1 + $0x2d4] sm:$0xf]
  %v208 = vld [vmem:[%s1 + $0x2d8] sm:$0xf]
  %v209 = vld [vmem:[%s1 + $0x2dc] sm:$0xf]
  %v210 = vld [vmem:[%s1 + $0x2e0] sm:$0xf]
  %v211 = vld [vmem:[%s1 + $0x2e4] sm:$0xf]
  %v212 = vld [vmem:[%s1 + $0x2e8] sm:$0xf]
  %v213 = vld [vmem:[%s1 + $0x2ec] sm:$0xf]
  %v214 = vld [vmem:[%s1 + $0x2f0] sm:$0xf]
  %v215 = vld [vmem:[%s1 + $0x2f4] sm:$0xf]
  %v216 = vld [vmem:[%s1 + $0x2f8] sm:$0xf]
  %v217 = vld [vmem:[%s1 + $0x2fc] sm:$0xf]
  %v218 = vld [vmem:[%s1 + $0x300] sm:$0xf]
  %v219 = vld [vmem:[%s1 + $0x304] sm:$0xf]
  %v220 = vld [vmem:[%s1 + $0x308] sm:$0xf]
  %v221 = vld [vmem:[%s1 + $0x30c] sm:$0xf]
  %v222 = vld [vmem:[%s1 + $0x310] sm:$0xf]
  %v223 = vld [vmem:[%s1 + $0x314] sm:$0xf]
  %v224 = vld [vmem:[%s1 + $0x318] sm:$0xf]
  %v225 = vld [vmem:[%s1 + $0x31c] sm:$0xf]
  %v226 = vld [vmem:[%s1 + $0x320] sm:$0xf]
  %v227 = vld [vmem:[%s1 + $0x324] sm:$0xf]
  %v228 = vld [vmem:[%s1 + $0x328] sm:$0xf]
  %v229 = vld [vmem:[%s1 + $0x32c] sm:$0xf]
  %v230 = vld [vmem:[%s1 + $0x330] sm:$0xf]
  %v231 = vld [vmem:[%s1 + $0x334] sm:$0xf]
  %v232 = vld [vmem:[%s1 + $0x338] sm:$0xf]
  %v233 = vld [vmem:[%s1 + $0x33c] sm:$0xf]
  %v234 = vld [vmem:[%s1 + $0x340] sm:$0xf]
  %v235 = vld [vmem:[%s1 + $0x344] sm:$0xf]
  %v236 = vld [vmem:[%s1 + $0x348] sm:$0xf]
  %v237 = vld [vmem:[%s1 + $0x34c] sm:$0xf]
  %v238 = vld [vmem:[%s1 + $0x350] sm:$0xf]
  %v239 = vld [vmem:[%s1 + $0x354] sm:$0xf]
  %v240 = vld [vmem:[%s1 + $0x358] sm:$0xf]
  %v241 = vld [vmem:[%s1 + $0x35c] sm:$0xf]
  %v242 = vld [vmem:[%s1 + $0x360] sm:$0xf]
  %v243 = vld [vmem:[%s1 + $0x364] sm:$0xf]
  %v244 = vld [vmem:[%s1 + $0x368] sm:$0xf]
  %v245 = vld [vmem:[%s1 + $0x36c] sm:$0xf]
  %v246 = vld [vmem:[%s1 + $0x370] sm:$0xf]
  %v247 = vld [vmem:[%s1 + $0x374] sm:$0xf]
  %v248 = vld [vmem:[%s1 + $0x378] sm:$0xf]
  %v249 = vld [vmem:[%s1 + $0x37c] sm:$0xf]
  %v250 = vld [vmem:[%s1 + $0x380] sm:$0xf]
  %v251 = vld [vmem:[%s1 + $0x384] sm:$0xf]
  %v252 = vld [vmem:[%s1 + $0x388] sm:$0xf]
  %v253 = vld [vmem:[%s1 + $0x38c] sm:$0xf]
  %v254 = vld [vmem:[%s1 + $0x390] sm:$0xf]
  %v255 = vld [vmem:[%s1 + $0x394] sm:$0xf]
  %v256 = vld [vmem:[%s1 + $0x398] sm:$0xf]
  %v257 = vld [vmem:[%s1 + $0x39c] sm:$0xf]
  %v258 = vld [vmem:[%s1 + $0x3a0] sm:$0xf]
  %v259 = vld [vmem:[%s1 + $0x3a4] sm:$0xf]
  %v260 = vld [vmem:[%s1 + $0x3a8] sm:$0xf]
  %v261 = vld [vmem:[%s1 + $0x3ac] sm:$0xf]
  %v262 = vld [vmem:[%s1 + $0x3b0] sm:$0xf]
  %v263 = vld [vmem:[%s1 + $0x3b4] sm:$0xf]
  %v264 = vld [vmem:[%s1 + $0x3b8] sm:$0xf]
  %v265 = vld [vmem:[%s1 + $0x3bc] sm:$0xf]
  %v266 = vld [vmem:[%s1 + $0x3c0] sm:$0xf]
  %v267 = vld [vmem:[%s1 + $0x3c4] sm:$0xf]
  %v268 = vld [vmem:[%s1 + $0x3c8] sm:$0xf]
  %v269 = vld [vmem:[%s1 + $0x3cc] sm:$0xf]
  %v270 = vld [vmem:[%s1 + $0x3d0] sm:$0xf]
  %v271 = vld [vmem:[%s1 + $0x3d4] sm:$0xf]
  %v272 = vld [vmem:[%s1 + $0x3d8] sm:$0xf]
  %v273 = vld [vmem:[%s1 + $0x3dc] sm:$0xf]
  %v274 = vld [vmem:[%s1 + $0x3e0] sm:$0xf]
  %v275 = vld [vmem:[%s1 + $0x3e4] sm:$0xf]
  %v276 = vld [vmem:[%s1 + $0x3e8] sm:$0xf]
  %v277 = vld [vmem:[%s1 + $0x3ec] sm:$0xf]
  %v278 = vld [vmem:[%s1 + $0x3f0] sm:$0xf]
  %v279 = vld [vmem:[%s1 + $0x3f4] sm:$0xf]
  %v280 = vld [vmem:[%s1 + $0x3f8] sm:$0xf]
  %v281 = vld [vmem:[%s1 + $0x3fc] sm:$0xf]
  %v282 = vld [vmem:[%s1 + $0x400] sm:$0xf]
  %v283 = vld [vmem:[%s1 + $0x404] sm:$0xf]
  %v284 = vld [vmem:[%s1 + $0x408] sm:$0xf]
  %v285 = vld [vmem:[%s1 + $0x40c] sm:$0xf]
  %v286 = vld [vmem:[%s1 + $0x410] sm:$0xf]
  %v287 = vld [vmem:[%s1 + $0x414] sm:$0xf]
  %v288 = vld [vmem:[%s1 + $0x418] sm:$0xf]
  %v289 = vld [vmem:[%s1 + $0x41c] sm:$0xf]
  %v290 = vld [vmem:[%s1 + $0x420] sm:$0xf]
  %v291 = vld [vmem:[%s1 + $0x424] sm:$0xf]
  %v292 = vld [vmem:[%s1 + $0x428] sm:$0xf]
  %v293 = vld [vmem:[%s1 + $0x42c] sm:$0xf]
  %v294 = vld [vmem:[%s1 + $0x430] sm:$0xf]
  %v295 = vld [vmem:[%s1 + $0x434] sm:$0xf]
  %v296 = vld [vmem:[%s1 + $0x438] sm:$0xf]
  %v297 = vld [vmem:[%s1 + $0x43c] sm:$0xf]
  %v298 = vld [vmem:[%s1 + $0x440] sm:$0xf]
  %v299 = vld [vmem:[%s1 + $0x444] sm:$0xf]
  %v300 = vld [vmem:[%s1 + $0x448] sm:$0xf]
  %v301 = vld [vmem:[%s1 + $0x44c] sm:$0xf]
  %v302 = vld [vmem:[%s1 + $0x450] sm:$0xf]
  %v303 = vld [vmem:[%s1 + $0x454] sm:$0xf]
  %v304 = vld [vmem:[%s1 + $0x458] sm:$0xf]
  %v305 = vld [vmem:[%s1 + $0x45c] sm:$0xf]
  %v306 = vld [vmem:[%s1 + $0x460] sm:$0xf]
  %v307 = vld [vmem:[%s1 + $0x464] sm:$0xf]
  %v308 = vld [vmem:[%s1 + $0x468] sm:$0xf]
  %v309 = vld [vmem:[%s1 + $0x46c] sm:$0xf]
  %v310 = vld [vmem:[%s1 + $0x470] sm:$0xf]
  %v311 = vld [vmem:[%s1 + $0x474] sm:$0xf]
  %v312 = vld [vmem:[%s1 + $0x478] sm:$0xf]
  %v313 = vld [vmem:[%s1 + $0x47c] sm:$0xf]
  %v314 = vld [vmem:[%s1 + $0x480] sm:$0xf]
  %v315 = vld [vmem:[%s1 + $0x484] sm:$0xf]
  %v316 = vld [vmem:[%s1 + $0x488] sm:$0xf]
  %v317 = vld [vmem:[%s1 + $0x48c] sm:$0xf]
  %v318 = vld [vmem:[%s1 + $0x490] sm:$0xf]
  %v319 = vld [vmem:[%s1 + $0x494] sm:$0xf]
  %v320 = vld [vmem:[%s1 + $0x498] sm:$0xf]
  %v321 = vld [vmem:[%s1 + $0x49c] sm:$0xf]
  %v322 = vld [vmem:[%s1 + $0x4a0] sm:$0xf]
  %v323 = vld [vmem:[%s1 + $0x4a4] sm:$0xf]
  %v324 = vld [vmem:[%s1 + $0x4a8] sm:$0xf]
  %v325 = vld [vmem:[%s1 + $0x4ac] sm:$0xf]
  %v326 = vld [vmem:[%s1 + $0x4b0] sm:$0xf]
  %v327 = vld [vmem:[%s1 + $0x4b4] sm:$0xf]
  %v328 = vld [vmem:[%s1 + $0x4b8] sm:$0xf]
  %v329 = vld [vmem:[%s1 + $0x4bc] sm:$0xf]
  %v330 = vld [vmem:[%s1 + $0x4c0] sm:$0xf]
  %v331 = vld [vmem:[%s1 + $0x4c4] sm:$0xf]
  %v332 = vld [vmem:[%s1 + $0x4c8] sm:$0xf]
  %v333 = vld [vmem:[%s1 + $0x4cc] sm:$0xf]
  %v334 = vld [vmem:[%s1 + $0x4d0] sm:$0xf]
  %v335 = vld [vmem:[%s1 + $0x4d4] sm:$0xf]
  %v336 = vld [vmem:[%s1 + $0x4d8] sm:$0xf]
  %v337 = vld [vmem:[%s1 + $0x4dc] sm:$0xf]
  %v338 = vld [vmem:[%s1 + $0x4e0] sm:$0xf]
  %v339 = vld [vmem:[%s1 + $0x4e4] sm:$0xf]
  %v340 = vld [vmem:[%s1 + $0x4e8] sm:$0xf]
  %v341 = vld [vmem:[%s1 + $0x4ec] sm:$0xf]
  %v342 = vld [vmem:[%s1 + $0x4f0] sm:$0xf]
  %v343 = vld [vmem:[%s1 + $0x4f4] sm:$0xf]
  %v344 = vld [vmem:[%s1 + $0x4f8] sm:$0xf]
  %v345 = vld [vmem:[%s1 + $0x4fc] sm:$0xf]
  %v346 = vld [vmem:[%s1 + $0x500] sm:$0xf]
  %v347 = vld [vmem:[%s1 + $0x504] sm:$0xf]
  %v348 = vld [vmem:[%s1 + $0x508] sm:$0xf]
  %v349 = vld [vmem:[%s1 + $0x50c] sm:$0xf]
  %v350 = vld [vmem:[%s1 + $0x510] sm:$0xf]
  %v351 = vld [vmem:[%s1 + $0x514] sm:$0xf]
  %v352 = vld [vmem:[%s1 + $0x518] sm:$0xf]
  %v353 = vld [vmem:[%s1 + $0x51c] sm:$0xf]
  %v354 = vld [vmem:[%s1 + $0x520] sm:$0xf]
  %v355 = vld [vmem:[%s1 + $0x524] sm:$0xf]
  %v356 = vld [vmem:[%s1 + $0x528] sm:$0xf]
  %v357 = vld [vmem:[%s1 + $0x52c] sm:$0xf]
  %v358 = vld [vmem:[%s1 + $0x530] sm:$0xf]
  %v359 = vld [vmem:[%s1 + $0x534] sm:$0xf]
  %v360 = vld [vmem:[%s1 + $0x538] sm:$0xf]
  %v361 = vld [vmem:[%s1 + $0x53c] sm:$0xf]
  %v362 = vld [vmem:[%s1 + $0x540] sm:$0xf]
  %v363 = vld [vmem:[%s1 + $0x544] sm:$0xf]
  %v364 = vld [vmem:[%s1 + $0x548] sm:$0xf]
  %v365 = vld [vmem:[%s1 + $0x54c] sm:$0xf]
  %v366 = vld [vmem:[%s1 + $0x550] sm:$0xf]
  %v367 = vld [vmem:[%s1 + $0x554] sm:$0xf]
  %v368 = vld [vmem:[%s1 + $0x558] sm:$0xf]
  %v369 = vld [vmem:[%s1 + $0x55c] sm:$0xf]
  %v370 = vld [vmem:[%s1 + $0x560] sm:$0xf]
  %v371 = vld [vmem:[%s1 + $0x564] sm:$0xf]
  %v372 = vld [vmem:[%s1 + $0x568] sm:$0xf]
  %v373 = vld [vmem:[%s1 + $0x56c] sm:$0xf]
  %v374 = vld [vmem:[%s1 + $0x570] sm:$0xf]
  %v375 = vld [vmem:[%s1 + $0x574] sm:$0xf]
  %v376 = vld [vmem:[%s1 + $0x578] sm:$0xf]
  %v377 = vld [vmem:[%s1 + $0x57c] sm:$0xf]
  %v378 = vld [vmem:[%s1 + $0x580] sm:$0xf]
  %v379 = vld [vmem:[%s1 + $0x584] sm:$0xf]
  %v380 = vld [vmem:[%s1 + $0x588] sm:$0xf]
  %v381 = vld [vmem:[%s1 + $0x58c] sm:$0xf]
  %v382 = vld [vmem:[%s1 + $0x590] sm:$0xf]
  %v383 = vld [vmem:[%s1 + $0x594] sm:$0xf]
  %v384 = vld [vmem:[%s1 + $0x598] sm:$0xf]
  %v385 = vld [vmem:[%s1 + $0x59c] sm:$0xf]
  %v386 = vld [vmem:[%s1 + $0x5a0] sm:$0xf]
  %v387 = vld [vmem:[%s1 + $0x5a4] sm:$0xf]
  %v388 = vld [vmem:[%s1 + $0x5a8] sm:$0xf]
  %v389 = vld [vmem:[%s1 + $0x5ac] sm:$0xf]
  %v390 = vld [vmem:[%s1 + $0x5b0] sm:$0xf]
  %v391 = vld [vmem:[%s1 + $0x5b4] sm:$0xf]
  %v392 = vld [vmem:[%s1 + $0x5b8] sm:$0xf]
  %v393 = vld [vmem:[%s1 + $0x5bc] sm:$0xf]
  %v394 = vld [vmem:[%s1 + $0x5c0] sm:$0xf]
  %v395 = vld [vmem:[%s1 + $0x5c4] sm:$0xf]
  %v396 = vld [vmem:[%s1 + $0x5c8] sm:$0xf]
  %v397 = vld [vmem:[%s1 + $0x5cc] sm:$0xf]
  %v398 = vld [vmem:[%s1 + $0x5d0] sm:$0xf]
  %v399 = vld [vmem:[%s1 + $0x5d4] sm:$0xf]
  %v400 = vld [vmem:[%s1 + $0x5d8] sm:$0xf]
  %v401 = vld [vmem:[%s1 + $0x5dc] sm:$0xf]
  %v402 = vld [vmem:[%s1 + $0x5e0] sm:$0xf]
  %v403 = vld [vmem:[%s1 + $0x5e4] sm:$0xf]
  %v404 = vld [vmem:[%s1 + $0x5e8] sm:$0xf]
  %v405 = vld [vmem:[%s1 + $0x5ec] sm:$0xf]
  %v406 = vld [vmem:[%s1 + $0x5f0] sm:$0xf]
  %v407 = vld [vmem:[%s1 + $0x5f4] sm:$0xf]
  %v408 = vld [vmem:[%s1 + $0x5f8] sm:$0xf]
  %v409 = vld [vmem:[%s1 + $0x5fc] sm:$0xf]
  %v410 = vld [vmem:[%s1 + $0x600] sm:$0xf]
  %v411 = vld [vmem:[%s1 + $0x604] sm:$0xf]
  %v412 = vld [vmem:[%s1 + $0x608] sm:$0xf]
  %v413 = vld [vmem:[%s1 + $0x60c] sm:$0xf]
  %v414 = vld [vmem:[%s1 + $0x610] sm:$0xf]
  %v415 = vld [vmem:[%s1 + $0x614] sm:$0xf]
  %v416 = vld [vmem:[%s1 + $0x618] sm:$0xf]
  %v417 = vld [vmem:[%s1 + $0x61c] sm:$0xf]
  %v418 = vld [vmem:[%s1 + $0x620] sm:$0xf]
  %v419 = vld [vmem:[%s1 + $0x624] sm:$0xf]
  %v420 = vld [vmem:[%s1 + $0x628] sm:$0xf]
  %v421 = vld [vmem:[%s1 + $0x62c] sm:$0xf]
  %v422 = vld [vmem:[%s1 + $0x630] sm:$0xf]
  %v423 = vld [vmem:[%s1 + $0x634] sm:$0xf]
  %v424 = vld [vmem:[%s1 + $0x638] sm:$0xf]
  %v425 = vld [vmem:[%s1 + $0x63c] sm:$0xf]
  %v426 = vld [vmem:[%s1 + $0x640] sm:$0xf]
  %v427 = vld [vmem:[%s1 + $0x644] sm:$0xf]
  %v428 = vld [vmem:[%s1 + $0x648] sm:$0xf]
  %v429 = vld [vmem:[%s1 + $0x64c] sm:$0xf]
  %v430 = vld [vmem:[%s1 + $0x650] sm:$0xf]
  %v431 = vld [vmem:[%s1 + $0x654] sm:$0xf]
  %v432 = vld [vmem:[%s1 + $0x658] sm:$0xf]
  %v433 = vld [vmem:[%s1 + $0x65c] sm:$0xf]
  %v434 = vld [vmem:[%s1 + $0x660] sm:$0xf]
  %v435 = vld [vmem:[%s1 + $0x664] sm:$0xf]
  %v436 = vld [vmem:[%s1 + $0x668] sm:$0xf]
  %v437 = vld [vmem:[%s1 + $0x66c] sm:$0xf]
  %v438 = vld [vmem:[%s1 + $0x670] sm:$0xf]
  %v439 = vld [vmem:[%s1 + $0x674] sm:$0xf]
  %v440 = vld [vmem:[%s1 + $0x678] sm:$0xf]
  %v441 = vld [vmem:[%s1 + $0x67c] sm:$0xf]
  %v442 = vld [vmem:[%s1 + $0x680] sm:$0xf]
  %v443 = vld [vmem:[%s1 + $0x684] sm:$0xf]
  %v444 = vld [vmem:[%s1 + $0x688] sm:$0xf]
  %v445 = vld [vmem:[%s1 + $0x68c] sm:$0xf]
  %v446 = vld [vmem:[%s1 + $0x690] sm:$0xf]
  %v447 = vld [vmem:[%s1 + $0x694] sm:$0xf]
  %v448 = vld [vmem:[%s1 + $0x698] sm:$0xf]
  %v449 = vld [vmem:[%s1 + $0x69c] sm:$0xf]
  %v450 = vld [vmem:[%s1 + $0x6a0] sm:$0xf]
  %v451 = vld [vmem:[%s1 + $0x6a4] sm:$0xf]
  %v452 = vld [vmem:[%s1 + $0x6a8] sm:$0xf]
  %v453 = vld [vmem:[%s1 + $0x6ac] sm:$0xf]
  %v454 = vld [vmem:[%s1 + $0x6b0] sm:$0xf]
  %v455 = vld [vmem:[%s1 + $0x6b4] sm:$0xf]
  %v456 = vld [vmem:[%s1 + $0x6b8] sm:$0xf]
  %v457 = vld [vmem:[%s1 + $0x6bc] sm:$0xf]
  %v458 = vld [vmem:[%s1 + $0x6c0] sm:$0xf]
  %v459 = vld [vmem:[%s1 + $0x6c4] sm:$0xf]
  %v460 = vld [vmem:[%s1 + $0x6c8] sm:$0xf]
  %v461 = vld [vmem:[%s1 + $0x6cc] sm:$0xf]
  %v462 = vld [vmem:[%s1 + $0x6d0] sm:$0xf]
  %v463 = vld [vmem:[%s1 + $0x6d4] sm:$0xf]
  %v464 = vld [vmem:[%s1 + $0x6d8] sm:$0xf]
  %v465 = vld [vmem:[%s1 + $0x6dc] sm:$0xf]
  %v466 = vld [vmem:[%s1 + $0x6e0] sm:$0xf]
  %v467 = vld [vmem:[%s1 + $0x6e4] sm:$0xf]
  %v468 = vld [vmem:[%s1 + $0x6e8] sm:$0xf]
  %v469 = vld [vmem:[%s1 + $0x6ec] sm:$0xf]
  %v470 = vld [vmem:[%s1 + $0x6f0] sm:$0xf]
  %v471 = vld [vmem:[%s1 + $0x6f4] sm:$0xf]
  %v472 = vld [vmem:[%s1 + $0x6f8] sm:$0xf]
  %v473 = vld [vmem:[%s1 + $0x6fc] sm:$0xf]
  %v474 = vld [vmem:[%s1 + $0x700] sm:$0xf]
  %v475 = vld [vmem:[%s1 + $0x704] sm:$0xf]
  %v476 = vld [vmem:[%s1 + $0x708] sm:$0xf]
  %v477 = vld [vmem:[%s1 + $0x70c] sm:$0xf]
  %v478 = vld [vmem:[%s1 + $0x710] sm:$0xf]
  %v479 = vld [vmem:[%s1 + $0x714] sm:$0xf]
  %v480 = vld [vmem:[%s1 + $0x718] sm:$0xf]
  %v481 = vld [vmem:[%s1 + $0x71c] sm:$0xf]
  %v482 = vld [vmem:[%s1 + $0x720] sm:$0xf]
  %v483 = vld [vmem:[%s1 + $0x724] sm:$0xf]
  %v484 = vld [vmem:[%s1 + $0x728] sm:$0xf]
  %v485 = vld [vmem:[%s1 + $0x72c] sm:$0xf]
  %v486 = vld [vmem:[%s1 + $0x730] sm:$0xf]
  %v487 = vld [vmem:[%s1 + $0x734] sm:$0xf]
  %v488 = vld [vmem:[%s1 + $0x738] sm:$0xf]
  %v489 = vld [vmem:[%s1 + $0x73c] sm:$0xf]
  %v490 = vld [vmem:[%s1 + $0x740] sm:$0xf]
  %v491 = vld [vmem:[%s1 + $0x744] sm:$0xf]
  %v492 = vld [vmem:[%s1 + $0x748] sm:$0xf]
  %v493 = vld [vmem:[%s1 + $0x74c] sm:$0xf]
  %v494 = vld [vmem:[%s1 + $0x750] sm:$0xf]
  %v495 = vld [vmem:[%s1 + $0x754] sm:$0xf]
  %v496 = vld [vmem:[%s1 + $0x758] sm:$0xf]
  %v497 = vld [vmem:[%s1 + $0x75c] sm:$0xf]
  %v498 = vld [vmem:[%s1 + $0x760] sm:$0xf]
  %v499 = vld [vmem:[%s1 + $0x764] sm:$0xf]
  %v500 = vld [vmem:[%s1 + $0x768] sm:$0xf]
  %v501 = vld [vmem:[%s1 + $0x76c] sm:$0xf]
  %v502 = vld [vmem:[%s1 + $0x770] sm:$0xf]
  %v503 = vld [vmem:[%s1 + $0x774] sm:$0xf]
  %v504 = vld [vmem:[%s1 + $0x778] sm:$0xf]
  %v505 = vld [vmem:[%s1 + $0x77c] sm:$0xf]
  %v506 = vld [vmem:[%s1 + $0x780] sm:$0xf]
  %v507 = vld [vmem:[%s1 + $0x784] sm:$0xf]
  %v508 = vld [vmem:[%s1 + $0x788] sm:$0xf]
  %v509 = vld [vmem:[%s1 + $0x78c] sm:$0xf]
  %v510 = vld [vmem:[%s1 + $0x790] sm:$0xf]
  %v511 = vld [vmem:[%s1 + $0x794] sm:$0xf]
  %v512 = vld [vmem:[%s1 + $0x798] sm:$0xf]
  %v513 = vld [vmem:[%s1 + $0x79c] sm:$0xf]
  %v514 = vld [vmem:[%s1 + $0x7a0] sm:$0xf]
  %v515 = vld [vmem:[%s1 + $0x7a4] sm:$0xf]
  %v516 = vld [vmem:[%s1 + $0x7a8] sm:$0xf]
  %v517 = vld [vmem:[%s1 + $0x7ac] sm:$0xf]
  %v518 = vld [vmem:[%s1 + $0x7b0] sm:$0xf]
  %v519 = vld [vmem:[%s1 + $0x7b4] sm:$0xf]
  %v520 = vld [vmem:[%s1 + $0x7b8] sm:$0xf]
  %v521 = vld [vmem:[%s1 + $0x7bc] sm:$0xf]
  %v522 = vld [vmem:[%s1 + $0x7c0] sm:$0xf]
  %v523 = vld [vmem:[%s1 + $0x7c4] sm:$0xf]
  %v524 = vld [vmem:[%s1 + $0x7c8] sm:$0xf]
  %v525 = vld [vmem:[%s1 + $0x7cc] sm:$0xf]
  %v526 = vld [vmem:[%s1 + $0x7d0] sm:$0xf]
  %v527 = vld [vmem:[%s1 + $0x7d4] sm:$0xf]
  %v528 = vld [vmem:[%s1 + $0x7d8] sm:$0xf]
  %v529 = vld [vmem:[%s1 + $0x7dc] sm:$0xf]
  %v530 = vld [vmem:[%s1 + $0x7e0] sm:$0xf]
  %v531 = vld [vmem:[%s1 + $0x7e4] sm:$0xf]
  %v532 = vld [vmem:[%s1 + $0x7e8] sm:$0xf]
  %v533 = vld [vmem:[%s1 + $0x7ec] sm:$0xf]
  %v534 = vld [vmem:[%s1 + $0x7f0] sm:$0xf]
  %v535 = vld [vmem:[%s1 + $0x7f4] sm:$0xf]
  %v536 = vld [vmem:[%s1 + $0x7f8] sm:$0xf]
  %v537 = vld [vmem:[%s1 + $0x7fc] sm:$0xf]
  %v538 = vld [vmem:[%s1 + $0x800] sm:$0xf]
  %v539 = vld [vmem:[%s1 + $0x804] sm:$0xf]
  %v540 = vld [vmem:[%s1 + $0x808] sm:$0xf]
  %v541 = vld [vmem:[%s1 + $0x80c] sm:$0xf]
  %v542 = vld [vmem:[%s1 + $0x810] sm:$0xf]
  %v543 = vld [vmem:[%s1 + $0x814] sm:$0xf]
  %v544 = vld [vmem:[%s1 + $0x818] sm:$0xf]
  %v545 = vld [vmem:[%s1 + $0x81c] sm:$0xf]
  %v546 = vld [vmem:[%s1 + $0x820] sm:$0xf]
  %v547 = vld [vmem:[%s1 + $0x824] sm:$0xf]
  %v548 = vld [vmem:[%s1 + $0x828] sm:$0xf]
  %v549 = vld [vmem:[%s1 + $0x82c] sm:$0xf]
  %v550 = vld [vmem:[%s1 + $0x830] sm:$0xf]
  %v551 = vld [vmem:[%s1 + $0x834] sm:$0xf]
  %v552 = vld [vmem:[%s1 + $0x838] sm:$0xf]
  %v553 = vld [vmem:[%s1 + $0x83c] sm:$0xf]
  %v554 = vld [vmem:[%s1 + $0x840] sm:$0xf]
  %v555 = vld [vmem:[%s1 + $0x844] sm:$0xf]
  %v556 = vld [vmem:[%s1 + $0x848] sm:$0xf]
  %v557 = vld [vmem:[%s1 + $0x84c] sm:$0xf]
  %v558 = vld [vmem:[%s1 + $0x850] sm:$0xf]
  %v559 = vld [vmem:[%s1 + $0x854] sm:$0xf]
  %v560 = vld [vmem:[%s1 + $0x858] sm:$0xf]
  %v561 = vld [vmem:[%s1 + $0x85c] sm:$0xf]
  %v562 = vld [vmem:[%s1 + $0x860] sm:$0xf]
  %v563 = vld [vmem:[%s1 + $0x864] sm:$0xf]
  %v564 = vld [vmem:[%s1 + $0x868] sm:$0xf]
  %v565 = vld [vmem:[%s1 + $0x86c] sm:$0xf]
  %v566 = vld [vmem:[%s1 + $0x870] sm:$0xf]
  %v567 = vld [vmem:[%s1 + $0x874] sm:$0xf]
  %v568 = vld [vmem:[%s1 + $0x878] sm:$0xf]
  %v569 = vld [vmem:[%s1 + $0x87c] sm:$0xf]
  %v570 = vld [vmem:[%s1 + $0x880] sm:$0xf]
  %v571 = vld [vmem:[%s1 + $0x884] sm:$0xf]
  %v572 = vld [vmem:[%s1 + $0x888] sm:$0xf]
  %v573 = vld [vmem:[%s1 + $0x88c] sm:$0xf]
  %v574 = vld [vmem:[%s1 + $0x890] sm:$0xf]
  %v575 = vld [vmem:[%s1 + $0x894] sm:$0xf]
  %v576 = vld [vmem:[%s1 + $0x898] sm:$0xf]
  %v577 = vld [vmem:[%s1 + $0x89c] sm:$0xf]
  %v578 = vld [vmem:[%s1 + $0x8a0] sm:$0xf]
  %v579 = vld [vmem:[%s1 + $0x8a4] sm:$0xf]
  %v580 = vld [vmem:[%s1 + $0x8a8] sm:$0xf]
  %v581 = vld [vmem:[%s1 + $0x8ac] sm:$0xf]
  %v582 = vld [vmem:[%s1 + $0x8b0] sm:$0xf]
  %v583 = vld [vmem:[%s1 + $0x8b4] sm:$0xf]
  %v584 = vld [vmem:[%s1 + $0x8b8] sm:$0xf]
  %v585 = vld [vmem:[%s1 + $0x8bc] sm:$0xf]
  %v586 = vld [vmem:[%s1 + $0x8c0] sm:$0xf]
  %v587 = vld [vmem:[%s1 + $0x8c4] sm:$0xf]
  %v588 = vld [vmem:[%s1 + $0x8c8] sm:$0xf]
  %v589 = vld [vmem:[%s1 + $0x8cc] sm:$0xf]
  %v590 = vld [vmem:[%s1 + $0x8d0] sm:$0xf]
  %v591 = vld [vmem:[%s1 + $0x8d4] sm:$0xf]
  %v592 = vld [vmem:[%s1 + $0x8d8] sm:$0xf]
  %v593 = vld [vmem:[%s1 + $0x8dc] sm:$0xf]
  %v594 = vld [vmem:[%s1 + $0x8e0] sm:$0xf]
  %v595 = vld [vmem:[%s1 + $0x8e4] sm:$0xf]
  %v596 = vld [vmem:[%s1 + $0x8e8] sm:$0xf]
  %v597 = vld [vmem:[%s1 + $0x8ec] sm:$0xf]
  %v598 = vld [vmem:[%s1 + $0x8f0] sm:$0xf]
  %v599 = vld [vmem:[%s1 + $0x8f4] sm:$0xf]
  %v600 = vld [vmem:[%s1 + $0x8f8] sm:$0xf]
  %v601 = vld [vmem:[%s1 + $0x8fc] sm:$0xf]
  %v602 = vld [vmem:[%s1 + $0x900] sm:$0xf]
  %v603 = vld [vmem:[%s1 + $0x904] sm:$0xf]
  %v604 = vld [vmem:[%s1 + $0x908] sm:$0xf]
  %v605 = vld [vmem:[%s1 + $0x90c] sm:$0xf]
  %v606 = vld [vmem:[%s1 + $0x910] sm:$0xf]
  %v607 = vld [vmem:[%s1 + $0x914] sm:$0xf]
  %v608 = vld [vmem:[%s1 + $0x918] sm:$0xf]
  %v609 = vld [vmem:[%s1 + $0x91c] sm:$0xf]
  %v610 = vld [vmem:[%s1 + $0x920] sm:$0xf]
  %v611 = vld [vmem:[%s1 + $0x924] sm:$0xf]
  %v612 = vld [vmem:[%s1 + $0x928] sm:$0xf]
  %v613 = vld [vmem:[%s1 + $0x92c] sm:$0xf]
  %v614 = vld [vmem:[%s1 + $0x930] sm:$0xf]
  %v615 = vld [vmem:[%s1 + $0x934] sm:$0xf]
  %v616 = vld [vmem:[%s1 + $0x938] sm:$0xf]
  %v617 = vld [vmem:[%s1 + $0x93c] sm:$0xf]
  %v618 = vld [vmem:[%s1 + $0x940] sm:$0xf]
  %v619 = vld [vmem:[%s1 + $0x944] sm:$0xf]
  %v620 = vld [vmem:[%s1 + $0x948] sm:$0xf]
  %v621 = vld [vmem:[%s1 + $0x94c] sm:$0xf]
  %v622 = vld [vmem:[%s1 + $0x950] sm:$0xf]
  %v623 = vld [vmem:[%s1 + $0x954] sm:$0xf]
  %v624 = vld [vmem:[%s1 + $0x958] sm:$0xf]
  %v625 = vld [vmem:[%s1 + $0x95c] sm:$0xf]
  %v626 = vld [vmem:[%s1 + $0x960] sm:$0xf]
  %v627 = vld [vmem:[%s1 + $0x964] sm:$0xf]
  %v628 = vld [vmem:[%s1 + $0x968] sm:$0xf]
  %v629 = vld [vmem:[%s1 + $0x96c] sm:$0xf]
  %v630 = vld [vmem:[%s1 + $0x970] sm:$0xf]
  %v631 = vld [vmem:[%s1 + $0x974] sm:$0xf]
  %v632 = vld [vmem:[%s1 + $0x978] sm:$0xf]
  %v633 = vld [vmem:[%s1 + $0x97c] sm:$0xf]
  %v634 = vld [vmem:[%s1 + $0x980] sm:$0xf]
  %v635 = vld [vmem:[%s1 + $0x984] sm:$0xf]
  %v636 = vld [vmem:[%s1 + $0x988] sm:$0xf]
  %v637 = vld [vmem:[%s1 + $0x98c] sm:$0xf]
  %v638 = vld [vmem:[%s1 + $0x990] sm:$0xf]
  %v639 = vld [vmem:[%s1 + $0x994] sm:$0xf]
  %v640 = vld [vmem:[%s1 + $0x998] sm:$0xf]
  %v641 = vld [vmem:[%s1 + $0x99c] sm:$0xf]
  %v642 = vld [vmem:[%s1 + $0x9a0] sm:$0xf]
  %v643 = vld [vmem:[%s1 + $0x9a4] sm:$0xf]
  %v644 = vld [vmem:[%s1 + $0x9a8] sm:$0xf]
  %v645 = vld [vmem:[%s1 + $0x9ac] sm:$0xf]
  %v646 = vld [vmem:[%s1 + $0x9b0] sm:$0xf]
  %v647 = vld [vmem:[%s1 + $0x9b4] sm:$0xf]
  %v648 = vld [vmem:[%s1 + $0x9b8] sm:$0xf]
  %v649 = vld [vmem:[%s1 + $0x9bc] sm:$0xf]
  %v650 = vld [vmem:[%s1 + $0x9c0] sm:$0xf]
  %v651 = vld [vmem:[%s1 + $0x9c4] sm:$0xf]
  %v652 = vld [vmem:[%s1 + $0x9c8] sm:$0xf]
  %v653 = vld [vmem:[%s1 + $0x9cc] sm:$0xf]
  %v654 = vld [vmem:[%s1 + $0x9d0] sm:$0xf]
  %v655 = vld [vmem:[%s1 + $0x9d4] sm:$0xf]
  %v656 = vld [vmem:[%s1 + $0x9d8] sm:$0xf]
  %v657 = vld [vmem:[%s1 + $0x9dc] sm:$0xf]
  %v658 = vld [vmem:[%s1 + $0x9e0] sm:$0xf]
  %v659 = vld [vmem:[%s1 + $0x9e4] sm:$0xf]
  %v660 = vld [vmem:[%s1 + $0x9e8] sm:$0xf]
  %v661 = vld [vmem:[%s1 + $0x9ec] sm:$0xf]
  %v662 = vld [vmem:[%s1 + $0x9f0] sm:$0xf]
  %v663 = vld [vmem:[%s1 + $0x9f4] sm:$0xf]
  %v664 = vld [vmem:[%s1 + $0x9f8] sm:$0xf]
  %v665 = vld [vmem:[%s1 + $0x9fc] sm:$0xf]
  %v666 = vld [vmem:[%s1 + $0xa00] sm:$0xf]
  %v667 = vld [vmem:[%s1 + $0xa04] sm:$0xf]
  %v668 = vld [vmem:[%s1 + $0xa08] sm:$0xf]
  %v669 = vld [vmem:[%s1 + $0xa0c] sm:$0xf]
  %v670 = vld [vmem:[%s1 + $0xa10] sm:$0xf]
  %v671 = vld [vmem:[%s1 + $0xa14] sm:$0xf]
  %v672 = vld [vmem:[%s1 + $0xa18] sm:$0xf]
  %v673 = vld [vmem:[%s1 + $0xa1c] sm:$0xf]
  %v674 = vld [vmem:[%s1 + $0xa20] sm:$0xf]
  %v675 = vld [vmem:[%s1 + $0xa24] sm:$0xf]
  %v676 = vld [vmem:[%s1 + $0xa28] sm:$0xf]
  %v677 = vld [vmem:[%s1 + $0xa2c] sm:$0xf]
  %v678 = vld [vmem:[%s1 + $0xa30] sm:$0xf]
  %v679 = vld [vmem:[%s1 + $0xa34] sm:$0xf]
  %v680 = vld [vmem:[%s1 + $0xa38] sm:$0xf]
  %v681 = vld [vmem:[%s1 + $0xa3c] sm:$0xf]
  %v682 = vld [vmem:[%s1 + $0xa40] sm:$0xf]
  %v683 = vld [vmem:[%s1 + $0xa44] sm:$0xf]
  %v684 = vld [vmem:[%s1 + $0xa48] sm:$0xf]
  %v685 = vld [vmem:[%s1 + $0xa4c] sm:$0xf]
  %v686 = vld [vmem:[%s1 + $0xa50] sm:$0xf]
  %v687 = vld [vmem:[%s1 + $0xa54] sm:$0xf]
  %v688 = vld [vmem:[%s1 + $0xa58] sm:$0xf]
  %v689 = vld [vmem:[%s1 + $0xa5c] sm:$0xf]
  %v690 = vld [vmem:[%s1 + $0xa60] sm:$0xf]
  %v691 = vld [vmem:[%s1 + $0xa64] sm:$0xf]
  %v692 = vld [vmem:[%s1 + $0xa68] sm:$0xf]
  %v693 = vld [vmem:[%s1 + $0xa6c] sm:$0xf]
  %v694 = vld [vmem:[%s1 + $0xa70] sm:$0xf]
  %v695 = vld [vmem:[%s1 + $0xa74] sm:$0xf]
  %v696 = vld [vmem:[%s1 + $0xa78] sm:$0xf]
  %v697 = vld [vmem:[%s1 + $0xa7c] sm:$0xf]
  %v698 = vld [vmem:[%s1 + $0xa80] sm:$0xf]
  %v699 = vld [vmem:[%s1 + $0xa84] sm:$0xf]
  %v700 = vld [vmem:[%s1 + $0xa88] sm:$0xf]
  %v701 = vld [vmem:[%s1 + $0xa8c] sm:$0xf]
  %v702 = vld [vmem:[%s1 + $0xa90] sm:$0xf]
  %v703 = vld [vmem:[%s1 + $0xa94] sm:$0xf]
  %v704 = vld [vmem:[%s1 + $0xa98] sm:$0xf]
  %v705 = vld [vmem:[%s1 + $0xa9c] sm:$0xf]
  %v706 = vld [vmem:[%s1 + $0xaa0] sm:$0xf]
  %v707 = vld [vmem:[%s1 + $0xaa4] sm:$0xf]
  %v708 = vld [vmem:[%s1 + $0xaa8] sm:$0xf]
  %v709 = vld [vmem:[%s1 + $0xaac] sm:$0xf]
  %v710 = vld [vmem:[%s1 + $0xab0] sm:$0xf]
  %v711 = vld [vmem:[%s1 + $0xab4] sm:$0xf]
  %v712 = vld [vmem:[%s1 + $0xab8] sm:$0xf]
  %v713 = vld [vmem:[%s1 + $0xabc] sm:$0xf]
  %v714 = vld [vmem:[%s1 + $0xac0] sm:$0xf]
  %v715 = vld [vmem:[%s1 + $0xac4] sm:$0xf]
  %v716 = vld [vmem:[%s1 + $0xac8] sm:$0xf]
  %v717 = vld [vmem:[%s1 + $0xacc] sm:$0xf]
  %v718 = vld [vmem:[%s1 + $0xad0] sm:$0xf]
  %v719 = vld [vmem:[%s1 + $0xad4] sm:$0xf]
  %v720 = vld [vmem:[%s1 + $0xad8] sm:$0xf]
  %v721 = vld [vmem:[%s1 + $0xadc] sm:$0xf]
  %v722 = vld [vmem:[%s1 + $0xae0] sm:$0xf]
  %v723 = vld [vmem:[%s1 + $0xae4] sm:$0xf]
  %v724 = vld [vmem:[%s1 + $0xae8] sm:$0xf]
  %v725 = vld [vmem:[%s1 + $0xaec] sm:$0xf]
  %v726 = vld [vmem:[%s1 + $0xaf0] sm:$0xf]
  %v727 = vld [vmem:[%s1 + $0xaf4] sm:$0xf]
  %v728 = vld [vmem:[%s1 + $0xaf8] sm:$0xf]
  %v729 = vld [vmem:[%s1 + $0xafc] sm:$0xf]
  %v730 = vld [vmem:[%s1 + $0xb00] sm:$0xf]
  %v731 = vld [vmem:[%s1 + $0xb04] sm:$0xf]
  %v732 = vld [vmem:[%s1 + $0xb08] sm:$0xf]
  %v733 = vld [vmem:[%s1 + $0xb0c] sm:$0xf]
  %v734 = vld [vmem:[%s1 + $0xb10] sm:$0xf]
  %v735 = vld [vmem:[%s1 + $0xb14] sm:$0xf]
  %v736 = vld [vmem:[%s1 + $0xb18] sm:$0xf]
  %v737 = vld [vmem:[%s1 + $0xb1c] sm:$0xf]
  %v738 = vld [vmem:[%s1 + $0xb20] sm:$0xf]
  %v739 = vld [vmem:[%s1 + $0xb24] sm:$0xf]
  %v740 = vld [vmem:[%s1 + $0xb28] sm:$0xf]
  %v741 = vld [vmem:[%s1 + $0xb2c] sm:$0xf]
  %v742 = vld [vmem:[%s1 + $0xb30] sm:$0xf]
  %v743 = vld [vmem:[%s1 + $0xb34] sm:$0xf]
  %v744 = vld [vmem:[%s1 + $0xb38] sm:$0xf]
  %v745 = vld [vmem:[%s1 + $0xb3c] sm:$0xf]
  %v746 = vld [vmem:[%s1 + $0xb40] sm:$0xf]
  %v747 = vld [vmem:[%s1 + $0xb44] sm:$0xf]
  %v748 = vld [vmem:[%s1 + $0xb48] sm:$0xf]
  %v749 = vld [vmem:[%s1 + $0xb4c] sm:$0xf]
  %v750 = vld [vmem:[%s1 + $0xb50] sm:$0xf]
  %v751 = vld [vmem:[%s1 + $0xb54] sm:$0xf]
  %v752 = vld [vmem:[%s1 + $0xb58] sm:$0xf]
  %v753 = vld [vmem:[%s1 + $0xb5c] sm:$0xf]
  %v754 = vld [vmem:[%s1 + $0xb60] sm:$0xf]
  %v755 = vld [vmem:[%s1 + $0xb64] sm:$0xf]
  %v756 = vld [vmem:[%s1 + $0xb68] sm:$0xf]
  %v757 = vld [vmem:[%s1 + $0xb6c] sm:$0xf]
  %v758 = vld [vmem:[%s1 + $0xb70] sm:$0xf]
  %v759 = vld [vmem:[%s1 + $0xb74] sm:$0xf]
  %v760 = vld [vmem:[%s1 + $0xb78] sm:$0xf]
  %v761 = vld [vmem:[%s1 + $0xb7c] sm:$0xf]
  %v762 = vld [vmem:[%s1 + $0xb80] sm:$0xf]
  %v763 = vld [vmem:[%s1 + $0xb84] sm:$0xf]
  %v764 = vld [vmem:[%s1 + $0xb88] sm:$0xf]
  %v765 = vld [vmem:[%s1 + $0xb8c] sm:$0xf]
  %v766 = vld [vmem:[%s1 + $0xb90] sm:$0xf]
  %v767 = vld [vmem:[%s1 + $0xb94] sm:$0xf]
  %v768 = vld [vmem:[%s1 + $0xb98] sm:$0xf]
  %v769 = vld [vmem:[%s1 + $0xb9c] sm:$0xf]
  %v770 = vld [vmem:[%s1 + $0xba0] sm:$0xf]
  %v771 = vld [vmem:[%s1 + $0xba4] sm:$0xf]
  %v772 = vld [vmem:[%s1 + $0xba8] sm:$0xf]
  %v773 = vld [vmem:[%s1 + $0xbac] sm:$0xf]
  %v774 = vld [vmem:[%s1 + $0xbb0] sm:$0xf]
  %v775 = vld [vmem:[%s1 + $0xbb4] sm:$0xf]
  %v776 = vld [vmem:[%s1 + $0xbb8] sm:$0xf]
  %v777 = vld [vmem:[%s1 + $0xbbc] sm:$0xf]
  %v778 = vld [vmem:[%s1 + $0xbc0] sm:$0xf]
  %v779 = vld [vmem:[%s1 + $0xbc4] sm:$0xf]
  %v780 = vld [vmem:[%s1 + $0xbc8] sm:$0xf]
  %v781 = vld [vmem:[%s1 + $0xbcc] sm:$0xf]
  %v782 = vld [vmem:[%s1 + $0xbd0] sm:$0xf]
  %v783 = vld [vmem:[%s1 + $0xbd4] sm:$0xf]
  %v784 = vld [vmem:[%s1 + $0xbd8] sm:$0xf]
  %v785 = vld [vmem:[%s1 + $0xbdc] sm:$0xf]
  %v786 = vld [vmem:[%s1 + $0xbe0] sm:$0xf]
  %v787 = vld [vmem:[%s1 + $0xbe4] sm:$0xf]
  %v788 = vld [vmem:[%s1 + $0xbe8] sm:$0xf]
  %v789 = vld [vmem:[%s1 + $0xbec] sm:$0xf]
  %v790 = vld [vmem:[%s1 + $0xbf0] sm:$0xf]
  %v791 = vld [vmem:[%s1 + $0xbf4] sm:$0xf]
  %v792 = vld [vmem:[%s1 + $0xbf8] sm:$0xf]
  %v793 = vld [vmem:[%s1 + $0xbfc] sm:$0xf]
  %v794 = vld [vmem:[%s1 + $0xc00] sm:$0xf]
  %v795 = vld [vmem:[%s1 + $0xc04] sm:$0xf]
  %v796 = vld [vmem:[%s1 + $0xc08] sm:$0xf]
  %v797 = vld [vmem:[%s1 + $0xc0c] sm:$0xf]
  %v798 = vld [vmem:[%s1 + $0xc10] sm:$0xf]
  %v799 = vld [vmem:[%s1 + $0xc14] sm:$0xf]
  %v800 = vld [vmem:[%s1 + $0xc18] sm:$0xf]
  %v801 = vld [vmem:[%s1 + $0xc1c] sm:$0xf]
  %v802 = vld [vmem:[%s1 + $0xc20] sm:$0xf]
  %v803 = vld [vmem:[%s1 + $0xc24] sm:$0xf]
  %v804 = vld [vmem:[%s1 + $0xc28] sm:$0xf]
  %v805 = vld [vmem:[%s1 + $0xc2c] sm:$0xf]
  %v806 = vld [vmem:[%s1 + $0xc30] sm:$0xf]
  %v807 = vld [vmem:[%s1 + $0xc34] sm:$0xf]
  %v808 = vld [vmem:[%s1 + $0xc38] sm:$0xf]
  %v809 = vld [vmem:[%s1 + $0xc3c] sm:$0xf]
  %v810 = vld [vmem:[%s1 + $0xc40] sm:$0xf]
  %v811 = vld [vmem:[%s1 + $0xc44] sm:$0xf]
  %v812 = vld [vmem:[%s1 + $0xc48] sm:$0xf]
  %v813 = vld [vmem:[%s1 + $0xc4c] sm:$0xf]
  %v814 = vld [vmem:[%s1 + $0xc50] sm:$0xf]
  %v815 = vld [vmem:[%s1 + $0xc54] sm:$0xf]
  %v816 = vld [vmem:[%s1 + $0xc58] sm:$0xf]
  %v817 = vld [vmem:[%s1 + $0xc5c] sm:$0xf]
  %v818 = vld [vmem:[%s1 + $0xc60] sm:$0xf]
  %v819 = vld [vmem:[%s1 + $0xc64] sm:$0xf]
  %v820 = vld [vmem:[%s1 + $0xc68] sm:$0xf]
  %v821 = vld [vmem:[%s1 + $0xc6c] sm:$0xf]
  %v822 = vld [vmem:[%s1 + $0xc70] sm:$0xf]
  %v823 = vld [vmem:[%s1 + $0xc74] sm:$0xf]
  %v824 = vld [vmem:[%s1 + $0xc78] sm:$0xf]
  %v825 = vld [vmem:[%s1 + $0xc7c] sm:$0xf]
  %v826 = vld [vmem:[%s1 + $0xc80] sm:$0xf]
  %v827 = vld [vmem:[%s1 + $0xc84] sm:$0xf]
  %v828 = vld [vmem:[%s1 + $0xc88] sm:$0xf]
  %v829 = vld [vmem:[%s1 + $0xc8c] sm:$0xf]
  %v830 = vld [vmem:[%s1 + $0xc90] sm:$0xf]
  %v831 = vld [vmem:[%s1 + $0xc94] sm:$0xf]
  %v832 = vld [vmem:[%s1 + $0xc98] sm:$0xf]
  %v833 = vld [vmem:[%s1 + $0xc9c] sm:$0xf]
  %v834 = vld [vmem:[%s1 + $0xca0] sm:$0xf]
  %v835 = vld [vmem:[%s1 + $0xca4] sm:$0xf]
  %v836 = vld [vmem:[%s1 + $0xca8] sm:$0xf]
  %v837 = vld [vmem:[%s1 + $0xcac] sm:$0xf]
  %v838 = vld [vmem:[%s1 + $0xcb0] sm:$0xf]
  %v839 = vld [vmem:[%s1 + $0xcb4] sm:$0xf]
  %v840 = vld [vmem:[%s1 + $0xcb8] sm:$0xf]
  %v841 = vld [vmem:[%s1 + $0xcbc] sm:$0xf]
  %v842 = vld [vmem:[%s1 + $0xcc0] sm:$0xf]
  %v843 = vld [vmem:[%s1 + $0xcc4] sm:$0xf]
  %v844 = vld [vmem:[%s1 + $0xcc8] sm:$0xf]
  %v845 = vld [vmem:[%s1 + $0xccc] sm:$0xf]
  %v846 = vld [vmem:[%s1 + $0xcd0] sm:$0xf]
  %v847 = vld [vmem:[%s1 + $0xcd4] sm:$0xf]
  %v848 = vld [vmem:[%s1 + $0xcd8] sm:$0xf]
  %v849 = vld [vmem:[%s1 + $0xcdc] sm:$0xf]
  %v850 = vld [vmem:[%s1 + $0xce0] sm:$0xf]
  %v851 = vld [vmem:[%s1 + $0xce4] sm:$0xf]
  %v852 = vld [vmem:[%s1 + $0xce8] sm:$0xf]
  %v853 = vld [vmem:[%s1 + $0xcec] sm:$0xf]
  %v854 = vld [vmem:[%s1 + $0xcf0] sm:$0xf]
  %v855 = vld [vmem:[%s1 + $0xcf4] sm:$0xf]
  %v856 = vld [vmem:[%s1 + $0xcf8] sm:$0xf]
  %v857 = vld [vmem:[%s1 + $0xcfc] sm:$0xf]
  %v858 = vld [vmem:[%s1 + $0xd00] sm:$0xf]
  %v859 = vld [vmem:[%s1 + $0xd04] sm:$0xf]
  %v860 = vld [vmem:[%s1 + $0xd08] sm:$0xf]
  %v861 = vld [vmem:[%s1 + $0xd0c] sm:$0xf]
  %v862 = vld [vmem:[%s1 + $0xd10] sm:$0xf]
  %v863 = vld [vmem:[%s1 + $0xd14] sm:$0xf]
  %v864 = vld [vmem:[%s1 + $0xd18] sm:$0xf]
  %v865 = vld [vmem:[%s1 + $0xd1c] sm:$0xf]
  %v866 = vld [vmem:[%s1 + $0xd20] sm:$0xf]
  %v867 = vld [vmem:[%s1 + $0xd24] sm:$0xf]
  %v868 = vld [vmem:[%s1 + $0xd28] sm:$0xf]
  %v869 = vld [vmem:[%s1 + $0xd2c] sm:$0xf]
  %v870 = vld [vmem:[%s1 + $0xd30] sm:$0xf]
  %v871 = vld [vmem:[%s1 + $0xd34] sm:$0xf]
  %v872 = vld [vmem:[%s1 + $0xd38] sm:$0xf]
  %v873 = vld [vmem:[%s1 + $0xd3c] sm:$0xf]
  %v874 = vld [vmem:[%s1 + $0xd40] sm:$0xf]
  %v875 = vld [vmem:[%s1 + $0xd44] sm:$0xf]
  %v876 = vld [vmem:[%s1 + $0xd48] sm:$0xf]
  %v877 = vld [vmem:[%s1 + $0xd4c] sm:$0xf]
  %v878 = vld [vmem:[%s1 + $0xd50] sm:$0xf]
  %v879 = vld [vmem:[%s1 + $0xd54] sm:$0xf]
  %v880 = vld [vmem:[%s1 + $0xd58] sm:$0xf]
  %v881 = vld [vmem:[%s1 + $0xd5c] sm:$0xf]
  %v882 = vld [vmem:[%s1 + $0xd60] sm:$0xf]
  %v883 = vld [vmem:[%s1 + $0xd64] sm:$0xf]
  %v884 = vld [vmem:[%s1 + $0xd68] sm:$0xf]
  %v885 = vld [vmem:[%s1 + $0xd6c] sm:$0xf]
  %v886 = vld [vmem:[%s1 + $0xd70] sm:$0xf]
  %v887 = vld [vmem:[%s1 + $0xd74] sm:$0xf]
  %v888 = vld [vmem:[%s1 + $0xd78] sm:$0xf]
  %v889 = vld [vmem:[%s1 + $0xd7c] sm:$0xf]
  %v890 = vld [vmem:[%s1 + $0xd80] sm:$0xf]
  %v891 = vld [vmem:[%s1 + $0xd84] sm:$0xf]
  %v892 = vld [vmem:[%s1 + $0xd88] sm:$0xf]
  %v893 = vld [vmem:[%s1 + $0xd8c] sm:$0xf]
  %v894 = vld [vmem:[%s1 + $0xd90] sm:$0xf]
  %v895 = vld [vmem:[%s1 + $0xd94] sm:$0xf]
  %v896 = vld [vmem:[%s1 + $0xd98] sm:$0xf]
  %v897 = vld [vmem:[%s1 + $0xd9c] sm:$0xf]
  %v898 = vld [vmem:[%s1 + $0xda0] sm:$0xf]
  %v899 = vld [vmem:[%s1 + $0xda4] sm:$0xf]
  %v900 = vld [vmem:[%s1 + $0xda8] sm:$0xf]
  %v901 = vld [vmem:[%s1 + $0xdac] sm:$0xf]
  %v902 = vld [vmem:[%s1 + $0xdb0] sm:$0xf]
  %v903 = vld [vmem:[%s1 + $0xdb4] sm:$0xf]
  %v904 = vld [vmem:[%s1 + $0xdb8] sm:$0xf]
  %v905 = vld [vmem:[%s1 + $0xdbc] sm:$0xf]
  %v906 = vld [vmem:[%s1 + $0xdc0] sm:$0xf]
  %v907 = vld [vmem:[%s1 + $0xdc4] sm:$0xf]
  %v908 = vld [vmem:[%s1 + $0xdc8] sm:$0xf]
  %v909 = vld [vmem:[%s1 + $0xdcc] sm:$0xf]
  %v910 = vld [vmem:[%s1 + $0xdd0] sm:$0xf]
  %v911 = vld [vmem:[%s1 + $0xdd4] sm:$0xf]
  %v912 = vld [vmem:[%s1 + $0xdd8] sm:$0xf]
  %v913 = vld [vmem:[%s1 + $0xddc] sm:$0xf]
  %v914 = vld [vmem:[%s1 + $0xde0] sm:$0xf]
  %v915 = vld [vmem:[%s1 + $0xde4] sm:$0xf]
  %v916 = vld [vmem:[%s1 + $0xde8] sm:$0xf]
  %v917 = vld [vmem:[%s1 + $0xdec] sm:$0xf]
  %v918 = vld [vmem:[%s1 + $0xdf0] sm:$0xf]
  %v919 = vld [vmem:[%s1 + $0xdf4] sm:$0xf]
  %v920 = vld [vmem:[%s1 + $0xdf8] sm:$0xf]
  %v921 = vld [vmem:[%s1 + $0xdfc] sm:$0xf]
  %v922 = vld [vmem:[%s1 + $0xe00] sm:$0xf]
  %v923 = vld [vmem:[%s1 + $0xe04] sm:$0xf]
  %v924 = vld [vmem:[%s1 + $0xe08] sm:$0xf]
  %v925 = vld [vmem:[%s1 + $0xe0c] sm:$0xf]
  %v926 = vld [vmem:[%s1 + $0xe10] sm:$0xf]
  %v927 = vld [vmem:[%s1 + $0xe14] sm:$0xf]
  %v928 = vld [vmem:[%s1 + $0xe18] sm:$0xf]
  %v929 = vld [vmem:[%s1 + $0xe1c] sm:$0xf]
  %v930 = vld [vmem:[%s1 + $0xe20] sm:$0xf]
  %v931 = vld [vmem:[%s1 + $0xe24] sm:$0xf]
  %v932 = vld [vmem:[%s1 + $0xe28] sm:$0xf]
  %v933 = vld [vmem:[%s1 + $0xe2c] sm:$0xf]
  %v934 = vld [vmem:[%s1 + $0xe30] sm:$0xf]
  %v935 = vld [vmem:[%s1 + $0xe34] sm:$0xf]
  %v936 = vld [vmem:[%s1 + $0xe38] sm:$0xf]
  %v937 = vld [vmem:[%s1 + $0xe3c] sm:$0xf]
  %v938 = vld [vmem:[%s1 + $0xe40] sm:$0xf]
  %v939 = vld [vmem:[%s1 + $0xe44] sm:$0xf]
  %v940 = vld [vmem:[%s1 + $0xe48] sm:$0xf]
  %v941 = vld [vmem:[%s1 + $0xe4c] sm:$0xf]
  %v942 = vld [vmem:[%s1 + $0xe50] sm:$0xf]
  %v943 = vld [vmem:[%s1 + $0xe54] sm:$0xf]
  %v944 = vld [vmem:[%s1 + $0xe58] sm:$0xf]
  %v945 = vld [vmem:[%s1 + $0xe5c] sm:$0xf]
  %v946 = vld [vmem:[%s1 + $0xe60] sm:$0xf]
  %v947 = vld [vmem:[%s1 + $0xe64] sm:$0xf]
  %v948 = vld [vmem:[%s1 + $0xe68] sm:$0xf]
  %v949 = vld [vmem:[%s1 + $0xe6c] sm:$0xf]
  %v950 = vld [vmem:[%s1 + $0xe70] sm:$0xf]
  %v951 = vld [vmem:[%s1 + $0xe74] sm:$0xf]
  %v952 = vld [vmem:[%s1 + $0xe78] sm:$0xf]
  %v953 = vld [vmem:[%s1 + $0xe7c] sm:$0xf]
  %v954 = vld [vmem:[%s1 + $0xe80] sm:$0xf]
  %v955 = vld [vmem:[%s1 + $0xe84] sm:$0xf]
  %v956 = vld [vmem:[%s1 + $0xe88] sm:$0xf]
  %v957 = vld [vmem:[%s1 + $0xe8c] sm:$0xf]
  %v958 = vld [vmem:[%s1 + $0xe90] sm:$0xf]
  %v959 = vld [vmem:[%s1 + $0xe94] sm:$0xf]
  %v960 = vld [vmem:[%s1 + $0xe98] sm:$0xf]
  %v961 = vld [vmem:[%s1 + $0xe9c] sm:$0xf]
  %v962 = vld [vmem:[%s1 + $0xea0] sm:$0xf]
  %v963 = vld [vmem:[%s1 + $0xea4] sm:$0xf]
  %v964 = vld [vmem:[%s1 + $0xea8] sm:$0xf]
  %v965 = vld [vmem:[%s1 + $0xeac] sm:$0xf]
  %v966 = vld [vmem:[%s1 + $0xeb0] sm:$0xf]
  %v967 = vld [vmem:[%s1 + $0xeb4] sm:$0xf]
  %v968 = vld [vmem:[%s1 + $0xeb8] sm:$0xf]
  %v969 = vld [vmem:[%s1 + $0xebc] sm:$0xf]
  %v970 = vld [vmem:[%s1 + $0xec0] sm:$0xf]
  %v971 = vld [vmem:[%s1 + $0xec4] sm:$0xf]
  %v972 = vld [vmem:[%s1 + $0xec8] sm:$0xf]
  %v973 = vld [vmem:[%s1 + $0xecc] sm:$0xf]
  %v974 = vld [vmem:[%s1 + $0xed0] sm:$0xf]
  %v975 = vld [vmem:[%s1 + $0xed4] sm:$0xf]
  %v976 = vld [vmem:[%s1 + $0xed8] sm:$0xf]
  %v977 = vld [vmem:[%s1 + $0xedc] sm:$0xf]
  %v978 = vld [vmem:[%s1 + $0xee0] sm:$0xf]
  %v979 = vld [vmem:[%s1 + $0xee4] sm:$0xf]
  %v980 = vld [vmem:[%s1 + $0xee8] sm:$0xf]
  %v981 = vld [vmem:[%s1 + $0xeec] sm:$0xf]
  %v982 = vld [vmem:[%s1 + $0xef0] sm:$0xf]
  %v983 = vld [vmem:[%s1 + $0xef4] sm:$0xf]
  %v984 = vld [vmem:[%s1 + $0xef8] sm:$0xf]
  %v985 = vld [vmem:[%s1 + $0xefc] sm:$0xf]
  %v986 = vld [vmem:[%s1 + $0xf00] sm:$0xf]
  %v987 = vld [vmem:[%s1 + $0xf04] sm:$0xf]
  %v988 = vld [vmem:[%s1 + $0xf08] sm:$0xf]
  %v989 = vld [vmem:[%s1 + $0xf0c] sm:$0xf]
  %v990 = vld [vmem:[%s1 + $0xf10] sm:$0xf]
  %v991 = vld [vmem:[%s1 + $0xf14] sm:$0xf]
  %v992 = vld [vmem:[%s1 + $0xf18] sm:$0xf]
  %v993 = vld [vmem:[%s1 + $0xf1c] sm:$0xf]
  %v994 = vld [vmem:[%s1 + $0xf20] sm:$0xf]
  %v995 = vld [vmem:[%s1 + $0xf24] sm:$0xf]
  %v996 = vld [vmem:[%s1 + $0xf28] sm:$0xf]
  %v997 = vld [vmem:[%s1 + $0xf2c] sm:$0xf]
  %v998 = vld [vmem:[%s1 + $0xf30] sm:$0xf]
  %v999 = vld [vmem:[%s1 + $0xf34] sm:$0xf]
  %v1000 = vld [vmem:[%s1 + $0xf38] sm:$0xf]
  %v1001 = vld [vmem:[%s1 + $0xf3c] sm:$0xf]
  %v1002 = vld [vmem:[%s1 + $0xf40] sm:$0xf]
  %v1003 = vld [vmem:[%s1 + $0xf44] sm:$0xf]
  %v1004 = vld [vmem:[%s1 + $0xf48] sm:$0xf]
  %v1005 = vld [vmem:[%s1 + $0xf4c] sm:$0xf]
  %v1006 = vld [vmem:[%s1 + $0xf50] sm:$0xf]
  %v1007 = vld [vmem:[%s1 + $0xf54] sm:$0xf]
  %v1008 = vld [vmem:[%s1 + $0xf58] sm:$0xf]
  %v1009 = vld [vmem:[%s1 + $0xf5c] sm:$0xf]
  %v1010 = vld [vmem:[%s1 + $0xf60] sm:$0xf]
  %v1011 = vld [vmem:[%s1 + $0xf64] sm:$0xf]
  %v1012 = vld [vmem:[%s1 + $0xf68] sm:$0xf]
  %v1013 = vld [vmem:[%s1 + $0xf6c] sm:$0xf]
  %v1014 = vld [vmem:[%s1 + $0xf70] sm:$0xf]
  %v1015 = vld [vmem:[%s1 + $0xf74] sm:$0xf]
  %v1016 = vld [vmem:[%s1 + $0xf78] sm:$0xf]
  %v1017 = vld [vmem:[%s1 + $0xf7c] sm:$0xf]
  %v1018 = vld [vmem:[%s1 + $0xf80] sm:$0xf]
  %v1019 = vld [vmem:[%s1 + $0xf84] sm:$0xf]
  %v1020 = vld [vmem:[%s1 + $0xf88] sm:$0xf]
  %v1021 = vld [vmem:[%s1 + $0xf8c] sm:$0xf]
  %v1022 = vld [vmem:[%s1 + $0xf90] sm:$0xf]
  %v1023 = vld [vmem:[%s1 + $0xf94] sm:$0xf]
  %v1024 = vld [vmem:[%s1 + $0xf98] sm:$0xf]
  %v1025 = vld [vmem:[%s1 + $0xf9c] sm:$0xf]
  %v1026 = vld [vmem:[%s1 + $0xfa0] sm:$0xf]
  %v1027 = vld [vmem:[%s1 + $0xfa4] sm:$0xf]
  %v1028 = vld [vmem:[%s1 + $0xfa8] sm:$0xf]
  %v1029 = vld [vmem:[%s1 + $0xfac] sm:$0xf]
  %v1030 = vld [vmem:[%s1 + $0xfb0] sm:$0xf]
  %v1031 = vld [vmem:[%s1 + $0xfb4] sm:$0xf]
  %v1032 = vld [vmem:[%s1 + $0xfb8] sm:$0xf]
  %v1033 = vld [vmem:[%s1 + $0xfbc] sm:$0xf]
  %v1034 = vld [vmem:[%s1 + $0xfc0] sm:$0xf]
  %v1035 = vld [vmem:[%s1 + $0xfc4] sm:$0xf]
  %v1036 = vld [vmem:[%s1 + $0xfc8] sm:$0xf]
  %v1037 = vld [vmem:[%s1 + $0xfcc] sm:$0xf]
  %v1038 = vld [vmem:[%s1 + $0xfd0] sm:$0xf]
  %v1039 = vld [vmem:[%s1 + $0xfd4] sm:$0xf]
  %v1040 = vld [vmem:[%s1 + $0xfd8] sm:$0xf]
  %v1041 = vld [vmem:[%s1 + $0xfdc] sm:$0xf]
  %v1042 = vld [vmem:[%s1 + $0xfe0] sm:$0xf]
  %v1043 = vld [vmem:[%s1 + $0xfe4] sm:$0xf]
  %v1044 = vld [vmem:[%s1 + $0xfe8] sm:$0xf]
  %v1045 = vld [vmem:[%s1 + $0xfec] sm:$0xf]
  %v1046 = vld [vmem:[%s1 + $0xff0] sm:$0xf]
  %v1047 = vld [vmem:[%s1 + $0xff4] sm:$0xf]
  %v1048 = vld [vmem:[%s1 + $0xff8] sm:$0xf]
  %v1049 = vld [vmem:[%s1 + $0xffc] sm:$0xf]
  %v1058 = vcombine.high %v18, %v18
  %v1060 = vunpack.c.l.s4 1966171168
  %v1061 = vunpack.c.0.s8 %v1060
  %v1062 = vlaneseq
  %v1063 = vshrl.u32 %v1062, 7
  %v1064 = vsub.s32 %v1061, %v1063
  %v1065 = vrot.slane %v18, %v1064
  %v1067 = vunpack.c.l.s4 1966171168
  %v1068 = vunpack.c.0.s8 %v1067
  %v1069 = vlaneseq
  %v1070 = vshrl.u32 %v1069, 7
  %v1071 = vsub.s32 %v1068, %v1070
  %v1072 = vrot.slane %v1058, %v1071
  %v1073 = vcombine.high %v1065, %v1065
  %v1074 = vcombine.high %v1072, %v1072
  %v1076 = vunpack.c.l.s4 1966171168
  %v1077 = vunpack.c.0.s8 %v1076
  %v1078 = vlaneseq
  %v1079 = vshrl.u32 %v1078, 7
  %v1080 = vsub.s32 %v1077, %v1079
  %v1081 = vrot.slane %v1065, %v1080
  %v1083 = vunpack.c.l.s4 1966171168
  %v1084 = vunpack.c.0.s8 %v1083
  %v1085 = vlaneseq
  %v1086 = vshrl.u32 %v1085, 7
  %v1087 = vsub.s32 %v1084, %v1086
  %v1088 = vrot.slane %v1072, %v1087
  %v1090 = vunpack.c.l.s4 1966171168
  %v1091 = vunpack.c.0.s8 %v1090
  %v1092 = vlaneseq
  %v1093 = vshrl.u32 %v1092, 7
  %v1094 = vsub.s32 %v1091, %v1093
  %v1095 = vrot.slane %v1073, %v1094
  %v1097 = vunpack.c.l.s4 1966171168
  %v1098 = vunpack.c.0.s8 %v1097
  %v1099 = vlaneseq
  %v1100 = vshrl.u32 %v1099, 7
  %v1101 = vsub.s32 %v1098, %v1100
  %v1102 = vrot.slane %v1074, %v1101
  %v1103 = vcombine.high %v1081, %v1081
  %v1104 = vcombine.high %v1088, %v1088
  %v1105 = vcombine.high %v1095, %v1095
  %v1106 = vcombine.high %v1102, %v1102
  %v1107 = vcombine.high %v19, %v19
  %v1109 = vunpack.c.l.s4 1966171168
  %v1110 = vunpack.c.0.s8 %v1109
  %v1111 = vlaneseq
  %v1112 = vshrl.u32 %v1111, 7
  %v1113 = vsub.s32 %v1110, %v1112
  %v1114 = vrot.slane %v19, %v1113
  %v1116 = vunpack.c.l.s4 1966171168
  %v1117 = vunpack.c.0.s8 %v1116
  %v1118 = vlaneseq
  %v1119 = vshrl.u32 %v1118, 7
  %v1120 = vsub.s32 %v1117, %v1119
  %v1121 = vrot.slane %v1107, %v1120
  %v1122 = vcombine.high %v1114, %v1114
  %v1123 = vcombine.high %v1121, %v1121
  %v1125 = vunpack.c.l.s4 1966171168
  %v1126 = vunpack.c.0.s8 %v1125
  %v1127 = vlaneseq
  %v1128 = vshrl.u32 %v1127, 7
  %v1129 = vsub.s32 %v1126, %v1128
  %v1130 = vrot.slane %v1114, %v1129
  %v1132 = vunpack.c.l.s4 1966171168
  %v1133 = vunpack.c.0.s8 %v1132
  %v1134 = vlaneseq
  %v1135 = vshrl.u32 %v1134, 7
  %v1136 = vsub.s32 %v1133, %v1135
  %v1137 = vrot.slane %v1121, %v1136
  %v1139 = vunpack.c.l.s4 1966171168
  %v1140 = vunpack.c.0.s8 %v1139
  %v1141 = vlaneseq
  %v1142 = vshrl.u32 %v1141, 7
  %v1143 = vsub.s32 %v1140, %v1142
  %v1144 = vrot.slane %v1122, %v1143
  %v1146 = vunpack.c.l.s4 1966171168
  %v1147 = vunpack.c.0.s8 %v1146
  %v1148 = vlaneseq
  %v1149 = vshrl.u32 %v1148, 7
  %v1150 = vsub.s32 %v1147, %v1149
  %v1151 = vrot.slane %v1123, %v1150
  %v1152 = vcombine.high %v1130, %v1130
  %v1153 = vcombine.high %v1137, %v1137
  %v1154 = vcombine.high %v1144, %v1144
  %v1155 = vcombine.high %v1151, %v1151
  %v1156 = vcombine.high %v20, %v20
  %v1158 = vunpack.c.l.s4 1966171168
  %v1159 = vunpack.c.0.s8 %v1158
  %v1160 = vlaneseq
  %v1161 = vshrl.u32 %v1160, 7
  %v1162 = vsub.s32 %v1159, %v1161
  %v1163 = vrot.slane %v20, %v1162
  %v1165 = vunpack.c.l.s4 1966171168
  %v1166 = vunpack.c.0.s8 %v1165
  %v1167 = vlaneseq
  %v1168 = vshrl.u32 %v1167, 7
  %v1169 = vsub.s32 %v1166, %v1168
  %v1170 = vrot.slane %v1156, %v1169
  %v1171 = vcombine.high %v1163, %v1163
  %v1172 = vcombine.high %v1170, %v1170
  %v1174 = vunpack.c.l.s4 1966171168
  %v1175 = vunpack.c.0.s8 %v1174
  %v1176 = vlaneseq
  %v1177 = vshrl.u32 %v1176, 7
  %v1178 = vsub.s32 %v1175, %v1177
  %v1179 = vrot.slane %v1163, %v1178
  %v1181 = vunpack.c.l.s4 1966171168
  %v1182 = vunpack.c.0.s8 %v1181
  %v1183 = vlaneseq
  %v1184 = vshrl.u32 %v1183, 7
  %v1185 = vsub.s32 %v1182, %v1184
  %v1186 = vrot.slane %v1170, %v1185
  %v1188 = vunpack.c.l.s4 1966171168
  %v1189 = vunpack.c.0.s8 %v1188
  %v1190 = vlaneseq
  %v1191 = vshrl.u32 %v1190, 7
  %v1192 = vsub.s32 %v1189, %v1191
  %v1193 = vrot.slane %v1171, %v1192
  %v1195 = vunpack.c.l.s4 1966171168
  %v1196 = vunpack.c.0.s8 %v1195
  %v1197 = vlaneseq
  %v1198 = vshrl.u32 %v1197, 7
  %v1199 = vsub.s32 %v1196, %v1198
  %v1200 = vrot.slane %v1172, %v1199
  %v1201 = vcombine.high %v1179, %v1179
  %v1202 = vcombine.high %v1186, %v1186
  %v1203 = vcombine.high %v1193, %v1193
  %v1204 = vcombine.high %v1200, %v1200
  %v1205 = vcombine.high %v21, %v21
  %v1207 = vunpack.c.l.s4 1966171168
  %v1208 = vunpack.c.0.s8 %v1207
  %v1209 = vlaneseq
  %v1210 = vshrl.u32 %v1209, 7
  %v1211 = vsub.s32 %v1208, %v1210
  %v1212 = vrot.slane %v21, %v1211
  %v1214 = vunpack.c.l.s4 1966171168
  %v1215 = vunpack.c.0.s8 %v1214
  %v1216 = vlaneseq
  %v1217 = vshrl.u32 %v1216, 7
  %v1218 = vsub.s32 %v1215, %v1217
  %v1219 = vrot.slane %v1205, %v1218
  %v1220 = vcombine.high %v1212, %v1212
  %v1221 = vcombine.high %v1219, %v1219
  %v1223 = vunpack.c.l.s4 1966171168
  %v1224 = vunpack.c.0.s8 %v1223
  %v1225 = vlaneseq
  %v1226 = vshrl.u32 %v1225, 7
  %v1227 = vsub.s32 %v1224, %v1226
  %v1228 = vrot.slane %v1212, %v1227
  %v1230 = vunpack.c.l.s4 1966171168
  %v1231 = vunpack.c.0.s8 %v1230
  %v1232 = vlaneseq
  %v1233 = vshrl.u32 %v1232, 7
  %v1234 = vsub.s32 %v1231, %v1233
  %v1235 = vrot.slane %v1219, %v1234
  %v1237 = vunpack.c.l.s4 1966171168
  %v1238 = vunpack.c.0.s8 %v1237
  %v1239 = vlaneseq
  %v1240 = vshrl.u32 %v1239, 7
  %v1241 = vsub.s32 %v1238, %v1240
  %v1242 = vrot.slane %v1220, %v1241
  %v1244 = vunpack.c.l.s4 1966171168
  %v1245 = vunpack.c.0.s8 %v1244
  %v1246 = vlaneseq
  %v1247 = vshrl.u32 %v1246, 7
  %v1248 = vsub.s32 %v1245, %v1247
  %v1249 = vrot.slane %v1221, %v1248
  %v1250 = vcombine.high %v1228, %v1228
  %v1251 = vcombine.high %v1235, %v1235
  %v1252 = vcombine.high %v1242, %v1242
  %v1253 = vcombine.high %v1249, %v1249
  %v1254 = vcombine.high %v22, %v22
  %v1256 = vunpack.c.l.s4 1966171168
  %v1257 = vunpack.c.0.s8 %v1256
  %v1258 = vlaneseq
  %v1259 = vshrl.u32 %v1258, 7
  %v1260 = vsub.s32 %v1257, %v1259
  %v1261 = vrot.slane %v22, %v1260
  %v1263 = vunpack.c.l.s4 1966171168
  %v1264 = vunpack.c.0.s8 %v1263
  %v1265 = vlaneseq
  %v1266 = vshrl.u32 %v1265, 7
  %v1267 = vsub.s32 %v1264, %v1266
  %v1268 = vrot.slane %v1254, %v1267
  %v1269 = vcombine.high %v1261, %v1261
  %v1270 = vcombine.high %v1268, %v1268
  %v1272 = vunpack.c.l.s4 1966171168
  %v1273 = vunpack.c.0.s8 %v1272
  %v1274 = vlaneseq
  %v1275 = vshrl.u32 %v1274, 7
  %v1276 = vsub.s32 %v1273, %v1275
  %v1277 = vrot.slane %v1261, %v1276
  %v1279 = vunpack.c.l.s4 1966171168
  %v1280 = vunpack.c.0.s8 %v1279
  %v1281 = vlaneseq
  %v1282 = vshrl.u32 %v1281, 7
  %v1283 = vsub.s32 %v1280, %v1282
  %v1284 = vrot.slane %v1268, %v1283
  %v1286 = vunpack.c.l.s4 1966171168
  %v1287 = vunpack.c.0.s8 %v1286
  %v1288 = vlaneseq
  %v1289 = vshrl.u32 %v1288, 7
  %v1290 = vsub.s32 %v1287, %v1289
  %v1291 = vrot.slane %v1269, %v1290
  %v1293 = vunpack.c.l.s4 1966171168
  %v1294 = vunpack.c.0.s8 %v1293
  %v1295 = vlaneseq
  %v1296 = vshrl.u32 %v1295, 7
  %v1297 = vsub.s32 %v1294, %v1296
  %v1298 = vrot.slane %v1270, %v1297
  %v1299 = vcombine.high %v1277, %v1277
  %v1300 = vcombine.high %v1284, %v1284
  %v1301 = vcombine.high %v1291, %v1291
  %v1302 = vcombine.high %v1298, %v1298
  %v1303 = vcombine.high %v23, %v23
  %v1305 = vunpack.c.l.s4 1966171168
  %v1306 = vunpack.c.0.s8 %v1305
  %v1307 = vlaneseq
  %v1308 = vshrl.u32 %v1307, 7
  %v1309 = vsub.s32 %v1306, %v1308
  %v1310 = vrot.slane %v23, %v1309
  %v1312 = vunpack.c.l.s4 1966171168
  %v1313 = vunpack.c.0.s8 %v1312
  %v1314 = vlaneseq
  %v1315 = vshrl.u32 %v1314, 7
  %v1316 = vsub.s32 %v1313, %v1315
  %v1317 = vrot.slane %v1303, %v1316
  %v1318 = vcombine.high %v1310, %v1310
  %v1319 = vcombine.high %v1317, %v1317
  %v1321 = vunpack.c.l.s4 1966171168
  %v1322 = vunpack.c.0.s8 %v1321
  %v1323 = vlaneseq
  %v1324 = vshrl.u32 %v1323, 7
  %v1325 = vsub.s32 %v1322, %v1324
  %v1326 = vrot.slane %v1310, %v1325
  %v1328 = vunpack.c.l.s4 1966171168
  %v1329 = vunpack.c.0.s8 %v1328
  %v1330 = vlaneseq
  %v1331 = vshrl.u32 %v1330, 7
  %v1332 = vsub.s32 %v1329, %v1331
  %v1333 = vrot.slane %v1317, %v1332
  %v1335 = vunpack.c.l.s4 1966171168
  %v1336 = vunpack.c.0.s8 %v1335
  %v1337 = vlaneseq
  %v1338 = vshrl.u32 %v1337, 7
  %v1339 = vsub.s32 %v1336, %v1338
  %v1340 = vrot.slane %v1318, %v1339
  %v1342 = vunpack.c.l.s4 1966171168
  %v1343 = vunpack.c.0.s8 %v1342
  %v1344 = vlaneseq
  %v1345 = vshrl.u32 %v1344, 7
  %v1346 = vsub.s32 %v1343, %v1345
  %v1347 = vrot.slane %v1319, %v1346
  %v1348 = vcombine.high %v1326, %v1326
  %v1349 = vcombine.high %v1333, %v1333
  %v1350 = vcombine.high %v1340, %v1340
  %v1351 = vcombine.high %v1347, %v1347
  %v1352 = vcombine.high %v24, %v24
  %v1354 = vunpack.c.l.s4 1966171168
  %v1355 = vunpack.c.0.s8 %v1354
  %v1356 = vlaneseq
  %v1357 = vshrl.u32 %v1356, 7
  %v1358 = vsub.s32 %v1355, %v1357
  %v1359 = vrot.slane %v24, %v1358
  %v1361 = vunpack.c.l.s4 1966171168
  %v1362 = vunpack.c.0.s8 %v1361
  %v1363 = vlaneseq
  %v1364 = vshrl.u32 %v1363, 7
  %v1365 = vsub.s32 %v1362, %v1364
  %v1366 = vrot.slane %v1352, %v1365
  %v1367 = vcombine.high %v1359, %v1359
  %v1368 = vcombine.high %v1366, %v1366
  %v1370 = vunpack.c.l.s4 1966171168
  %v1371 = vunpack.c.0.s8 %v1370
  %v1372 = vlaneseq
  %v1373 = vshrl.u32 %v1372, 7
  %v1374 = vsub.s32 %v1371, %v1373
  %v1375 = vrot.slane %v1359, %v1374
  %v1377 = vunpack.c.l.s4 1966171168
  %v1378 = vunpack.c.0.s8 %v1377
  %v1379 = vlaneseq
  %v1380 = vshrl.u32 %v1379, 7
  %v1381 = vsub.s32 %v1378, %v1380
  %v1382 = vrot.slane %v1366, %v1381
  %v1384 = vunpack.c.l.s4 1966171168
  %v1385 = vunpack.c.0.s8 %v1384
  %v1386 = vlaneseq
  %v1387 = vshrl.u32 %v1386, 7
  %v1388 = vsub.s32 %v1385, %v1387
  %v1389 = vrot.slane %v1367, %v1388
  %v1391 = vunpack.c.l.s4 1966171168
  %v1392 = vunpack.c.0.s8 %v1391
  %v1393 = vlaneseq
  %v1394 = vshrl.u32 %v1393, 7
  %v1395 = vsub.s32 %v1392, %v1394
  %v1396 = vrot.slane %v1368, %v1395
  %v1397 = vcombine.high %v1375, %v1375
  %v1398 = vcombine.high %v1382, %v1382
  %v1399 = vcombine.high %v1389, %v1389
  %v1400 = vcombine.high %v1396, %v1396
  %v1401 = vcombine.high %v25, %v25
  %v1403 = vunpack.c.l.s4 1966171168
  %v1404 = vunpack.c.0.s8 %v1403
  %v1405 = vlaneseq
  %v1406 = vshrl.u32 %v1405, 7
  %v1407 = vsub.s32 %v1404, %v1406
  %v1408 = vrot.slane %v25, %v1407
  %v1410 = vunpack.c.l.s4 1966171168
  %v1411 = vunpack.c.0.s8 %v1410
  %v1412 = vlaneseq
  %v1413 = vshrl.u32 %v1412, 7
  %v1414 = vsub.s32 %v1411, %v1413
  %v1415 = vrot.slane %v1401, %v1414
  %v1416 = vcombine.high %v1408, %v1408
  %v1417 = vcombine.high %v1415, %v1415
  %v1419 = vunpack.c.l.s4 1966171168
  %v1420 = vunpack.c.0.s8 %v1419
  %v1421 = vlaneseq
  %v1422 = vshrl.u32 %v1421, 7
  %v1423 = vsub.s32 %v1420, %v1422
  %v1424 = vrot.slane %v1408, %v1423
  %v1426 = vunpack.c.l.s4 1966171168
  %v1427 = vunpack.c.0.s8 %v1426
  %v1428 = vlaneseq
  %v1429 = vshrl.u32 %v1428, 7
  %v1430 = vsub.s32 %v1427, %v1429
  %v1431 = vrot.slane %v1415, %v1430
  %v1433 = vunpack.c.l.s4 1966171168
  %v1434 = vunpack.c.0.s8 %v1433
  %v1435 = vlaneseq
  %v1436 = vshrl.u32 %v1435, 7
  %v1437 = vsub.s32 %v1434, %v1436
  %v1438 = vrot.slane %v1416, %v1437
  %v1440 = vunpack.c.l.s4 1966171168
  %v1441 = vunpack.c.0.s8 %v1440
  %v1442 = vlaneseq
  %v1443 = vshrl.u32 %v1442, 7
  %v1444 = vsub.s32 %v1441, %v1443
  %v1445 = vrot.slane %v1417, %v1444
  %v1446 = vcombine.high %v1424, %v1424
  %v1447 = vcombine.high %v1431, %v1431
  %v1448 = vcombine.high %v1438, %v1438
  %v1449 = vcombine.high %v1445, %v1445
  %v2538 = vunpack.c.l.b16 %v26
  %v2539 = vunpack.c.l.b16 %v27
  %v2540 = vunpack.c.l.b16 %v28
  %v2541 = vunpack.c.l.b16 %v29
  %v2542 = vunpack.c.l.b16 %v30
  %v2543 = vunpack.c.l.b16 %v31
  %v2544 = vunpack.c.l.b16 %v32
  %v2545 = vunpack.c.l.b16 %v33
  %v2546 = vunpack.c.l.b16 %v34
  %v2547 = vunpack.c.l.b16 %v35
  %v2548 = vunpack.c.l.b16 %v36
  %v2549 = vunpack.c.l.b16 %v37
  %v2550 = vunpack.c.l.b16 %v38
  %v2551 = vunpack.c.l.b16 %v39
  %v2552 = vunpack.c.l.b16 %v40
  %v2553 = vunpack.c.l.b16 %v41
  %v2554 = vunpack.c.l.b16 %v42
  %v2555 = vunpack.c.l.b16 %v43
  %v2556 = vunpack.c.l.b16 %v44
  %v2557 = vunpack.c.l.b16 %v45
  %v2558 = vunpack.c.l.b16 %v46
  %v2559 = vunpack.c.l.b16 %v47
  %v2560 = vunpack.c.l.b16 %v48
  %v2561 = vunpack.c.l.b16 %v49
  %v2562 = vunpack.c.l.b16 %v50
  %v2563 = vunpack.c.l.b16 %v51
  %v2564 = vunpack.c.l.b16 %v52
  %v2565 = vunpack.c.l.b16 %v53
  %v2566 = vunpack.c.l.b16 %v54
  %v2567 = vunpack.c.l.b16 %v55
  %v2568 = vunpack.c.l.b16 %v56
  %v2569 = vunpack.c.l.b16 %v57
  %v2570 = vunpack.c.l.b16 %v58
  %v2571 = vunpack.c.l.b16 %v59
  %v2572 = vunpack.c.l.b16 %v60
  %v2573 = vunpack.c.l.b16 %v61
  %v2574 = vunpack.c.l.b16 %v62
  %v2575 = vunpack.c.l.b16 %v63
  %v2576 = vunpack.c.l.b16 %v64
  %v2577 = vunpack.c.l.b16 %v65
  %v2578 = vunpack.c.l.b16 %v66
  %v2579 = vunpack.c.l.b16 %v67
  %v2580 = vunpack.c.l.b16 %v68
  %v2581 = vunpack.c.l.b16 %v69
  %v2582 = vunpack.c.l.b16 %v70
  %v2583 = vunpack.c.l.b16 %v71
  %v2584 = vunpack.c.l.b16 %v72
  %v2585 = vunpack.c.l.b16 %v73
  %v2586 = vunpack.c.l.b16 %v74
  %v2587 = vunpack.c.l.b16 %v75
  %v2588 = vunpack.c.l.b16 %v76
  %v2589 = vunpack.c.l.b16 %v77
  %v2590 = vunpack.c.l.b16 %v78
  %v2591 = vunpack.c.l.b16 %v79
  %v2592 = vunpack.c.l.b16 %v80
  %v2593 = vunpack.c.l.b16 %v81
  %v2594 = vunpack.c.l.b16 %v82
  %v2595 = vunpack.c.l.b16 %v83
  %v2596 = vunpack.c.l.b16 %v84
  %v2597 = vunpack.c.l.b16 %v85
  %v2598 = vunpack.c.l.b16 %v86
  %v2599 = vunpack.c.l.b16 %v87
  %v2600 = vunpack.c.l.b16 %v88
  %v2601 = vunpack.c.l.b16 %v89
  %v2602 = vunpack.c.l.b16 %v90
  %v2603 = vunpack.c.l.b16 %v91
  %v2604 = vunpack.c.l.b16 %v92
  %v2605 = vunpack.c.l.b16 %v93
  %v2606 = vunpack.c.l.b16 %v94
  %v2607 = vunpack.c.l.b16 %v95
  %v2608 = vunpack.c.l.b16 %v96
  %v2609 = vunpack.c.l.b16 %v97
  %v2610 = vunpack.c.l.b16 %v98
  %v2611 = vunpack.c.l.b16 %v99
  %v2612 = vunpack.c.l.b16 %v100
  %v2613 = vunpack.c.l.b16 %v101
  %v2614 = vunpack.c.l.b16 %v102
  %v2615 = vunpack.c.l.b16 %v103
  %v2616 = vunpack.c.l.b16 %v104
  %v2617 = vunpack.c.l.b16 %v105
  %v2618 = vunpack.c.l.b16 %v106
  %v2619 = vunpack.c.l.b16 %v107
  %v2620 = vunpack.c.l.b16 %v108
  %v2621 = vunpack.c.l.b16 %v109
  %v2622 = vunpack.c.l.b16 %v110
  %v2623 = vunpack.c.l.b16 %v111
  %v2624 = vunpack.c.l.b16 %v112
  %v2625 = vunpack.c.l.b16 %v113
  %v2626 = vunpack.c.l.b16 %v114
  %v2627 = vunpack.c.l.b16 %v115
  %v2628 = vunpack.c.l.b16 %v116
  %v2629 = vunpack.c.l.b16 %v117
  %v2630 = vunpack.c.l.b16 %v118
  %v2631 = vunpack.c.l.b16 %v119
  %v2632 = vunpack.c.l.b16 %v120
  %v2633 = vunpack.c.l.b16 %v121
  %v2634 = vunpack.c.l.b16 %v122
  %v2635 = vunpack.c.l.b16 %v123
  %v2636 = vunpack.c.l.b16 %v124
  %v2637 = vunpack.c.l.b16 %v125
  %v2638 = vunpack.c.l.b16 %v126
  %v2639 = vunpack.c.l.b16 %v127
  %v2640 = vunpack.c.l.b16 %v128
  %v2641 = vunpack.c.l.b16 %v129
  %v2642 = vunpack.c.l.b16 %v130
  %v2643 = vunpack.c.l.b16 %v131
  %v2644 = vunpack.c.l.b16 %v132
  %v2645 = vunpack.c.l.b16 %v133
  %v2646 = vunpack.c.l.b16 %v134
  %v2647 = vunpack.c.l.b16 %v135
  %v2648 = vunpack.c.l.b16 %v136
  %v2649 = vunpack.c.l.b16 %v137
  %v2650 = vunpack.c.l.b16 %v138
  %v2651 = vunpack.c.l.b16 %v139
  %v2652 = vunpack.c.l.b16 %v140
  %v2653 = vunpack.c.l.b16 %v141
  %v2654 = vunpack.c.l.b16 %v142
  %v2655 = vunpack.c.l.b16 %v143
  %v2656 = vunpack.c.l.b16 %v144
  %v2657 = vunpack.c.l.b16 %v145
  %v2658 = vunpack.c.l.b16 %v146
  %v2659 = vunpack.c.l.b16 %v147
  %v2660 = vunpack.c.l.b16 %v148
  %v2661 = vunpack.c.l.b16 %v149
  %v2662 = vunpack.c.l.b16 %v150
  %v2663 = vunpack.c.l.b16 %v151
  %v2664 = vunpack.c.l.b16 %v152
  %v2665 = vunpack.c.l.b16 %v153
  %v2666 = vunpack.c.l.b16 %v154
  %v2667 = vunpack.c.l.b16 %v155
  %v2668 = vunpack.c.l.b16 %v156
  %v2669 = vunpack.c.l.b16 %v157
  %v2670 = vunpack.c.l.b16 %v158
  %v2671 = vunpack.c.l.b16 %v159
  %v2672 = vunpack.c.l.b16 %v160
  %v2673 = vunpack.c.l.b16 %v161
  %v2674 = vunpack.c.l.b16 %v162
  %v2675 = vunpack.c.l.b16 %v163
  %v2676 = vunpack.c.l.b16 %v164
  %v2677 = vunpack.c.l.b16 %v165
  %v2678 = vunpack.c.l.b16 %v166
  %v2679 = vunpack.c.l.b16 %v167
  %v2680 = vunpack.c.l.b16 %v168
  %v2681 = vunpack.c.l.b16 %v169
  %v2682 = vunpack.c.l.b16 %v170
  %v2683 = vunpack.c.l.b16 %v171
  %v2684 = vunpack.c.l.b16 %v172
  %v2685 = vunpack.c.l.b16 %v173
  %v2686 = vunpack.c.l.b16 %v174
  %v2687 = vunpack.c.l.b16 %v175
  %v2688 = vunpack.c.l.b16 %v176
  %v2689 = vunpack.c.l.b16 %v177
  %v2690 = vunpack.c.l.b16 %v178
  %v2691 = vunpack.c.l.b16 %v179
  %v2692 = vunpack.c.l.b16 %v180
  %v2693 = vunpack.c.l.b16 %v181
  %v2694 = vunpack.c.l.b16 %v182
  %v2695 = vunpack.c.l.b16 %v183
  %v2696 = vunpack.c.l.b16 %v184
  %v2697 = vunpack.c.l.b16 %v185
  %v2698 = vunpack.c.l.b16 %v186
  %v2699 = vunpack.c.l.b16 %v187
  %v2700 = vunpack.c.l.b16 %v188
  %v2701 = vunpack.c.l.b16 %v189
  %v2702 = vunpack.c.l.b16 %v190
  %v2703 = vunpack.c.l.b16 %v191
  %v2704 = vunpack.c.l.b16 %v192
  %v2705 = vunpack.c.l.b16 %v193
  %v2706 = vunpack.c.l.b16 %v194
  %v2707 = vunpack.c.l.b16 %v195
  %v2708 = vunpack.c.l.b16 %v196
  %v2709 = vunpack.c.l.b16 %v197
  %v2710 = vunpack.c.l.b16 %v198
  %v2711 = vunpack.c.l.b16 %v199
  %v2712 = vunpack.c.l.b16 %v200
  %v2713 = vunpack.c.l.b16 %v201
  %v2714 = vunpack.c.l.b16 %v202
  %v2715 = vunpack.c.l.b16 %v203
  %v2716 = vunpack.c.l.b16 %v204
  %v2717 = vunpack.c.l.b16 %v205
  %v2718 = vunpack.c.l.b16 %v206
  %v2719 = vunpack.c.l.b16 %v207
  %v2720 = vunpack.c.l.b16 %v208
  %v2721 = vunpack.c.l.b16 %v209
  %v2722 = vunpack.c.l.b16 %v210
  %v2723 = vunpack.c.l.b16 %v211
  %v2724 = vunpack.c.l.b16 %v212
  %v2725 = vunpack.c.l.b16 %v213
  %v2726 = vunpack.c.l.b16 %v214
  %v2727 = vunpack.c.l.b16 %v215
  %v2728 = vunpack.c.l.b16 %v216
  %v2729 = vunpack.c.l.b16 %v217
  %v2730 = vunpack.c.l.b16 %v218
  %v2731 = vunpack.c.l.b16 %v219
  %v2732 = vunpack.c.l.b16 %v220
  %v2733 = vunpack.c.l.b16 %v221
  %v2734 = vunpack.c.l.b16 %v222
  %v2735 = vunpack.c.l.b16 %v223
  %v2736 = vunpack.c.l.b16 %v224
  %v2737 = vunpack.c.l.b16 %v225
  %v2738 = vunpack.c.l.b16 %v226
  %v2739 = vunpack.c.l.b16 %v227
  %v2740 = vunpack.c.l.b16 %v228
  %v2741 = vunpack.c.l.b16 %v229
  %v2742 = vunpack.c.l.b16 %v230
  %v2743 = vunpack.c.l.b16 %v231
  %v2744 = vunpack.c.l.b16 %v232
  %v2745 = vunpack.c.l.b16 %v233
  %v2746 = vunpack.c.l.b16 %v234
  %v2747 = vunpack.c.l.b16 %v235
  %v2748 = vunpack.c.l.b16 %v236
  %v2749 = vunpack.c.l.b16 %v237
  %v2750 = vunpack.c.l.b16 %v238
  %v2751 = vunpack.c.l.b16 %v239
  %v2752 = vunpack.c.l.b16 %v240
  %v2753 = vunpack.c.l.b16 %v241
  %v2754 = vunpack.c.l.b16 %v242
  %v2755 = vunpack.c.l.b16 %v243
  %v2756 = vunpack.c.l.b16 %v244
  %v2757 = vunpack.c.l.b16 %v245
  %v2758 = vunpack.c.l.b16 %v246
  %v2759 = vunpack.c.l.b16 %v247
  %v2760 = vunpack.c.l.b16 %v248
  %v2761 = vunpack.c.l.b16 %v249
  %v2762 = vunpack.c.l.b16 %v250
  %v2763 = vunpack.c.l.b16 %v251
  %v2764 = vunpack.c.l.b16 %v252
  %v2765 = vunpack.c.l.b16 %v253
  %v2766 = vunpack.c.l.b16 %v254
  %v2767 = vunpack.c.l.b16 %v255
  %v2768 = vunpack.c.l.b16 %v256
  %v2769 = vunpack.c.l.b16 %v257
  %v2770 = vunpack.c.l.b16 %v258
  %v2771 = vunpack.c.l.b16 %v259
  %v2772 = vunpack.c.l.b16 %v260
  %v2773 = vunpack.c.l.b16 %v261
  %v2774 = vunpack.c.l.b16 %v262
  %v2775 = vunpack.c.l.b16 %v263
  %v2776 = vunpack.c.l.b16 %v264
  %v2777 = vunpack.c.l.b16 %v265
  %v2778 = vunpack.c.l.b16 %v266
  %v2779 = vunpack.c.l.b16 %v267
  %v2780 = vunpack.c.l.b16 %v268
  %v2781 = vunpack.c.l.b16 %v269
  %v2782 = vunpack.c.l.b16 %v270
  %v2783 = vunpack.c.l.b16 %v271
  %v2784 = vunpack.c.l.b16 %v272
  %v2785 = vunpack.c.l.b16 %v273
  %v2786 = vunpack.c.l.b16 %v274
  %v2787 = vunpack.c.l.b16 %v275
  %v2788 = vunpack.c.l.b16 %v276
  %v2789 = vunpack.c.l.b16 %v277
  %v2790 = vunpack.c.l.b16 %v278
  %v2791 = vunpack.c.l.b16 %v279
  %v2792 = vunpack.c.l.b16 %v280
  %v2793 = vunpack.c.l.b16 %v281
  %v2794 = vunpack.c.l.b16 %v282
  %v2795 = vunpack.c.l.b16 %v283
  %v2796 = vunpack.c.l.b16 %v284
  %v2797 = vunpack.c.l.b16 %v285
  %v2798 = vunpack.c.l.b16 %v286
  %v2799 = vunpack.c.l.b16 %v287
  %v2800 = vunpack.c.l.b16 %v288
  %v2801 = vunpack.c.l.b16 %v289
  %v2802 = vunpack.c.l.b16 %v290
  %v2803 = vunpack.c.l.b16 %v291
  %v2804 = vunpack.c.l.b16 %v292
  %v2805 = vunpack.c.l.b16 %v293
  %v2806 = vunpack.c.l.b16 %v294
  %v2807 = vunpack.c.l.b16 %v295
  %v2808 = vunpack.c.l.b16 %v296
  %v2809 = vunpack.c.l.b16 %v297
  %v2810 = vunpack.c.l.b16 %v298
  %v2811 = vunpack.c.l.b16 %v299
  %v2812 = vunpack.c.l.b16 %v300
  %v2813 = vunpack.c.l.b16 %v301
  %v2814 = vunpack.c.l.b16 %v302
  %v2815 = vunpack.c.l.b16 %v303
  %v2816 = vunpack.c.l.b16 %v304
  %v2817 = vunpack.c.l.b16 %v305
  %v2818 = vunpack.c.l.b16 %v306
  %v2819 = vunpack.c.l.b16 %v307
  %v2820 = vunpack.c.l.b16 %v308
  %v2821 = vunpack.c.l.b16 %v309
  %v2822 = vunpack.c.l.b16 %v310
  %v2823 = vunpack.c.l.b16 %v311
  %v2824 = vunpack.c.l.b16 %v312
  %v2825 = vunpack.c.l.b16 %v313
  %v2826 = vunpack.c.l.b16 %v314
  %v2827 = vunpack.c.l.b16 %v315
  %v2828 = vunpack.c.l.b16 %v316
  %v2829 = vunpack.c.l.b16 %v317
  %v2830 = vunpack.c.l.b16 %v318
  %v2831 = vunpack.c.l.b16 %v319
  %v2832 = vunpack.c.l.b16 %v320
  %v2833 = vunpack.c.l.b16 %v321
  %v2834 = vunpack.c.l.b16 %v322
  %v2835 = vunpack.c.l.b16 %v323
  %v2836 = vunpack.c.l.b16 %v324
  %v2837 = vunpack.c.l.b16 %v325
  %v2838 = vunpack.c.l.b16 %v326
  %v2839 = vunpack.c.l.b16 %v327
  %v2840 = vunpack.c.l.b16 %v328
  %v2841 = vunpack.c.l.b16 %v329
  %v2842 = vunpack.c.l.b16 %v330
  %v2843 = vunpack.c.l.b16 %v331
  %v2844 = vunpack.c.l.b16 %v332
  %v2845 = vunpack.c.l.b16 %v333
  %v2846 = vunpack.c.l.b16 %v334
  %v2847 = vunpack.c.l.b16 %v335
  %v2848 = vunpack.c.l.b16 %v336
  %v2849 = vunpack.c.l.b16 %v337
  %v2850 = vunpack.c.l.b16 %v338
  %v2851 = vunpack.c.l.b16 %v339
  %v2852 = vunpack.c.l.b16 %v340
  %v2853 = vunpack.c.l.b16 %v341
  %v2854 = vunpack.c.l.b16 %v342
  %v2855 = vunpack.c.l.b16 %v343
  %v2856 = vunpack.c.l.b16 %v344
  %v2857 = vunpack.c.l.b16 %v345
  %v2858 = vunpack.c.l.b16 %v346
  %v2859 = vunpack.c.l.b16 %v347
  %v2860 = vunpack.c.l.b16 %v348
  %v2861 = vunpack.c.l.b16 %v349
  %v2862 = vunpack.c.l.b16 %v350
  %v2863 = vunpack.c.l.b16 %v351
  %v2864 = vunpack.c.l.b16 %v352
  %v2865 = vunpack.c.l.b16 %v353
  %v2866 = vunpack.c.l.b16 %v354
  %v2867 = vunpack.c.l.b16 %v355
  %v2868 = vunpack.c.l.b16 %v356
  %v2869 = vunpack.c.l.b16 %v357
  %v2870 = vunpack.c.l.b16 %v358
  %v2871 = vunpack.c.l.b16 %v359
  %v2872 = vunpack.c.l.b16 %v360
  %v2873 = vunpack.c.l.b16 %v361
  %v2874 = vunpack.c.l.b16 %v362
  %v2875 = vunpack.c.l.b16 %v363
  %v2876 = vunpack.c.l.b16 %v364
  %v2877 = vunpack.c.l.b16 %v365
  %v2878 = vunpack.c.l.b16 %v366
  %v2879 = vunpack.c.l.b16 %v367
  %v2880 = vunpack.c.l.b16 %v368
  %v2881 = vunpack.c.l.b16 %v369
  %v2882 = vunpack.c.l.b16 %v370
  %v2883 = vunpack.c.l.b16 %v371
  %v2884 = vunpack.c.l.b16 %v372
  %v2885 = vunpack.c.l.b16 %v373
  %v2886 = vunpack.c.l.b16 %v374
  %v2887 = vunpack.c.l.b16 %v375
  %v2888 = vunpack.c.l.b16 %v376
  %v2889 = vunpack.c.l.b16 %v377
  %v2890 = vunpack.c.l.b16 %v378
  %v2891 = vunpack.c.l.b16 %v379
  %v2892 = vunpack.c.l.b16 %v380
  %v2893 = vunpack.c.l.b16 %v381
  %v2894 = vunpack.c.l.b16 %v382
  %v2895 = vunpack.c.l.b16 %v383
  %v2896 = vunpack.c.l.b16 %v384
  %v2897 = vunpack.c.l.b16 %v385
  %v2898 = vunpack.c.l.b16 %v386
  %v2899 = vunpack.c.l.b16 %v387
  %v2900 = vunpack.c.l.b16 %v388
  %v2901 = vunpack.c.l.b16 %v389
  %v2902 = vunpack.c.l.b16 %v390
  %v2903 = vunpack.c.l.b16 %v391
  %v2904 = vunpack.c.l.b16 %v392
  %v2905 = vunpack.c.l.b16 %v393
  %v2906 = vunpack.c.l.b16 %v394
  %v2907 = vunpack.c.l.b16 %v395
  %v2908 = vunpack.c.l.b16 %v396
  %v2909 = vunpack.c.l.b16 %v397
  %v2910 = vunpack.c.l.b16 %v398
  %v2911 = vunpack.c.l.b16 %v399
  %v2912 = vunpack.c.l.b16 %v400
  %v2913 = vunpack.c.l.b16 %v401
  %v2914 = vunpack.c.l.b16 %v402
  %v2915 = vunpack.c.l.b16 %v403
  %v2916 = vunpack.c.l.b16 %v404
  %v2917 = vunpack.c.l.b16 %v405
  %v2918 = vunpack.c.l.b16 %v406
  %v2919 = vunpack.c.l.b16 %v407
  %v2920 = vunpack.c.l.b16 %v408
  %v2921 = vunpack.c.l.b16 %v409
  %v2922 = vunpack.c.l.b16 %v410
  %v2923 = vunpack.c.l.b16 %v411
  %v2924 = vunpack.c.l.b16 %v412
  %v2925 = vunpack.c.l.b16 %v413
  %v2926 = vunpack.c.l.b16 %v414
  %v2927 = vunpack.c.l.b16 %v415
  %v2928 = vunpack.c.l.b16 %v416
  %v2929 = vunpack.c.l.b16 %v417
  %v2930 = vunpack.c.l.b16 %v418
  %v2931 = vunpack.c.l.b16 %v419
  %v2932 = vunpack.c.l.b16 %v420
  %v2933 = vunpack.c.l.b16 %v421
  %v2934 = vunpack.c.l.b16 %v422
  %v2935 = vunpack.c.l.b16 %v423
  %v2936 = vunpack.c.l.b16 %v424
  %v2937 = vunpack.c.l.b16 %v425
  %v2938 = vunpack.c.l.b16 %v426
  %v2939 = vunpack.c.l.b16 %v427
  %v2940 = vunpack.c.l.b16 %v428
  %v2941 = vunpack.c.l.b16 %v429
  %v2942 = vunpack.c.l.b16 %v430
  %v2943 = vunpack.c.l.b16 %v431
  %v2944 = vunpack.c.l.b16 %v432
  %v2945 = vunpack.c.l.b16 %v433
  %v2946 = vunpack.c.l.b16 %v434
  %v2947 = vunpack.c.l.b16 %v435
  %v2948 = vunpack.c.l.b16 %v436
  %v2949 = vunpack.c.l.b16 %v437
  %v2950 = vunpack.c.l.b16 %v438
  %v2951 = vunpack.c.l.b16 %v439
  %v2952 = vunpack.c.l.b16 %v440
  %v2953 = vunpack.c.l.b16 %v441
  %v2954 = vunpack.c.l.b16 %v442
  %v2955 = vunpack.c.l.b16 %v443
  %v2956 = vunpack.c.l.b16 %v444
  %v2957 = vunpack.c.l.b16 %v445
  %v2958 = vunpack.c.l.b16 %v446
  %v2959 = vunpack.c.l.b16 %v447
  %v2960 = vunpack.c.l.b16 %v448
  %v2961 = vunpack.c.l.b16 %v449
  %v2962 = vunpack.c.l.b16 %v450
  %v2963 = vunpack.c.l.b16 %v451
  %v2964 = vunpack.c.l.b16 %v452
  %v2965 = vunpack.c.l.b16 %v453
  %v2966 = vunpack.c.l.b16 %v454
  %v2967 = vunpack.c.l.b16 %v455
  %v2968 = vunpack.c.l.b16 %v456
  %v2969 = vunpack.c.l.b16 %v457
  %v2970 = vunpack.c.l.b16 %v458
  %v2971 = vunpack.c.l.b16 %v459
  %v2972 = vunpack.c.l.b16 %v460
  %v2973 = vunpack.c.l.b16 %v461
  %v2974 = vunpack.c.l.b16 %v462
  %v2975 = vunpack.c.l.b16 %v463
  %v2976 = vunpack.c.l.b16 %v464
  %v2977 = vunpack.c.l.b16 %v465
  %v2978 = vunpack.c.l.b16 %v466
  %v2979 = vunpack.c.l.b16 %v467
  %v2980 = vunpack.c.l.b16 %v468
  %v2981 = vunpack.c.l.b16 %v469
  %v2982 = vunpack.c.l.b16 %v470
  %v2983 = vunpack.c.l.b16 %v471
  %v2984 = vunpack.c.l.b16 %v472
  %v2985 = vunpack.c.l.b16 %v473
  %v2986 = vunpack.c.l.b16 %v474
  %v2987 = vunpack.c.l.b16 %v475
  %v2988 = vunpack.c.l.b16 %v476
  %v2989 = vunpack.c.l.b16 %v477
  %v2990 = vunpack.c.l.b16 %v478
  %v2991 = vunpack.c.l.b16 %v479
  %v2992 = vunpack.c.l.b16 %v480
  %v2993 = vunpack.c.l.b16 %v481
  %v2994 = vunpack.c.l.b16 %v482
  %v2995 = vunpack.c.l.b16 %v483
  %v2996 = vunpack.c.l.b16 %v484
  %v2997 = vunpack.c.l.b16 %v485
  %v2998 = vunpack.c.l.b16 %v486
  %v2999 = vunpack.c.l.b16 %v487
  %v3000 = vunpack.c.l.b16 %v488
  %v3001 = vunpack.c.l.b16 %v489
  %v3002 = vunpack.c.l.b16 %v490
  %v3003 = vunpack.c.l.b16 %v491
  %v3004 = vunpack.c.l.b16 %v492
  %v3005 = vunpack.c.l.b16 %v493
  %v3006 = vunpack.c.l.b16 %v494
  %v3007 = vunpack.c.l.b16 %v495
  %v3008 = vunpack.c.l.b16 %v496
  %v3009 = vunpack.c.l.b16 %v497
  %v3010 = vunpack.c.l.b16 %v498
  %v3011 = vunpack.c.l.b16 %v499
  %v3012 = vunpack.c.l.b16 %v500
  %v3013 = vunpack.c.l.b16 %v501
  %v3014 = vunpack.c.l.b16 %v502
  %v3015 = vunpack.c.l.b16 %v503
  %v3016 = vunpack.c.l.b16 %v504
  %v3017 = vunpack.c.l.b16 %v505
  %v3018 = vunpack.c.l.b16 %v506
  %v3019 = vunpack.c.l.b16 %v507
  %v3020 = vunpack.c.l.b16 %v508
  %v3021 = vunpack.c.l.b16 %v509
  %v3022 = vunpack.c.l.b16 %v510
  %v3023 = vunpack.c.l.b16 %v511
  %v3024 = vunpack.c.l.b16 %v512
  %v3025 = vunpack.c.l.b16 %v513
  %v3026 = vunpack.c.l.b16 %v514
  %v3027 = vunpack.c.l.b16 %v515
  %v3028 = vunpack.c.l.b16 %v516
  %v3029 = vunpack.c.l.b16 %v517
  %v3030 = vunpack.c.l.b16 %v518
  %v3031 = vunpack.c.l.b16 %v519
  %v3032 = vunpack.c.l.b16 %v520
  %v3033 = vunpack.c.l.b16 %v521
  %v3034 = vunpack.c.l.b16 %v522
  %v3035 = vunpack.c.l.b16 %v523
  %v3036 = vunpack.c.l.b16 %v524
  %v3037 = vunpack.c.l.b16 %v525
  %v3038 = vunpack.c.l.b16 %v526
  %v3039 = vunpack.c.l.b16 %v527
  %v3040 = vunpack.c.l.b16 %v528
  %v3041 = vunpack.c.l.b16 %v529
  %v3042 = vunpack.c.l.b16 %v530
  %v3043 = vunpack.c.l.b16 %v531
  %v3044 = vunpack.c.l.b16 %v532
  %v3045 = vunpack.c.l.b16 %v533
  %v3046 = vunpack.c.l.b16 %v534
  %v3047 = vunpack.c.l.b16 %v535
  %v3048 = vunpack.c.l.b16 %v536
  %v3049 = vunpack.c.l.b16 %v537
  %v3050 = vunpack.c.l.b16 %v538
  %v3051 = vunpack.c.l.b16 %v539
  %v3052 = vunpack.c.l.b16 %v540
  %v3053 = vunpack.c.l.b16 %v541
  %v3054 = vunpack.c.l.b16 %v542
  %v3055 = vunpack.c.l.b16 %v543
  %v3056 = vunpack.c.l.b16 %v544
  %v3057 = vunpack.c.l.b16 %v545
  %v3058 = vunpack.c.l.b16 %v546
  %v3059 = vunpack.c.l.b16 %v547
  %v3060 = vunpack.c.l.b16 %v548
  %v3061 = vunpack.c.l.b16 %v549
  %v3062 = vunpack.c.l.b16 %v550
  %v3063 = vunpack.c.l.b16 %v551
  %v3064 = vunpack.c.l.b16 %v552
  %v3065 = vunpack.c.l.b16 %v553
  %v3066 = vunpack.c.l.b16 %v554
  %v3067 = vunpack.c.l.b16 %v555
  %v3068 = vunpack.c.l.b16 %v556
  %v3069 = vunpack.c.l.b16 %v557
  %v3070 = vunpack.c.l.b16 %v558
  %v3071 = vunpack.c.l.b16 %v559
  %v3072 = vunpack.c.l.b16 %v560
  %v3073 = vunpack.c.l.b16 %v561
  %v3074 = vunpack.c.l.b16 %v562
  %v3075 = vunpack.c.l.b16 %v563
  %v3076 = vunpack.c.l.b16 %v564
  %v3077 = vunpack.c.l.b16 %v565
  %v3078 = vunpack.c.l.b16 %v566
  %v3079 = vunpack.c.l.b16 %v567
  %v3080 = vunpack.c.l.b16 %v568
  %v3081 = vunpack.c.l.b16 %v569
  %v3082 = vunpack.c.l.b16 %v570
  %v3083 = vunpack.c.l.b16 %v571
  %v3084 = vunpack.c.l.b16 %v572
  %v3085 = vunpack.c.l.b16 %v573
  %v3086 = vunpack.c.l.b16 %v574
  %v3087 = vunpack.c.l.b16 %v575
  %v3088 = vunpack.c.l.b16 %v576
  %v3089 = vunpack.c.l.b16 %v577
  %v3090 = vunpack.c.l.b16 %v578
  %v3091 = vunpack.c.l.b16 %v579
  %v3092 = vunpack.c.l.b16 %v580
  %v3093 = vunpack.c.l.b16 %v581
  %v3094 = vunpack.c.l.b16 %v582
  %v3095 = vunpack.c.l.b16 %v583
  %v3096 = vunpack.c.l.b16 %v584
  %v3097 = vunpack.c.l.b16 %v585
  %v3098 = vunpack.c.l.b16 %v586
  %v3099 = vunpack.c.l.b16 %v587
  %v3100 = vunpack.c.l.b16 %v588
  %v3101 = vunpack.c.l.b16 %v589
  %v3102 = vunpack.c.l.b16 %v590
  %v3103 = vunpack.c.l.b16 %v591
  %v3104 = vunpack.c.l.b16 %v592
  %v3105 = vunpack.c.l.b16 %v593
  %v3106 = vunpack.c.l.b16 %v594
  %v3107 = vunpack.c.l.b16 %v595
  %v3108 = vunpack.c.l.b16 %v596
  %v3109 = vunpack.c.l.b16 %v597
  %v3110 = vunpack.c.l.b16 %v598
  %v3111 = vunpack.c.l.b16 %v599
  %v3112 = vunpack.c.l.b16 %v600
  %v3113 = vunpack.c.l.b16 %v601
  %v3114 = vunpack.c.l.b16 %v602
  %v3115 = vunpack.c.l.b16 %v603
  %v3116 = vunpack.c.l.b16 %v604
  %v3117 = vunpack.c.l.b16 %v605
  %v3118 = vunpack.c.l.b16 %v606
  %v3119 = vunpack.c.l.b16 %v607
  %v3120 = vunpack.c.l.b16 %v608
  %v3121 = vunpack.c.l.b16 %v609
  %v3122 = vunpack.c.l.b16 %v610
  %v3123 = vunpack.c.l.b16 %v611
  %v3124 = vunpack.c.l.b16 %v612
  %v3125 = vunpack.c.l.b16 %v613
  %v3126 = vunpack.c.l.b16 %v614
  %v3127 = vunpack.c.l.b16 %v615
  %v3128 = vunpack.c.l.b16 %v616
  %v3129 = vunpack.c.l.b16 %v617
  %v3130 = vunpack.c.l.b16 %v618
  %v3131 = vunpack.c.l.b16 %v619
  %v3132 = vunpack.c.l.b16 %v620
  %v3133 = vunpack.c.l.b16 %v621
  %v3134 = vunpack.c.l.b16 %v622
  %v3135 = vunpack.c.l.b16 %v623
  %v3136 = vunpack.c.l.b16 %v624
  %v3137 = vunpack.c.l.b16 %v625
  %v3138 = vunpack.c.l.b16 %v626
  %v3139 = vunpack.c.l.b16 %v627
  %v3140 = vunpack.c.l.b16 %v628
  %v3141 = vunpack.c.l.b16 %v629
  %v3142 = vunpack.c.l.b16 %v630
  %v3143 = vunpack.c.l.b16 %v631
  %v3144 = vunpack.c.l.b16 %v632
  %v3145 = vunpack.c.l.b16 %v633
  %v3146 = vunpack.c.l.b16 %v634
  %v3147 = vunpack.c.l.b16 %v635
  %v3148 = vunpack.c.l.b16 %v636
  %v3149 = vunpack.c.l.b16 %v637
  %v3150 = vunpack.c.l.b16 %v638
  %v3151 = vunpack.c.l.b16 %v639
  %v3152 = vunpack.c.l.b16 %v640
  %v3153 = vunpack.c.l.b16 %v641
  %v3154 = vunpack.c.l.b16 %v642
  %v3155 = vunpack.c.l.b16 %v643
  %v3156 = vunpack.c.l.b16 %v644
  %v3157 = vunpack.c.l.b16 %v645
  %v3158 = vunpack.c.l.b16 %v646
  %v3159 = vunpack.c.l.b16 %v647
  %v3160 = vunpack.c.l.b16 %v648
  %v3161 = vunpack.c.l.b16 %v649
  %v3162 = vunpack.c.l.b16 %v650
  %v3163 = vunpack.c.l.b16 %v651
  %v3164 = vunpack.c.l.b16 %v652
  %v3165 = vunpack.c.l.b16 %v653
  %v3166 = vunpack.c.l.b16 %v654
  %v3167 = vunpack.c.l.b16 %v655
  %v3168 = vunpack.c.l.b16 %v656
  %v3169 = vunpack.c.l.b16 %v657
  %v3170 = vunpack.c.l.b16 %v658
  %v3171 = vunpack.c.l.b16 %v659
  %v3172 = vunpack.c.l.b16 %v660
  %v3173 = vunpack.c.l.b16 %v661
  %v3174 = vunpack.c.l.b16 %v662
  %v3175 = vunpack.c.l.b16 %v663
  %v3176 = vunpack.c.l.b16 %v664
  %v3177 = vunpack.c.l.b16 %v665
  %v3178 = vunpack.c.l.b16 %v666
  %v3179 = vunpack.c.l.b16 %v667
  %v3180 = vunpack.c.l.b16 %v668
  %v3181 = vunpack.c.l.b16 %v669
  %v3182 = vunpack.c.l.b16 %v670
  %v3183 = vunpack.c.l.b16 %v671
  %v3184 = vunpack.c.l.b16 %v672
  %v3185 = vunpack.c.l.b16 %v673
  %v3186 = vunpack.c.l.b16 %v674
  %v3187 = vunpack.c.l.b16 %v675
  %v3188 = vunpack.c.l.b16 %v676
  %v3189 = vunpack.c.l.b16 %v677
  %v3190 = vunpack.c.l.b16 %v678
  %v3191 = vunpack.c.l.b16 %v679
  %v3192 = vunpack.c.l.b16 %v680
  %v3193 = vunpack.c.l.b16 %v681
  %v3194 = vunpack.c.l.b16 %v682
  %v3195 = vunpack.c.l.b16 %v683
  %v3196 = vunpack.c.l.b16 %v684
  %v3197 = vunpack.c.l.b16 %v685
  %v3198 = vunpack.c.l.b16 %v686
  %v3199 = vunpack.c.l.b16 %v687
  %v3200 = vunpack.c.l.b16 %v688
  %v3201 = vunpack.c.l.b16 %v689
  %v3202 = vunpack.c.l.b16 %v690
  %v3203 = vunpack.c.l.b16 %v691
  %v3204 = vunpack.c.l.b16 %v692
  %v3205 = vunpack.c.l.b16 %v693
  %v3206 = vunpack.c.l.b16 %v694
  %v3207 = vunpack.c.l.b16 %v695
  %v3208 = vunpack.c.l.b16 %v696
  %v3209 = vunpack.c.l.b16 %v697
  %v3210 = vunpack.c.l.b16 %v698
  %v3211 = vunpack.c.l.b16 %v699
  %v3212 = vunpack.c.l.b16 %v700
  %v3213 = vunpack.c.l.b16 %v701
  %v3214 = vunpack.c.l.b16 %v702
  %v3215 = vunpack.c.l.b16 %v703
  %v3216 = vunpack.c.l.b16 %v704
  %v3217 = vunpack.c.l.b16 %v705
  %v3218 = vunpack.c.l.b16 %v706
  %v3219 = vunpack.c.l.b16 %v707
  %v3220 = vunpack.c.l.b16 %v708
  %v3221 = vunpack.c.l.b16 %v709
  %v3222 = vunpack.c.l.b16 %v710
  %v3223 = vunpack.c.l.b16 %v711
  %v3224 = vunpack.c.l.b16 %v712
  %v3225 = vunpack.c.l.b16 %v713
  %v3226 = vunpack.c.l.b16 %v714
  %v3227 = vunpack.c.l.b16 %v715
  %v3228 = vunpack.c.l.b16 %v716
  %v3229 = vunpack.c.l.b16 %v717
  %v3230 = vunpack.c.l.b16 %v718
  %v3231 = vunpack.c.l.b16 %v719
  %v3232 = vunpack.c.l.b16 %v720
  %v3233 = vunpack.c.l.b16 %v721
  %v3234 = vunpack.c.l.b16 %v722
  %v3235 = vunpack.c.l.b16 %v723
  %v3236 = vunpack.c.l.b16 %v724
  %v3237 = vunpack.c.l.b16 %v725
  %v3238 = vunpack.c.l.b16 %v726
  %v3239 = vunpack.c.l.b16 %v727
  %v3240 = vunpack.c.l.b16 %v728
  %v3241 = vunpack.c.l.b16 %v729
  %v3242 = vunpack.c.l.b16 %v730
  %v3243 = vunpack.c.l.b16 %v731
  %v3244 = vunpack.c.l.b16 %v732
  %v3245 = vunpack.c.l.b16 %v733
  %v3246 = vunpack.c.l.b16 %v734
  %v3247 = vunpack.c.l.b16 %v735
  %v3248 = vunpack.c.l.b16 %v736
  %v3249 = vunpack.c.l.b16 %v737
  %v3250 = vunpack.c.l.b16 %v738
  %v3251 = vunpack.c.l.b16 %v739
  %v3252 = vunpack.c.l.b16 %v740
  %v3253 = vunpack.c.l.b16 %v741
  %v3254 = vunpack.c.l.b16 %v742
  %v3255 = vunpack.c.l.b16 %v743
  %v3256 = vunpack.c.l.b16 %v744
  %v3257 = vunpack.c.l.b16 %v745
  %v3258 = vunpack.c.l.b16 %v746
  %v3259 = vunpack.c.l.b16 %v747
  %v3260 = vunpack.c.l.b16 %v748
  %v3261 = vunpack.c.l.b16 %v749
  %v3262 = vunpack.c.l.b16 %v750
  %v3263 = vunpack.c.l.b16 %v751
  %v3264 = vunpack.c.l.b16 %v752
  %v3265 = vunpack.c.l.b16 %v753
  %v3266 = vunpack.c.l.b16 %v754
  %v3267 = vunpack.c.l.b16 %v755
  %v3268 = vunpack.c.l.b16 %v756
  %v3269 = vunpack.c.l.b16 %v757
  %v3270 = vunpack.c.l.b16 %v758
  %v3271 = vunpack.c.l.b16 %v759
  %v3272 = vunpack.c.l.b16 %v760
  %v3273 = vunpack.c.l.b16 %v761
  %v3274 = vunpack.c.l.b16 %v762
  %v3275 = vunpack.c.l.b16 %v763
  %v3276 = vunpack.c.l.b16 %v764
  %v3277 = vunpack.c.l.b16 %v765
  %v3278 = vunpack.c.l.b16 %v766
  %v3279 = vunpack.c.l.b16 %v767
  %v3280 = vunpack.c.l.b16 %v768
  %v3281 = vunpack.c.l.b16 %v769
  %v3282 = vunpack.c.l.b16 %v770
  %v3283 = vunpack.c.l.b16 %v771
  %v3284 = vunpack.c.l.b16 %v772
  %v3285 = vunpack.c.l.b16 %v773
  %v3286 = vunpack.c.l.b16 %v774
  %v3287 = vunpack.c.l.b16 %v775
  %v3288 = vunpack.c.l.b16 %v776
  %v3289 = vunpack.c.l.b16 %v777
  %v3290 = vunpack.c.l.b16 %v778
  %v3291 = vunpack.c.l.b16 %v779
  %v3292 = vunpack.c.l.b16 %v780
  %v3293 = vunpack.c.l.b16 %v781
  %v3294 = vunpack.c.l.b16 %v782
  %v3295 = vunpack.c.l.b16 %v783
  %v3296 = vunpack.c.l.b16 %v784
  %v3297 = vunpack.c.l.b16 %v785
  %v3298 = vunpack.c.l.b16 %v786
  %v3299 = vunpack.c.l.b16 %v787
  %v3300 = vunpack.c.l.b16 %v788
  %v3301 = vunpack.c.l.b16 %v789
  %v3302 = vunpack.c.l.b16 %v790
  %v3303 = vunpack.c.l.b16 %v791
  %v3304 = vunpack.c.l.b16 %v792
  %v3305 = vunpack.c.l.b16 %v793
  %v3306 = vunpack.c.l.b16 %v794
  %v3307 = vunpack.c.l.b16 %v795
  %v3308 = vunpack.c.l.b16 %v796
  %v3309 = vunpack.c.l.b16 %v797
  %v3310 = vunpack.c.l.b16 %v798
  %v3311 = vunpack.c.l.b16 %v799
  %v3312 = vunpack.c.l.b16 %v800
  %v3313 = vunpack.c.l.b16 %v801
  %v3314 = vunpack.c.l.b16 %v802
  %v3315 = vunpack.c.l.b16 %v803
  %v3316 = vunpack.c.l.b16 %v804
  %v3317 = vunpack.c.l.b16 %v805
  %v3318 = vunpack.c.l.b16 %v806
  %v3319 = vunpack.c.l.b16 %v807
  %v3320 = vunpack.c.l.b16 %v808
  %v3321 = vunpack.c.l.b16 %v809
  %v3322 = vunpack.c.l.b16 %v810
  %v3323 = vunpack.c.l.b16 %v811
  %v3324 = vunpack.c.l.b16 %v812
  %v3325 = vunpack.c.l.b16 %v813
  %v3326 = vunpack.c.l.b16 %v814
  %v3327 = vunpack.c.l.b16 %v815
  %v3328 = vunpack.c.l.b16 %v816
  %v3329 = vunpack.c.l.b16 %v817
  %v3330 = vunpack.c.l.b16 %v818
  %v3331 = vunpack.c.l.b16 %v819
  %v3332 = vunpack.c.l.b16 %v820
  %v3333 = vunpack.c.l.b16 %v821
  %v3334 = vunpack.c.l.b16 %v822
  %v3335 = vunpack.c.l.b16 %v823
  %v3336 = vunpack.c.l.b16 %v824
  %v3337 = vunpack.c.l.b16 %v825
  %v3338 = vunpack.c.l.b16 %v826
  %v3339 = vunpack.c.l.b16 %v827
  %v3340 = vunpack.c.l.b16 %v828
  %v3341 = vunpack.c.l.b16 %v829
  %v3342 = vunpack.c.l.b16 %v830
  %v3343 = vunpack.c.l.b16 %v831
  %v3344 = vunpack.c.l.b16 %v832
  %v3345 = vunpack.c.l.b16 %v833
  %v3346 = vunpack.c.l.b16 %v834
  %v3347 = vunpack.c.l.b16 %v835
  %v3348 = vunpack.c.l.b16 %v836
  %v3349 = vunpack.c.l.b16 %v837
  %v3350 = vunpack.c.l.b16 %v838
  %v3351 = vunpack.c.l.b16 %v839
  %v3352 = vunpack.c.l.b16 %v840
  %v3353 = vunpack.c.l.b16 %v841
  %v3354 = vunpack.c.l.b16 %v842
  %v3355 = vunpack.c.l.b16 %v843
  %v3356 = vunpack.c.l.b16 %v844
  %v3357 = vunpack.c.l.b16 %v845
  %v3358 = vunpack.c.l.b16 %v846
  %v3359 = vunpack.c.l.b16 %v847
  %v3360 = vunpack.c.l.b16 %v848
  %v3361 = vunpack.c.l.b16 %v849
  %v3362 = vunpack.c.l.b16 %v850
  %v3363 = vunpack.c.l.b16 %v851
  %v3364 = vunpack.c.l.b16 %v852
  %v3365 = vunpack.c.l.b16 %v853
  %v3366 = vunpack.c.l.b16 %v854
  %v3367 = vunpack.c.l.b16 %v855
  %v3368 = vunpack.c.l.b16 %v856
  %v3369 = vunpack.c.l.b16 %v857
  %v3370 = vunpack.c.l.b16 %v858
  %v3371 = vunpack.c.l.b16 %v859
  %v3372 = vunpack.c.l.b16 %v860
  %v3373 = vunpack.c.l.b16 %v861
  %v3374 = vunpack.c.l.b16 %v862
  %v3375 = vunpack.c.l.b16 %v863
  %v3376 = vunpack.c.l.b16 %v864
  %v3377 = vunpack.c.l.b16 %v865
  %v3378 = vunpack.c.l.b16 %v866
  %v3379 = vunpack.c.l.b16 %v867
  %v3380 = vunpack.c.l.b16 %v868
  %v3381 = vunpack.c.l.b16 %v869
  %v3382 = vunpack.c.l.b16 %v870
  %v3383 = vunpack.c.l.b16 %v871
  %v3384 = vunpack.c.l.b16 %v872
  %v3385 = vunpack.c.l.b16 %v873
  %v3386 = vunpack.c.l.b16 %v874
  %v3387 = vunpack.c.l.b16 %v875
  %v3388 = vunpack.c.l.b16 %v876
  %v3389 = vunpack.c.l.b16 %v877
  %v3390 = vunpack.c.l.b16 %v878
  %v3391 = vunpack.c.l.b16 %v879
  %v3392 = vunpack.c.l.b16 %v880
  %v3393 = vunpack.c.l.b16 %v881
  %v3394 = vunpack.c.l.b16 %v882
  %v3395 = vunpack.c.l.b16 %v883
  %v3396 = vunpack.c.l.b16 %v884
  %v3397 = vunpack.c.l.b16 %v885
  %v3398 = vunpack.c.l.b16 %v886
  %v3399 = vunpack.c.l.b16 %v887
  %v3400 = vunpack.c.l.b16 %v888
  %v3401 = vunpack.c.l.b16 %v889
  %v3402 = vunpack.c.l.b16 %v890
  %v3403 = vunpack.c.l.b16 %v891
  %v3404 = vunpack.c.l.b16 %v892
  %v3405 = vunpack.c.l.b16 %v893
  %v3406 = vunpack.c.l.b16 %v894
  %v3407 = vunpack.c.l.b16 %v895
  %v3408 = vunpack.c.l.b16 %v896
  %v3409 = vunpack.c.l.b16 %v897
  %v3410 = vunpack.c.l.b16 %v898
  %v3411 = vunpack.c.l.b16 %v899
  %v3412 = vunpack.c.l.b16 %v900
  %v3413 = vunpack.c.l.b16 %v901
  %v3414 = vunpack.c.l.b16 %v902
  %v3415 = vunpack.c.l.b16 %v903
  %v3416 = vunpack.c.l.b16 %v904
  %v3417 = vunpack.c.l.b16 %v905
  %v3418 = vunpack.c.l.b16 %v906
  %v3419 = vunpack.c.l.b16 %v907
  %v3420 = vunpack.c.l.b16 %v908
  %v3421 = vunpack.c.l.b16 %v909
  %v3422 = vunpack.c.l.b16 %v910
  %v3423 = vunpack.c.l.b16 %v911
  %v3424 = vunpack.c.l.b16 %v912
  %v3425 = vunpack.c.l.b16 %v913
  %v3426 = vunpack.c.l.b16 %v914
  %v3427 = vunpack.c.l.b16 %v915
  %v3428 = vunpack.c.l.b16 %v916
  %v3429 = vunpack.c.l.b16 %v917
  %v3430 = vunpack.c.l.b16 %v918
  %v3431 = vunpack.c.l.b16 %v919
  %v3432 = vunpack.c.l.b16 %v920
  %v3433 = vunpack.c.l.b16 %v921
  %v3434 = vunpack.c.l.b16 %v922
  %v3435 = vunpack.c.l.b16 %v923
  %v3436 = vunpack.c.l.b16 %v924
  %v3437 = vunpack.c.l.b16 %v925
  %v3438 = vunpack.c.l.b16 %v926
  %v3439 = vunpack.c.l.b16 %v927
  %v3440 = vunpack.c.l.b16 %v928
  %v3441 = vunpack.c.l.b16 %v929
  %v3442 = vunpack.c.l.b16 %v930
  %v3443 = vunpack.c.l.b16 %v931
  %v3444 = vunpack.c.l.b16 %v932
  %v3445 = vunpack.c.l.b16 %v933
  %v3446 = vunpack.c.l.b16 %v934
  %v3447 = vunpack.c.l.b16 %v935
  %v3448 = vunpack.c.l.b16 %v936
  %v3449 = vunpack.c.l.b16 %v937
  %v3450 = vunpack.c.l.b16 %v938
  %v3451 = vunpack.c.l.b16 %v939
  %v3452 = vunpack.c.l.b16 %v940
  %v3453 = vunpack.c.l.b16 %v941
  %v3454 = vunpack.c.l.b16 %v942
  %v3455 = vunpack.c.l.b16 %v943
  %v3456 = vunpack.c.l.b16 %v944
  %v3457 = vunpack.c.l.b16 %v945
  %v3458 = vunpack.c.l.b16 %v946
  %v3459 = vunpack.c.l.b16 %v947
  %v3460 = vunpack.c.l.b16 %v948
  %v3461 = vunpack.c.l.b16 %v949
  %v3462 = vunpack.c.l.b16 %v950
  %v3463 = vunpack.c.l.b16 %v951
  %v3464 = vunpack.c.l.b16 %v952
  %v3465 = vunpack.c.l.b16 %v953
  %v3466 = vunpack.c.l.b16 %v954
  %v3467 = vunpack.c.l.b16 %v955
  %v3468 = vunpack.c.l.b16 %v956
  %v3469 = vunpack.c.l.b16 %v957
  %v3470 = vunpack.c.l.b16 %v958
  %v3471 = vunpack.c.l.b16 %v959
  %v3472 = vunpack.c.l.b16 %v960
  %v3473 = vunpack.c.l.b16 %v961
  %v3474 = vunpack.c.l.b16 %v962
  %v3475 = vunpack.c.l.b16 %v963
  %v3476 = vunpack.c.l.b16 %v964
  %v3477 = vunpack.c.l.b16 %v965
  %v3478 = vunpack.c.l.b16 %v966
  %v3479 = vunpack.c.l.b16 %v967
  %v3480 = vunpack.c.l.b16 %v968
  %v3481 = vunpack.c.l.b16 %v969
  %v3482 = vunpack.c.l.b16 %v970
  %v3483 = vunpack.c.l.b16 %v971
  %v3484 = vunpack.c.l.b16 %v972
  %v3485 = vunpack.c.l.b16 %v973
  %v3486 = vunpack.c.l.b16 %v974
  %v3487 = vunpack.c.l.b16 %v975
  %v3488 = vunpack.c.l.b16 %v976
  %v3489 = vunpack.c.l.b16 %v977
  %v3490 = vunpack.c.l.b16 %v978
  %v3491 = vunpack.c.l.b16 %v979
  %v3492 = vunpack.c.l.b16 %v980
  %v3493 = vunpack.c.l.b16 %v981
  %v3494 = vunpack.c.l.b16 %v982
  %v3495 = vunpack.c.l.b16 %v983
  %v3496 = vunpack.c.l.b16 %v984
  %v3497 = vunpack.c.l.b16 %v985
  %v3498 = vunpack.c.l.b16 %v986
  %v3499 = vunpack.c.l.b16 %v987
  %v3500 = vunpack.c.l.b16 %v988
  %v3501 = vunpack.c.l.b16 %v989
  %v3502 = vunpack.c.l.b16 %v990
  %v3503 = vunpack.c.l.b16 %v991
  %v3504 = vunpack.c.l.b16 %v992
  %v3505 = vunpack.c.l.b16 %v993
  %v3506 = vunpack.c.l.b16 %v994
  %v3507 = vunpack.c.l.b16 %v995
  %v3508 = vunpack.c.l.b16 %v996
  %v3509 = vunpack.c.l.b16 %v997
  %v3510 = vunpack.c.l.b16 %v998
  %v3511 = vunpack.c.l.b16 %v999
  %v3512 = vunpack.c.l.b16 %v1000
  %v3513 = vunpack.c.l.b16 %v1001
  %v3514 = vunpack.c.l.b16 %v1002
  %v3515 = vunpack.c.l.b16 %v1003
  %v3516 = vunpack.c.l.b16 %v1004
  %v3517 = vunpack.c.l.b16 %v1005
  %v3518 = vunpack.c.l.b16 %v1006
  %v3519 = vunpack.c.l.b16 %v1007
  %v3520 = vunpack.c.l.b16 %v1008
  %v3521 = vunpack.c.l.b16 %v1009
  %v3522 = vunpack.c.l.b16 %v1010
  %v3523 = vunpack.c.l.b16 %v1011
  %v3524 = vunpack.c.l.b16 %v1012
  %v3525 = vunpack.c.l.b16 %v1013
  %v3526 = vunpack.c.l.b16 %v1014
  %v3527 = vunpack.c.l.b16 %v1015
  %v3528 = vunpack.c.l.b16 %v1016
  %v3529 = vunpack.c.l.b16 %v1017
  %v3530 = vunpack.c.l.b16 %v1018
  %v3531 = vunpack.c.l.b16 %v1019
  %v3532 = vunpack.c.l.b16 %v1020
  %v3533 = vunpack.c.l.b16 %v1021
  %v3534 = vunpack.c.l.b16 %v1022
  %v3535 = vunpack.c.l.b16 %v1023
  %v3536 = vunpack.c.l.b16 %v1024
  %v3537 = vunpack.c.l.b16 %v1025
  %v3538 = vunpack.c.l.b16 %v1026
  %v3539 = vunpack.c.l.b16 %v1027
  %v3540 = vunpack.c.l.b16 %v1028
  %v3541 = vunpack.c.l.b16 %v1029
  %v3542 = vunpack.c.l.b16 %v1030
  %v3543 = vunpack.c.l.b16 %v1031
  %v3544 = vunpack.c.l.b16 %v1032
  %v3545 = vunpack.c.l.b16 %v1033
  %v3546 = vunpack.c.l.b16 %v1034
  %v3547 = vunpack.c.l.b16 %v1035
  %v3548 = vunpack.c.l.b16 %v1036
  %v3549 = vunpack.c.l.b16 %v1037
  %v3550 = vunpack.c.l.b16 %v1038
  %v3551 = vunpack.c.l.b16 %v1039
  %v3552 = vunpack.c.l.b16 %v1040
  %v3553 = vunpack.c.l.b16 %v1041
  %v3554 = vunpack.c.l.b16 %v1042
  %v3555 = vunpack.c.l.b16 %v1043
  %v3556 = vunpack.c.l.b16 %v1044
  %v3557 = vunpack.c.l.b16 %v1045
  %v3558 = vunpack.c.l.b16 %v1046
  %v3559 = vunpack.c.l.b16 %v1047
  %v3560 = vunpack.c.l.b16 %v1048
  %v3561 = vunpack.c.l.b16 %v1049
  %v3562 = vpack.c.b16 %v2539, %v2538
  %v3563 = vpack.c.b16 %v2541, %v2540
  %v3564 = vpack.c.b16 %v2543, %v2542
  %v3565 = vpack.c.b16 %v2545, %v2544
  %v3566 = vpack.c.b16 %v2547, %v2546
  %v3567 = vpack.c.b16 %v2549, %v2548
  %v3568 = vpack.c.b16 %v2551, %v2550
  %v3569 = vpack.c.b16 %v2553, %v2552
  %v3570 = vpack.c.b16 %v2555, %v2554
  %v3571 = vpack.c.b16 %v2557, %v2556
  %v3572 = vpack.c.b16 %v2559, %v2558
  %v3573 = vpack.c.b16 %v2561, %v2560
  %v3574 = vpack.c.b16 %v2563, %v2562
  %v3575 = vpack.c.b16 %v2565, %v2564
  %v3576 = vpack.c.b16 %v2567, %v2566
  %v3577 = vpack.c.b16 %v2569, %v2568
  %v3578 = vpack.c.b16 %v2571, %v2570
  %v3579 = vpack.c.b16 %v2573, %v2572
  %v3580 = vpack.c.b16 %v2575, %v2574
  %v3581 = vpack.c.b16 %v2577, %v2576
  %v3582 = vpack.c.b16 %v2579, %v2578
  %v3583 = vpack.c.b16 %v2581, %v2580
  %v3584 = vpack.c.b16 %v2583, %v2582
  %v3585 = vpack.c.b16 %v2585, %v2584
  %v3586 = vpack.c.b16 %v2587, %v2586
  %v3587 = vpack.c.b16 %v2589, %v2588
  %v3588 = vpack.c.b16 %v2591, %v2590
  %v3589 = vpack.c.b16 %v2593, %v2592
  %v3590 = vpack.c.b16 %v2595, %v2594
  %v3591 = vpack.c.b16 %v2597, %v2596
  %v3592 = vpack.c.b16 %v2599, %v2598
  %v3593 = vpack.c.b16 %v2601, %v2600
  %v3594 = vpack.c.b16 %v2603, %v2602
  %v3595 = vpack.c.b16 %v2605, %v2604
  %v3596 = vpack.c.b16 %v2607, %v2606
  %v3597 = vpack.c.b16 %v2609, %v2608
  %v3598 = vpack.c.b16 %v2611, %v2610
  %v3599 = vpack.c.b16 %v2613, %v2612
  %v3600 = vpack.c.b16 %v2615, %v2614
  %v3601 = vpack.c.b16 %v2617, %v2616
  %v3602 = vpack.c.b16 %v2619, %v2618
  %v3603 = vpack.c.b16 %v2621, %v2620
  %v3604 = vpack.c.b16 %v2623, %v2622
  %v3605 = vpack.c.b16 %v2625, %v2624
  %v3606 = vpack.c.b16 %v2627, %v2626
  %v3607 = vpack.c.b16 %v2629, %v2628
  %v3608 = vpack.c.b16 %v2631, %v2630
  %v3609 = vpack.c.b16 %v2633, %v2632
  %v3610 = vpack.c.b16 %v2635, %v2634
  %v3611 = vpack.c.b16 %v2637, %v2636
  %v3612 = vpack.c.b16 %v2639, %v2638
  %v3613 = vpack.c.b16 %v2641, %v2640
  %v3614 = vpack.c.b16 %v2643, %v2642
  %v3615 = vpack.c.b16 %v2645, %v2644
  %v3616 = vpack.c.b16 %v2647, %v2646
  %v3617 = vpack.c.b16 %v2649, %v2648
  %v3618 = vpack.c.b16 %v2651, %v2650
  %v3619 = vpack.c.b16 %v2653, %v2652
  %v3620 = vpack.c.b16 %v2655, %v2654
  %v3621 = vpack.c.b16 %v2657, %v2656
  %v3622 = vpack.c.b16 %v2659, %v2658
  %v3623 = vpack.c.b16 %v2661, %v2660
  %v3624 = vpack.c.b16 %v2663, %v2662
  %v3625 = vpack.c.b16 %v2665, %v2664
  %v3626 = vpack.c.b16 %v2667, %v2666
  %v3627 = vpack.c.b16 %v2669, %v2668
  %v3628 = vpack.c.b16 %v2671, %v2670
  %v3629 = vpack.c.b16 %v2673, %v2672
  %v3630 = vpack.c.b16 %v2675, %v2674
  %v3631 = vpack.c.b16 %v2677, %v2676
  %v3632 = vpack.c.b16 %v2679, %v2678
  %v3633 = vpack.c.b16 %v2681, %v2680
  %v3634 = vpack.c.b16 %v2683, %v2682
  %v3635 = vpack.c.b16 %v2685, %v2684
  %v3636 = vpack.c.b16 %v2687, %v2686
  %v3637 = vpack.c.b16 %v2689, %v2688
  %v3638 = vpack.c.b16 %v2691, %v2690
  %v3639 = vpack.c.b16 %v2693, %v2692
  %v3640 = vpack.c.b16 %v2695, %v2694
  %v3641 = vpack.c.b16 %v2697, %v2696
  %v3642 = vpack.c.b16 %v2699, %v2698
  %v3643 = vpack.c.b16 %v2701, %v2700
  %v3644 = vpack.c.b16 %v2703, %v2702
  %v3645 = vpack.c.b16 %v2705, %v2704
  %v3646 = vpack.c.b16 %v2707, %v2706
  %v3647 = vpack.c.b16 %v2709, %v2708
  %v3648 = vpack.c.b16 %v2711, %v2710
  %v3649 = vpack.c.b16 %v2713, %v2712
  %v3650 = vpack.c.b16 %v2715, %v2714
  %v3651 = vpack.c.b16 %v2717, %v2716
  %v3652 = vpack.c.b16 %v2719, %v2718
  %v3653 = vpack.c.b16 %v2721, %v2720
  %v3654 = vpack.c.b16 %v2723, %v2722
  %v3655 = vpack.c.b16 %v2725, %v2724
  %v3656 = vpack.c.b16 %v2727, %v2726
  %v3657 = vpack.c.b16 %v2729, %v2728
  %v3658 = vpack.c.b16 %v2731, %v2730
  %v3659 = vpack.c.b16 %v2733, %v2732
  %v3660 = vpack.c.b16 %v2735, %v2734
  %v3661 = vpack.c.b16 %v2737, %v2736
  %v3662 = vpack.c.b16 %v2739, %v2738
  %v3663 = vpack.c.b16 %v2741, %v2740
  %v3664 = vpack.c.b16 %v2743, %v2742
  %v3665 = vpack.c.b16 %v2745, %v2744
  %v3666 = vpack.c.b16 %v2747, %v2746
  %v3667 = vpack.c.b16 %v2749, %v2748
  %v3668 = vpack.c.b16 %v2751, %v2750
  %v3669 = vpack.c.b16 %v2753, %v2752
  %v3670 = vpack.c.b16 %v2755, %v2754
  %v3671 = vpack.c.b16 %v2757, %v2756
  %v3672 = vpack.c.b16 %v2759, %v2758
  %v3673 = vpack.c.b16 %v2761, %v2760
  %v3674 = vpack.c.b16 %v2763, %v2762
  %v3675 = vpack.c.b16 %v2765, %v2764
  %v3676 = vpack.c.b16 %v2767, %v2766
  %v3677 = vpack.c.b16 %v2769, %v2768
  %v3678 = vpack.c.b16 %v2771, %v2770
  %v3679 = vpack.c.b16 %v2773, %v2772
  %v3680 = vpack.c.b16 %v2775, %v2774
  %v3681 = vpack.c.b16 %v2777, %v2776
  %v3682 = vpack.c.b16 %v2779, %v2778
  %v3683 = vpack.c.b16 %v2781, %v2780
  %v3684 = vpack.c.b16 %v2783, %v2782
  %v3685 = vpack.c.b16 %v2785, %v2784
  %v3686 = vpack.c.b16 %v2787, %v2786
  %v3687 = vpack.c.b16 %v2789, %v2788
  %v3688 = vpack.c.b16 %v2791, %v2790
  %v3689 = vpack.c.b16 %v2793, %v2792
  %v3690 = vpack.c.b16 %v2795, %v2794
  %v3691 = vpack.c.b16 %v2797, %v2796
  %v3692 = vpack.c.b16 %v2799, %v2798
  %v3693 = vpack.c.b16 %v2801, %v2800
  %v3694 = vpack.c.b16 %v2803, %v2802
  %v3695 = vpack.c.b16 %v2805, %v2804
  %v3696 = vpack.c.b16 %v2807, %v2806
  %v3697 = vpack.c.b16 %v2809, %v2808
  %v3698 = vpack.c.b16 %v2811, %v2810
  %v3699 = vpack.c.b16 %v2813, %v2812
  %v3700 = vpack.c.b16 %v2815, %v2814
  %v3701 = vpack.c.b16 %v2817, %v2816
  %v3702 = vpack.c.b16 %v2819, %v2818
  %v3703 = vpack.c.b16 %v2821, %v2820
  %v3704 = vpack.c.b16 %v2823, %v2822
  %v3705 = vpack.c.b16 %v2825, %v2824
  %v3706 = vpack.c.b16 %v2827, %v2826
  %v3707 = vpack.c.b16 %v2829, %v2828
  %v3708 = vpack.c.b16 %v2831, %v2830
  %v3709 = vpack.c.b16 %v2833, %v2832
  %v3710 = vpack.c.b16 %v2835, %v2834
  %v3711 = vpack.c.b16 %v2837, %v2836
  %v3712 = vpack.c.b16 %v2839, %v2838
  %v3713 = vpack.c.b16 %v2841, %v2840
  %v3714 = vpack.c.b16 %v2843, %v2842
  %v3715 = vpack.c.b16 %v2845, %v2844
  %v3716 = vpack.c.b16 %v2847, %v2846
  %v3717 = vpack.c.b16 %v2849, %v2848
  %v3718 = vpack.c.b16 %v2851, %v2850
  %v3719 = vpack.c.b16 %v2853, %v2852
  %v3720 = vpack.c.b16 %v2855, %v2854
  %v3721 = vpack.c.b16 %v2857, %v2856
  %v3722 = vpack.c.b16 %v2859, %v2858
  %v3723 = vpack.c.b16 %v2861, %v2860
  %v3724 = vpack.c.b16 %v2863, %v2862
  %v3725 = vpack.c.b16 %v2865, %v2864
  %v3726 = vpack.c.b16 %v2867, %v2866
  %v3727 = vpack.c.b16 %v2869, %v2868
  %v3728 = vpack.c.b16 %v2871, %v2870
  %v3729 = vpack.c.b16 %v2873, %v2872
  %v3730 = vpack.c.b16 %v2875, %v2874
  %v3731 = vpack.c.b16 %v2877, %v2876
  %v3732 = vpack.c.b16 %v2879, %v2878
  %v3733 = vpack.c.b16 %v2881, %v2880
  %v3734 = vpack.c.b16 %v2883, %v2882
  %v3735 = vpack.c.b16 %v2885, %v2884
  %v3736 = vpack.c.b16 %v2887, %v2886
  %v3737 = vpack.c.b16 %v2889, %v2888
  %v3738 = vpack.c.b16 %v2891, %v2890
  %v3739 = vpack.c.b16 %v2893, %v2892
  %v3740 = vpack.c.b16 %v2895, %v2894
  %v3741 = vpack.c.b16 %v2897, %v2896
  %v3742 = vpack.c.b16 %v2899, %v2898
  %v3743 = vpack.c.b16 %v2901, %v2900
  %v3744 = vpack.c.b16 %v2903, %v2902
  %v3745 = vpack.c.b16 %v2905, %v2904
  %v3746 = vpack.c.b16 %v2907, %v2906
  %v3747 = vpack.c.b16 %v2909, %v2908
  %v3748 = vpack.c.b16 %v2911, %v2910
  %v3749 = vpack.c.b16 %v2913, %v2912
  %v3750 = vpack.c.b16 %v2915, %v2914
  %v3751 = vpack.c.b16 %v2917, %v2916
  %v3752 = vpack.c.b16 %v2919, %v2918
  %v3753 = vpack.c.b16 %v2921, %v2920
  %v3754 = vpack.c.b16 %v2923, %v2922
  %v3755 = vpack.c.b16 %v2925, %v2924
  %v3756 = vpack.c.b16 %v2927, %v2926
  %v3757 = vpack.c.b16 %v2929, %v2928
  %v3758 = vpack.c.b16 %v2931, %v2930
  %v3759 = vpack.c.b16 %v2933, %v2932
  %v3760 = vpack.c.b16 %v2935, %v2934
  %v3761 = vpack.c.b16 %v2937, %v2936
  %v3762 = vpack.c.b16 %v2939, %v2938
  %v3763 = vpack.c.b16 %v2941, %v2940
  %v3764 = vpack.c.b16 %v2943, %v2942
  %v3765 = vpack.c.b16 %v2945, %v2944
  %v3766 = vpack.c.b16 %v2947, %v2946
  %v3767 = vpack.c.b16 %v2949, %v2948
  %v3768 = vpack.c.b16 %v2951, %v2950
  %v3769 = vpack.c.b16 %v2953, %v2952
  %v3770 = vpack.c.b16 %v2955, %v2954
  %v3771 = vpack.c.b16 %v2957, %v2956
  %v3772 = vpack.c.b16 %v2959, %v2958
  %v3773 = vpack.c.b16 %v2961, %v2960
  %v3774 = vpack.c.b16 %v2963, %v2962
  %v3775 = vpack.c.b16 %v2965, %v2964
  %v3776 = vpack.c.b16 %v2967, %v2966
  %v3777 = vpack.c.b16 %v2969, %v2968
  %v3778 = vpack.c.b16 %v2971, %v2970
  %v3779 = vpack.c.b16 %v2973, %v2972
  %v3780 = vpack.c.b16 %v2975, %v2974
  %v3781 = vpack.c.b16 %v2977, %v2976
  %v3782 = vpack.c.b16 %v2979, %v2978
  %v3783 = vpack.c.b16 %v2981, %v2980
  %v3784 = vpack.c.b16 %v2983, %v2982
  %v3785 = vpack.c.b16 %v2985, %v2984
  %v3786 = vpack.c.b16 %v2987, %v2986
  %v3787 = vpack.c.b16 %v2989, %v2988
  %v3788 = vpack.c.b16 %v2991, %v2990
  %v3789 = vpack.c.b16 %v2993, %v2992
  %v3790 = vpack.c.b16 %v2995, %v2994
  %v3791 = vpack.c.b16 %v2997, %v2996
  %v3792 = vpack.c.b16 %v2999, %v2998
  %v3793 = vpack.c.b16 %v3001, %v3000
  %v3794 = vpack.c.b16 %v3003, %v3002
  %v3795 = vpack.c.b16 %v3005, %v3004
  %v3796 = vpack.c.b16 %v3007, %v3006
  %v3797 = vpack.c.b16 %v3009, %v3008
  %v3798 = vpack.c.b16 %v3011, %v3010
  %v3799 = vpack.c.b16 %v3013, %v3012
  %v3800 = vpack.c.b16 %v3015, %v3014
  %v3801 = vpack.c.b16 %v3017, %v3016
  %v3802 = vpack.c.b16 %v3019, %v3018
  %v3803 = vpack.c.b16 %v3021, %v3020
  %v3804 = vpack.c.b16 %v3023, %v3022
  %v3805 = vpack.c.b16 %v3025, %v3024
  %v3806 = vpack.c.b16 %v3027, %v3026
  %v3807 = vpack.c.b16 %v3029, %v3028
  %v3808 = vpack.c.b16 %v3031, %v3030
  %v3809 = vpack.c.b16 %v3033, %v3032
  %v3810 = vpack.c.b16 %v3035, %v3034
  %v3811 = vpack.c.b16 %v3037, %v3036
  %v3812 = vpack.c.b16 %v3039, %v3038
  %v3813 = vpack.c.b16 %v3041, %v3040
  %v3814 = vpack.c.b16 %v3043, %v3042
  %v3815 = vpack.c.b16 %v3045, %v3044
  %v3816 = vpack.c.b16 %v3047, %v3046
  %v3817 = vpack.c.b16 %v3049, %v3048
  %v3818 = vpack.c.b16 %v3051, %v3050
  %v3819 = vpack.c.b16 %v3053, %v3052
  %v3820 = vpack.c.b16 %v3055, %v3054
  %v3821 = vpack.c.b16 %v3057, %v3056
  %v3822 = vpack.c.b16 %v3059, %v3058
  %v3823 = vpack.c.b16 %v3061, %v3060
  %v3824 = vpack.c.b16 %v3063, %v3062
  %v3825 = vpack.c.b16 %v3065, %v3064
  %v3826 = vpack.c.b16 %v3067, %v3066
  %v3827 = vpack.c.b16 %v3069, %v3068
  %v3828 = vpack.c.b16 %v3071, %v3070
  %v3829 = vpack.c.b16 %v3073, %v3072
  %v3830 = vpack.c.b16 %v3075, %v3074
  %v3831 = vpack.c.b16 %v3077, %v3076
  %v3832 = vpack.c.b16 %v3079, %v3078
  %v3833 = vpack.c.b16 %v3081, %v3080
  %v3834 = vpack.c.b16 %v3083, %v3082
  %v3835 = vpack.c.b16 %v3085, %v3084
  %v3836 = vpack.c.b16 %v3087, %v3086
  %v3837 = vpack.c.b16 %v3089, %v3088
  %v3838 = vpack.c.b16 %v3091, %v3090
  %v3839 = vpack.c.b16 %v3093, %v3092
  %v3840 = vpack.c.b16 %v3095, %v3094
  %v3841 = vpack.c.b16 %v3097, %v3096
  %v3842 = vpack.c.b16 %v3099, %v3098
  %v3843 = vpack.c.b16 %v3101, %v3100
  %v3844 = vpack.c.b16 %v3103, %v3102
  %v3845 = vpack.c.b16 %v3105, %v3104
  %v3846 = vpack.c.b16 %v3107, %v3106
  %v3847 = vpack.c.b16 %v3109, %v3108
  %v3848 = vpack.c.b16 %v3111, %v3110
  %v3849 = vpack.c.b16 %v3113, %v3112
  %v3850 = vpack.c.b16 %v3115, %v3114
  %v3851 = vpack.c.b16 %v3117, %v3116
  %v3852 = vpack.c.b16 %v3119, %v3118
  %v3853 = vpack.c.b16 %v3121, %v3120
  %v3854 = vpack.c.b16 %v3123, %v3122
  %v3855 = vpack.c.b16 %v3125, %v3124
  %v3856 = vpack.c.b16 %v3127, %v3126
  %v3857 = vpack.c.b16 %v3129, %v3128
  %v3858 = vpack.c.b16 %v3131, %v3130
  %v3859 = vpack.c.b16 %v3133, %v3132
  %v3860 = vpack.c.b16 %v3135, %v3134
  %v3861 = vpack.c.b16 %v3137, %v3136
  %v3862 = vpack.c.b16 %v3139, %v3138
  %v3863 = vpack.c.b16 %v3141, %v3140
  %v3864 = vpack.c.b16 %v3143, %v3142
  %v3865 = vpack.c.b16 %v3145, %v3144
  %v3866 = vpack.c.b16 %v3147, %v3146
  %v3867 = vpack.c.b16 %v3149, %v3148
  %v3868 = vpack.c.b16 %v3151, %v3150
  %v3869 = vpack.c.b16 %v3153, %v3152
  %v3870 = vpack.c.b16 %v3155, %v3154
  %v3871 = vpack.c.b16 %v3157, %v3156
  %v3872 = vpack.c.b16 %v3159, %v3158
  %v3873 = vpack.c.b16 %v3161, %v3160
  %v3874 = vpack.c.b16 %v3163, %v3162
  %v3875 = vpack.c.b16 %v3165, %v3164
  %v3876 = vpack.c.b16 %v3167, %v3166
  %v3877 = vpack.c.b16 %v3169, %v3168
  %v3878 = vpack.c.b16 %v3171, %v3170
  %v3879 = vpack.c.b16 %v3173, %v3172
  %v3880 = vpack.c.b16 %v3175, %v3174
  %v3881 = vpack.c.b16 %v3177, %v3176
  %v3882 = vpack.c.b16 %v3179, %v3178
  %v3883 = vpack.c.b16 %v3181, %v3180
  %v3884 = vpack.c.b16 %v3183, %v3182
  %v3885 = vpack.c.b16 %v3185, %v3184
  %v3886 = vpack.c.b16 %v3187, %v3186
  %v3887 = vpack.c.b16 %v3189, %v3188
  %v3888 = vpack.c.b16 %v3191, %v3190
  %v3889 = vpack.c.b16 %v3193, %v3192
  %v3890 = vpack.c.b16 %v3195, %v3194
  %v3891 = vpack.c.b16 %v3197, %v3196
  %v3892 = vpack.c.b16 %v3199, %v3198
  %v3893 = vpack.c.b16 %v3201, %v3200
  %v3894 = vpack.c.b16 %v3203, %v3202
  %v3895 = vpack.c.b16 %v3205, %v3204
  %v3896 = vpack.c.b16 %v3207, %v3206
  %v3897 = vpack.c.b16 %v3209, %v3208
  %v3898 = vpack.c.b16 %v3211, %v3210
  %v3899 = vpack.c.b16 %v3213, %v3212
  %v3900 = vpack.c.b16 %v3215, %v3214
  %v3901 = vpack.c.b16 %v3217, %v3216
  %v3902 = vpack.c.b16 %v3219, %v3218
  %v3903 = vpack.c.b16 %v3221, %v3220
  %v3904 = vpack.c.b16 %v3223, %v3222
  %v3905 = vpack.c.b16 %v3225, %v3224
  %v3906 = vpack.c.b16 %v3227, %v3226
  %v3907 = vpack.c.b16 %v3229, %v3228
  %v3908 = vpack.c.b16 %v3231, %v3230
  %v3909 = vpack.c.b16 %v3233, %v3232
  %v3910 = vpack.c.b16 %v3235, %v3234
  %v3911 = vpack.c.b16 %v3237, %v3236
  %v3912 = vpack.c.b16 %v3239, %v3238
  %v3913 = vpack.c.b16 %v3241, %v3240
  %v3914 = vpack.c.b16 %v3243, %v3242
  %v3915 = vpack.c.b16 %v3245, %v3244
  %v3916 = vpack.c.b16 %v3247, %v3246
  %v3917 = vpack.c.b16 %v3249, %v3248
  %v3918 = vpack.c.b16 %v3251, %v3250
  %v3919 = vpack.c.b16 %v3253, %v3252
  %v3920 = vpack.c.b16 %v3255, %v3254
  %v3921 = vpack.c.b16 %v3257, %v3256
  %v3922 = vpack.c.b16 %v3259, %v3258
  %v3923 = vpack.c.b16 %v3261, %v3260
  %v3924 = vpack.c.b16 %v3263, %v3262
  %v3925 = vpack.c.b16 %v3265, %v3264
  %v3926 = vpack.c.b16 %v3267, %v3266
  %v3927 = vpack.c.b16 %v3269, %v3268
  %v3928 = vpack.c.b16 %v3271, %v3270
  %v3929 = vpack.c.b16 %v3273, %v3272
  %v3930 = vpack.c.b16 %v3275, %v3274
  %v3931 = vpack.c.b16 %v3277, %v3276
  %v3932 = vpack.c.b16 %v3279, %v3278
  %v3933 = vpack.c.b16 %v3281, %v3280
  %v3934 = vpack.c.b16 %v3283, %v3282
  %v3935 = vpack.c.b16 %v3285, %v3284
  %v3936 = vpack.c.b16 %v3287, %v3286
  %v3937 = vpack.c.b16 %v3289, %v3288
  %v3938 = vpack.c.b16 %v3291, %v3290
  %v3939 = vpack.c.b16 %v3293, %v3292
  %v3940 = vpack.c.b16 %v3295, %v3294
  %v3941 = vpack.c.b16 %v3297, %v3296
  %v3942 = vpack.c.b16 %v3299, %v3298
  %v3943 = vpack.c.b16 %v3301, %v3300
  %v3944 = vpack.c.b16 %v3303, %v3302
  %v3945 = vpack.c.b16 %v3305, %v3304
  %v3946 = vpack.c.b16 %v3307, %v3306
  %v3947 = vpack.c.b16 %v3309, %v3308
  %v3948 = vpack.c.b16 %v3311, %v3310
  %v3949 = vpack.c.b16 %v3313, %v3312
  %v3950 = vpack.c.b16 %v3315, %v3314
  %v3951 = vpack.c.b16 %v3317, %v3316
  %v3952 = vpack.c.b16 %v3319, %v3318
  %v3953 = vpack.c.b16 %v3321, %v3320
  %v3954 = vpack.c.b16 %v3323, %v3322
  %v3955 = vpack.c.b16 %v3325, %v3324
  %v3956 = vpack.c.b16 %v3327, %v3326
  %v3957 = vpack.c.b16 %v3329, %v3328
  %v3958 = vpack.c.b16 %v3331, %v3330
  %v3959 = vpack.c.b16 %v3333, %v3332
  %v3960 = vpack.c.b16 %v3335, %v3334
  %v3961 = vpack.c.b16 %v3337, %v3336
  %v3962 = vpack.c.b16 %v3339, %v3338
  %v3963 = vpack.c.b16 %v3341, %v3340
  %v3964 = vpack.c.b16 %v3343, %v3342
  %v3965 = vpack.c.b16 %v3345, %v3344
  %v3966 = vpack.c.b16 %v3347, %v3346
  %v3967 = vpack.c.b16 %v3349, %v3348
  %v3968 = vpack.c.b16 %v3351, %v3350
  %v3969 = vpack.c.b16 %v3353, %v3352
  %v3970 = vpack.c.b16 %v3355, %v3354
  %v3971 = vpack.c.b16 %v3357, %v3356
  %v3972 = vpack.c.b16 %v3359, %v3358
  %v3973 = vpack.c.b16 %v3361, %v3360
  %v3974 = vpack.c.b16 %v3363, %v3362
  %v3975 = vpack.c.b16 %v3365, %v3364
  %v3976 = vpack.c.b16 %v3367, %v3366
  %v3977 = vpack.c.b16 %v3369, %v3368
  %v3978 = vpack.c.b16 %v3371, %v3370
  %v3979 = vpack.c.b16 %v3373, %v3372
  %v3980 = vpack.c.b16 %v3375, %v3374
  %v3981 = vpack.c.b16 %v3377, %v3376
  %v3982 = vpack.c.b16 %v3379, %v3378
  %v3983 = vpack.c.b16 %v3381, %v3380
  %v3984 = vpack.c.b16 %v3383, %v3382
  %v3985 = vpack.c.b16 %v3385, %v3384
  %v3986 = vpack.c.b16 %v3387, %v3386
  %v3987 = vpack.c.b16 %v3389, %v3388
  %v3988 = vpack.c.b16 %v3391, %v3390
  %v3989 = vpack.c.b16 %v3393, %v3392
  %v3990 = vpack.c.b16 %v3395, %v3394
  %v3991 = vpack.c.b16 %v3397, %v3396
  %v3992 = vpack.c.b16 %v3399, %v3398
  %v3993 = vpack.c.b16 %v3401, %v3400
  %v3994 = vpack.c.b16 %v3403, %v3402
  %v3995 = vpack.c.b16 %v3405, %v3404
  %v3996 = vpack.c.b16 %v3407, %v3406
  %v3997 = vpack.c.b16 %v3409, %v3408
  %v3998 = vpack.c.b16 %v3411, %v3410
  %v3999 = vpack.c.b16 %v3413, %v3412
  %v4000 = vpack.c.b16 %v3415, %v3414
  %v4001 = vpack.c.b16 %v3417, %v3416
  %v4002 = vpack.c.b16 %v3419, %v3418
  %v4003 = vpack.c.b16 %v3421, %v3420
  %v4004 = vpack.c.b16 %v3423, %v3422
  %v4005 = vpack.c.b16 %v3425, %v3424
  %v4006 = vpack.c.b16 %v3427, %v3426
  %v4007 = vpack.c.b16 %v3429, %v3428
  %v4008 = vpack.c.b16 %v3431, %v3430
  %v4009 = vpack.c.b16 %v3433, %v3432
  %v4010 = vpack.c.b16 %v3435, %v3434
  %v4011 = vpack.c.b16 %v3437, %v3436
  %v4012 = vpack.c.b16 %v3439, %v3438
  %v4013 = vpack.c.b16 %v3441, %v3440
  %v4014 = vpack.c.b16 %v3443, %v3442
  %v4015 = vpack.c.b16 %v3445, %v3444
  %v4016 = vpack.c.b16 %v3447, %v3446
  %v4017 = vpack.c.b16 %v3449, %v3448
  %v4018 = vpack.c.b16 %v3451, %v3450
  %v4019 = vpack.c.b16 %v3453, %v3452
  %v4020 = vpack.c.b16 %v3455, %v3454
  %v4021 = vpack.c.b16 %v3457, %v3456
  %v4022 = vpack.c.b16 %v3459, %v3458
  %v4023 = vpack.c.b16 %v3461, %v3460
  %v4024 = vpack.c.b16 %v3463, %v3462
  %v4025 = vpack.c.b16 %v3465, %v3464
  %v4026 = vpack.c.b16 %v3467, %v3466
  %v4027 = vpack.c.b16 %v3469, %v3468
  %v4028 = vpack.c.b16 %v3471, %v3470
  %v4029 = vpack.c.b16 %v3473, %v3472
  %v4030 = vpack.c.b16 %v3475, %v3474
  %v4031 = vpack.c.b16 %v3477, %v3476
  %v4032 = vpack.c.b16 %v3479, %v3478
  %v4033 = vpack.c.b16 %v3481, %v3480
  %v4034 = vpack.c.b16 %v3483, %v3482
  %v4035 = vpack.c.b16 %v3485, %v3484
  %v4036 = vpack.c.b16 %v3487, %v3486
  %v4037 = vpack.c.b16 %v3489, %v3488
  %v4038 = vpack.c.b16 %v3491, %v3490
  %v4039 = vpack.c.b16 %v3493, %v3492
  %v4040 = vpack.c.b16 %v3495, %v3494
  %v4041 = vpack.c.b16 %v3497, %v3496
  %v4042 = vpack.c.b16 %v3499, %v3498
  %v4043 = vpack.c.b16 %v3501, %v3500
  %v4044 = vpack.c.b16 %v3503, %v3502
  %v4045 = vpack.c.b16 %v3505, %v3504
  %v4046 = vpack.c.b16 %v3507, %v3506
  %v4047 = vpack.c.b16 %v3509, %v3508
  %v4048 = vpack.c.b16 %v3511, %v3510
  %v4049 = vpack.c.b16 %v3513, %v3512
  %v4050 = vpack.c.b16 %v3515, %v3514
  %v4051 = vpack.c.b16 %v3517, %v3516
  %v4052 = vpack.c.b16 %v3519, %v3518
  %v4053 = vpack.c.b16 %v3521, %v3520
  %v4054 = vpack.c.b16 %v3523, %v3522
  %v4055 = vpack.c.b16 %v3525, %v3524
  %v4056 = vpack.c.b16 %v3527, %v3526
  %v4057 = vpack.c.b16 %v3529, %v3528
  %v4058 = vpack.c.b16 %v3531, %v3530
  %v4059 = vpack.c.b16 %v3533, %v3532
  %v4060 = vpack.c.b16 %v3535, %v3534
  %v4061 = vpack.c.b16 %v3537, %v3536
  %v4062 = vpack.c.b16 %v3539, %v3538
  %v4063 = vpack.c.b16 %v3541, %v3540
  %v4064 = vpack.c.b16 %v3543, %v3542
  %v4065 = vpack.c.b16 %v3545, %v3544
  %v4066 = vpack.c.b16 %v3547, %v3546
  %v4067 = vpack.c.b16 %v3549, %v3548
  %v4068 = vpack.c.b16 %v3551, %v3550
  %v4069 = vpack.c.b16 %v3553, %v3552
  %v4070 = vpack.c.b16 %v3555, %v3554
  %v4071 = vpack.c.b16 %v3557, %v3556
  %v4072 = vpack.c.b16 %v3559, %v3558
  %v4073 = vpack.c.b16 %v3561, %v3560
  %4586 = vmatprep.subr.bf16.mxu0 0
  %4587 = vmatpush1.bf16.msra.mxu0 %v3562
  %4588 = vmatprep.subr.bf16.mxu0 0
  %4589 = vmatpush1.bf16.msra.mxu0 %v3563
  %4590 = vmatprep.subr.bf16.mxu0 0
  %4591 = vmatpush1.bf16.msra.mxu0 %v3564
  %4592 = vmatprep.subr.bf16.mxu0 0
  %4593 = vmatpush1.bf16.msra.mxu0 %v3565
  %4594 = vmatprep.subr.bf16.mxu0 0
  %4595 = vmatpush1.bf16.msra.mxu0 %v3566
  %4596 = vmatprep.subr.bf16.mxu0 0
  %4597 = vmatpush1.bf16.msra.mxu0 %v3567
  %4598 = vmatprep.subr.bf16.mxu0 0
  %4599 = vmatpush1.bf16.msra.mxu0 %v3568
  %4600 = vmatprep.subr.bf16.mxu0 0
  %4601 = vmatpush1.bf16.msra.mxu0 %v3569
  %4602 = vmatprep.subr.bf16.mxu0 0
  %4603 = vmatpush1.bf16.msra.mxu0 %v3570
  %4604 = vmatprep.subr.bf16.mxu0 0
  %4605 = vmatpush1.bf16.msra.mxu0 %v3571
  %4606 = vmatprep.subr.bf16.mxu0 0
  %4607 = vmatpush1.bf16.msra.mxu0 %v3572
  %4608 = vmatprep.subr.bf16.mxu0 0
  %4609 = vmatpush1.bf16.msra.mxu0 %v3573
  %4610 = vmatprep.subr.bf16.mxu0 0
  %4611 = vmatpush1.bf16.msra.mxu0 %v3574
  %4612 = vmatprep.subr.bf16.mxu0 0
  %4613 = vmatpush1.bf16.msra.mxu0 %v3575
  %4614 = vmatprep.subr.bf16.mxu0 0
  %4615 = vmatpush1.bf16.msra.mxu0 %v3576
  %4616 = vmatprep.subr.bf16.mxu0 0
  %4617 = vmatpush1.bf16.msra.mxu0 %v3577
  %4618 = vmatprep.mubr.bf16.mxu0 %v1095
  %4619 = vmatmul.mubr.bf16.gmra.mrb[0].mxu0 %v1081
  %v4620 = vpop.f32.mrb[0].mxu0
  %v4621 = vadd.f32 0.0, %v4620
  %v4622 = vpop.f32.mrb[0].mxu0
  %v4623 = vpop.f32.mrb[0].mxu0
  %v4624 = vpop.f32.mrb[0].mxu0
  %4625 = vdwg.mxu0
  %4626 = vmatprep.subr.bf16.mxu0 0
  %4627 = vmatpush1.bf16.msra.mxu0 %v3578
  %4628 = vmatprep.subr.bf16.mxu0 0
  %4629 = vmatpush1.bf16.msra.mxu0 %v3579
  %4630 = vmatprep.subr.bf16.mxu0 0
  %4631 = vmatpush1.bf16.msra.mxu0 %v3580
  %4632 = vmatprep.subr.bf16.mxu0 0
  %4633 = vmatpush1.bf16.msra.mxu0 %v3581
  %4634 = vmatprep.subr.bf16.mxu0 0
  %4635 = vmatpush1.bf16.msra.mxu0 %v3582
  %4636 = vmatprep.subr.bf16.mxu0 0
  %4637 = vmatpush1.bf16.msra.mxu0 %v3583
  %4638 = vmatprep.subr.bf16.mxu0 0
  %4639 = vmatpush1.bf16.msra.mxu0 %v3584
  %4640 = vmatprep.subr.bf16.mxu0 0
  %4641 = vmatpush1.bf16.msra.mxu0 %v3585
  %4642 = vmatprep.subr.bf16.mxu0 0
  %4643 = vmatpush1.bf16.msra.mxu0 %v3586
  %4644 = vmatprep.subr.bf16.mxu0 0
  %4645 = vmatpush1.bf16.msra.mxu0 %v3587
  %4646 = vmatprep.subr.bf16.mxu0 0
  %4647 = vmatpush1.bf16.msra.mxu0 %v3588
  %4648 = vmatprep.subr.bf16.mxu0 0
  %4649 = vmatpush1.bf16.msra.mxu0 %v3589
  %4650 = vmatprep.subr.bf16.mxu0 0
  %4651 = vmatpush1.bf16.msra.mxu0 %v3590
  %4652 = vmatprep.subr.bf16.mxu0 0
  %4653 = vmatpush1.bf16.msra.mxu0 %v3591
  %4654 = vmatprep.subr.bf16.mxu0 0
  %4655 = vmatpush1.bf16.msra.mxu0 %v3592
  %4656 = vmatprep.subr.bf16.mxu0 0
  %4657 = vmatpush1.bf16.msra.mxu0 %v3593
  %4658 = vmatprep.mubr.bf16.mxu0 %v1105
  %4659 = vmatmul.mubr.bf16.gmra.mrb[0].mxu0 %v1103
  %v4660 = vpop.f32.mrb[0].mxu0
  %v4661 = vadd.f32 %v4621, %v4660
  %v4662 = vpop.f32.mrb[0].mxu0
  %v4663 = vpop.f32.mrb[0].mxu0
  %v4664 = vpop.f32.mrb[0].mxu0
  %4665 = vdwg.mxu0
  %4666 = vmatprep.subr.bf16.mxu0 0
  %4667 = vmatpush1.bf16.msra.mxu0 %v3594
  %4668 = vmatprep.subr.bf16.mxu0 0
  %4669 = vmatpush1.bf16.msra.mxu0 %v3595
  %4670 = vmatprep.subr.bf16.mxu0 0
  %4671 = vmatpush1.bf16.msra.mxu0 %v3596
  %4672 = vmatprep.subr.bf16.mxu0 0
  %4673 = vmatpush1.bf16.msra.mxu0 %v3597
  %4674 = vmatprep.subr.bf16.mxu0 0
  %4675 = vmatpush1.bf16.msra.mxu0 %v3598
  %4676 = vmatprep.subr.bf16.mxu0 0
  %4677 = vmatpush1.bf16.msra.mxu0 %v3599
  %4678 = vmatprep.subr.bf16.mxu0 0
  %4679 = vmatpush1.bf16.msra.mxu0 %v3600
  %4680 = vmatprep.subr.bf16.mxu0 0
  %4681 = vmatpush1.bf16.msra.mxu0 %v3601
  %4682 = vmatprep.subr.bf16.mxu0 0
  %4683 = vmatpush1.bf16.msra.mxu0 %v3602
  %4684 = vmatprep.subr.bf16.mxu0 0
  %4685 = vmatpush1.bf16.msra.mxu0 %v3603
  %4686 = vmatprep.subr.bf16.mxu0 0
  %4687 = vmatpush1.bf16.msra.mxu0 %v3604
  %4688 = vmatprep.subr.bf16.mxu0 0
  %4689 = vmatpush1.bf16.msra.mxu0 %v3605
  %4690 = vmatprep.subr.bf16.mxu0 0
  %4691 = vmatpush1.bf16.msra.mxu0 %v3606
  %4692 = vmatprep.subr.bf16.mxu0 0
  %4693 = vmatpush1.bf16.msra.mxu0 %v3607
  %4694 = vmatprep.subr.bf16.mxu0 0
  %4695 = vmatpush1.bf16.msra.mxu0 %v3608
  %4696 = vmatprep.subr.bf16.mxu0 0
  %4697 = vmatpush1.bf16.msra.mxu0 %v3609
  %4698 = vmatprep.mubr.bf16.mxu0 %v1102
  %4699 = vmatmul.mubr.bf16.gmra.mrb[0].mxu0 %v1088
  %v4700 = vpop.f32.mrb[0].mxu0
  %v4701 = vadd.f32 %v4661, %v4700
  %v4702 = vpop.f32.mrb[0].mxu0
  %v4703 = vpop.f32.mrb[0].mxu0
  %v4704 = vpop.f32.mrb[0].mxu0
  %4705 = vdwg.mxu0
  %4706 = vmatprep.subr.bf16.mxu0 0
  %4707 = vmatpush1.bf16.msra.mxu0 %v3610
  %4708 = vmatprep.subr.bf16.mxu0 0
  %4709 = vmatpush1.bf16.msra.mxu0 %v3611
  %4710 = vmatprep.subr.bf16.mxu0 0
  %4711 = vmatpush1.bf16.msra.mxu0 %v3612
  %4712 = vmatprep.subr.bf16.mxu0 0
  %4713 = vmatpush1.bf16.msra.mxu0 %v3613
  %4714 = vmatprep.subr.bf16.mxu0 0
  %4715 = vmatpush1.bf16.msra.mxu0 %v3614
  %4716 = vmatprep.subr.bf16.mxu0 0
  %4717 = vmatpush1.bf16.msra.mxu0 %v3615
  %4718 = vmatprep.subr.bf16.mxu0 0
  %4719 = vmatpush1.bf16.msra.mxu0 %v3616
  %4720 = vmatprep.subr.bf16.mxu0 0
  %4721 = vmatpush1.bf16.msra.mxu0 %v3617
  %4722 = vmatprep.subr.bf16.mxu0 0
  %4723 = vmatpush1.bf16.msra.mxu0 %v3618
  %4724 = vmatprep.subr.bf16.mxu0 0
  %4725 = vmatpush1.bf16.msra.mxu0 %v3619
  %4726 = vmatprep.subr.bf16.mxu0 0
  %4727 = vmatpush1.bf16.msra.mxu0 %v3620
  %4728 = vmatprep.subr.bf16.mxu0 0
  %4729 = vmatpush1.bf16.msra.mxu0 %v3621
  %4730 = vmatprep.subr.bf16.mxu0 0
  %4731 = vmatpush1.bf16.msra.mxu0 %v3622
  %4732 = vmatprep.subr.bf16.mxu0 0
  %4733 = vmatpush1.bf16.msra.mxu0 %v3623
  %4734 = vmatprep.subr.bf16.mxu0 0
  %4735 = vmatpush1.bf16.msra.mxu0 %v3624
  %4736 = vmatprep.subr.bf16.mxu0 0
  %4737 = vmatpush1.bf16.msra.mxu0 %v3625
  %4738 = vmatprep.mubr.bf16.mxu0 %v1106
  %4739 = vmatmul.mubr.bf16.gmra.mrb[0].mxu0 %v1104
  %v4740 = vpop.f32.mrb[0].mxu0
  %v4741 = vadd.f32 %v4701, %v4740
  %v4742 = vpop.f32.mrb[0].mxu0
  %v4743 = vpop.f32.mrb[0].mxu0
  %v4744 = vpop.f32.mrb[0].mxu0
  %4745 = vdwg.mxu0
  %4746 = vmatprep.subr.bf16.mxu0 0
  %4747 = vmatpush1.bf16.msra.mxu0 %v3626
  %4748 = vmatprep.subr.bf16.mxu0 0
  %4749 = vmatpush1.bf16.msra.mxu0 %v3627
  %4750 = vmatprep.subr.bf16.mxu0 0
  %4751 = vmatpush1.bf16.msra.mxu0 %v3628
  %4752 = vmatprep.subr.bf16.mxu0 0
  %4753 = vmatpush1.bf16.msra.mxu0 %v3629
  %4754 = vmatprep.subr.bf16.mxu0 0
  %4755 = vmatpush1.bf16.msra.mxu0 %v3630
  %4756 = vmatprep.subr.bf16.mxu0 0
  %4757 = vmatpush1.bf16.msra.mxu0 %v3631
  %4758 = vmatprep.subr.bf16.mxu0 0
  %4759 = vmatpush1.bf16.msra.mxu0 %v3632
  %4760 = vmatprep.subr.bf16.mxu0 0
  %4761 = vmatpush1.bf16.msra.mxu0 %v3633
  %4762 = vmatprep.subr.bf16.mxu0 0
  %4763 = vmatpush1.bf16.msra.mxu0 %v3634
  %4764 = vmatprep.subr.bf16.mxu0 0
  %4765 = vmatpush1.bf16.msra.mxu0 %v3635
  %4766 = vmatprep.subr.bf16.mxu0 0
  %4767 = vmatpush1.bf16.msra.mxu0 %v3636
  %4768 = vmatprep.subr.bf16.mxu0 0
  %4769 = vmatpush1.bf16.msra.mxu0 %v3637
  %4770 = vmatprep.subr.bf16.mxu0 0
  %4771 = vmatpush1.bf16.msra.mxu0 %v3638
  %4772 = vmatprep.subr.bf16.mxu0 0
  %4773 = vmatpush1.bf16.msra.mxu0 %v3639
  %4774 = vmatprep.subr.bf16.mxu0 0
  %4775 = vmatpush1.bf16.msra.mxu0 %v3640
  %4776 = vmatprep.subr.bf16.mxu0 0
  %4777 = vmatpush1.bf16.msra.mxu0 %v3641
  %4778 = vmatprep.mubr.bf16.mxu0 %v1144
  %4779 = vmatmul.mubr.bf16.gmra.mrb[0].mxu0 %v1130
  %v4780 = vpop.f32.mrb[0].mxu0
  %v4781 = vadd.f32 %v4741, %v4780
  %v4782 = vpop.f32.mrb[0].mxu0
  %v4783 = vpop.f32.mrb[0].mxu0
  %v4784 = vpop.f32.mrb[0].mxu0
  %4785 = vdwg.mxu0
  %4786 = vmatprep.subr.bf16.mxu0 0
  %4787 = vmatpush1.bf16.msra.mxu0 %v3642
  %4788 = vmatprep.subr.bf16.mxu0 0
  %4789 = vmatpush1.bf16.msra.mxu0 %v3643
  %4790 = vmatprep.subr.bf16.mxu0 0
  %4791 = vmatpush1.bf16.msra.mxu0 %v3644
  %4792 = vmatprep.subr.bf16.mxu0 0
  %4793 = vmatpush1.bf16.msra.mxu0 %v3645
  %4794 = vmatprep.subr.bf16.mxu0 0
  %4795 = vmatpush1.bf16.msra.mxu0 %v3646
  %4796 = vmatprep.subr.bf16.mxu0 0
  %4797 = vmatpush1.bf16.msra.mxu0 %v3647
  %4798 = vmatprep.subr.bf16.mxu0 0
  %4799 = vmatpush1.bf16.msra.mxu0 %v3648
  %4800 = vmatprep.subr.bf16.mxu0 0
  %4801 = vmatpush1.bf16.msra.mxu0 %v3649
  %4802 = vmatprep.subr.bf16.mxu0 0
  %4803 = vmatpush1.bf16.msra.mxu0 %v3650
  %4804 = vmatprep.subr.bf16.mxu0 0
  %4805 = vmatpush1.bf16.msra.mxu0 %v3651
  %4806 = vmatprep.subr.bf16.mxu0 0
  %4807 = vmatpush1.bf16.msra.mxu0 %v3652
  %4808 = vmatprep.subr.bf16.mxu0 0
  %4809 = vmatpush1.bf16.msra.mxu0 %v3653
  %4810 = vmatprep.subr.bf16.mxu0 0
  %4811 = vmatpush1.bf16.msra.mxu0 %v3654
  %4812 = vmatprep.subr.bf16.mxu0 0
  %4813 = vmatpush1.bf16.msra.mxu0 %v3655
  %4814 = vmatprep.subr.bf16.mxu0 0
  %4815 = vmatpush1.bf16.msra.mxu0 %v3656
  %4816 = vmatprep.subr.bf16.mxu0 0
  %4817 = vmatpush1.bf16.msra.mxu0 %v3657
  %4818 = vmatprep.mubr.bf16.mxu0 %v1154
  %4819 = vmatmul.mubr.bf16.gmra.mrb[0].mxu0 %v1152
  %v4820 = vpop.f32.mrb[0].mxu0
  %v4821 = vadd.f32 %v4781, %v4820
  %v4822 = vpop.f32.mrb[0].mxu0
  %v4823 = vpop.f32.mrb[0].mxu0
  %v4824 = vpop.f32.mrb[0].mxu0
  %4825 = vdwg.mxu0
  %4826 = vmatprep.subr.bf16.mxu0 0
  %4827 = vmatpush1.bf16.msra.mxu0 %v3658
  %4828 = vmatprep.subr.bf16.mxu0 0
  %4829 = vmatpush1.bf16.msra.mxu0 %v3659
  %4830 = vmatprep.subr.bf16.mxu0 0
  %4831 = vmatpush1.bf16.msra.mxu0 %v3660
  %4832 = vmatprep.subr.bf16.mxu0 0
  %4833 = vmatpush1.bf16.msra.mxu0 %v3661
  %4834 = vmatprep.subr.bf16.mxu0 0
  %4835 = vmatpush1.bf16.msra.mxu0 %v3662
  %4836 = vmatprep.subr.bf16.mxu0 0
  %4837 = vmatpush1.bf16.msra.mxu0 %v3663
  %4838 = vmatprep.subr.bf16.mxu0 0
  %4839 = vmatpush1.bf16.msra.mxu0 %v3664
  %4840 = vmatprep.subr.bf16.mxu0 0
  %4841 = vmatpush1.bf16.msra.mxu0 %v3665
  %4842 = vmatprep.subr.bf16.mxu0 0
  %4843 = vmatpush1.bf16.msra.mxu0 %v3666
  %4844 = vmatprep.subr.bf16.mxu0 0
  %4845 = vmatpush1.bf16.msra.mxu0 %v3667
  %4846 = vmatprep.subr.bf16.mxu0 0
  %4847 = vmatpush1.bf16.msra.mxu0 %v3668
  %4848 = vmatprep.subr.bf16.mxu0 0
  %4849 = vmatpush1.bf16.msra.mxu0 %v3669
  %4850 = vmatprep.subr.bf16.mxu0 0
  %4851 = vmatpush1.bf16.msra.mxu0 %v3670
  %4852 = vmatprep.subr.bf16.mxu0 0
  %4853 = vmatpush1.bf16.msra.mxu0 %v3671
  %4854 = vmatprep.subr.bf16.mxu0 0
  %4855 = vmatpush1.bf16.msra.mxu0 %v3672
  %4856 = vmatprep.subr.bf16.mxu0 0
  %4857 = vmatpush1.bf16.msra.mxu0 %v3673
  %4858 = vmatprep.mubr.bf16.mxu0 %v1151
  %4859 = vmatmul.mubr.bf16.gmra.mrb[0].mxu0 %v1137
  %v4860 = vpop.f32.mrb[0].mxu0
  %v4861 = vadd.f32 %v4821, %v4860
  %v4862 = vpop.f32.mrb[0].mxu0
  %v4863 = vpop.f32.mrb[0].mxu0
  %v4864 = vpop.f32.mrb[0].mxu0
  %4865 = vdwg.mxu0
  %4866 = vmatprep.subr.bf16.mxu0 0
  %4867 = vmatpush1.bf16.msra.mxu0 %v3674
  %4868 = vmatprep.subr.bf16.mxu0 0
  %4869 = vmatpush1.bf16.msra.mxu0 %v3675
  %4870 = vmatprep.subr.bf16.mxu0 0
  %4871 = vmatpush1.bf16.msra.mxu0 %v3676
  %4872 = vmatprep.subr.bf16.mxu0 0
  %4873 = vmatpush1.bf16.msra.mxu0 %v3677
  %4874 = vmatprep.subr.bf16.mxu0 0
  %4875 = vmatpush1.bf16.msra.mxu0 %v3678
  %4876 = vmatprep.subr.bf16.mxu0 0
  %4877 = vmatpush1.bf16.msra.mxu0 %v3679
  %4878 = vmatprep.subr.bf16.mxu0 0
  %4879 = vmatpush1.bf16.msra.mxu0 %v3680
  %4880 = vmatprep.subr.bf16.mxu0 0
  %4881 = vmatpush1.bf16.msra.mxu0 %v3681
  %4882 = vmatprep.subr.bf16.mxu0 0
  %4883 = vmatpush1.bf16.msra.mxu0 %v3682
  %4884 = vmatprep.subr.bf16.mxu0 0
  %4885 = vmatpush1.bf16.msra.mxu0 %v3683
  %4886 = vmatprep.subr.bf16.mxu0 0
  %4887 = vmatpush1.bf16.msra.mxu0 %v3684
  %4888 = vmatprep.subr.bf16.mxu0 0
  %4889 = vmatpush1.bf16.msra.mxu0 %v3685
  %4890 = vmatprep.subr.bf16.mxu0 0
  %4891 = vmatpush1.bf16.msra.mxu0 %v3686
  %4892 = vmatprep.subr.bf16.mxu0 0
  %4893 = vmatpush1.bf16.msra.mxu0 %v3687
  %4894 = vmatprep.subr.bf16.mxu0 0
  %4895 = vmatpush1.bf16.msra.mxu0 %v3688
  %4896 = vmatprep.subr.bf16.mxu0 0
  %4897 = vmatpush1.bf16.msra.mxu0 %v3689
  %4898 = vmatprep.mubr.bf16.mxu0 %v1155
  %4899 = vmatmul.mubr.bf16.gmra.mrb[0].mxu0 %v1153
  %v4900 = vpop.f32.mrb[0].mxu0
  %v4901 = vadd.f32 %v4861, %v4900
  %v4902 = vpop.f32.mrb[0].mxu0
  %v4903 = vpop.f32.mrb[0].mxu0
  %v4904 = vpop.f32.mrb[0].mxu0
  %4905 = vdwg.mxu0
  %4906 = vmatprep.subr.bf16.mxu0 0
  %4907 = vmatpush1.bf16.msra.mxu0 %v3690
  %4908 = vmatprep.subr.bf16.mxu0 0
  %4909 = vmatpush1.bf16.msra.mxu0 %v3691
  %4910 = vmatprep.subr.bf16.mxu0 0
  %4911 = vmatpush1.bf16.msra.mxu0 %v3692
  %4912 = vmatprep.subr.bf16.mxu0 0
  %4913 = vmatpush1.bf16.msra.mxu0 %v3693
  %4914 = vmatprep.subr.bf16.mxu0 0
  %4915 = vmatpush1.bf16.msra.mxu0 %v3694
  %4916 = vmatprep.subr.bf16.mxu0 0
  %4917 = vmatpush1.bf16.msra.mxu0 %v3695
  %4918 = vmatprep.subr.bf16.mxu0 0
  %4919 = vmatpush1.bf16.msra.mxu0 %v3696
  %4920 = vmatprep.subr.bf16.mxu0 0
  %4921 = vmatpush1.bf16.msra.mxu0 %v3697
  %4922 = vmatprep.subr.bf16.mxu0 0
  %4923 = vmatpush1.bf16.msra.mxu0 %v3698
  %4924 = vmatprep.subr.bf16.mxu0 0
  %4925 = vmatpush1.bf16.msra.mxu0 %v3699
  %4926 = vmatprep.subr.bf16.mxu0 0
  %4927 = vmatpush1.bf16.msra.mxu0 %v3700
  %4928 = vmatprep.subr.bf16.mxu0 0
  %4929 = vmatpush1.bf16.msra.mxu0 %v3701
  %4930 = vmatprep.subr.bf16.mxu0 0
  %4931 = vmatpush1.bf16.msra.mxu0 %v3702
  %4932 = vmatprep.subr.bf16.mxu0 0
  %4933 = vmatpush1.bf16.msra.mxu0 %v3703
  %4934 = vmatprep.subr.bf16.mxu0 0
  %4935 = vmatpush1.bf16.msra.mxu0 %v3704
  %4936 = vmatprep.subr.bf16.mxu0 0
  %4937 = vmatpush1.bf16.msra.mxu0 %v3705
  %4938 = vmatprep.mubr.bf16.mxu0 %v1193
  %4939 = vmatmul.mubr.bf16.gmra.mrb[0].mxu0 %v1179
  %v4940 = vpop.f32.mrb[0].mxu0
  %v4941 = vadd.f32 %v4901, %v4940
  %v4942 = vpop.f32.mrb[0].mxu0
  %v4943 = vpop.f32.mrb[0].mxu0
  %v4944 = vpop.f32.mrb[0].mxu0
  %4945 = vdwg.mxu0
  %4946 = vmatprep.subr.bf16.mxu0 0
  %4947 = vmatpush1.bf16.msra.mxu0 %v3706
  %4948 = vmatprep.subr.bf16.mxu0 0
  %4949 = vmatpush1.bf16.msra.mxu0 %v3707
  %4950 = vmatprep.subr.bf16.mxu0 0
  %4951 = vmatpush1.bf16.msra.mxu0 %v3708
  %4952 = vmatprep.subr.bf16.mxu0 0
  %4953 = vmatpush1.bf16.msra.mxu0 %v3709
  %4954 = vmatprep.subr.bf16.mxu0 0
  %4955 = vmatpush1.bf16.msra.mxu0 %v3710
  %4956 = vmatprep.subr.bf16.mxu0 0
  %4957 = vmatpush1.bf16.msra.mxu0 %v3711
  %4958 = vmatprep.subr.bf16.mxu0 0
  %4959 = vmatpush1.bf16.msra.mxu0 %v3712
  %4960 = vmatprep.subr.bf16.mxu0 0
  %4961 = vmatpush1.bf16.msra.mxu0 %v3713
  %4962 = vmatprep.subr.bf16.mxu0 0
  %4963 = vmatpush1.bf16.msra.mxu0 %v3714
  %4964 = vmatprep.subr.bf16.mxu0 0
  %4965 = vmatpush1.bf16.msra.mxu0 %v3715
  %4966 = vmatprep.subr.bf16.mxu0 0
  %4967 = vmatpush1.bf16.msra.mxu0 %v3716
  %4968 = vmatprep.subr.bf16.mxu0 0
  %4969 = vmatpush1.bf16.msra.mxu0 %v3717
  %4970 = vmatprep.subr.bf16.mxu0 0
  %4971 = vmatpush1.bf16.msra.mxu0 %v3718
  %4972 = vmatprep.subr.bf16.mxu0 0
  %4973 = vmatpush1.bf16.msra.mxu0 %v3719
  %4974 = vmatprep.subr.bf16.mxu0 0
  %4975 = vmatpush1.bf16.msra.mxu0 %v3720
  %4976 = vmatprep.subr.bf16.mxu0 0
  %4977 = vmatpush1.bf16.msra.mxu0 %v3721
  %4978 = vmatprep.mubr.bf16.mxu0 %v1203
  %4979 = vmatmul.mubr.bf16.gmra.mrb[0].mxu0 %v1201
  %v4980 = vpop.f32.mrb[0].mxu0
  %v4981 = vadd.f32 %v4941, %v4980
  %v4982 = vpop.f32.mrb[0].mxu0
  %v4983 = vpop.f32.mrb[0].mxu0
  %v4984 = vpop.f32.mrb[0].mxu0
  %4985 = vdwg.mxu0
  %4986 = vmatprep.subr.bf16.mxu0 0
  %4987 = vmatpush1.bf16.msra.mxu0 %v3722
  %4988 = vmatprep.subr.bf16.mxu0 0
  %4989 = vmatpush1.bf16.msra.mxu0 %v3723
  %4990 = vmatprep.subr.bf16.mxu0 0
  %4991 = vmatpush1.bf16.msra.mxu0 %v3724
  %4992 = vmatprep.subr.bf16.mxu0 0
  %4993 = vmatpush1.bf16.msra.mxu0 %v3725
  %4994 = vmatprep.subr.bf16.mxu0 0
  %4995 = vmatpush1.bf16.msra.mxu0 %v3726
  %4996 = vmatprep.subr.bf16.mxu0 0
  %4997 = vmatpush1.bf16.msra.mxu0 %v3727
  %4998 = vmatprep.subr.bf16.mxu0 0
  %4999 = vmatpush1.bf16.msra.mxu0 %v3728
  %5000 = vmatprep.subr.bf16.mxu0 0
  %5001 = vmatpush1.bf16.msra.mxu0 %v3729
  %5002 = vmatprep.subr.bf16.mxu0 0
  %5003 = vmatpush1.bf16.msra.mxu0 %v3730
  %5004 = vmatprep.subr.bf16.mxu0 0
  %5005 = vmatpush1.bf16.msra.mxu0 %v3731
  %5006 = vmatprep.subr.bf16.mxu0 0
  %5007 = vmatpush1.bf16.msra.mxu0 %v3732
  %5008 = vmatprep.subr.bf16.mxu0 0
  %5009 = vmatpush1.bf16.msra.mxu0 %v3733
  %5010 = vmatprep.subr.bf16.mxu0 0
  %5011 = vmatpush1.bf16.msra.mxu0 %v3734
  %5012 = vmatprep.subr.bf16.mxu0 0
  %5013 = vmatpush1.bf16.msra.mxu0 %v3735
  %5014 = vmatprep.subr.bf16.mxu0 0
  %5015 = vmatpush1.bf16.msra.mxu0 %v3736
  %5016 = vmatprep.subr.bf16.mxu0 0
  %5017 = vmatpush1.bf16.msra.mxu0 %v3737
  %5018 = vmatprep.mubr.bf16.mxu0 %v1200
  %5019 = vmatmul.mubr.bf16.gmra.mrb[0].mxu0 %v1186
  %v5020 = vpop.f32.mrb[0].mxu0
  %v5021 = vadd.f32 %v4981, %v5020
  %v5022 = vpop.f32.mrb[0].mxu0
  %v5023 = vpop.f32.mrb[0].mxu0
  %v5024 = vpop.f32.mrb[0].mxu0
  %5025 = vdwg.mxu0
  %5026 = vmatprep.subr.bf16.mxu0 0
  %5027 = vmatpush1.bf16.msra.mxu0 %v3738
  %5028 = vmatprep.subr.bf16.mxu0 0
  %5029 = vmatpush1.bf16.msra.mxu0 %v3739
  %5030 = vmatprep.subr.bf16.mxu0 0
  %5031 = vmatpush1.bf16.msra.mxu0 %v3740
  %5032 = vmatprep.subr.bf16.mxu0 0
  %5033 = vmatpush1.bf16.msra.mxu0 %v3741
  %5034 = vmatprep.subr.bf16.mxu0 0
  %5035 = vmatpush1.bf16.msra.mxu0 %v3742
  %5036 = vmatprep.subr.bf16.mxu0 0
  %5037 = vmatpush1.bf16.msra.mxu0 %v3743
  %5038 = vmatprep.subr.bf16.mxu0 0
  %5039 = vmatpush1.bf16.msra.mxu0 %v3744
  %5040 = vmatprep.subr.bf16.mxu0 0
  %5041 = vmatpush1.bf16.msra.mxu0 %v3745
  %5042 = vmatprep.subr.bf16.mxu0 0
  %5043 = vmatpush1.bf16.msra.mxu0 %v3746
  %5044 = vmatprep.subr.bf16.mxu0 0
  %5045 = vmatpush1.bf16.msra.mxu0 %v3747
  %5046 = vmatprep.subr.bf16.mxu0 0
  %5047 = vmatpush1.bf16.msra.mxu0 %v3748
  %5048 = vmatprep.subr.bf16.mxu0 0
  %5049 = vmatpush1.bf16.msra.mxu0 %v3749
  %5050 = vmatprep.subr.bf16.mxu0 0
  %5051 = vmatpush1.bf16.msra.mxu0 %v3750
  %5052 = vmatprep.subr.bf16.mxu0 0
  %5053 = vmatpush1.bf16.msra.mxu0 %v3751
  %5054 = vmatprep.subr.bf16.mxu0 0
  %5055 = vmatpush1.bf16.msra.mxu0 %v3752
  %5056 = vmatprep.subr.bf16.mxu0 0
  %5057 = vmatpush1.bf16.msra.mxu0 %v3753
  %5058 = vmatprep.mubr.bf16.mxu0 %v1204
  %5059 = vmatmul.mubr.bf16.gmra.mrb[0].mxu0 %v1202
  %v5060 = vpop.f32.mrb[0].mxu0
  %v5061 = vadd.f32 %v5021, %v5060
  %v5062 = vpop.f32.mrb[0].mxu0
  %v5063 = vpop.f32.mrb[0].mxu0
  %v5064 = vpop.f32.mrb[0].mxu0
  %5065 = vdwg.mxu0
  %5066 = vmatprep.subr.bf16.mxu0 0
  %5067 = vmatpush1.bf16.msra.mxu0 %v3754
  %5068 = vmatprep.subr.bf16.mxu0 0
  %5069 = vmatpush1.bf16.msra.mxu0 %v3755
  %5070 = vmatprep.subr.bf16.mxu0 0
  %5071 = vmatpush1.bf16.msra.mxu0 %v3756
  %5072 = vmatprep.subr.bf16.mxu0 0
  %5073 = vmatpush1.bf16.msra.mxu0 %v3757
  %5074 = vmatprep.subr.bf16.mxu0 0
  %5075 = vmatpush1.bf16.msra.mxu0 %v3758
  %5076 = vmatprep.subr.bf16.mxu0 0
  %5077 = vmatpush1.bf16.msra.mxu0 %v3759
  %5078 = vmatprep.subr.bf16.mxu0 0
  %5079 = vmatpush1.bf16.msra.mxu0 %v3760
  %5080 = vmatprep.subr.bf16.mxu0 0
  %5081 = vmatpush1.bf16.msra.mxu0 %v3761
  %5082 = vmatprep.subr.bf16.mxu0 0
  %5083 = vmatpush1.bf16.msra.mxu0 %v3762
  %5084 = vmatprep.subr.bf16.mxu0 0
  %5085 = vmatpush1.bf16.msra.mxu0 %v3763
  %5086 = vmatprep.subr.bf16.mxu0 0
  %5087 = vmatpush1.bf16.msra.mxu0 %v3764
  %5088 = vmatprep.subr.bf16.mxu0 0
  %5089 = vmatpush1.bf16.msra.mxu0 %v3765
  %5090 = vmatprep.subr.bf16.mxu0 0
  %5091 = vmatpush1.bf16.msra.mxu0 %v3766
  %5092 = vmatprep.subr.bf16.mxu0 0
  %5093 = vmatpush1.bf16.msra.mxu0 %v3767
  %5094 = vmatprep.subr.bf16.mxu0 0
  %5095 = vmatpush1.bf16.msra.mxu0 %v3768
  %5096 = vmatprep.subr.bf16.mxu0 0
  %5097 = vmatpush1.bf16.msra.mxu0 %v3769
  %5098 = vmatprep.mubr.bf16.mxu0 %v1242
  %5099 = vmatmul.mubr.bf16.gmra.mrb[0].mxu0 %v1228
  %v5100 = vpop.f32.mrb[0].mxu0
  %v5101 = vadd.f32 %v5061, %v5100
  %v5102 = vpop.f32.mrb[0].mxu0
  %v5103 = vpop.f32.mrb[0].mxu0
  %v5104 = vpop.f32.mrb[0].mxu0
  %5105 = vdwg.mxu0
  %5106 = vmatprep.subr.bf16.mxu0 0
  %5107 = vmatpush1.bf16.msra.mxu0 %v3770
  %5108 = vmatprep.subr.bf16.mxu0 0
  %5109 = vmatpush1.bf16.msra.mxu0 %v3771
  %5110 = vmatprep.subr.bf16.mxu0 0
  %5111 = vmatpush1.bf16.msra.mxu0 %v3772
  %5112 = vmatprep.subr.bf16.mxu0 0
  %5113 = vmatpush1.bf16.msra.mxu0 %v3773
  %5114 = vmatprep.subr.bf16.mxu0 0
  %5115 = vmatpush1.bf16.msra.mxu0 %v3774
  %5116 = vmatprep.subr.bf16.mxu0 0
  %5117 = vmatpush1.bf16.msra.mxu0 %v3775
  %5118 = vmatprep.subr.bf16.mxu0 0
  %5119 = vmatpush1.bf16.msra.mxu0 %v3776
  %5120 = vmatprep.subr.bf16.mxu0 0
  %5121 = vmatpush1.bf16.msra.mxu0 %v3777
  %5122 = vmatprep.subr.bf16.mxu0 0
  %5123 = vmatpush1.bf16.msra.mxu0 %v3778
  %5124 = vmatprep.subr.bf16.mxu0 0
  %5125 = vmatpush1.bf16.msra.mxu0 %v3779
  %5126 = vmatprep.subr.bf16.mxu0 0
  %5127 = vmatpush1.bf16.msra.mxu0 %v3780
  %5128 = vmatprep.subr.bf16.mxu0 0
  %5129 = vmatpush1.bf16.msra.mxu0 %v3781
  %5130 = vmatprep.subr.bf16.mxu0 0
  %5131 = vmatpush1.bf16.msra.mxu0 %v3782
  %5132 = vmatprep.subr.bf16.mxu0 0
  %5133 = vmatpush1.bf16.msra.mxu0 %v3783
  %5134 = vmatprep.subr.bf16.mxu0 0
  %5135 = vmatpush1.bf16.msra.mxu0 %v3784
  %5136 = vmatprep.subr.bf16.mxu0 0
  %5137 = vmatpush1.bf16.msra.mxu0 %v3785
  %5138 = vmatprep.mubr.bf16.mxu0 %v1252
  %5139 = vmatmul.mubr.bf16.gmra.mrb[0].mxu0 %v1250
  %v5140 = vpop.f32.mrb[0].mxu0
  %v5141 = vadd.f32 %v5101, %v5140
  %v5142 = vpop.f32.mrb[0].mxu0
  %v5143 = vpop.f32.mrb[0].mxu0
  %v5144 = vpop.f32.mrb[0].mxu0
  %5145 = vdwg.mxu0
  %5146 = vmatprep.subr.bf16.mxu0 0
  %5147 = vmatpush1.bf16.msra.mxu0 %v3786
  %5148 = vmatprep.subr.bf16.mxu0 0
  %5149 = vmatpush1.bf16.msra.mxu0 %v3787
  %5150 = vmatprep.subr.bf16.mxu0 0
  %5151 = vmatpush1.bf16.msra.mxu0 %v3788
  %5152 = vmatprep.subr.bf16.mxu0 0
  %5153 = vmatpush1.bf16.msra.mxu0 %v3789
  %5154 = vmatprep.subr.bf16.mxu0 0
  %5155 = vmatpush1.bf16.msra.mxu0 %v3790
  %5156 = vmatprep.subr.bf16.mxu0 0
  %5157 = vmatpush1.bf16.msra.mxu0 %v3791
  %5158 = vmatprep.subr.bf16.mxu0 0
  %5159 = vmatpush1.bf16.msra.mxu0 %v3792
  %5160 = vmatprep.subr.bf16.mxu0 0
  %5161 = vmatpush1.bf16.msra.mxu0 %v3793
  %5162 = vmatprep.subr.bf16.mxu0 0
  %5163 = vmatpush1.bf16.msra.mxu0 %v3794
  %5164 = vmatprep.subr.bf16.mxu0 0
  %5165 = vmatpush1.bf16.msra.mxu0 %v3795
  %5166 = vmatprep.subr.bf16.mxu0 0
  %5167 = vmatpush1.bf16.msra.mxu0 %v3796
  %5168 = vmatprep.subr.bf16.mxu0 0
  %5169 = vmatpush1.bf16.msra.mxu0 %v3797
  %5170 = vmatprep.subr.bf16.mxu0 0
  %5171 = vmatpush1.bf16.msra.mxu0 %v3798
  %5172 = vmatprep.subr.bf16.mxu0 0
  %5173 = vmatpush1.bf16.msra.mxu0 %v3799
  %5174 = vmatprep.subr.bf16.mxu0 0
  %5175 = vmatpush1.bf16.msra.mxu0 %v3800
  %5176 = vmatprep.subr.bf16.mxu0 0
  %5177 = vmatpush1.bf16.msra.mxu0 %v3801
  %5178 = vmatprep.mubr.bf16.mxu0 %v1249
  %5179 = vmatmul.mubr.bf16.gmra.mrb[0].mxu0 %v1235
  %v5180 = vpop.f32.mrb[0].mxu0
  %v5181 = vadd.f32 %v5141, %v5180
  %v5182 = vpop.f32.mrb[0].mxu0
  %v5183 = vpop.f32.mrb[0].mxu0
  %v5184 = vpop.f32.mrb[0].mxu0
  %5185 = vdwg.mxu0
  %5186 = vmatprep.subr.bf16.mxu0 0
  %5187 = vmatpush1.bf16.msra.mxu0 %v3802
  %5188 = vmatprep.subr.bf16.mxu0 0
  %5189 = vmatpush1.bf16.msra.mxu0 %v3803
  %5190 = vmatprep.subr.bf16.mxu0 0
  %5191 = vmatpush1.bf16.msra.mxu0 %v3804
  %5192 = vmatprep.subr.bf16.mxu0 0
  %5193 = vmatpush1.bf16.msra.mxu0 %v3805
  %5194 = vmatprep.subr.bf16.mxu0 0
  %5195 = vmatpush1.bf16.msra.mxu0 %v3806
  %5196 = vmatprep.subr.bf16.mxu0 0
  %5197 = vmatpush1.bf16.msra.mxu0 %v3807
  %5198 = vmatprep.subr.bf16.mxu0 0
  %5199 = vmatpush1.bf16.msra.mxu0 %v3808
  %5200 = vmatprep.subr.bf16.mxu0 0
  %5201 = vmatpush1.bf16.msra.mxu0 %v3809
  %5202 = vmatprep.subr.bf16.mxu0 0
  %5203 = vmatpush1.bf16.msra.mxu0 %v3810
  %5204 = vmatprep.subr.bf16.mxu0 0
  %5205 = vmatpush1.bf16.msra.mxu0 %v3811
  %5206 = vmatprep.subr.bf16.mxu0 0
  %5207 = vmatpush1.bf16.msra.mxu0 %v3812
  %5208 = vmatprep.subr.bf16.mxu0 0
  %5209 = vmatpush1.bf16.msra.mxu0 %v3813
  %5210 = vmatprep.subr.bf16.mxu0 0
  %5211 = vmatpush1.bf16.msra.mxu0 %v3814
  %5212 = vmatprep.subr.bf16.mxu0 0
  %5213 = vmatpush1.bf16.msra.mxu0 %v3815
  %5214 = vmatprep.subr.bf16.mxu0 0
  %5215 = vmatpush1.bf16.msra.mxu0 %v3816
  %5216 = vmatprep.subr.bf16.mxu0 0
  %5217 = vmatpush1.bf16.msra.mxu0 %v3817
  %5218 = vmatprep.mubr.bf16.mxu0 %v1253
  %5219 = vmatmul.mubr.bf16.gmra.mrb[0].mxu0 %v1251
  %v5220 = vpop.f32.mrb[0].mxu0
  %v5221 = vadd.f32 %v5181, %v5220
  %v5222 = vpop.f32.mrb[0].mxu0
  %v5223 = vpop.f32.mrb[0].mxu0
  %v5224 = vpop.f32.mrb[0].mxu0
  %5225 = vdwg.mxu0
  %5226 = vmatprep.subr.bf16.mxu0 0
  %5227 = vmatpush1.bf16.msra.mxu0 %v3818
  %5228 = vmatprep.subr.bf16.mxu0 0
  %5229 = vmatpush1.bf16.msra.mxu0 %v3819
  %5230 = vmatprep.subr.bf16.mxu0 0
  %5231 = vmatpush1.bf16.msra.mxu0 %v3820
  %5232 = vmatprep.subr.bf16.mxu0 0
  %5233 = vmatpush1.bf16.msra.mxu0 %v3821
  %5234 = vmatprep.subr.bf16.mxu0 0
  %5235 = vmatpush1.bf16.msra.mxu0 %v3822
  %5236 = vmatprep.subr.bf16.mxu0 0
  %5237 = vmatpush1.bf16.msra.mxu0 %v3823
  %5238 = vmatprep.subr.bf16.mxu0 0
  %5239 = vmatpush1.bf16.msra.mxu0 %v3824
  %5240 = vmatprep.subr.bf16.mxu0 0
  %5241 = vmatpush1.bf16.msra.mxu0 %v3825
  %5242 = vmatprep.subr.bf16.mxu0 0
  %5243 = vmatpush1.bf16.msra.mxu0 %v3826
  %5244 = vmatprep.subr.bf16.mxu0 0
  %5245 = vmatpush1.bf16.msra.mxu0 %v3827
  %5246 = vmatprep.subr.bf16.mxu0 0
  %5247 = vmatpush1.bf16.msra.mxu0 %v3828
  %5248 = vmatprep.subr.bf16.mxu0 0
  %5249 = vmatpush1.bf16.msra.mxu0 %v3829
  %5250 = vmatprep.subr.bf16.mxu0 0
  %5251 = vmatpush1.bf16.msra.mxu0 %v3830
  %5252 = vmatprep.subr.bf16.mxu0 0
  %5253 = vmatpush1.bf16.msra.mxu0 %v3831
  %5254 = vmatprep.subr.bf16.mxu0 0
  %5255 = vmatpush1.bf16.msra.mxu0 %v3832
  %5256 = vmatprep.subr.bf16.mxu0 0
  %5257 = vmatpush1.bf16.msra.mxu0 %v3833
  %5258 = vmatprep.mubr.bf16.mxu0 %v1291
  %5259 = vmatmul.mubr.bf16.gmra.mrb[0].mxu0 %v1277
  %v5260 = vpop.f32.mrb[0].mxu0
  %v5261 = vadd.f32 %v5221, %v5260
  %v5262 = vpop.f32.mrb[0].mxu0
  %v5263 = vpop.f32.mrb[0].mxu0
  %v5264 = vpop.f32.mrb[0].mxu0
  %5265 = vdwg.mxu0
  %5266 = vmatprep.subr.bf16.mxu0 0
  %5267 = vmatpush1.bf16.msra.mxu0 %v3834
  %5268 = vmatprep.subr.bf16.mxu0 0
  %5269 = vmatpush1.bf16.msra.mxu0 %v3835
  %5270 = vmatprep.subr.bf16.mxu0 0
  %5271 = vmatpush1.bf16.msra.mxu0 %v3836
  %5272 = vmatprep.subr.bf16.mxu0 0
  %5273 = vmatpush1.bf16.msra.mxu0 %v3837
  %5274 = vmatprep.subr.bf16.mxu0 0
  %5275 = vmatpush1.bf16.msra.mxu0 %v3838
  %5276 = vmatprep.subr.bf16.mxu0 0
  %5277 = vmatpush1.bf16.msra.mxu0 %v3839
  %5278 = vmatprep.subr.bf16.mxu0 0
  %5279 = vmatpush1.bf16.msra.mxu0 %v3840
  %5280 = vmatprep.subr.bf16.mxu0 0
  %5281 = vmatpush1.bf16.msra.mxu0 %v3841
  %5282 = vmatprep.subr.bf16.mxu0 0
  %5283 = vmatpush1.bf16.msra.mxu0 %v3842
  %5284 = vmatprep.subr.bf16.mxu0 0
  %5285 = vmatpush1.bf16.msra.mxu0 %v3843
  %5286 = vmatprep.subr.bf16.mxu0 0
  %5287 = vmatpush1.bf16.msra.mxu0 %v3844
  %5288 = vmatprep.subr.bf16.mxu0 0
  %5289 = vmatpush1.bf16.msra.mxu0 %v3845
  %5290 = vmatprep.subr.bf16.mxu0 0
  %5291 = vmatpush1.bf16.msra.mxu0 %v3846
  %5292 = vmatprep.subr.bf16.mxu0 0
  %5293 = vmatpush1.bf16.msra.mxu0 %v3847
  %5294 = vmatprep.subr.bf16.mxu0 0
  %5295 = vmatpush1.bf16.msra.mxu0 %v3848
  %5296 = vmatprep.subr.bf16.mxu0 0
  %5297 = vmatpush1.bf16.msra.mxu0 %v3849
  %5298 = vmatprep.mubr.bf16.mxu0 %v1301
  %5299 = vmatmul.mubr.bf16.gmra.mrb[0].mxu0 %v1299
  %v5300 = vpop.f32.mrb[0].mxu0
  %v5301 = vadd.f32 %v5261, %v5300
  %v5302 = vpop.f32.mrb[0].mxu0
  %v5303 = vpop.f32.mrb[0].mxu0
  %v5304 = vpop.f32.mrb[0].mxu0
  %5305 = vdwg.mxu0
  %5306 = vmatprep.subr.bf16.mxu0 0
  %5307 = vmatpush1.bf16.msra.mxu0 %v3850
  %5308 = vmatprep.subr.bf16.mxu0 0
  %5309 = vmatpush1.bf16.msra.mxu0 %v3851
  %5310 = vmatprep.subr.bf16.mxu0 0
  %5311 = vmatpush1.bf16.msra.mxu0 %v3852
  %5312 = vmatprep.subr.bf16.mxu0 0
  %5313 = vmatpush1.bf16.msra.mxu0 %v3853
  %5314 = vmatprep.subr.bf16.mxu0 0
  %5315 = vmatpush1.bf16.msra.mxu0 %v3854
  %5316 = vmatprep.subr.bf16.mxu0 0
  %5317 = vmatpush1.bf16.msra.mxu0 %v3855
  %5318 = vmatprep.subr.bf16.mxu0 0
  %5319 = vmatpush1.bf16.msra.mxu0 %v3856
  %5320 = vmatprep.subr.bf16.mxu0 0
  %5321 = vmatpush1.bf16.msra.mxu0 %v3857
  %5322 = vmatprep.subr.bf16.mxu0 0
  %5323 = vmatpush1.bf16.msra.mxu0 %v3858
  %5324 = vmatprep.subr.bf16.mxu0 0
  %5325 = vmatpush1.bf16.msra.mxu0 %v3859
  %5326 = vmatprep.subr.bf16.mxu0 0
  %5327 = vmatpush1.bf16.msra.mxu0 %v3860
  %5328 = vmatprep.subr.bf16.mxu0 0
  %5329 = vmatpush1.bf16.msra.mxu0 %v3861
  %5330 = vmatprep.subr.bf16.mxu0 0
  %5331 = vmatpush1.bf16.msra.mxu0 %v3862
  %5332 = vmatprep.subr.bf16.mxu0 0
  %5333 = vmatpush1.bf16.msra.mxu0 %v3863
  %5334 = vmatprep.subr.bf16.mxu0 0
  %5335 = vmatpush1.bf16.msra.mxu0 %v3864
  %5336 = vmatprep.subr.bf16.mxu0 0
  %5337 = vmatpush1.bf16.msra.mxu0 %v3865
  %5338 = vmatprep.mubr.bf16.mxu0 %v1298
  %5339 = vmatmul.mubr.bf16.gmra.mrb[0].mxu0 %v1284
  %v5340 = vpop.f32.mrb[0].mxu0
  %v5341 = vadd.f32 %v5301, %v5340
  %v5342 = vpop.f32.mrb[0].mxu0
  %v5343 = vpop.f32.mrb[0].mxu0
  %v5344 = vpop.f32.mrb[0].mxu0
  %5345 = vdwg.mxu0
  %5346 = vmatprep.subr.bf16.mxu0 0
  %5347 = vmatpush1.bf16.msra.mxu0 %v3866
  %5348 = vmatprep.subr.bf16.mxu0 0
  %5349 = vmatpush1.bf16.msra.mxu0 %v3867
  %5350 = vmatprep.subr.bf16.mxu0 0
  %5351 = vmatpush1.bf16.msra.mxu0 %v3868
  %5352 = vmatprep.subr.bf16.mxu0 0
  %5353 = vmatpush1.bf16.msra.mxu0 %v3869
  %5354 = vmatprep.subr.bf16.mxu0 0
  %5355 = vmatpush1.bf16.msra.mxu0 %v3870
  %5356 = vmatprep.subr.bf16.mxu0 0
  %5357 = vmatpush1.bf16.msra.mxu0 %v3871
  %5358 = vmatprep.subr.bf16.mxu0 0
  %5359 = vmatpush1.bf16.msra.mxu0 %v3872
  %5360 = vmatprep.subr.bf16.mxu0 0
  %5361 = vmatpush1.bf16.msra.mxu0 %v3873
  %5362 = vmatprep.subr.bf16.mxu0 0
  %5363 = vmatpush1.bf16.msra.mxu0 %v3874
  %5364 = vmatprep.subr.bf16.mxu0 0
  %5365 = vmatpush1.bf16.msra.mxu0 %v3875
  %5366 = vmatprep.subr.bf16.mxu0 0
  %5367 = vmatpush1.bf16.msra.mxu0 %v3876
  %5368 = vmatprep.subr.bf16.mxu0 0
  %5369 = vmatpush1.bf16.msra.mxu0 %v3877
  %5370 = vmatprep.subr.bf16.mxu0 0
  %5371 = vmatpush1.bf16.msra.mxu0 %v3878
  %5372 = vmatprep.subr.bf16.mxu0 0
  %5373 = vmatpush1.bf16.msra.mxu0 %v3879
  %5374 = vmatprep.subr.bf16.mxu0 0
  %5375 = vmatpush1.bf16.msra.mxu0 %v3880
  %5376 = vmatprep.subr.bf16.mxu0 0
  %5377 = vmatpush1.bf16.msra.mxu0 %v3881
  %5378 = vmatprep.mubr.bf16.mxu0 %v1302
  %5379 = vmatmul.mubr.bf16.gmra.mrb[0].mxu0 %v1300
  %v5380 = vpop.f32.mrb[0].mxu0
  %v5381 = vadd.f32 %v5341, %v5380
  %v5382 = vpop.f32.mrb[0].mxu0
  %v5383 = vpop.f32.mrb[0].mxu0
  %v5384 = vpop.f32.mrb[0].mxu0
  %5385 = vdwg.mxu0
  %5386 = vmatprep.subr.bf16.mxu0 0
  %5387 = vmatpush1.bf16.msra.mxu0 %v3882
  %5388 = vmatprep.subr.bf16.mxu0 0
  %5389 = vmatpush1.bf16.msra.mxu0 %v3883
  %5390 = vmatprep.subr.bf16.mxu0 0
  %5391 = vmatpush1.bf16.msra.mxu0 %v3884
  %5392 = vmatprep.subr.bf16.mxu0 0
  %5393 = vmatpush1.bf16.msra.mxu0 %v3885
  %5394 = vmatprep.subr.bf16.mxu0 0
  %5395 = vmatpush1.bf16.msra.mxu0 %v3886
  %5396 = vmatprep.subr.bf16.mxu0 0
  %5397 = vmatpush1.bf16.msra.mxu0 %v3887
  %5398 = vmatprep.subr.bf16.mxu0 0
  %5399 = vmatpush1.bf16.msra.mxu0 %v3888
  %5400 = vmatprep.subr.bf16.mxu0 0
  %5401 = vmatpush1.bf16.msra.mxu0 %v3889
  %5402 = vmatprep.subr.bf16.mxu0 0
  %5403 = vmatpush1.bf16.msra.mxu0 %v3890
  %5404 = vmatprep.subr.bf16.mxu0 0
  %5405 = vmatpush1.bf16.msra.mxu0 %v3891
  %5406 = vmatprep.subr.bf16.mxu0 0
  %5407 = vmatpush1.bf16.msra.mxu0 %v3892
  %5408 = vmatprep.subr.bf16.mxu0 0
  %5409 = vmatpush1.bf16.msra.mxu0 %v3893
  %5410 = vmatprep.subr.bf16.mxu0 0
  %5411 = vmatpush1.bf16.msra.mxu0 %v3894
  %5412 = vmatprep.subr.bf16.mxu0 0
  %5413 = vmatpush1.bf16.msra.mxu0 %v3895
  %5414 = vmatprep.subr.bf16.mxu0 0
  %5415 = vmatpush1.bf16.msra.mxu0 %v3896
  %5416 = vmatprep.subr.bf16.mxu0 0
  %5417 = vmatpush1.bf16.msra.mxu0 %v3897
  %5418 = vmatprep.mubr.bf16.mxu0 %v1340
  %5419 = vmatmul.mubr.bf16.gmra.mrb[0].mxu0 %v1326
  %v5420 = vpop.f32.mrb[0].mxu0
  %v5421 = vadd.f32 %v5381, %v5420
  %v5422 = vpop.f32.mrb[0].mxu0
  %v5423 = vpop.f32.mrb[0].mxu0
  %v5424 = vpop.f32.mrb[0].mxu0
  %5425 = vdwg.mxu0
  %5426 = vmatprep.subr.bf16.mxu0 0
  %5427 = vmatpush1.bf16.msra.mxu0 %v3898
  %5428 = vmatprep.subr.bf16.mxu0 0
  %5429 = vmatpush1.bf16.msra.mxu0 %v3899
  %5430 = vmatprep.subr.bf16.mxu0 0
  %5431 = vmatpush1.bf16.msra.mxu0 %v3900
  %5432 = vmatprep.subr.bf16.mxu0 0
  %5433 = vmatpush1.bf16.msra.mxu0 %v3901
  %5434 = vmatprep.subr.bf16.mxu0 0
  %5435 = vmatpush1.bf16.msra.mxu0 %v3902
  %5436 = vmatprep.subr.bf16.mxu0 0
  %5437 = vmatpush1.bf16.msra.mxu0 %v3903
  %5438 = vmatprep.subr.bf16.mxu0 0
  %5439 = vmatpush1.bf16.msra.mxu0 %v3904
  %5440 = vmatprep.subr.bf16.mxu0 0
  %5441 = vmatpush1.bf16.msra.mxu0 %v3905
  %5442 = vmatprep.subr.bf16.mxu0 0
  %5443 = vmatpush1.bf16.msra.mxu0 %v3906
  %5444 = vmatprep.subr.bf16.mxu0 0
  %5445 = vmatpush1.bf16.msra.mxu0 %v3907
  %5446 = vmatprep.subr.bf16.mxu0 0
  %5447 = vmatpush1.bf16.msra.mxu0 %v3908
  %5448 = vmatprep.subr.bf16.mxu0 0
  %5449 = vmatpush1.bf16.msra.mxu0 %v3909
  %5450 = vmatprep.subr.bf16.mxu0 0
  %5451 = vmatpush1.bf16.msra.mxu0 %v3910
  %5452 = vmatprep.subr.bf16.mxu0 0
  %5453 = vmatpush1.bf16.msra.mxu0 %v3911
  %5454 = vmatprep.subr.bf16.mxu0 0
  %5455 = vmatpush1.bf16.msra.mxu0 %v3912
  %5456 = vmatprep.subr.bf16.mxu0 0
  %5457 = vmatpush1.bf16.msra.mxu0 %v3913
  %5458 = vmatprep.mubr.bf16.mxu0 %v1350
  %5459 = vmatmul.mubr.bf16.gmra.mrb[0].mxu0 %v1348
  %v5460 = vpop.f32.mrb[0].mxu0
  %v5461 = vadd.f32 %v5421, %v5460
  %v5462 = vpop.f32.mrb[0].mxu0
  %v5463 = vpop.f32.mrb[0].mxu0
  %v5464 = vpop.f32.mrb[0].mxu0
  %5465 = vdwg.mxu0
  %5466 = vmatprep.subr.bf16.mxu0 0
  %5467 = vmatpush1.bf16.msra.mxu0 %v3914
  %5468 = vmatprep.subr.bf16.mxu0 0
  %5469 = vmatpush1.bf16.msra.mxu0 %v3915
  %5470 = vmatprep.subr.bf16.mxu0 0
  %5471 = vmatpush1.bf16.msra.mxu0 %v3916
  %5472 = vmatprep.subr.bf16.mxu0 0
  %5473 = vmatpush1.bf16.msra.mxu0 %v3917
  %5474 = vmatprep.subr.bf16.mxu0 0
  %5475 = vmatpush1.bf16.msra.mxu0 %v3918
  %5476 = vmatprep.subr.bf16.mxu0 0
  %5477 = vmatpush1.bf16.msra.mxu0 %v3919
  %5478 = vmatprep.subr.bf16.mxu0 0
  %5479 = vmatpush1.bf16.msra.mxu0 %v3920
  %5480 = vmatprep.subr.bf16.mxu0 0
  %5481 = vmatpush1.bf16.msra.mxu0 %v3921
  %5482 = vmatprep.subr.bf16.mxu0 0
  %5483 = vmatpush1.bf16.msra.mxu0 %v3922
  %5484 = vmatprep.subr.bf16.mxu0 0
  %5485 = vmatpush1.bf16.msra.mxu0 %v3923
  %5486 = vmatprep.subr.bf16.mxu0 0
  %5487 = vmatpush1.bf16.msra.mxu0 %v3924
  %5488 = vmatprep.subr.bf16.mxu0 0
  %5489 = vmatpush1.bf16.msra.mxu0 %v3925
  %5490 = vmatprep.subr.bf16.mxu0 0
  %5491 = vmatpush1.bf16.msra.mxu0 %v3926
  %5492 = vmatprep.subr.bf16.mxu0 0
  %5493 = vmatpush1.bf16.msra.mxu0 %v3927
  %5494 = vmatprep.subr.bf16.mxu0 0
  %5495 = vmatpush1.bf16.msra.mxu0 %v3928
  %5496 = vmatprep.subr.bf16.mxu0 0
  %5497 = vmatpush1.bf16.msra.mxu0 %v3929
  %5498 = vmatprep.mubr.bf16.mxu0 %v1347
  %5499 = vmatmul.mubr.bf16.gmra.mrb[0].mxu0 %v1333
  %v5500 = vpop.f32.mrb[0].mxu0
  %v5501 = vadd.f32 %v5461, %v5500
  %v5502 = vpop.f32.mrb[0].mxu0
  %v5503 = vpop.f32.mrb[0].mxu0
  %v5504 = vpop.f32.mrb[0].mxu0
  %5505 = vdwg.mxu0
  %5506 = vmatprep.subr.bf16.mxu0 0
  %5507 = vmatpush1.bf16.msra.mxu0 %v3930
  %5508 = vmatprep.subr.bf16.mxu0 0
  %5509 = vmatpush1.bf16.msra.mxu0 %v3931
  %5510 = vmatprep.subr.bf16.mxu0 0
  %5511 = vmatpush1.bf16.msra.mxu0 %v3932
  %5512 = vmatprep.subr.bf16.mxu0 0
  %5513 = vmatpush1.bf16.msra.mxu0 %v3933
  %5514 = vmatprep.subr.bf16.mxu0 0
  %5515 = vmatpush1.bf16.msra.mxu0 %v3934
  %5516 = vmatprep.subr.bf16.mxu0 0
  %5517 = vmatpush1.bf16.msra.mxu0 %v3935
  %5518 = vmatprep.subr.bf16.mxu0 0
  %5519 = vmatpush1.bf16.msra.mxu0 %v3936
  %5520 = vmatprep.subr.bf16.mxu0 0
  %5521 = vmatpush1.bf16.msra.mxu0 %v3937
  %5522 = vmatprep.subr.bf16.mxu0 0
  %5523 = vmatpush1.bf16.msra.mxu0 %v3938
  %5524 = vmatprep.subr.bf16.mxu0 0
  %5525 = vmatpush1.bf16.msra.mxu0 %v3939
  %5526 = vmatprep.subr.bf16.mxu0 0
  %5527 = vmatpush1.bf16.msra.mxu0 %v3940
  %5528 = vmatprep.subr.bf16.mxu0 0
  %5529 = vmatpush1.bf16.msra.mxu0 %v3941
  %5530 = vmatprep.subr.bf16.mxu0 0
  %5531 = vmatpush1.bf16.msra.mxu0 %v3942
  %5532 = vmatprep.subr.bf16.mxu0 0
  %5533 = vmatpush1.bf16.msra.mxu0 %v3943
  %5534 = vmatprep.subr.bf16.mxu0 0
  %5535 = vmatpush1.bf16.msra.mxu0 %v3944
  %5536 = vmatprep.subr.bf16.mxu0 0
  %5537 = vmatpush1.bf16.msra.mxu0 %v3945
  %5538 = vmatprep.mubr.bf16.mxu0 %v1351
  %5539 = vmatmul.mubr.bf16.gmra.mrb[0].mxu0 %v1349
  %v5540 = vpop.f32.mrb[0].mxu0
  %v5541 = vadd.f32 %v5501, %v5540
  %v5542 = vpop.f32.mrb[0].mxu0
  %v5543 = vpop.f32.mrb[0].mxu0
  %v5544 = vpop.f32.mrb[0].mxu0
  %5545 = vdwg.mxu0
  %5546 = vmatprep.subr.bf16.mxu0 0
  %5547 = vmatpush1.bf16.msra.mxu0 %v3946
  %5548 = vmatprep.subr.bf16.mxu0 0
  %5549 = vmatpush1.bf16.msra.mxu0 %v3947
  %5550 = vmatprep.subr.bf16.mxu0 0
  %5551 = vmatpush1.bf16.msra.mxu0 %v3948
  %5552 = vmatprep.subr.bf16.mxu0 0
  %5553 = vmatpush1.bf16.msra.mxu0 %v3949
  %5554 = vmatprep.subr.bf16.mxu0 0
  %5555 = vmatpush1.bf16.msra.mxu0 %v3950
  %5556 = vmatprep.subr.bf16.mxu0 0
  %5557 = vmatpush1.bf16.msra.mxu0 %v3951
  %5558 = vmatprep.subr.bf16.mxu0 0
  %5559 = vmatpush1.bf16.msra.mxu0 %v3952
  %5560 = vmatprep.subr.bf16.mxu0 0
  %5561 = vmatpush1.bf16.msra.mxu0 %v3953
  %5562 = vmatprep.subr.bf16.mxu0 0
  %5563 = vmatpush1.bf16.msra.mxu0 %v3954
  %5564 = vmatprep.subr.bf16.mxu0 0
  %5565 = vmatpush1.bf16.msra.mxu0 %v3955
  %5566 = vmatprep.subr.bf16.mxu0 0
  %5567 = vmatpush1.bf16.msra.mxu0 %v3956
  %5568 = vmatprep.subr.bf16.mxu0 0
  %5569 = vmatpush1.bf16.msra.mxu0 %v3957
  %5570 = vmatprep.subr.bf16.mxu0 0
  %5571 = vmatpush1.bf16.msra.mxu0 %v3958
  %5572 = vmatprep.subr.bf16.mxu0 0
  %5573 = vmatpush1.bf16.msra.mxu0 %v3959
  %5574 = vmatprep.subr.bf16.mxu0 0
  %5575 = vmatpush1.bf16.msra.mxu0 %v3960
  %5576 = vmatprep.subr.bf16.mxu0 0
  %5577 = vmatpush1.bf16.msra.mxu0 %v3961
  %5578 = vmatprep.mubr.bf16.mxu0 %v1389
  %5579 = vmatmul.mubr.bf16.gmra.mrb[0].mxu0 %v1375
  %v5580 = vpop.f32.mrb[0].mxu0
  %v5581 = vadd.f32 %v5541, %v5580
  %v5582 = vpop.f32.mrb[0].mxu0
  %v5583 = vpop.f32.mrb[0].mxu0
  %v5584 = vpop.f32.mrb[0].mxu0
  %5585 = vdwg.mxu0
  %5586 = vmatprep.subr.bf16.mxu0 0
  %5587 = vmatpush1.bf16.msra.mxu0 %v3962
  %5588 = vmatprep.subr.bf16.mxu0 0
  %5589 = vmatpush1.bf16.msra.mxu0 %v3963
  %5590 = vmatprep.subr.bf16.mxu0 0
  %5591 = vmatpush1.bf16.msra.mxu0 %v3964
  %5592 = vmatprep.subr.bf16.mxu0 0
  %5593 = vmatpush1.bf16.msra.mxu0 %v3965
  %5594 = vmatprep.subr.bf16.mxu0 0
  %5595 = vmatpush1.bf16.msra.mxu0 %v3966
  %5596 = vmatprep.subr.bf16.mxu0 0
  %5597 = vmatpush1.bf16.msra.mxu0 %v3967
  %5598 = vmatprep.subr.bf16.mxu0 0
  %5599 = vmatpush1.bf16.msra.mxu0 %v3968
  %5600 = vmatprep.subr.bf16.mxu0 0
  %5601 = vmatpush1.bf16.msra.mxu0 %v3969
  %5602 = vmatprep.subr.bf16.mxu0 0
  %5603 = vmatpush1.bf16.msra.mxu0 %v3970
  %5604 = vmatprep.subr.bf16.mxu0 0
  %5605 = vmatpush1.bf16.msra.mxu0 %v3971
  %5606 = vmatprep.subr.bf16.mxu0 0
  %5607 = vmatpush1.bf16.msra.mxu0 %v3972
  %5608 = vmatprep.subr.bf16.mxu0 0
  %5609 = vmatpush1.bf16.msra.mxu0 %v3973
  %5610 = vmatprep.subr.bf16.mxu0 0
  %5611 = vmatpush1.bf16.msra.mxu0 %v3974
  %5612 = vmatprep.subr.bf16.mxu0 0
  %5613 = vmatpush1.bf16.msra.mxu0 %v3975
  %5614 = vmatprep.subr.bf16.mxu0 0
  %5615 = vmatpush1.bf16.msra.mxu0 %v3976
  %5616 = vmatprep.subr.bf16.mxu0 0
  %5617 = vmatpush1.bf16.msra.mxu0 %v3977
  %5618 = vmatprep.mubr.bf16.mxu0 %v1399
  %5619 = vmatmul.mubr.bf16.gmra.mrb[0].mxu0 %v1397
  %v5620 = vpop.f32.mrb[0].mxu0
  %v5621 = vadd.f32 %v5581, %v5620
  %v5622 = vpop.f32.mrb[0].mxu0
  %v5623 = vpop.f32.mrb[0].mxu0
  %v5624 = vpop.f32.mrb[0].mxu0
  %5625 = vdwg.mxu0
  %5626 = vmatprep.subr.bf16.mxu0 0
  %5627 = vmatpush1.bf16.msra.mxu0 %v3978
  %5628 = vmatprep.subr.bf16.mxu0 0
  %5629 = vmatpush1.bf16.msra.mxu0 %v3979
  %5630 = vmatprep.subr.bf16.mxu0 0
  %5631 = vmatpush1.bf16.msra.mxu0 %v3980
  %5632 = vmatprep.subr.bf16.mxu0 0
  %5633 = vmatpush1.bf16.msra.mxu0 %v3981
  %5634 = vmatprep.subr.bf16.mxu0 0
  %5635 = vmatpush1.bf16.msra.mxu0 %v3982
  %5636 = vmatprep.subr.bf16.mxu0 0
  %5637 = vmatpush1.bf16.msra.mxu0 %v3983
  %5638 = vmatprep.subr.bf16.mxu0 0
  %5639 = vmatpush1.bf16.msra.mxu0 %v3984
  %5640 = vmatprep.subr.bf16.mxu0 0
  %5641 = vmatpush1.bf16.msra.mxu0 %v3985
  %5642 = vmatprep.subr.bf16.mxu0 0
  %5643 = vmatpush1.bf16.msra.mxu0 %v3986
  %5644 = vmatprep.subr.bf16.mxu0 0
  %5645 = vmatpush1.bf16.msra.mxu0 %v3987
  %5646 = vmatprep.subr.bf16.mxu0 0
  %5647 = vmatpush1.bf16.msra.mxu0 %v3988
  %5648 = vmatprep.subr.bf16.mxu0 0
  %5649 = vmatpush1.bf16.msra.mxu0 %v3989
  %5650 = vmatprep.subr.bf16.mxu0 0
  %5651 = vmatpush1.bf16.msra.mxu0 %v3990
  %5652 = vmatprep.subr.bf16.mxu0 0
  %5653 = vmatpush1.bf16.msra.mxu0 %v3991
  %5654 = vmatprep.subr.bf16.mxu0 0
  %5655 = vmatpush1.bf16.msra.mxu0 %v3992
  %5656 = vmatprep.subr.bf16.mxu0 0
  %5657 = vmatpush1.bf16.msra.mxu0 %v3993
  %5658 = vmatprep.mubr.bf16.mxu0 %v1396
  %5659 = vmatmul.mubr.bf16.gmra.mrb[0].mxu0 %v1382
  %v5660 = vpop.f32.mrb[0].mxu0
  %v5661 = vadd.f32 %v5621, %v5660
  %v5662 = vpop.f32.mrb[0].mxu0
  %v5663 = vpop.f32.mrb[0].mxu0
  %v5664 = vpop.f32.mrb[0].mxu0
  %5665 = vdwg.mxu0
  %5666 = vmatprep.subr.bf16.mxu0 0
  %5667 = vmatpush1.bf16.msra.mxu0 %v3994
  %5668 = vmatprep.subr.bf16.mxu0 0
  %5669 = vmatpush1.bf16.msra.mxu0 %v3995
  %5670 = vmatprep.subr.bf16.mxu0 0
  %5671 = vmatpush1.bf16.msra.mxu0 %v3996
  %5672 = vmatprep.subr.bf16.mxu0 0
  %5673 = vmatpush1.bf16.msra.mxu0 %v3997
  %5674 = vmatprep.subr.bf16.mxu0 0
  %5675 = vmatpush1.bf16.msra.mxu0 %v3998
  %5676 = vmatprep.subr.bf16.mxu0 0
  %5677 = vmatpush1.bf16.msra.mxu0 %v3999
  %5678 = vmatprep.subr.bf16.mxu0 0
  %5679 = vmatpush1.bf16.msra.mxu0 %v4000
  %5680 = vmatprep.subr.bf16.mxu0 0
  %5681 = vmatpush1.bf16.msra.mxu0 %v4001
  %5682 = vmatprep.subr.bf16.mxu0 0
  %5683 = vmatpush1.bf16.msra.mxu0 %v4002
  %5684 = vmatprep.subr.bf16.mxu0 0
  %5685 = vmatpush1.bf16.msra.mxu0 %v4003
  %5686 = vmatprep.subr.bf16.mxu0 0
  %5687 = vmatpush1.bf16.msra.mxu0 %v4004
  %5688 = vmatprep.subr.bf16.mxu0 0
  %5689 = vmatpush1.bf16.msra.mxu0 %v4005
  %5690 = vmatprep.subr.bf16.mxu0 0
  %5691 = vmatpush1.bf16.msra.mxu0 %v4006
  %5692 = vmatprep.subr.bf16.mxu0 0
  %5693 = vmatpush1.bf16.msra.mxu0 %v4007
  %5694 = vmatprep.subr.bf16.mxu0 0
  %5695 = vmatpush1.bf16.msra.mxu0 %v4008
  %5696 = vmatprep.subr.bf16.mxu0 0
  %5697 = vmatpush1.bf16.msra.mxu0 %v4009
  %5698 = vmatprep.mubr.bf16.mxu0 %v1400
  %5699 = vmatmul.mubr.bf16.gmra.mrb[0].mxu0 %v1398
  %v5700 = vpop.f32.mrb[0].mxu0
  %v5701 = vadd.f32 %v5661, %v5700
  %v5702 = vpop.f32.mrb[0].mxu0
  %v5703 = vpop.f32.mrb[0].mxu0
  %v5704 = vpop.f32.mrb[0].mxu0
  %5705 = vdwg.mxu0
  %5706 = vmatprep.subr.bf16.mxu0 0
  %5707 = vmatpush1.bf16.msra.mxu0 %v4010
  %5708 = vmatprep.subr.bf16.mxu0 0
  %5709 = vmatpush1.bf16.msra.mxu0 %v4011
  %5710 = vmatprep.subr.bf16.mxu0 0
  %5711 = vmatpush1.bf16.msra.mxu0 %v4012
  %5712 = vmatprep.subr.bf16.mxu0 0
  %5713 = vmatpush1.bf16.msra.mxu0 %v4013
  %5714 = vmatprep.subr.bf16.mxu0 0
  %5715 = vmatpush1.bf16.msra.mxu0 %v4014
  %5716 = vmatprep.subr.bf16.mxu0 0
  %5717 = vmatpush1.bf16.msra.mxu0 %v4015
  %5718 = vmatprep.subr.bf16.mxu0 0
  %5719 = vmatpush1.bf16.msra.mxu0 %v4016
  %5720 = vmatprep.subr.bf16.mxu0 0
  %5721 = vmatpush1.bf16.msra.mxu0 %v4017
  %5722 = vmatprep.subr.bf16.mxu0 0
  %5723 = vmatpush1.bf16.msra.mxu0 %v4018
  %5724 = vmatprep.subr.bf16.mxu0 0
  %5725 = vmatpush1.bf16.msra.mxu0 %v4019
  %5726 = vmatprep.subr.bf16.mxu0 0
  %5727 = vmatpush1.bf16.msra.mxu0 %v4020
  %5728 = vmatprep.subr.bf16.mxu0 0
  %5729 = vmatpush1.bf16.msra.mxu0 %v4021
  %5730 = vmatprep.subr.bf16.mxu0 0
  %5731 = vmatpush1.bf16.msra.mxu0 %v4022
  %5732 = vmatprep.subr.bf16.mxu0 0
  %5733 = vmatpush1.bf16.msra.mxu0 %v4023
  %5734 = vmatprep.subr.bf16.mxu0 0
  %5735 = vmatpush1.bf16.msra.mxu0 %v4024
  %5736 = vmatprep.subr.bf16.mxu0 0
  %5737 = vmatpush1.bf16.msra.mxu0 %v4025
  %5738 = vmatprep.mubr.bf16.mxu0 %v1438
  %5739 = vmatmul.mubr.bf16.gmra.mrb[0].mxu0 %v1424
  %v5740 = vpop.f32.mrb[0].mxu0
  %v5741 = vadd.f32 %v5701, %v5740
  %v5742 = vpop.f32.mrb[0].mxu0
  %v5743 = vpop.f32.mrb[0].mxu0
  %v5744 = vpop.f32.mrb[0].mxu0
  %5745 = vdwg.mxu0
  %5746 = vmatprep.subr.bf16.mxu0 0
  %5747 = vmatpush1.bf16.msra.mxu0 %v4026
  %5748 = vmatprep.subr.bf16.mxu0 0
  %5749 = vmatpush1.bf16.msra.mxu0 %v4027
  %5750 = vmatprep.subr.bf16.mxu0 0
  %5751 = vmatpush1.bf16.msra.mxu0 %v4028
  %5752 = vmatprep.subr.bf16.mxu0 0
  %5753 = vmatpush1.bf16.msra.mxu0 %v4029
  %5754 = vmatprep.subr.bf16.mxu0 0
  %5755 = vmatpush1.bf16.msra.mxu0 %v4030
  %5756 = vmatprep.subr.bf16.mxu0 0
  %5757 = vmatpush1.bf16.msra.mxu0 %v4031
  %5758 = vmatprep.subr.bf16.mxu0 0
  %5759 = vmatpush1.bf16.msra.mxu0 %v4032
  %5760 = vmatprep.subr.bf16.mxu0 0
  %5761 = vmatpush1.bf16.msra.mxu0 %v4033
  %5762 = vmatprep.subr.bf16.mxu0 0
  %5763 = vmatpush1.bf16.msra.mxu0 %v4034
  %5764 = vmatprep.subr.bf16.mxu0 0
  %5765 = vmatpush1.bf16.msra.mxu0 %v4035
  %5766 = vmatprep.subr.bf16.mxu0 0
  %5767 = vmatpush1.bf16.msra.mxu0 %v4036
  %5768 = vmatprep.subr.bf16.mxu0 0
  %5769 = vmatpush1.bf16.msra.mxu0 %v4037
  %5770 = vmatprep.subr.bf16.mxu0 0
  %5771 = vmatpush1.bf16.msra.mxu0 %v4038
  %5772 = vmatprep.subr.bf16.mxu0 0
  %5773 = vmatpush1.bf16.msra.mxu0 %v4039
  %5774 = vmatprep.subr.bf16.mxu0 0
  %5775 = vmatpush1.bf16.msra.mxu0 %v4040
  %5776 = vmatprep.subr.bf16.mxu0 0
  %5777 = vmatpush1.bf16.msra.mxu0 %v4041
  %5778 = vmatprep.mubr.bf16.mxu0 %v1448
  %5779 = vmatmul.mubr.bf16.gmra.mrb[0].mxu0 %v1446
  %v5780 = vpop.f32.mrb[0].mxu0
  %v5781 = vadd.f32 %v5741, %v5780
  %v5782 = vpop.f32.mrb[0].mxu0
  %v5783 = vpop.f32.mrb[0].mxu0
  %v5784 = vpop.f32.mrb[0].mxu0
  %5785 = vdwg.mxu0
  %5786 = vmatprep.subr.bf16.mxu0 0
  %5787 = vmatpush1.bf16.msra.mxu0 %v4042
  %5788 = vmatprep.subr.bf16.mxu0 0
  %5789 = vmatpush1.bf16.msra.mxu0 %v4043
  %5790 = vmatprep.subr.bf16.mxu0 0
  %5791 = vmatpush1.bf16.msra.mxu0 %v4044
  %5792 = vmatprep.subr.bf16.mxu0 0
  %5793 = vmatpush1.bf16.msra.mxu0 %v4045
  %5794 = vmatprep.subr.bf16.mxu0 0
  %5795 = vmatpush1.bf16.msra.mxu0 %v4046
  %5796 = vmatprep.subr.bf16.mxu0 0
  %5797 = vmatpush1.bf16.msra.mxu0 %v4047
  %5798 = vmatprep.subr.bf16.mxu0 0
  %5799 = vmatpush1.bf16.msra.mxu0 %v4048
  %5800 = vmatprep.subr.bf16.mxu0 0
  %5801 = vmatpush1.bf16.msra.mxu0 %v4049
  %5802 = vmatprep.subr.bf16.mxu0 0
  %5803 = vmatpush1.bf16.msra.mxu0 %v4050
  %5804 = vmatprep.subr.bf16.mxu0 0
  %5805 = vmatpush1.bf16.msra.mxu0 %v4051
  %5806 = vmatprep.subr.bf16.mxu0 0
  %5807 = vmatpush1.bf16.msra.mxu0 %v4052
  %5808 = vmatprep.subr.bf16.mxu0 0
  %5809 = vmatpush1.bf16.msra.mxu0 %v4053
  %5810 = vmatprep.subr.bf16.mxu0 0
  %5811 = vmatpush1.bf16.msra.mxu0 %v4054
  %5812 = vmatprep.subr.bf16.mxu0 0
  %5813 = vmatpush1.bf16.msra.mxu0 %v4055
  %5814 = vmatprep.subr.bf16.mxu0 0
  %5815 = vmatpush1.bf16.msra.mxu0 %v4056
  %5816 = vmatprep.subr.bf16.mxu0 0
  %5817 = vmatpush1.bf16.msra.mxu0 %v4057
  %5818 = vmatprep.mubr.bf16.mxu0 %v1445
  %5819 = vmatmul.mubr.bf16.gmra.mrb[0].mxu0 %v1431
  %v5820 = vpop.f32.mrb[0].mxu0
  %v5821 = vadd.f32 %v5781, %v5820
  %v5822 = vpop.f32.mrb[0].mxu0
  %v5823 = vpop.f32.mrb[0].mxu0
  %v5824 = vpop.f32.mrb[0].mxu0
  %5825 = vdwg.mxu0
  %5826 = vmatprep.subr.bf16.mxu0 0
  %5827 = vmatpush1.bf16.msra.mxu0 %v4058
  %5828 = vmatprep.subr.bf16.mxu0 0
  %5829 = vmatpush1.bf16.msra.mxu0 %v4059
  %5830 = vmatprep.subr.bf16.mxu0 0
  %5831 = vmatpush1.bf16.msra.mxu0 %v4060
  %5832 = vmatprep.subr.bf16.mxu0 0
  %5833 = vmatpush1.bf16.msra.mxu0 %v4061
  %5834 = vmatprep.subr.bf16.mxu0 0
  %5835 = vmatpush1.bf16.msra.mxu0 %v4062
  %5836 = vmatprep.subr.bf16.mxu0 0
  %5837 = vmatpush1.bf16.msra.mxu0 %v4063
  %5838 = vmatprep.subr.bf16.mxu0 0
  %5839 = vmatpush1.bf16.msra.mxu0 %v4064
  %5840 = vmatprep.subr.bf16.mxu0 0
  %5841 = vmatpush1.bf16.msra.mxu0 %v4065
  %5842 = vmatprep.subr.bf16.mxu0 0
  %5843 = vmatpush1.bf16.msra.mxu0 %v4066
  %5844 = vmatprep.subr.bf16.mxu0 0
  %5845 = vmatpush1.bf16.msra.mxu0 %v4067
  %5846 = vmatprep.subr.bf16.mxu0 0
  %5847 = vmatpush1.bf16.msra.mxu0 %v4068
  %5848 = vmatprep.subr.bf16.mxu0 0
  %5849 = vmatpush1.bf16.msra.mxu0 %v4069
  %5850 = vmatprep.subr.bf16.mxu0 0
  %5851 = vmatpush1.bf16.msra.mxu0 %v4070
  %5852 = vmatprep.subr.bf16.mxu0 0
  %5853 = vmatpush1.bf16.msra.mxu0 %v4071
  %5854 = vmatprep.subr.bf16.mxu0 0
  %5855 = vmatpush1.bf16.msra.mxu0 %v4072
  %5856 = vmatprep.subr.bf16.mxu0 0
  %5857 = vmatpush1.bf16.msra.mxu0 %v4073
  %5858 = vmatprep.mubr.bf16.mxu0 %v1449
  %5859 = vmatmul.mubr.bf16.gmra.mrb[0].mxu0 %v1447
  %v5860 = vpop.f32.mrb[0].mxu0
  %v5861 = vadd.f32 %v5821, %v5860
  %v5862 = vpop.f32.mrb[0].mxu0
  %v5863 = vpop.f32.mrb[0].mxu0
  %v5864 = vpop.f32.mrb[0].mxu0
  %5865 = vdwg.mxu0
  %v5866 = vld [vmem:[%s2] sm:$0x1]
  %v5867 = vmul.f32 %v5861, %v5866
  %v5868 = vld [vmem:[%s3] sm:$0x1]
  %v5869 = vadd.f32 %v5867, %v5868
  %vm5870 = vcmask 57344
  %5871 = vst.msk [vmem:[%s4] sm:$0x1] %vm5870, %v5869
  // Predicated region
  $region18: #{nlayer_attention_forward.9} parent=0 // pred_check
    _
  $region19: #{nlayer_attention_forward.9} parent=0 // pred_check_branch
    %5873 = sbr.rel (0) target = $region21
  $region20: #{nlayer_attention_forward.9} parent=0 // pred_region
    _
  $region21: #{nlayer_attention_forward.9} parent=0 // pred_fallthru
    _
  // Predicated region
  $region22: #{nlayer_attention_forward.9} parent=0 // pred_check
    _
  $region23: #{nlayer_attention_forward.9} parent=0 // pred_check_branch
    %5875 = sbr.rel (0) target = $region25
  $region24: #{nlayer_attention_forward.9} parent=0 // pred_region
    _
  $region25: #{nlayer_attention_forward.9} parent=0 // pred_fallthru
    _

</llo_original>
